<compile_context>
chip_gen: v7x
topology: tpu7x:2x2x1
jax: 0.10.0
libtpu: 0.0.40
codegen_flags: <defaults>
</compile_context>

<pallas_src>
import math

import jax
import jax.numpy as jnp
from jax import lax
from jax.experimental import pallas as pl
from jax.experimental.pallas import tpu as pltpu


LEAKY_SLOPE = 0.1
BN_EPS = 1e-5


def _make_ssh_kernel(B, H, W, c_in, c_half, c_quarter):
    Hp, Wp = H + 2, W + 2
    M = B * H * W
    cq = c_quarter
    c_out = c_half + 2 * cq

    def leaky(v):
        return jnp.where(v > 0, v, LEAKY_SLOPE * v)

    def im2col(tap, c):
        # tap(kh, kw) -> (B, H, W, c) shifted window of a zero-padded input.
        # Returns the (M, 9*c) patch matrix, built once per input and reused.
        cols = []
        for kh in range(3):
            for kw in range(3):
                cols.append(tap(kh, kw).reshape(M, c))
        return jnp.concatenate(cols, axis=-1)

    def zero_halo(pad):
        # Only the 1-px border needs zeroing; the interior is rewritten below.
        z_row = jnp.zeros((B, 1, Wp, cq), pad.dtype)
        z_col = jnp.zeros((B, Hp, 1, cq), pad.dtype)
        pad[:, 0:1, :, :] = z_row
        pad[:, Hp - 1:Hp, :, :] = z_row
        pad[:, :, 0:1, :] = z_col
        pad[:, :, Wp - 1:Wp, :] = z_col

    def kernel(x_ref,
               wx_ref, bx_ref,     # fused conv3X3 | conv5X5_1 : (9*Cin, c_half+cq)
               wt_ref, bt_ref,     # fused conv5X5_2 | conv7X7_2 : (9*cq, 2*cq)
               wu_ref, bu_ref,     # conv7x7_3 : (9*cq, cq)
               o_ref,
               pad_t, pad_u):      # bf16 VMEM scratch: zero-padded t / u
        zero_halo(pad_t)
        zero_halo(pad_u)

        # ---- pass 1: x -> [c1 | t]   (one matmul, K = 9*Cin, N = c_half + cq)
        patch_x = im2col(lambda kh, kw: x_ref[:, kh:kh + H, kw:kw + W, :], c_in)
        yx = jnp.dot(patch_x, wx_ref[...],
                     preferred_element_type=jnp.float32) + bx_ref[...]
        c1 = yx[:, :c_half]                                   # conv3X3 (no relu)
        t = leaky(yx[:, c_half:c_half + cq])                  # conv5X5_1 + leaky
        pad_t[:, 1:H + 1, 1:W + 1, :] = (
            t.reshape(B, H, W, cq).astype(pad_t.dtype))

        # ---- pass 2: t -> [c2 | u]   (one matmul, K = 9*cq, N = 2*cq)
        patch_t = im2col(lambda kh, kw: pad_t[:, kh:kh + H, kw:kw + W, :], cq)
        yt = jnp.dot(patch_t, wt_ref[...],
                     preferred_element_type=jnp.float32) + bt_ref[...]
        c2 = yt[:, :cq]                                       # conv5X5_2 (no relu)
        u = leaky(yt[:, cq:2 * cq])                           # conv7X7_2 + leaky
        pad_u[:, 1:H + 1, 1:W + 1, :] = (
            u.reshape(B, H, W, cq).astype(pad_u.dtype))

        # ---- pass 3: u -> c3         (one matmul, K = 9*cq, N = cq)
        patch_u = im2col(lambda kh, kw: pad_u[:, kh:kh + H, kw:kw + W, :], cq)
        c3 = jnp.dot(patch_u, wu_ref[...],
                     preferred_element_type=jnp.float32) + bu_ref[...]

        # cat([c1, c2, c3], channel) + ReLU; channels on the lane dim.
        out = jnp.maximum(jnp.concatenate([c1, c2, c3], axis=-1), 0.0)
        o_ref[...] = out.reshape(B, H, W, c_out).astype(o_ref.dtype)

    return kernel


def fold_bn(conv_w, gamma, beta, mean, var, eps=BN_EPS):
    """Fold an inference-mode BatchNorm2d into a bias-free conv -> (w_eff, b_eff)."""
    scale = gamma / jnp.sqrt(var + eps)               # (Cout,)
    w_eff = conv_w * scale[:, None, None, None]       # (Cout, Cin, 3, 3)
    b_eff = beta - mean * scale                       # (Cout,)
    return w_eff, b_eff


def _pack_weights(folded, names, dtype=jnp.bfloat16):
    """Pack sibling convs sharing the same input into one (9*Cin, sum Cout) bf16
    matrix (tap-major K: kh, kw, cin) and one (1, sum Cout) f32 bias."""
    mats, biases = [], []
    for name in names:
        w, b = folded[name]
        cout, cin = w.shape[0], w.shape[1]
        mats.append(jnp.transpose(w, (2, 3, 1, 0)).reshape(9 * cin, cout))
        biases.append(b)
    wk = jnp.concatenate(mats, axis=-1).astype(dtype)
    bk = jnp.concatenate(biases, axis=-1).reshape(1, -1).astype(jnp.float32)
    return wk, bk


def _pick_batch_block(n, max_blk=4):
    """Largest divisor of n that keeps >= 2 grid steps (v7x megacore) and <= max_blk."""
    cap = min(max_blk, max(1, n // 2))
    for b in range(cap, 0, -1):
        if n % b == 0:
            return b
    return 1


def mobilenetv2_ssh_forward(x_nchw, folded_params):
    """x_nchw: (N, Cin, H, W).  folded_params: name -> (w_eff, b_eff) with BN folded.
    Returns (N, out_channel, H, W), matching the PyTorch module output."""
    N, Cin, H, W = x_nchw.shape
    c_half = folded_params["conv3X3"][0].shape[0]
    cq = folded_params["conv5X5_1"][0].shape[0]
    c_out = c_half + 2 * cq
    B = _pick_batch_block(N)

    # NCHW -> NHWC with a 1-px zero halo; bf16 operands for the MXU.
    # TODO(synk): in an end-to-end NHWC network these layout passes disappear.
    x_pad = jnp.pad(jnp.transpose(x_nchw, (0, 2, 3, 1)),
                    ((0, 0), (1, 1), (1, 1), (0, 0))).astype(jnp.bfloat16)

    wx, bx = _pack_weights(folded_params, ("conv3X3", "conv5X5_1"))
    wt, bt = _pack_weights(folded_params, ("conv5X5_2", "conv7X7_2"))
    wu, bu = _pack_weights(folded_params, ("conv7x7_3",))
    packed = (wx, bx, wt, bt, wu, bu)

    def _const(n):
        return (0, 0)

    w_specs = [pl.BlockSpec(a.shape, _const) for a in packed]  # VMEM-resident

    kernel = _make_ssh_kernel(B, H, W, Cin, c_half, cq)

    out_nhwc = pl.pallas_call(
        kernel,
        out_shape=jax.ShapeDtypeStruct((N, H, W, c_out), x_nchw.dtype),
        grid_spec=pltpu.PrefetchScalarGridSpec(
            num_scalar_prefetch=0,
            grid=(N // B,),                                  # B images per step
            in_specs=[pl.BlockSpec((B, H + 2, W + 2, Cin),
                                   lambda n: (n, 0, 0, 0))] + w_specs,
            out_specs=pl.BlockSpec((B, H, W, c_out), lambda n: (n, 0, 0, 0)),
            scratch_shapes=[
                pltpu.VMEM((B, H + 2, W + 2, cq), jnp.bfloat16),   # padded t
                pltpu.VMEM((B, H + 2, W + 2, cq), jnp.bfloat16),   # padded u
            ],
        ),
        compiler_params=pltpu.CompilerParams(
            dimension_semantics=("parallel",),               # megacore over batch
            vmem_limit_bytes=32 * 1024 * 1024,               # explicit (v5e default 16 MiB)
        ),
    )(x_pad, *packed)

    # Back to NCHW to match the PyTorch module's output layout.
    return jnp.transpose(out_nhwc, (0, 3, 1, 2))


if __name__ == "__main__":
    # Small shapes consistent with the module defaults (in_channel=out_channel=64).
    N, Cin, H, W = 2, 64, 16, 16
    out_channel = 64
    c_half, c_quarter = out_channel // 2, out_channel // 4

    key = jax.random.PRNGKey(0)

    def make_conv_bn(k, cin, cout):
        kw_, kg, kb, km, kv = jax.random.split(k, 5)
        w = jax.random.normal(kw_, (cout, cin, 3, 3), jnp.float32) / math.sqrt(9 * cin)
        gamma = 1.0 + 0.1 * jax.random.normal(kg, (cout,), jnp.float32)
        beta = 0.1 * jax.random.normal(kb, (cout,), jnp.float32)
        mean = 0.1 * jax.random.normal(km, (cout,), jnp.float32)
        var = jax.random.uniform(kv, (cout,), jnp.float32, minval=0.5, maxval=1.5)
        return fold_bn(w, gamma, beta, mean, var)

    keys = jax.random.split(key, 6)
    x = jax.random.normal(keys[0], (N, Cin, H, W), jnp.float32)
    params = {
        "conv3X3":   make_conv_bn(keys[1], Cin, c_half),
        "conv5X5_1": make_conv_bn(keys[2], Cin, c_quarter),
        "conv5X5_2": make_conv_bn(keys[3], c_quarter, c_quarter),
        "conv7X7_2": make_conv_bn(keys[4], c_quarter, c_quarter),
        "conv7x7_3": make_conv_bn(keys[5], c_quarter, c_quarter),
    }

    out = jax.block_until_ready(mobilenetv2_ssh_forward(x, params))

    # Pure-JAX f32 reference of the PyTorch forward (NCHW convs, same folded BN).
    def ref_conv(xx, w, b):
        y = lax.conv_general_dilated(
            xx, w, window_strides=(1, 1), padding=((1, 1), (1, 1)),
            dimension_numbers=("NCHW", "OIHW", "NCHW"))
        return y + b[None, :, None, None]

    def lrelu(v):
        return jnp.where(v > 0, v, LEAKY_SLOPE * v)

    c1 = ref_conv(x, *params["conv3X3"])
    t = lrelu(ref_conv(x, *params["conv5X5_1"]))
    c2 = ref_conv(t, *params["conv5X5_2"])
    u = lrelu(ref_conv(t, *params["conv7X7_2"]))
    c3 = ref_conv(u, *params["conv7x7_3"])
    ref = jax.nn.relu(jnp.concatenate([c1, c2, c3], axis=1))

    assert out.shape == (N, out_channel, H, W)
    # bf16 operands (f32 accumulation) vs pure-f32 reference -> relaxed tolerance.
    max_err = float(jnp.max(jnp.abs(out - ref)))
    assert jnp.allclose(out, ref, atol=6e-2, rtol=6e-2), max_err
    print("KERNEL_OK")
</pallas_src>

<mosaic_0001>
module attributes {stable_mosaic.version = 11 : i64} {
  func.func @kernel(%arg0: i32, %arg1: memref<1x18x18x64xbf16, #tpu.memory_space<vmem>>, %arg2: memref<576x48xbf16, #tpu.memory_space<vmem>>, %arg3: memref<1x48xf32, #tpu.memory_space<vmem>>, %arg4: memref<144x32xbf16, #tpu.memory_space<vmem>>, %arg5: memref<1x32xf32, #tpu.memory_space<vmem>>, %arg6: memref<144x16xbf16, #tpu.memory_space<vmem>>, %arg7: memref<1x16xf32, #tpu.memory_space<vmem>>, %arg8: memref<1x16x16x64xf32, #tpu.memory_space<vmem>>, %arg9: memref<1x18x18x16xbf16, #tpu.memory_space<vmem>>, %arg10: memref<1x18x18x16xbf16, #tpu.memory_space<vmem>>) attributes {dimension_semantics = [#tpu.dimension_semantics<parallel>], iteration_bounds = array<i64: 2>, scalar_prefetch = 0 : i64, scratch_operands = 2 : i64, tpu.core_type = #tpu.core_type<tc>, window_params = [{transform_indices = @transform_0, window_bounds = array<i64: 1, 18, 18, 64>}, {pipeline_mode = #tpu.pipeline_mode<synchronous>, transform_indices = @transform_1, window_bounds = array<i64: 576, 48>}, {pipeline_mode = #tpu.pipeline_mode<synchronous>, transform_indices = @transform_2, window_bounds = array<i64: 1, 48>}, {pipeline_mode = #tpu.pipeline_mode<synchronous>, transform_indices = @transform_3, window_bounds = array<i64: 144, 32>}, {pipeline_mode = #tpu.pipeline_mode<synchronous>, transform_indices = @transform_4, window_bounds = array<i64: 1, 32>}, {pipeline_mode = #tpu.pipeline_mode<synchronous>, transform_indices = @transform_5, window_bounds = array<i64: 144, 16>}, {pipeline_mode = #tpu.pipeline_mode<synchronous>, transform_indices = @transform_6, window_bounds = array<i64: 1, 16>}, {transform_indices = @transform_7, window_bounds = array<i64: 1, 16, 16, 64>}]} {
    %cst = arith.constant 0.000000e+00 : bf16
    %0 = vector.broadcast %cst : bf16 to vector<1x1x18x16xbf16>
    %cst_0 = arith.constant 0.000000e+00 : bf16
    %1 = vector.broadcast %cst_0 : bf16 to vector<1x18x1x16xbf16>
    %c0 = arith.constant 0 : index
    %c0_1 = arith.constant 0 : index
    %c0_2 = arith.constant 0 : index
    %c0_3 = arith.constant 0 : index
    %2 = vector.load %arg9[%c0, %c0_1, %c0_2, %c0_3] : memref<1x18x18x16xbf16, #tpu.memory_space<vmem>>, vector<1x1x18x16xbf16>
    tpu.vector_store %arg9[%c0, %c0_1, %c0_2, %c0_3], %0 {strides = array<i32>} : memref<1x18x18x16xbf16, #tpu.memory_space<vmem>>, vector<1x1x18x16xbf16>,
    %c0_4 = arith.constant 0 : index
    %c17 = arith.constant 17 : index
    %c0_5 = arith.constant 0 : index
    %c0_6 = arith.constant 0 : index
    %3 = vector.load %arg9[%c0_4, %c17, %c0_5, %c0_6] : memref<1x18x18x16xbf16, #tpu.memory_space<vmem>>, vector<1x1x18x16xbf16>
    tpu.vector_store %arg9[%c0_4, %c17, %c0_5, %c0_6], %0 {strides = array<i32>} : memref<1x18x18x16xbf16, #tpu.memory_space<vmem>>, vector<1x1x18x16xbf16>,
    %c0_7 = arith.constant 0 : index
    %c0_8 = arith.constant 0 : index
    %c0_9 = arith.constant 0 : index
    %c0_10 = arith.constant 0 : index
    %4 = vector.load %arg9[%c0_7, %c0_8, %c0_9, %c0_10] : memref<1x18x18x16xbf16, #tpu.memory_space<vmem>>, vector<1x18x1x16xbf16>
    tpu.vector_store %arg9[%c0_7, %c0_8, %c0_9, %c0_10], %1 {strides = array<i32>} : memref<1x18x18x16xbf16, #tpu.memory_space<vmem>>, vector<1x18x1x16xbf16>,
    %c0_11 = arith.constant 0 : index
    %c0_12 = arith.constant 0 : index
    %c17_13 = arith.constant 17 : index
    %c0_14 = arith.constant 0 : index
    %5 = vector.load %arg9[%c0_11, %c0_12, %c17_13, %c0_14] : memref<1x18x18x16xbf16, #tpu.memory_space<vmem>>, vector<1x18x1x16xbf16>
    tpu.vector_store %arg9[%c0_11, %c0_12, %c17_13, %c0_14], %1 {strides = array<i32>} : memref<1x18x18x16xbf16, #tpu.memory_space<vmem>>, vector<1x18x1x16xbf16>,
    %cst_15 = arith.constant 0.000000e+00 : bf16
    %6 = vector.broadcast %cst_15 : bf16 to vector<1x1x18x16xbf16>
    %cst_16 = arith.constant 0.000000e+00 : bf16
    %7 = vector.broadcast %cst_16 : bf16 to vector<1x18x1x16xbf16>
    %c0_17 = arith.constant 0 : index
    %c0_18 = arith.constant 0 : index
    %c0_19 = arith.constant 0 : index
    %c0_20 = arith.constant 0 : index
    %8 = vector.load %arg10[%c0_17, %c0_18, %c0_19, %c0_20] : memref<1x18x18x16xbf16, #tpu.memory_space<vmem>>, vector<1x1x18x16xbf16>
    tpu.vector_store %arg10[%c0_17, %c0_18, %c0_19, %c0_20], %6 {strides = array<i32>} : memref<1x18x18x16xbf16, #tpu.memory_space<vmem>>, vector<1x1x18x16xbf16>,
    %c0_21 = arith.constant 0 : index
    %c17_22 = arith.constant 17 : index
    %c0_23 = arith.constant 0 : index
    %c0_24 = arith.constant 0 : index
    %9 = vector.load %arg10[%c0_21, %c17_22, %c0_23, %c0_24] : memref<1x18x18x16xbf16, #tpu.memory_space<vmem>>, vector<1x1x18x16xbf16>
    tpu.vector_store %arg10[%c0_21, %c17_22, %c0_23, %c0_24], %6 {strides = array<i32>} : memref<1x18x18x16xbf16, #tpu.memory_space<vmem>>, vector<1x1x18x16xbf16>,
    %c0_25 = arith.constant 0 : index
    %c0_26 = arith.constant 0 : index
    %c0_27 = arith.constant 0 : index
    %c0_28 = arith.constant 0 : index
    %10 = vector.load %arg10[%c0_25, %c0_26, %c0_27, %c0_28] : memref<1x18x18x16xbf16, #tpu.memory_space<vmem>>, vector<1x18x1x16xbf16>
    tpu.vector_store %arg10[%c0_25, %c0_26, %c0_27, %c0_28], %7 {strides = array<i32>} : memref<1x18x18x16xbf16, #tpu.memory_space<vmem>>, vector<1x18x1x16xbf16>,
    %c0_29 = arith.constant 0 : index
    %c0_30 = arith.constant 0 : index
    %c17_31 = arith.constant 17 : index
    %c0_32 = arith.constant 0 : index
    %11 = vector.load %arg10[%c0_29, %c0_30, %c17_31, %c0_32] : memref<1x18x18x16xbf16, #tpu.memory_space<vmem>>, vector<1x18x1x16xbf16>
    tpu.vector_store %arg10[%c0_29, %c0_30, %c17_31, %c0_32], %7 {strides = array<i32>} : memref<1x18x18x16xbf16, #tpu.memory_space<vmem>>, vector<1x18x1x16xbf16>,
    %c0_33 = arith.constant 0 : index
    %c0_34 = arith.constant 0 : index
    %c0_35 = arith.constant 0 : index
    %c0_36 = arith.constant 0 : index
    %12 = vector.load %arg1[%c0_33, %c0_34, %c0_35, %c0_36] : memref<1x18x18x64xbf16, #tpu.memory_space<vmem>>, vector<1x16x16x64xbf16>
    %13 = vector.shape_cast %12 : vector<1x16x16x64xbf16> to vector<256x64xbf16>
    %c0_37 = arith.constant 0 : index
    %c0_38 = arith.constant 0 : index
    %c1 = arith.constant 1 : index
    %c0_39 = arith.constant 0 : index
    %14 = vector.load %arg1[%c0_37, %c0_38, %c1, %c0_39] : memref<1x18x18x64xbf16, #tpu.memory_space<vmem>>, vector<1x16x16x64xbf16>
    %15 = vector.shape_cast %14 : vector<1x16x16x64xbf16> to vector<256x64xbf16>
    %c0_40 = arith.constant 0 : index
    %c0_41 = arith.constant 0 : index
    %c2 = arith.constant 2 : index
    %c0_42 = arith.constant 0 : index
    %16 = vector.load %arg1[%c0_40, %c0_41, %c2, %c0_42] : memref<1x18x18x64xbf16, #tpu.memory_space<vmem>>, vector<1x16x16x64xbf16>
    %17 = vector.shape_cast %16 : vector<1x16x16x64xbf16> to vector<256x64xbf16>
    %c0_43 = arith.constant 0 : index
    %c1_44 = arith.constant 1 : index
    %c0_45 = arith.constant 0 : index
    %c0_46 = arith.constant 0 : index
    %18 = vector.load %arg1[%c0_43, %c1_44, %c0_45, %c0_46] : memref<1x18x18x64xbf16, #tpu.memory_space<vmem>>, vector<1x16x16x64xbf16>
    %19 = vector.shape_cast %18 : vector<1x16x16x64xbf16> to vector<256x64xbf16>
    %c0_47 = arith.constant 0 : index
    %c1_48 = arith.constant 1 : index
    %c1_49 = arith.constant 1 : index
    %c0_50 = arith.constant 0 : index
    %20 = vector.load %arg1[%c0_47, %c1_48, %c1_49, %c0_50] : memref<1x18x18x64xbf16, #tpu.memory_space<vmem>>, vector<1x16x16x64xbf16>
    %21 = vector.shape_cast %20 : vector<1x16x16x64xbf16> to vector<256x64xbf16>
    %c0_51 = arith.constant 0 : index
    %c1_52 = arith.constant 1 : index
    %c2_53 = arith.constant 2 : index
    %c0_54 = arith.constant 0 : index
    %22 = vector.load %arg1[%c0_51, %c1_52, %c2_53, %c0_54] : memref<1x18x18x64xbf16, #tpu.memory_space<vmem>>, vector<1x16x16x64xbf16>
    %23 = vector.shape_cast %22 : vector<1x16x16x64xbf16> to vector<256x64xbf16>
    %c0_55 = arith.constant 0 : index
    %c2_56 = arith.constant 2 : index
    %c0_57 = arith.constant 0 : index
    %c0_58 = arith.constant 0 : index
    %24 = vector.load %arg1[%c0_55, %c2_56, %c0_57, %c0_58] : memref<1x18x18x64xbf16, #tpu.memory_space<vmem>>, vector<1x16x16x64xbf16>
    %25 = vector.shape_cast %24 : vector<1x16x16x64xbf16> to vector<256x64xbf16>
    %c0_59 = arith.constant 0 : index
    %c2_60 = arith.constant 2 : index
    %c1_61 = arith.constant 1 : index
    %c0_62 = arith.constant 0 : index
    %26 = vector.load %arg1[%c0_59, %c2_60, %c1_61, %c0_62] : memref<1x18x18x64xbf16, #tpu.memory_space<vmem>>, vector<1x16x16x64xbf16>
    %27 = vector.shape_cast %26 : vector<1x16x16x64xbf16> to vector<256x64xbf16>
    %c0_63 = arith.constant 0 : index
    %c2_64 = arith.constant 2 : index
    %c2_65 = arith.constant 2 : index
    %c0_66 = arith.constant 0 : index
    %28 = vector.load %arg1[%c0_63, %c2_64, %c2_65, %c0_66] : memref<1x18x18x64xbf16, #tpu.memory_space<vmem>>, vector<1x16x16x64xbf16>
    %29 = vector.shape_cast %28 : vector<1x16x16x64xbf16> to vector<256x64xbf16>
    %30 = tpu.concatenate %13, %15, %17, %19, %21, %23, %25, %27, %29 in 1 : vector<256x64xbf16>, vector<256x64xbf16>, vector<256x64xbf16>, vector<256x64xbf16>, vector<256x64xbf16>, vector<256x64xbf16>, vector<256x64xbf16>, vector<256x64xbf16>, vector<256x64xbf16> -> vector<256x576xbf16>
    %c0_67 = arith.constant 0 : index
    %c0_68 = arith.constant 0 : index
    %31 = vector.load %arg2[%c0_67, %c0_68] : memref<576x48xbf16, #tpu.memory_space<vmem>>, vector<576x48xbf16>
    %cst_69 = arith.constant dense<0.000000e+00> : vector<256x48xf32>
    %32 = tpu.matmul %30, %31, %cst_69 {dimension_numbers = #tpu.dot_dimension_numbers<[1], [0], [0], [1], [0, 0, 1, 1], [], []>} : vector<256x576xbf16>, vector<576x48xbf16>, vector<256x48xf32> -> vector<256x48xf32>
    %c0_70 = arith.constant 0 : index
    %c0_71 = arith.constant 0 : index
    %33 = vector.load %arg3[%c0_70, %c0_71] : memref<1x48xf32, #tpu.memory_space<vmem>>, vector<1x48xf32>
    %34 = vector.broadcast %33 : vector<1x48xf32> to vector<256x48xf32>
    %35 = arith.addf %32, %34 : vector<256x48xf32>
    %36 = vector.extract_strided_slice %35 {offsets = [0, 0], sizes = [256, 32], strides = [1, 1]} : vector<256x48xf32> to vector<256x32xf32>
    %37 = vector.extract_strided_slice %35 {offsets = [0, 32], sizes = [256, 16], strides = [1, 1]} : vector<256x48xf32> to vector<256x16xf32>
    %cst_72 = arith.constant 0.000000e+00 : f32
    %38 = vector.broadcast %cst_72 : f32 to vector<256x16xf32>
    %39 = arith.cmpf ogt, %37, %38 : vector<256x16xf32>
    %cst_73 = arith.constant 1.000000e-01 : f32
    %40 = vector.broadcast %cst_73 : f32 to vector<256x16xf32>
    %41 = arith.mulf %40, %37 : vector<256x16xf32>
    %42 = arith.select %39, %37, %41 : vector<256x16xi1>, vector<256x16xf32>
    %43 = vector.shape_cast %42 : vector<256x16xf32> to vector<1x16x16x16xf32>
    %44 = arith.truncf %43 : vector<1x16x16x16xf32> to vector<1x16x16x16xbf16>
    %c0_74 = arith.constant 0 : index
    %c1_75 = arith.constant 1 : index
    %c1_76 = arith.constant 1 : index
    %c0_77 = arith.constant 0 : index
    %45 = vector.load %arg9[%c0_74, %c1_75, %c1_76, %c0_77] : memref<1x18x18x16xbf16, #tpu.memory_space<vmem>>, vector<1x16x16x16xbf16>
    tpu.vector_store %arg9[%c0_74, %c1_75, %c1_76, %c0_77], %44 {strides = array<i32>} : memref<1x18x18x16xbf16, #tpu.memory_space<vmem>>, vector<1x16x16x16xbf16>,
    %c0_78 = arith.constant 0 : index
    %c0_79 = arith.constant 0 : index
    %c0_80 = arith.constant 0 : index
    %c0_81 = arith.constant 0 : index
    %46 = vector.load %arg9[%c0_78, %c0_79, %c0_80, %c0_81] : memref<1x18x18x16xbf16, #tpu.memory_space<vmem>>, vector<1x16x16x16xbf16>
    %47 = vector.shape_cast %46 : vector<1x16x16x16xbf16> to vector<256x16xbf16>
    %c0_82 = arith.constant 0 : index
    %c0_83 = arith.constant 0 : index
    %c1_84 = arith.constant 1 : index
    %c0_85 = arith.constant 0 : index
    %48 = vector.load %arg9[%c0_82, %c0_83, %c1_84, %c0_85] : memref<1x18x18x16xbf16, #tpu.memory_space<vmem>>, vector<1x16x16x16xbf16>
    %49 = vector.shape_cast %48 : vector<1x16x16x16xbf16> to vector<256x16xbf16>
    %c0_86 = arith.constant 0 : index
    %c0_87 = arith.constant 0 : index
    %c2_88 = arith.constant 2 : index
    %c0_89 = arith.constant 0 : index
    %50 = vector.load %arg9[%c0_86, %c0_87, %c2_88, %c0_89] : memref<1x18x18x16xbf16, #tpu.memory_space<vmem>>, vector<1x16x16x16xbf16>
    %51 = vector.shape_cast %50 : vector<1x16x16x16xbf16> to vector<256x16xbf16>
    %c0_90 = arith.constant 0 : index
    %c1_91 = arith.constant 1 : index
    %c0_92 = arith.constant 0 : index
    %c0_93 = arith.constant 0 : index
    %52 = vector.load %arg9[%c0_90, %c1_91, %c0_92, %c0_93] : memref<1x18x18x16xbf16, #tpu.memory_space<vmem>>, vector<1x16x16x16xbf16>
    %53 = vector.shape_cast %52 : vector<1x16x16x16xbf16> to vector<256x16xbf16>
    %c0_94 = arith.constant 0 : index
    %c1_95 = arith.constant 1 : index
    %c1_96 = arith.constant 1 : index
    %c0_97 = arith.constant 0 : index
    %54 = vector.load %arg9[%c0_94, %c1_95, %c1_96, %c0_97] : memref<1x18x18x16xbf16, #tpu.memory_space<vmem>>, vector<1x16x16x16xbf16>
    %55 = vector.shape_cast %54 : vector<1x16x16x16xbf16> to vector<256x16xbf16>
    %c0_98 = arith.constant 0 : index
    %c1_99 = arith.constant 1 : index
    %c2_100 = arith.constant 2 : index
    %c0_101 = arith.constant 0 : index
    %56 = vector.load %arg9[%c0_98, %c1_99, %c2_100, %c0_101] : memref<1x18x18x16xbf16, #tpu.memory_space<vmem>>, vector<1x16x16x16xbf16>
    %57 = vector.shape_cast %56 : vector<1x16x16x16xbf16> to vector<256x16xbf16>
    %c0_102 = arith.constant 0 : index
    %c2_103 = arith.constant 2 : index
    %c0_104 = arith.constant 0 : index
    %c0_105 = arith.constant 0 : index
    %58 = vector.load %arg9[%c0_102, %c2_103, %c0_104, %c0_105] : memref<1x18x18x16xbf16, #tpu.memory_space<vmem>>, vector<1x16x16x16xbf16>
    %59 = vector.shape_cast %58 : vector<1x16x16x16xbf16> to vector<256x16xbf16>
    %c0_106 = arith.constant 0 : index
    %c2_107 = arith.constant 2 : index
    %c1_108 = arith.constant 1 : index
    %c0_109 = arith.constant 0 : index
    %60 = vector.load %arg9[%c0_106, %c2_107, %c1_108, %c0_109] : memref<1x18x18x16xbf16, #tpu.memory_space<vmem>>, vector<1x16x16x16xbf16>
    %61 = vector.shape_cast %60 : vector<1x16x16x16xbf16> to vector<256x16xbf16>
    %c0_110 = arith.constant 0 : index
    %c2_111 = arith.constant 2 : index
    %c2_112 = arith.constant 2 : index
    %c0_113 = arith.constant 0 : index
    %62 = vector.load %arg9[%c0_110, %c2_111, %c2_112, %c0_113] : memref<1x18x18x16xbf16, #tpu.memory_space<vmem>>, vector<1x16x16x16xbf16>
    %63 = vector.shape_cast %62 : vector<1x16x16x16xbf16> to vector<256x16xbf16>
    %64 = tpu.concatenate %47, %49, %51, %53, %55, %57, %59, %61, %63 in 1 : vector<256x16xbf16>, vector<256x16xbf16>, vector<256x16xbf16>, vector<256x16xbf16>, vector<256x16xbf16>, vector<256x16xbf16>, vector<256x16xbf16>, vector<256x16xbf16>, vector<256x16xbf16> -> vector<256x144xbf16>
    %c0_114 = arith.constant 0 : index
    %c0_115 = arith.constant 0 : index
    %65 = vector.load %arg4[%c0_114, %c0_115] : memref<144x32xbf16, #tpu.memory_space<vmem>>, vector<144x32xbf16>
    %cst_116 = arith.constant dense<0.000000e+00> : vector<256x32xf32>
    %66 = tpu.matmul %64, %65, %cst_116 {dimension_numbers = #tpu.dot_dimension_numbers<[1], [0], [0], [1], [0, 0, 1, 1], [], []>} : vector<256x144xbf16>, vector<144x32xbf16>, vector<256x32xf32> -> vector<256x32xf32>
    %c0_117 = arith.constant 0 : index
    %c0_118 = arith.constant 0 : index
    %67 = vector.load %arg5[%c0_117, %c0_118] : memref<1x32xf32, #tpu.memory_space<vmem>>, vector<1x32xf32>
    %68 = vector.broadcast %67 : vector<1x32xf32> to vector<256x32xf32>
    %69 = arith.addf %66, %68 : vector<256x32xf32>
    %70 = vector.extract_strided_slice %69 {offsets = [0, 0], sizes = [256, 16], strides = [1, 1]} : vector<256x32xf32> to vector<256x16xf32>
    %71 = vector.extract_strided_slice %69 {offsets = [0, 16], sizes = [256, 16], strides = [1, 1]} : vector<256x32xf32> to vector<256x16xf32>
    %cst_119 = arith.constant 0.000000e+00 : f32
    %72 = vector.broadcast %cst_119 : f32 to vector<256x16xf32>
    %73 = arith.cmpf ogt, %71, %72 : vector<256x16xf32>
    %cst_120 = arith.constant 1.000000e-01 : f32
    %74 = vector.broadcast %cst_120 : f32 to vector<256x16xf32>
    %75 = arith.mulf %74, %71 : vector<256x16xf32>
    %76 = arith.select %73, %71, %75 : vector<256x16xi1>, vector<256x16xf32>
    %77 = vector.shape_cast %76 : vector<256x16xf32> to vector<1x16x16x16xf32>
    %78 = arith.truncf %77 : vector<1x16x16x16xf32> to vector<1x16x16x16xbf16>
    %c0_121 = arith.constant 0 : index
    %c1_122 = arith.constant 1 : index
    %c1_123 = arith.constant 1 : index
    %c0_124 = arith.constant 0 : index
    %79 = vector.load %arg10[%c0_121, %c1_122, %c1_123, %c0_124] : memref<1x18x18x16xbf16, #tpu.memory_space<vmem>>, vector<1x16x16x16xbf16>
    tpu.vector_store %arg10[%c0_121, %c1_122, %c1_123, %c0_124], %78 {strides = array<i32>} : memref<1x18x18x16xbf16, #tpu.memory_space<vmem>>, vector<1x16x16x16xbf16>,
    %c0_125 = arith.constant 0 : index
    %c0_126 = arith.constant 0 : index
    %c0_127 = arith.constant 0 : index
    %c0_128 = arith.constant 0 : index
    %80 = vector.load %arg10[%c0_125, %c0_126, %c0_127, %c0_128] : memref<1x18x18x16xbf16, #tpu.memory_space<vmem>>, vector<1x16x16x16xbf16>
    %81 = vector.shape_cast %80 : vector<1x16x16x16xbf16> to vector<256x16xbf16>
    %c0_129 = arith.constant 0 : index
    %c0_130 = arith.constant 0 : index
    %c1_131 = arith.constant 1 : index
    %c0_132 = arith.constant 0 : index
    %82 = vector.load %arg10[%c0_129, %c0_130, %c1_131, %c0_132] : memref<1x18x18x16xbf16, #tpu.memory_space<vmem>>, vector<1x16x16x16xbf16>
    %83 = vector.shape_cast %82 : vector<1x16x16x16xbf16> to vector<256x16xbf16>
    %c0_133 = arith.constant 0 : index
    %c0_134 = arith.constant 0 : index
    %c2_135 = arith.constant 2 : index
    %c0_136 = arith.constant 0 : index
    %84 = vector.load %arg10[%c0_133, %c0_134, %c2_135, %c0_136] : memref<1x18x18x16xbf16, #tpu.memory_space<vmem>>, vector<1x16x16x16xbf16>
    %85 = vector.shape_cast %84 : vector<1x16x16x16xbf16> to vector<256x16xbf16>
    %c0_137 = arith.constant 0 : index
    %c1_138 = arith.constant 1 : index
    %c0_139 = arith.constant 0 : index
    %c0_140 = arith.constant 0 : index
    %86 = vector.load %arg10[%c0_137, %c1_138, %c0_139, %c0_140] : memref<1x18x18x16xbf16, #tpu.memory_space<vmem>>, vector<1x16x16x16xbf16>
    %87 = vector.shape_cast %86 : vector<1x16x16x16xbf16> to vector<256x16xbf16>
    %c0_141 = arith.constant 0 : index
    %c1_142 = arith.constant 1 : index
    %c1_143 = arith.constant 1 : index
    %c0_144 = arith.constant 0 : index
    %88 = vector.load %arg10[%c0_141, %c1_142, %c1_143, %c0_144] : memref<1x18x18x16xbf16, #tpu.memory_space<vmem>>, vector<1x16x16x16xbf16>
    %89 = vector.shape_cast %88 : vector<1x16x16x16xbf16> to vector<256x16xbf16>
    %c0_145 = arith.constant 0 : index
    %c1_146 = arith.constant 1 : index
    %c2_147 = arith.constant 2 : index
    %c0_148 = arith.constant 0 : index
    %90 = vector.load %arg10[%c0_145, %c1_146, %c2_147, %c0_148] : memref<1x18x18x16xbf16, #tpu.memory_space<vmem>>, vector<1x16x16x16xbf16>
    %91 = vector.shape_cast %90 : vector<1x16x16x16xbf16> to vector<256x16xbf16>
    %c0_149 = arith.constant 0 : index
    %c2_150 = arith.constant 2 : index
    %c0_151 = arith.constant 0 : index
    %c0_152 = arith.constant 0 : index
    %92 = vector.load %arg10[%c0_149, %c2_150, %c0_151, %c0_152] : memref<1x18x18x16xbf16, #tpu.memory_space<vmem>>, vector<1x16x16x16xbf16>
    %93 = vector.shape_cast %92 : vector<1x16x16x16xbf16> to vector<256x16xbf16>
    %c0_153 = arith.constant 0 : index
    %c2_154 = arith.constant 2 : index
    %c1_155 = arith.constant 1 : index
    %c0_156 = arith.constant 0 : index
    %94 = vector.load %arg10[%c0_153, %c2_154, %c1_155, %c0_156] : memref<1x18x18x16xbf16, #tpu.memory_space<vmem>>, vector<1x16x16x16xbf16>
    %95 = vector.shape_cast %94 : vector<1x16x16x16xbf16> to vector<256x16xbf16>
    %c0_157 = arith.constant 0 : index
    %c2_158 = arith.constant 2 : index
    %c2_159 = arith.constant 2 : index
    %c0_160 = arith.constant 0 : index
    %96 = vector.load %arg10[%c0_157, %c2_158, %c2_159, %c0_160] : memref<1x18x18x16xbf16, #tpu.memory_space<vmem>>, vector<1x16x16x16xbf16>
    %97 = vector.shape_cast %96 : vector<1x16x16x16xbf16> to vector<256x16xbf16>
    %98 = tpu.concatenate %81, %83, %85, %87, %89, %91, %93, %95, %97 in 1 : vector<256x16xbf16>, vector<256x16xbf16>, vector<256x16xbf16>, vector<256x16xbf16>, vector<256x16xbf16>, vector<256x16xbf16>, vector<256x16xbf16>, vector<256x16xbf16>, vector<256x16xbf16> -> vector<256x144xbf16>
    %c0_161 = arith.constant 0 : index
    %c0_162 = arith.constant 0 : index
    %99 = vector.load %arg6[%c0_161, %c0_162] : memref<144x16xbf16, #tpu.memory_space<vmem>>, vector<144x16xbf16>
    %cst_163 = arith.constant dense<0.000000e+00> : vector<256x16xf32>
    %100 = tpu.matmul %98, %99, %cst_163 {dimension_numbers = #tpu.dot_dimension_numbers<[1], [0], [0], [1], [0, 0, 1, 1], [], []>} : vector<256x144xbf16>, vector<144x16xbf16>, vector<256x16xf32> -> vector<256x16xf32>
    %c0_164 = arith.constant 0 : index
    %c0_165 = arith.constant 0 : index
    %101 = vector.load %arg7[%c0_164, %c0_165] : memref<1x16xf32, #tpu.memory_space<vmem>>, vector<1x16xf32>
    %102 = vector.broadcast %101 : vector<1x16xf32> to vector<256x16xf32>
    %103 = arith.addf %100, %102 : vector<256x16xf32>
    %104 = tpu.concatenate %36, %70, %103 in 1 : vector<256x32xf32>, vector<256x16xf32>, vector<256x16xf32> -> vector<256x64xf32>
    %cst_166 = arith.constant 0.000000e+00 : f32
    %105 = vector.broadcast %cst_166 : f32 to vector<256x64xf32>
    %106 = arith.maximumf %104, %105 : vector<256x64xf32>
    %107 = vector.shape_cast %106 : vector<256x64xf32> to vector<1x16x16x64xf32>
    %c0_167 = arith.constant 0 : index
    %c0_168 = arith.constant 0 : index
    %c0_169 = arith.constant 0 : index
    %c0_170 = arith.constant 0 : index
    %108 = vector.load %arg8[%c0_167, %c0_168, %c0_169, %c0_170] : memref<1x16x16x64xf32, #tpu.memory_space<vmem>>, vector<1x16x16x64xf32>
    tpu.vector_store %arg8[%c0_167, %c0_168, %c0_169, %c0_170], %107 {strides = array<i32>} : memref<1x16x16x64xf32, #tpu.memory_space<vmem>>, vector<1x16x16x64xf32>,
    return
  }
  func.func @transform_0(%arg0: i32) -> (i32, i32, i32, i32) {
    %c0_i32 = arith.constant 0 : i32
    %c0_i32_0 = arith.constant 0 : i32
    %c0_i32_1 = arith.constant 0 : i32
    %c0_i32_2 = arith.constant 0 : i32
    return %arg0, %c0_i32, %c0_i32_0, %c0_i32_1 : i32, i32, i32, i32
  }
  func.func @transform_1(%arg0: i32) -> (i32, i32) {
    %c0_i32 = arith.constant 0 : i32
    %c0_i32_0 = arith.constant 0 : i32
    %c0_i32_1 = arith.constant 0 : i32
    return %c0_i32, %c0_i32_0 : i32, i32
  }
  func.func @transform_2(%arg0: i32) -> (i32, i32) {
    %c0_i32 = arith.constant 0 : i32
    %c0_i32_0 = arith.constant 0 : i32
    %c0_i32_1 = arith.constant 0 : i32
    return %c0_i32, %c0_i32_0 : i32, i32
  }
  func.func @transform_3(%arg0: i32) -> (i32, i32) {
    %c0_i32 = arith.constant 0 : i32
    %c0_i32_0 = arith.constant 0 : i32
    %c0_i32_1 = arith.constant 0 : i32
    return %c0_i32, %c0_i32_0 : i32, i32
  }
  func.func @transform_4(%arg0: i32) -> (i32, i32) {
    %c0_i32 = arith.constant 0 : i32
    %c0_i32_0 = arith.constant 0 : i32
    %c0_i32_1 = arith.constant 0 : i32
    return %c0_i32, %c0_i32_0 : i32, i32
  }
  func.func @transform_5(%arg0: i32) -> (i32, i32) {
    %c0_i32 = arith.constant 0 : i32
    %c0_i32_0 = arith.constant 0 : i32
    %c0_i32_1 = arith.constant 0 : i32
    return %c0_i32, %c0_i32_0 : i32, i32
  }
  func.func @transform_6(%arg0: i32) -> (i32, i32) {
    %c0_i32 = arith.constant 0 : i32
    %c0_i32_0 = arith.constant 0 : i32
    %c0_i32_1 = arith.constant 0 : i32
    return %c0_i32, %c0_i32_0 : i32, i32
  }
  func.func @transform_7(%arg0: i32) -> (i32, i32, i32, i32) {
    %c0_i32 = arith.constant 0 : i32
    %c0_i32_0 = arith.constant 0 : i32
    %c0_i32_1 = arith.constant 0 : i32
    %c0_i32_2 = arith.constant 0 : i32
    return %arg0, %c0_i32, %c0_i32_0, %c0_i32_1 : i32, i32, i32, i32
  }
}

</mosaic_0001>

<llo_original>
// kernel: tpu_custom_call.1
$region0: #{tpu_custom_call.1}
  #allocation0 [shape = 'u32[]', space=smem, size = 0x4, offset = 0x4, fixed_abs, tag = 'smem constant byte address 0x4 - core index']
  #allocation1 [shape = 'u32[144,128]{1,0:T(1,128)}', space=vmem, size = 0x12000, scoped, tag = 'internal scratch']
  #allocation2 [shape = 'bf16[1,18,18,16]{3,2,1,0:T(8,128)(2,1)}', space=vmem, size = 0x1b000, scoped, tag = 'scratch operand']
  #allocation3 [shape = 'bf16[1,18,18,16]{3,2,1,0:T(8,128)(2,1)}', space=vmem, size = 0x1b000, scoped, tag = 'scratch operand']
  %s0 = inlined_call_operand.vmem [shape: bf16[2,18,18,64], index: 0, kind: input, shape index: {}]
  %s1 = inlined_call_operand.vmem [shape: bf16[576,48], index: 1, kind: input, shape index: {}]
  %s2 = inlined_call_operand.vmem [shape: f32[1,48], index: 2, kind: input, shape index: {}]
  %s3 = inlined_call_operand.vmem [shape: bf16[144,32], index: 3, kind: input, shape index: {}]
  %s4 = inlined_call_operand.vmem [shape: f32[1,32], index: 4, kind: input, shape index: {}]
  %s5 = inlined_call_operand.vmem [shape: bf16[144,16], index: 5, kind: input, shape index: {}]
  %s6 = inlined_call_operand.vmem [shape: f32[1,16], index: 6, kind: input, shape index: {}]
  %s7 = inlined_call_operand.hbm [shape: f32[2,16,16,64], index: 7, kind: output, shape index: {}]
  %s8 = sld [smem:[#allocation0]]
  $region61: #{tpu_custom_call.1} parent=0
    _
  %s10 = ssub.s32 1, %s8
  %s11 = scalar_select 0, %s10, %s8
  $region1: #{tpu_custom_call.1} parent=0
    #allocation4 [shape = 'u8[262144]{0}', space=vmem, size = 0x40000, scoped, tag = 'output window, operand 0']
    #allocation5 [shape = 's32[2]{0}', space=sflag, size = 0x8, scoped, tag = 'scoped memory for tpu_custom_call.1']
    %12 = vsyncpa [#allocation5], 0
    %s13 = scalar_lea.sflag [#allocation5], 1
    %14 = vsyncpa %s13, 0
    loop: start=0, step=1, limit=4
    $region2: #{tpu_custom_call.1} parent=1 // loop_pre_header
      _
    $region3: #{tpu_custom_call.1} parent=1 // loop_header
      %s16 = sphi 0, %s20
      %p17 = scmp.ge.s32.totalorder %s16, 4
      %s26 = sphi 0, %s28
      %s29 = sphi 0, %s26
      %s30 = sphi 0, %s29
      %s46 = sphi 0, %s30
      %s50 = sphi 0, %s50
      %s52 = sphi 0, %s50
      %s53 = sphi 0, %s52
      %s67 = sphi 0, %s53
      %s71 = sphi 0, %s71
      %s73 = sphi 0, %s71
      %s74 = sphi 0, %s73
      %s88 = sphi 0, %s74
      %s92 = sphi 0, %s92
      %s94 = sphi 0, %s92
      %s95 = sphi 0, %s94
      %s109 = sphi 0, %s95
      %s113 = sphi 0, %s113
      %s115 = sphi 0, %s113
      %s116 = sphi 0, %s115
      %s130 = sphi 0, %s116
      %s134 = sphi 0, %s134
      %s136 = sphi 0, %s134
      %s137 = sphi 0, %s136
      %s151 = sphi 0, %s137
      %s155 = sphi 0, %s155
      %s157 = sphi 0, %s155
      %s158 = sphi 0, %s157
      %s172 = sphi 0, %s158
      %s178 = sphi 0, %s180
      %s181 = sphi 0, %s178
      %s182 = sphi 0, %s181
      %s198 = sphi 0, %s182
    $region4: #{tpu_custom_call.1} parent=1 // loop_header_branch
      %19 = sbr.rel (%p17) target = $region8
    $region5: #{tpu_custom_call.1} parent=1 // loop_body
      %s21 = ssub.s32 %s16, 1
      %s22 = ssub.s32 %s16, 2
      %s23 = sadd.s32 %s16, 1
      %s24 = ssub.s32 %s16, %s23
      %p25 = scmp.eq.s32.totalorder %s24, 0
      %s27 = sadd.s32 %s26, 1
      %s28 = scalar_select %p25, %s26, %s27
      %p31 = pneg %p25
      %p32 = scmp.eq.s32.totalorder %s16, 1
      %p33 = por %p31, %p32
      %p34 = scmp.ne.s32.totalorder %s26, %s29
      %p35 = scmp.eq.s32.totalorder %s16, 0
      %p36 = por %p34, %p35
      %p37 = scmp.ne.s32.totalorder %s26, %s29
      %p38 = scmp.eq.s32.totalorder %s21, 1
      %p39 = por %p37, %p38
      %p40 = scmp.ne.s32.totalorder %s29, %s30
      %p41 = scmp.eq.s32.totalorder %s21, 0
      %p42 = por %p40, %p41
      %p43 = scmp.ne.s32.totalorder %s29, %s30
      %p44 = scmp.eq.s32.totalorder %s22, 1
      %p45 = por %p43, %p44
      %p47 = scmp.ne.s32.totalorder %s30, %s46
      %p48 = scmp.eq.s32.totalorder %s22, 0
      %p49 = por %p47, %p48
      %s51 = sadd.s32 %s50, 1
      %p54 = scmp.eq.s32.totalorder %s16, 1
      %p55 = scmp.ne.s32.totalorder %s50, %s52
      %p56 = scmp.eq.s32.totalorder %s16, 0
      %p57 = por %p55, %p56
      %p58 = scmp.ne.s32.totalorder %s50, %s52
      %p59 = scmp.eq.s32.totalorder %s21, 1
      %p60 = por %p58, %p59
      %p61 = scmp.ne.s32.totalorder %s52, %s53
      %p62 = scmp.eq.s32.totalorder %s21, 0
      %p63 = por %p61, %p62
      %p64 = scmp.ne.s32.totalorder %s52, %s53
      %p65 = scmp.eq.s32.totalorder %s22, 1
      %p66 = por %p64, %p65
      %p68 = scmp.ne.s32.totalorder %s53, %s67
      %p69 = scmp.eq.s32.totalorder %s22, 0
      %p70 = por %p68, %p69
      %s72 = sadd.s32 %s71, 1
      %p75 = scmp.eq.s32.totalorder %s16, 1
      %p76 = scmp.ne.s32.totalorder %s71, %s73
      %p77 = scmp.eq.s32.totalorder %s16, 0
      %p78 = por %p76, %p77
      %p79 = scmp.ne.s32.totalorder %s71, %s73
      %p80 = scmp.eq.s32.totalorder %s21, 1
      %p81 = por %p79, %p80
      %p82 = scmp.ne.s32.totalorder %s73, %s74
      %p83 = scmp.eq.s32.totalorder %s21, 0
      %p84 = por %p82, %p83
      %p85 = scmp.ne.s32.totalorder %s73, %s74
      %p86 = scmp.eq.s32.totalorder %s22, 1
      %p87 = por %p85, %p86
      %p89 = scmp.ne.s32.totalorder %s74, %s88
      %p90 = scmp.eq.s32.totalorder %s22, 0
      %p91 = por %p89, %p90
      %s93 = sadd.s32 %s92, 1
      %p96 = scmp.eq.s32.totalorder %s16, 1
      %p97 = scmp.ne.s32.totalorder %s92, %s94
      %p98 = scmp.eq.s32.totalorder %s16, 0
      %p99 = por %p97, %p98
      %p100 = scmp.ne.s32.totalorder %s92, %s94
      %p101 = scmp.eq.s32.totalorder %s21, 1
      %p102 = por %p100, %p101
      %p103 = scmp.ne.s32.totalorder %s94, %s95
      %p104 = scmp.eq.s32.totalorder %s21, 0
      %p105 = por %p103, %p104
      %p106 = scmp.ne.s32.totalorder %s94, %s95
      %p107 = scmp.eq.s32.totalorder %s22, 1
      %p108 = por %p106, %p107
      %p110 = scmp.ne.s32.totalorder %s95, %s109
      %p111 = scmp.eq.s32.totalorder %s22, 0
      %p112 = por %p110, %p111
      %s114 = sadd.s32 %s113, 1
      %p117 = scmp.eq.s32.totalorder %s16, 1
      %p118 = scmp.ne.s32.totalorder %s113, %s115
      %p119 = scmp.eq.s32.totalorder %s16, 0
      %p120 = por %p118, %p119
      %p121 = scmp.ne.s32.totalorder %s113, %s115
      %p122 = scmp.eq.s32.totalorder %s21, 1
      %p123 = por %p121, %p122
      %p124 = scmp.ne.s32.totalorder %s115, %s116
      %p125 = scmp.eq.s32.totalorder %s21, 0
      %p126 = por %p124, %p125
      %p127 = scmp.ne.s32.totalorder %s115, %s116
      %p128 = scmp.eq.s32.totalorder %s22, 1
      %p129 = por %p127, %p128
      %p131 = scmp.ne.s32.totalorder %s116, %s130
      %p132 = scmp.eq.s32.totalorder %s22, 0
      %p133 = por %p131, %p132
      %s135 = sadd.s32 %s134, 1
      %p138 = scmp.eq.s32.totalorder %s16, 1
      %p139 = scmp.ne.s32.totalorder %s134, %s136
      %p140 = scmp.eq.s32.totalorder %s16, 0
      %p141 = por %p139, %p140
      %p142 = scmp.ne.s32.totalorder %s134, %s136
      %p143 = scmp.eq.s32.totalorder %s21, 1
      %p144 = por %p142, %p143
      %p145 = scmp.ne.s32.totalorder %s136, %s137
      %p146 = scmp.eq.s32.totalorder %s21, 0
      %p147 = por %p145, %p146
      %p148 = scmp.ne.s32.totalorder %s136, %s137
      %p149 = scmp.eq.s32.totalorder %s22, 1
      %p150 = por %p148, %p149
      %p152 = scmp.ne.s32.totalorder %s137, %s151
      %p153 = scmp.eq.s32.totalorder %s22, 0
      %p154 = por %p152, %p153
      %s156 = sadd.s32 %s155, 1
      %p159 = scmp.eq.s32.totalorder %s16, 1
      %p160 = scmp.ne.s32.totalorder %s155, %s157
      %p161 = scmp.eq.s32.totalorder %s16, 0
      %p162 = por %p160, %p161
      %p163 = scmp.ne.s32.totalorder %s155, %s157
      %p164 = scmp.eq.s32.totalorder %s21, 1
      %p165 = por %p163, %p164
      %p166 = scmp.ne.s32.totalorder %s157, %s158
      %p167 = scmp.eq.s32.totalorder %s21, 0
      %p168 = por %p166, %p167
      %p169 = scmp.ne.s32.totalorder %s157, %s158
      %p170 = scmp.eq.s32.totalorder %s22, 1
      %p171 = por %p169, %p170
      %p173 = scmp.ne.s32.totalorder %s158, %s172
      %p174 = scmp.eq.s32.totalorder %s22, 0
      %p175 = por %p173, %p174
      %s176 = ssub.s32 %s16, %s23
      %p177 = scmp.eq.s32.totalorder %s176, 0
      %s179 = sadd.s32 %s178, 1
      %s180 = scalar_select %p177, %s178, %s179
      %p183 = pneg %p177
      %p184 = scmp.eq.s32.totalorder %s16, 1
      %p185 = por %p183, %p184
      %p186 = scmp.ne.s32.totalorder %s178, %s181
      %p187 = scmp.eq.s32.totalorder %s16, 0
      %p188 = por %p186, %p187
      %p189 = scmp.ne.s32.totalorder %s178, %s181
      %p190 = scmp.eq.s32.totalorder %s21, 1
      %p191 = por %p189, %p190
      %p192 = scmp.ne.s32.totalorder %s181, %s182
      %p193 = scmp.eq.s32.totalorder %s21, 0
      %p194 = por %p192, %p193
      %p195 = scmp.ne.s32.totalorder %s181, %s182
      %p196 = scmp.eq.s32.totalorder %s22, 1
      %p197 = por %p195, %p196
      %p199 = scmp.ne.s32.totalorder %s182, %s198
      %p200 = scmp.eq.s32.totalorder %s22, 0
      %p201 = por %p199, %p200
      %p202 = scmp.le.s32.totalorder 1, %s16
      %p203 = scmp.lt.s32.totalorder %s16, 3
      %p204 = pnand %p202, %p203
      %p205 = pneg %p204
      // Predicated region
      $region9: #{tpu_custom_call.1} parent=5 // pred_check
        _
      $region10: #{tpu_custom_call.1} parent=5 // pred_check_branch
        %207 = sbr.rel (%p204) target = $region12
      $region11: #{tpu_custom_call.1} parent=5 // pred_region
        %s208 = ssub.s32 %s16, 1
        // Predicated region
        $region13: #{tpu_custom_call.1} parent=11 // pred_check
          %p209 = pneg %p63
        $region14: #{tpu_custom_call.1} parent=11 // pred_check_branch
          %211 = sbr.rel (%p209) target = $region16
        $region15: #{tpu_custom_call.1} parent=11 // pred_region
          _
        $region16: #{tpu_custom_call.1} parent=11 // pred_fallthru
          _
        // Predicated region
        $region17: #{tpu_custom_call.1} parent=11 // pred_check
          %p212 = pneg %p84
        $region18: #{tpu_custom_call.1} parent=11 // pred_check_branch
          %214 = sbr.rel (%p212) target = $region20
        $region19: #{tpu_custom_call.1} parent=11 // pred_region
          _
        $region20: #{tpu_custom_call.1} parent=11 // pred_fallthru
          _
        // Predicated region
        $region21: #{tpu_custom_call.1} parent=11 // pred_check
          %p215 = pneg %p105
        $region22: #{tpu_custom_call.1} parent=11 // pred_check_branch
          %217 = sbr.rel (%p215) target = $region24
        $region23: #{tpu_custom_call.1} parent=11 // pred_region
          _
        $region24: #{tpu_custom_call.1} parent=11 // pred_fallthru
          _
        // Predicated region
        $region25: #{tpu_custom_call.1} parent=11 // pred_check
          %p218 = pneg %p126
        $region26: #{tpu_custom_call.1} parent=11 // pred_check_branch
          %220 = sbr.rel (%p218) target = $region28
        $region27: #{tpu_custom_call.1} parent=11 // pred_region
          _
        $region28: #{tpu_custom_call.1} parent=11 // pred_fallthru
          _
        // Predicated region
        $region29: #{tpu_custom_call.1} parent=11 // pred_check
          %p221 = pneg %p147
        $region30: #{tpu_custom_call.1} parent=11 // pred_check_branch
          %223 = sbr.rel (%p221) target = $region32
        $region31: #{tpu_custom_call.1} parent=11 // pred_region
          _
        $region32: #{tpu_custom_call.1} parent=11 // pred_fallthru
          _
        // Predicated region
        $region33: #{tpu_custom_call.1} parent=11 // pred_check
          %p224 = pneg %p168
        $region34: #{tpu_custom_call.1} parent=11 // pred_check_branch
          %226 = sbr.rel (%p224) target = $region36
        $region35: #{tpu_custom_call.1} parent=11 // pred_region
          _
        $region36: #{tpu_custom_call.1} parent=11 // pred_fallthru
          _
      $region12: #{tpu_custom_call.1} parent=5 // pred_fallthru
        _
      %p227 = scmp.lt.s32.totalorder %s16, 2
      // Predicated region
      $region37: #{tpu_custom_call.1} parent=5 // pred_check
        %p228 = pneg %p227
      $region38: #{tpu_custom_call.1} parent=5 // pred_check_branch
        %230 = sbr.rel (%p228) target = $region40
      $region39: #{tpu_custom_call.1} parent=5 // pred_region
        // Predicated region
        $region41: #{tpu_custom_call.1} parent=39 // pred_check
          %p231 = pneg %p36
        $region42: #{tpu_custom_call.1} parent=39 // pred_check_branch
          %233 = sbr.rel (%p231) target = $region44
        $region43: #{tpu_custom_call.1} parent=39 // pred_region
          %p234 = scmp.lt.s32.totalorder %s16, 1
          %s235 = scalar_select %p234, %s16, 1
          %s236 = smul.addr %s235, 54
          %s237 = smul.addr %s236, 4
          %s238 = scalar_lea.vmem %s0, %s237
        $region44: #{tpu_custom_call.1} parent=39 // pred_fallthru
          _
      $region40: #{tpu_custom_call.1} parent=5 // pred_fallthru
        _
      %p239 = scmp.le.s32.totalorder 1, %s16
      %p240 = scmp.lt.s32.totalorder %s16, 3
      %p241 = pnand %p239, %p240
      %p242 = pneg %p241
      // Predicated region
      $region45: #{tpu_custom_call.1} parent=5 // pred_check
        _
      $region46: #{tpu_custom_call.1} parent=5 // pred_check_branch
        %244 = sbr.rel (%p241) target = $region48
      $region47: #{tpu_custom_call.1} parent=5 // pred_region
        %s245 = ssub.s32 %s16, 1
        %p246 = scmp.lt.s32.totalorder %s21, 1
        %s247 = scalar_select %p246, %s21, 1
        %s248 = smul.addr %s247, 54
        %s249 = smul.addr %s248, 4
        %s250 = scalar_lea.vmem %s0, %s249
        %p251 = pneg %p42
        %p252 = pneg %p39
        %p253 = pneg %p63
        %p254 = pneg %p60
        %p255 = pneg %p84
        %p256 = pneg %p81
        %p257 = pneg %p105
        %p258 = pneg %p102
        %p259 = pneg %p126
        %p260 = pneg %p123
        %p261 = pneg %p147
        %p262 = pneg %p144
        %p263 = pneg %p168
        %p264 = pneg %p165
        %p265 = pneg %p194
        %p266 = pneg %p191
        %s267 = sand.u32 %s181, 1
        %s268 = scalar_lea.sflag [#allocation5], %s267
        %s269 = sand.u32 %s181, 1
        %s270 = smul.addr %s269, 256
        %s271 = scalar_lea.vmem [#allocation4], %s270
        %p272 = scmp.lt.s32.totalorder %s21, 1
        %s273 = scalar_select %p272, %s21, 1
        %s274 = smul.addr %s273, 54
        %s275 = smul.addr %s274, 4
        %s276 = scalar_lea.vmem %s0, %s275
        %vm278 = vcmask 125952
        %279 = vst.msk [vmem:[#allocation2] sm:$0xf] %vm278, 0
        %280 = vst.msk [vmem:[#allocation2 + $0x4] sm:$0xf] %vm278, 0
        %vm281 = vcmask 122880
        %282 = vst.msk [vmem:[#allocation2 + $0x8] sm:$0x1] %vm281, 0
        %s283 = scalar_lea.vmem [#allocation2], 204
        %284 = vst.msk [vmem:[%s283] sm:$0xf] %vm278, 0
        %285 = vst.msk [vmem:[%s283 + $0x4] sm:$0xf] %vm278, 0
        %286 = vst.msk [vmem:[%s283 + $0x8] sm:$0x1] %vm281, 0
        %vm287 = vcmask 122880
        %vm288 = vsmask.f32 256
        %vm289 = vmand %vm287, %vm288
        %v290 = vld [vmem:[#allocation2] sm:$0x1]
        %v291 = vsel %vm289, 0, %v290
        %292 = vst [vmem:[#allocation2] sm:$0x1] %v291
        %v293 = vld [vmem:[#allocation2 + $0xc] sm:$0x1]
        %v294 = vsel %vm289, 0, %v293
        %295 = vst [vmem:[#allocation2 + $0xc] sm:$0x1] %v294
        %v296 = vld [vmem:[#allocation2 + $0x18] sm:$0x1]
        %v297 = vsel %vm289, 0, %v296
        %298 = vst [vmem:[#allocation2 + $0x18] sm:$0x1] %v297
        %v299 = vld [vmem:[#allocation2 + $0x24] sm:$0x1]
        %v300 = vsel %vm289, 0, %v299
        %301 = vst [vmem:[#allocation2 + $0x24] sm:$0x1] %v300
        %v302 = vld [vmem:[#allocation2 + $0x30] sm:$0x1]
        %v303 = vsel %vm289, 0, %v302
        %304 = vst [vmem:[#allocation2 + $0x30] sm:$0x1] %v303
        %v305 = vld [vmem:[#allocation2 + $0x3c] sm:$0x1]
        %v306 = vsel %vm289, 0, %v305
        %307 = vst [vmem:[#allocation2 + $0x3c] sm:$0x1] %v306
        %v308 = vld [vmem:[#allocation2 + $0x48] sm:$0x1]
        %v309 = vsel %vm289, 0, %v308
        %310 = vst [vmem:[#allocation2 + $0x48] sm:$0x1] %v309
        %v311 = vld [vmem:[#allocation2 + $0x54] sm:$0x1]
        %v312 = vsel %vm289, 0, %v311
        %313 = vst [vmem:[#allocation2 + $0x54] sm:$0x1] %v312
        %v314 = vld [vmem:[#allocation2 + $0x60] sm:$0x1]
        %v315 = vsel %vm289, 0, %v314
        %316 = vst [vmem:[#allocation2 + $0x60] sm:$0x1] %v315
        %v317 = vld [vmem:[#allocation2 + $0x6c] sm:$0x1]
        %v318 = vsel %vm289, 0, %v317
        %319 = vst [vmem:[#allocation2 + $0x6c] sm:$0x1] %v318
        %v320 = vld [vmem:[#allocation2 + $0x78] sm:$0x1]
        %v321 = vsel %vm289, 0, %v320
        %322 = vst [vmem:[#allocation2 + $0x78] sm:$0x1] %v321
        %v323 = vld [vmem:[#allocation2 + $0x84] sm:$0x1]
        %v324 = vsel %vm289, 0, %v323
        %325 = vst [vmem:[#allocation2 + $0x84] sm:$0x1] %v324
        %v326 = vld [vmem:[#allocation2 + $0x90] sm:$0x1]
        %v327 = vsel %vm289, 0, %v326
        %328 = vst [vmem:[#allocation2 + $0x90] sm:$0x1] %v327
        %v329 = vld [vmem:[#allocation2 + $0x9c] sm:$0x1]
        %v330 = vsel %vm289, 0, %v329
        %331 = vst [vmem:[#allocation2 + $0x9c] sm:$0x1] %v330
        %v332 = vld [vmem:[#allocation2 + $0xa8] sm:$0x1]
        %v333 = vsel %vm289, 0, %v332
        %334 = vst [vmem:[#allocation2 + $0xa8] sm:$0x1] %v333
        %v335 = vld [vmem:[#allocation2 + $0xb4] sm:$0x1]
        %v336 = vsel %vm289, 0, %v335
        %337 = vst [vmem:[#allocation2 + $0xb4] sm:$0x1] %v336
        %v338 = vld [vmem:[#allocation2 + $0xc0] sm:$0x1]
        %v339 = vsel %vm289, 0, %v338
        %340 = vst [vmem:[#allocation2 + $0xc0] sm:$0x1] %v339
        %v341 = vld [vmem:[#allocation2 + $0xcc] sm:$0x1]
        %v342 = vsel %vm289, 0, %v341
        %343 = vst [vmem:[#allocation2 + $0xcc] sm:$0x1] %v342
        %vm344 = vsmask.f32 7938
        %vm345 = vmand %vm287, %vm344
        %v346 = vld [vmem:[#allocation2 + $0x8] sm:$0x1]
        %v347 = vsel %vm345, 0, %v346
        %348 = vst [vmem:[#allocation2 + $0x8] sm:$0x1] %v347
        %v349 = vld [vmem:[#allocation2 + $0x14] sm:$0x1]
        %v350 = vsel %vm345, 0, %v349
        %351 = vst [vmem:[#allocation2 + $0x14] sm:$0x1] %v350
        %v352 = vld [vmem:[#allocation2 + $0x20] sm:$0x1]
        %v353 = vsel %vm345, 0, %v352
        %354 = vst [vmem:[#allocation2 + $0x20] sm:$0x1] %v353
        %v355 = vld [vmem:[#allocation2 + $0x2c] sm:$0x1]
        %v356 = vsel %vm345, 0, %v355
        %357 = vst [vmem:[#allocation2 + $0x2c] sm:$0x1] %v356
        %v358 = vld [vmem:[#allocation2 + $0x38] sm:$0x1]
        %v359 = vsel %vm345, 0, %v358
        %360 = vst [vmem:[#allocation2 + $0x38] sm:$0x1] %v359
        %v361 = vld [vmem:[#allocation2 + $0x44] sm:$0x1]
        %v362 = vsel %vm345, 0, %v361
        %363 = vst [vmem:[#allocation2 + $0x44] sm:$0x1] %v362
        %v364 = vld [vmem:[#allocation2 + $0x50] sm:$0x1]
        %v365 = vsel %vm345, 0, %v364
        %366 = vst [vmem:[#allocation2 + $0x50] sm:$0x1] %v365
        %v367 = vld [vmem:[#allocation2 + $0x5c] sm:$0x1]
        %v368 = vsel %vm345, 0, %v367
        %369 = vst [vmem:[#allocation2 + $0x5c] sm:$0x1] %v368
        %v370 = vld [vmem:[#allocation2 + $0x68] sm:$0x1]
        %v371 = vsel %vm345, 0, %v370
        %372 = vst [vmem:[#allocation2 + $0x68] sm:$0x1] %v371
        %v373 = vld [vmem:[#allocation2 + $0x74] sm:$0x1]
        %v374 = vsel %vm345, 0, %v373
        %375 = vst [vmem:[#allocation2 + $0x74] sm:$0x1] %v374
        %v376 = vld [vmem:[#allocation2 + $0x80] sm:$0x1]
        %v377 = vsel %vm345, 0, %v376
        %378 = vst [vmem:[#allocation2 + $0x80] sm:$0x1] %v377
        %v379 = vld [vmem:[#allocation2 + $0x8c] sm:$0x1]
        %v380 = vsel %vm345, 0, %v379
        %381 = vst [vmem:[#allocation2 + $0x8c] sm:$0x1] %v380
        %v382 = vld [vmem:[#allocation2 + $0x98] sm:$0x1]
        %v383 = vsel %vm345, 0, %v382
        %384 = vst [vmem:[#allocation2 + $0x98] sm:$0x1] %v383
        %v385 = vld [vmem:[#allocation2 + $0xa4] sm:$0x1]
        %v386 = vsel %vm345, 0, %v385
        %387 = vst [vmem:[#allocation2 + $0xa4] sm:$0x1] %v386
        %v388 = vld [vmem:[#allocation2 + $0xb0] sm:$0x1]
        %v389 = vsel %vm345, 0, %v388
        %390 = vst [vmem:[#allocation2 + $0xb0] sm:$0x1] %v389
        %v391 = vld [vmem:[#allocation2 + $0xbc] sm:$0x1]
        %v392 = vsel %vm345, 0, %v391
        %393 = vst [vmem:[#allocation2 + $0xbc] sm:$0x1] %v392
        %v394 = vld [vmem:[#allocation2 + $0xc8] sm:$0x1]
        %v395 = vsel %vm345, 0, %v394
        %396 = vst [vmem:[#allocation2 + $0xc8] sm:$0x1] %v395
        %v397 = vld [vmem:[#allocation2 + $0xd4] sm:$0x1]
        %v398 = vsel %vm345, 0, %v397
        %399 = vst [vmem:[#allocation2 + $0xd4] sm:$0x1] %v398
        %400 = vst.msk [vmem:[#allocation3] sm:$0xf] %vm278, 0
        %401 = vst.msk [vmem:[#allocation3 + $0x4] sm:$0xf] %vm278, 0
        %402 = vst.msk [vmem:[#allocation3 + $0x8] sm:$0x1] %vm281, 0
        %s403 = scalar_lea.vmem [#allocation3], 204
        %404 = vst.msk [vmem:[%s403] sm:$0xf] %vm278, 0
        %405 = vst.msk [vmem:[%s403 + $0x4] sm:$0xf] %vm278, 0
        %406 = vst.msk [vmem:[%s403 + $0x8] sm:$0x1] %vm281, 0
        %v407 = vld [vmem:[#allocation3] sm:$0x1]
        %v408 = vsel %vm289, 0, %v407
        %409 = vst [vmem:[#allocation3] sm:$0x1] %v408
        %v410 = vld [vmem:[#allocation3 + $0xc] sm:$0x1]
        %v411 = vsel %vm289, 0, %v410
        %412 = vst [vmem:[#allocation3 + $0xc] sm:$0x1] %v411
        %v413 = vld [vmem:[#allocation3 + $0x18] sm:$0x1]
        %v414 = vsel %vm289, 0, %v413
        %415 = vst [vmem:[#allocation3 + $0x18] sm:$0x1] %v414
        %v416 = vld [vmem:[#allocation3 + $0x24] sm:$0x1]
        %v417 = vsel %vm289, 0, %v416
        %418 = vst [vmem:[#allocation3 + $0x24] sm:$0x1] %v417
        %v419 = vld [vmem:[#allocation3 + $0x30] sm:$0x1]
        %v420 = vsel %vm289, 0, %v419
        %421 = vst [vmem:[#allocation3 + $0x30] sm:$0x1] %v420
        %v422 = vld [vmem:[#allocation3 + $0x3c] sm:$0x1]
        %v423 = vsel %vm289, 0, %v422
        %424 = vst [vmem:[#allocation3 + $0x3c] sm:$0x1] %v423
        %v425 = vld [vmem:[#allocation3 + $0x48] sm:$0x1]
        %v426 = vsel %vm289, 0, %v425
        %427 = vst [vmem:[#allocation3 + $0x48] sm:$0x1] %v426
        %v428 = vld [vmem:[#allocation3 + $0x54] sm:$0x1]
        %v429 = vsel %vm289, 0, %v428
        %430 = vst [vmem:[#allocation3 + $0x54] sm:$0x1] %v429
        %v431 = vld [vmem:[#allocation3 + $0x60] sm:$0x1]
        %v432 = vsel %vm289, 0, %v431
        %433 = vst [vmem:[#allocation3 + $0x60] sm:$0x1] %v432
        %v434 = vld [vmem:[#allocation3 + $0x6c] sm:$0x1]
        %v435 = vsel %vm289, 0, %v434
        %436 = vst [vmem:[#allocation3 + $0x6c] sm:$0x1] %v435
        %v437 = vld [vmem:[#allocation3 + $0x78] sm:$0x1]
        %v438 = vsel %vm289, 0, %v437
        %439 = vst [vmem:[#allocation3 + $0x78] sm:$0x1] %v438
        %v440 = vld [vmem:[#allocation3 + $0x84] sm:$0x1]
        %v441 = vsel %vm289, 0, %v440
        %442 = vst [vmem:[#allocation3 + $0x84] sm:$0x1] %v441
        %v443 = vld [vmem:[#allocation3 + $0x90] sm:$0x1]
        %v444 = vsel %vm289, 0, %v443
        %445 = vst [vmem:[#allocation3 + $0x90] sm:$0x1] %v444
        %v446 = vld [vmem:[#allocation3 + $0x9c] sm:$0x1]
        %v447 = vsel %vm289, 0, %v446
        %448 = vst [vmem:[#allocation3 + $0x9c] sm:$0x1] %v447
        %v449 = vld [vmem:[#allocation3 + $0xa8] sm:$0x1]
        %v450 = vsel %vm289, 0, %v449
        %451 = vst [vmem:[#allocation3 + $0xa8] sm:$0x1] %v450
        %v452 = vld [vmem:[#allocation3 + $0xb4] sm:$0x1]
        %v453 = vsel %vm289, 0, %v452
        %454 = vst [vmem:[#allocation3 + $0xb4] sm:$0x1] %v453
        %v455 = vld [vmem:[#allocation3 + $0xc0] sm:$0x1]
        %v456 = vsel %vm289, 0, %v455
        %457 = vst [vmem:[#allocation3 + $0xc0] sm:$0x1] %v456
        %v458 = vld [vmem:[#allocation3 + $0xcc] sm:$0x1]
        %v459 = vsel %vm289, 0, %v458
        %460 = vst [vmem:[#allocation3 + $0xcc] sm:$0x1] %v459
        %v461 = vld [vmem:[#allocation3 + $0x8] sm:$0x1]
        %v462 = vsel %vm345, 0, %v461
        %463 = vst [vmem:[#allocation3 + $0x8] sm:$0x1] %v462
        %v464 = vld [vmem:[#allocation3 + $0x14] sm:$0x1]
        %v465 = vsel %vm345, 0, %v464
        %466 = vst [vmem:[#allocation3 + $0x14] sm:$0x1] %v465
        %v467 = vld [vmem:[#allocation3 + $0x20] sm:$0x1]
        %v468 = vsel %vm345, 0, %v467
        %469 = vst [vmem:[#allocation3 + $0x20] sm:$0x1] %v468
        %v470 = vld [vmem:[#allocation3 + $0x2c] sm:$0x1]
        %v471 = vsel %vm345, 0, %v470
        %472 = vst [vmem:[#allocation3 + $0x2c] sm:$0x1] %v471
        %v473 = vld [vmem:[#allocation3 + $0x38] sm:$0x1]
        %v474 = vsel %vm345, 0, %v473
        %475 = vst [vmem:[#allocation3 + $0x38] sm:$0x1] %v474
        %v476 = vld [vmem:[#allocation3 + $0x44] sm:$0x1]
        %v477 = vsel %vm345, 0, %v476
        %478 = vst [vmem:[#allocation3 + $0x44] sm:$0x1] %v477
        %v479 = vld [vmem:[#allocation3 + $0x50] sm:$0x1]
        %v480 = vsel %vm345, 0, %v479
        %481 = vst [vmem:[#allocation3 + $0x50] sm:$0x1] %v480
        %v482 = vld [vmem:[#allocation3 + $0x5c] sm:$0x1]
        %v483 = vsel %vm345, 0, %v482
        %484 = vst [vmem:[#allocation3 + $0x5c] sm:$0x1] %v483
        %v485 = vld [vmem:[#allocation3 + $0x68] sm:$0x1]
        %v486 = vsel %vm345, 0, %v485
        %487 = vst [vmem:[#allocation3 + $0x68] sm:$0x1] %v486
        %v488 = vld [vmem:[#allocation3 + $0x74] sm:$0x1]
        %v489 = vsel %vm345, 0, %v488
        %490 = vst [vmem:[#allocation3 + $0x74] sm:$0x1] %v489
        %v491 = vld [vmem:[#allocation3 + $0x80] sm:$0x1]
        %v492 = vsel %vm345, 0, %v491
        %493 = vst [vmem:[#allocation3 + $0x80] sm:$0x1] %v492
        %v494 = vld [vmem:[#allocation3 + $0x8c] sm:$0x1]
        %v495 = vsel %vm345, 0, %v494
        %496 = vst [vmem:[#allocation3 + $0x8c] sm:$0x1] %v495
        %v497 = vld [vmem:[#allocation3 + $0x98] sm:$0x1]
        %v498 = vsel %vm345, 0, %v497
        %499 = vst [vmem:[#allocation3 + $0x98] sm:$0x1] %v498
        %v500 = vld [vmem:[#allocation3 + $0xa4] sm:$0x1]
        %v501 = vsel %vm345, 0, %v500
        %502 = vst [vmem:[#allocation3 + $0xa4] sm:$0x1] %v501
        %v503 = vld [vmem:[#allocation3 + $0xb0] sm:$0x1]
        %v504 = vsel %vm345, 0, %v503
        %505 = vst [vmem:[#allocation3 + $0xb0] sm:$0x1] %v504
        %v506 = vld [vmem:[#allocation3 + $0xbc] sm:$0x1]
        %v507 = vsel %vm345, 0, %v506
        %508 = vst [vmem:[#allocation3 + $0xbc] sm:$0x1] %v507
        %v509 = vld [vmem:[#allocation3 + $0xc8] sm:$0x1]
        %v510 = vsel %vm345, 0, %v509
        %511 = vst [vmem:[#allocation3 + $0xc8] sm:$0x1] %v510
        %v512 = vld [vmem:[#allocation3 + $0xd4] sm:$0x1]
        %v513 = vsel %vm345, 0, %v512
        %514 = vst [vmem:[#allocation3 + $0xd4] sm:$0x1] %v513
        %v515 = vld [vmem:[%s276] sm:$0xf]
        %v516 = vld [vmem:[%s276 + $0x4] sm:$0xf]
        %v517 = vld [vmem:[%s276 + $0xc] sm:$0xf]
        %v518 = vld [vmem:[%s276 + $0x10] sm:$0xf]
        %v519 = vld [vmem:[%s276 + $0x18] sm:$0xf]
        %v520 = vld [vmem:[%s276 + $0x1c] sm:$0xf]
        %v521 = vld [vmem:[%s276 + $0x24] sm:$0xf]
        %v522 = vld [vmem:[%s276 + $0x28] sm:$0xf]
        %v523 = vld [vmem:[%s276 + $0x30] sm:$0xf]
        %v524 = vld [vmem:[%s276 + $0x34] sm:$0xf]
        %v525 = vld [vmem:[%s276 + $0x3c] sm:$0xf]
        %v526 = vld [vmem:[%s276 + $0x40] sm:$0xf]
        %v527 = vld [vmem:[%s276 + $0x48] sm:$0xf]
        %v528 = vld [vmem:[%s276 + $0x4c] sm:$0xf]
        %v529 = vld [vmem:[%s276 + $0x54] sm:$0xf]
        %v530 = vld [vmem:[%s276 + $0x58] sm:$0xf]
        %v531 = vld [vmem:[%s276 + $0x60] sm:$0xf]
        %v532 = vld [vmem:[%s276 + $0x64] sm:$0xf]
        %v533 = vld [vmem:[%s276 + $0x6c] sm:$0xf]
        %v534 = vld [vmem:[%s276 + $0x70] sm:$0xf]
        %v535 = vld [vmem:[%s276 + $0x78] sm:$0xf]
        %v536 = vld [vmem:[%s276 + $0x7c] sm:$0xf]
        %v537 = vld [vmem:[%s276 + $0x84] sm:$0xf]
        %v538 = vld [vmem:[%s276 + $0x88] sm:$0xf]
        %v539 = vld [vmem:[%s276 + $0x90] sm:$0xf]
        %v540 = vld [vmem:[%s276 + $0x94] sm:$0xf]
        %v541 = vld [vmem:[%s276 + $0x9c] sm:$0xf]
        %v542 = vld [vmem:[%s276 + $0xa0] sm:$0xf]
        %v543 = vld [vmem:[%s276 + $0xa8] sm:$0xf]
        %v544 = vld [vmem:[%s276 + $0xac] sm:$0xf]
        %v545 = vld [vmem:[%s276 + $0xb4] sm:$0xf]
        %v546 = vld [vmem:[%s276 + $0xb8] sm:$0xf]
        %v547 = vld [vmem:[%s276 + $0x8] sm:$0x1]
        %v548 = vld [vmem:[%s276 + $0x14] sm:$0x1]
        %v549 = vld [vmem:[%s276 + $0x20] sm:$0x1]
        %v550 = vld [vmem:[%s276 + $0x2c] sm:$0x1]
        %v551 = vld [vmem:[%s276 + $0x38] sm:$0x1]
        %v552 = vld [vmem:[%s276 + $0x44] sm:$0x1]
        %v553 = vld [vmem:[%s276 + $0x50] sm:$0x1]
        %v554 = vld [vmem:[%s276 + $0x5c] sm:$0x1]
        %v555 = vld [vmem:[%s276 + $0x68] sm:$0x1]
        %v556 = vld [vmem:[%s276 + $0x74] sm:$0x1]
        %v557 = vld [vmem:[%s276 + $0x80] sm:$0x1]
        %v558 = vld [vmem:[%s276 + $0x8c] sm:$0x1]
        %v559 = vld [vmem:[%s276 + $0x98] sm:$0x1]
        %v560 = vld [vmem:[%s276 + $0xa4] sm:$0x1]
        %v561 = vld [vmem:[%s276 + $0xb0] sm:$0x1]
        %v562 = vld [vmem:[%s276 + $0xbc] sm:$0x1]
        %vm563 = vsmask.f32 3328
        %vm564 = vsmask.f32 7440
        %vm565 = vmor %vm563, %vm564
        %v567 = vshrl.u32 %v515, 16
        %v569 = vrot.slane %v567, 4
        %v570 = vshll.u32 %v515, 16
        %v572 = vrot.slane %v570, 5
        %v573 = vor.u32 %v569, %v572
        %v574 = vrot.slane %v573, 4
        %v576 = vshll.u32 %v516, 16
        %v578 = vrot.slane %v576, 5
        %v579 = vsel %vm565, %v574, %v578
        %v580 = vshrl.u32 %v516, 16
        %v582 = vrot.slane %v580, 4
        %v583 = vor.u32 %v582, %v578
        %v584 = vrot.slane %v583, 4
        %v586 = vshll.u32 %v547, 16
        %v588 = vrot.slane %v586, 5
        %v589 = vsel %vm565, %v584, %v588
        %v591 = vshrl.u32 %v517, 16
        %v593 = vrot.slane %v591, 4
        %v594 = vshll.u32 %v517, 16
        %v596 = vrot.slane %v594, 5
        %v597 = vor.u32 %v593, %v596
        %v598 = vrot.slane %v597, 4
        %v600 = vshll.u32 %v518, 16
        %v602 = vrot.slane %v600, 5
        %v603 = vsel %vm565, %v598, %v602
        %v604 = vshrl.u32 %v518, 16
        %v606 = vrot.slane %v604, 4
        %v607 = vor.u32 %v606, %v602
        %v608 = vrot.slane %v607, 4
        %v610 = vshll.u32 %v548, 16
        %v612 = vrot.slane %v610, 5
        %v613 = vsel %vm565, %v608, %v612
        %v615 = vshrl.u32 %v519, 16
        %v617 = vrot.slane %v615, 4
        %v618 = vshll.u32 %v519, 16
        %v620 = vrot.slane %v618, 5
        %v621 = vor.u32 %v617, %v620
        %v622 = vrot.slane %v621, 4
        %v624 = vshll.u32 %v520, 16
        %v626 = vrot.slane %v624, 5
        %v627 = vsel %vm565, %v622, %v626
        %v628 = vshrl.u32 %v520, 16
        %v630 = vrot.slane %v628, 4
        %v631 = vor.u32 %v630, %v626
        %v632 = vrot.slane %v631, 4
        %v634 = vshll.u32 %v549, 16
        %v636 = vrot.slane %v634, 5
        %v637 = vsel %vm565, %v632, %v636
        %v639 = vshrl.u32 %v521, 16
        %v641 = vrot.slane %v639, 4
        %v642 = vshll.u32 %v521, 16
        %v644 = vrot.slane %v642, 5
        %v645 = vor.u32 %v641, %v644
        %v646 = vrot.slane %v645, 4
        %v648 = vshll.u32 %v522, 16
        %v650 = vrot.slane %v648, 5
        %v651 = vsel %vm565, %v646, %v650
        %v652 = vshrl.u32 %v522, 16
        %v654 = vrot.slane %v652, 4
        %v655 = vor.u32 %v654, %v650
        %v656 = vrot.slane %v655, 4
        %v658 = vshll.u32 %v550, 16
        %v660 = vrot.slane %v658, 5
        %v661 = vsel %vm565, %v656, %v660
        %v663 = vshrl.u32 %v523, 16
        %v665 = vrot.slane %v663, 4
        %v666 = vshll.u32 %v523, 16
        %v668 = vrot.slane %v666, 5
        %v669 = vor.u32 %v665, %v668
        %v670 = vrot.slane %v669, 4
        %v672 = vshll.u32 %v524, 16
        %v674 = vrot.slane %v672, 5
        %v675 = vsel %vm565, %v670, %v674
        %v676 = vshrl.u32 %v524, 16
        %v678 = vrot.slane %v676, 4
        %v679 = vor.u32 %v678, %v674
        %v680 = vrot.slane %v679, 4
        %v682 = vshll.u32 %v551, 16
        %v684 = vrot.slane %v682, 5
        %v685 = vsel %vm565, %v680, %v684
        %v687 = vshrl.u32 %v525, 16
        %v689 = vrot.slane %v687, 4
        %v690 = vshll.u32 %v525, 16
        %v692 = vrot.slane %v690, 5
        %v693 = vor.u32 %v689, %v692
        %v694 = vrot.slane %v693, 4
        %v696 = vshll.u32 %v526, 16
        %v698 = vrot.slane %v696, 5
        %v699 = vsel %vm565, %v694, %v698
        %v700 = vshrl.u32 %v526, 16
        %v702 = vrot.slane %v700, 4
        %v703 = vor.u32 %v702, %v698
        %v704 = vrot.slane %v703, 4
        %v706 = vshll.u32 %v552, 16
        %v708 = vrot.slane %v706, 5
        %v709 = vsel %vm565, %v704, %v708
        %v711 = vshrl.u32 %v527, 16
        %v713 = vrot.slane %v711, 4
        %v714 = vshll.u32 %v527, 16
        %v716 = vrot.slane %v714, 5
        %v717 = vor.u32 %v713, %v716
        %v718 = vrot.slane %v717, 4
        %v720 = vshll.u32 %v528, 16
        %v722 = vrot.slane %v720, 5
        %v723 = vsel %vm565, %v718, %v722
        %v724 = vshrl.u32 %v528, 16
        %v726 = vrot.slane %v724, 4
        %v727 = vor.u32 %v726, %v722
        %v728 = vrot.slane %v727, 4
        %v730 = vshll.u32 %v553, 16
        %v732 = vrot.slane %v730, 5
        %v733 = vsel %vm565, %v728, %v732
        %v735 = vshrl.u32 %v529, 16
        %v737 = vrot.slane %v735, 4
        %v738 = vshll.u32 %v529, 16
        %v740 = vrot.slane %v738, 5
        %v741 = vor.u32 %v737, %v740
        %v742 = vrot.slane %v741, 4
        %v744 = vshll.u32 %v530, 16
        %v746 = vrot.slane %v744, 5
        %v747 = vsel %vm565, %v742, %v746
        %v748 = vshrl.u32 %v530, 16
        %v750 = vrot.slane %v748, 4
        %v751 = vor.u32 %v750, %v746
        %v752 = vrot.slane %v751, 4
        %v754 = vshll.u32 %v554, 16
        %v756 = vrot.slane %v754, 5
        %v757 = vsel %vm565, %v752, %v756
        %v759 = vshrl.u32 %v531, 16
        %v761 = vrot.slane %v759, 4
        %v762 = vshll.u32 %v531, 16
        %v764 = vrot.slane %v762, 5
        %v765 = vor.u32 %v761, %v764
        %v766 = vrot.slane %v765, 4
        %v768 = vshll.u32 %v532, 16
        %v770 = vrot.slane %v768, 5
        %v771 = vsel %vm565, %v766, %v770
        %v772 = vshrl.u32 %v532, 16
        %v774 = vrot.slane %v772, 4
        %v775 = vor.u32 %v774, %v770
        %v776 = vrot.slane %v775, 4
        %v778 = vshll.u32 %v555, 16
        %v780 = vrot.slane %v778, 5
        %v781 = vsel %vm565, %v776, %v780
        %v783 = vshrl.u32 %v533, 16
        %v785 = vrot.slane %v783, 4
        %v786 = vshll.u32 %v533, 16
        %v788 = vrot.slane %v786, 5
        %v789 = vor.u32 %v785, %v788
        %v790 = vrot.slane %v789, 4
        %v792 = vshll.u32 %v534, 16
        %v794 = vrot.slane %v792, 5
        %v795 = vsel %vm565, %v790, %v794
        %v796 = vshrl.u32 %v534, 16
        %v798 = vrot.slane %v796, 4
        %v799 = vor.u32 %v798, %v794
        %v800 = vrot.slane %v799, 4
        %v802 = vshll.u32 %v556, 16
        %v804 = vrot.slane %v802, 5
        %v805 = vsel %vm565, %v800, %v804
        %v807 = vshrl.u32 %v535, 16
        %v809 = vrot.slane %v807, 4
        %v810 = vshll.u32 %v535, 16
        %v812 = vrot.slane %v810, 5
        %v813 = vor.u32 %v809, %v812
        %v814 = vrot.slane %v813, 4
        %v816 = vshll.u32 %v536, 16
        %v818 = vrot.slane %v816, 5
        %v819 = vsel %vm565, %v814, %v818
        %v820 = vshrl.u32 %v536, 16
        %v822 = vrot.slane %v820, 4
        %v823 = vor.u32 %v822, %v818
        %v824 = vrot.slane %v823, 4
        %v826 = vshll.u32 %v557, 16
        %v828 = vrot.slane %v826, 5
        %v829 = vsel %vm565, %v824, %v828
        %v831 = vshrl.u32 %v537, 16
        %v833 = vrot.slane %v831, 4
        %v834 = vshll.u32 %v537, 16
        %v836 = vrot.slane %v834, 5
        %v837 = vor.u32 %v833, %v836
        %v838 = vrot.slane %v837, 4
        %v840 = vshll.u32 %v538, 16
        %v842 = vrot.slane %v840, 5
        %v843 = vsel %vm565, %v838, %v842
        %v844 = vshrl.u32 %v538, 16
        %v846 = vrot.slane %v844, 4
        %v847 = vor.u32 %v846, %v842
        %v848 = vrot.slane %v847, 4
        %v850 = vshll.u32 %v558, 16
        %v852 = vrot.slane %v850, 5
        %v853 = vsel %vm565, %v848, %v852
        %v855 = vshrl.u32 %v539, 16
        %v857 = vrot.slane %v855, 4
        %v858 = vshll.u32 %v539, 16
        %v860 = vrot.slane %v858, 5
        %v861 = vor.u32 %v857, %v860
        %v862 = vrot.slane %v861, 4
        %v864 = vshll.u32 %v540, 16
        %v866 = vrot.slane %v864, 5
        %v867 = vsel %vm565, %v862, %v866
        %v868 = vshrl.u32 %v540, 16
        %v870 = vrot.slane %v868, 4
        %v871 = vor.u32 %v870, %v866
        %v872 = vrot.slane %v871, 4
        %v874 = vshll.u32 %v559, 16
        %v876 = vrot.slane %v874, 5
        %v877 = vsel %vm565, %v872, %v876
        %v879 = vshrl.u32 %v541, 16
        %v881 = vrot.slane %v879, 4
        %v882 = vshll.u32 %v541, 16
        %v884 = vrot.slane %v882, 5
        %v885 = vor.u32 %v881, %v884
        %v886 = vrot.slane %v885, 4
        %v888 = vshll.u32 %v542, 16
        %v890 = vrot.slane %v888, 5
        %v891 = vsel %vm565, %v886, %v890
        %v892 = vshrl.u32 %v542, 16
        %v894 = vrot.slane %v892, 4
        %v895 = vor.u32 %v894, %v890
        %v896 = vrot.slane %v895, 4
        %v898 = vshll.u32 %v560, 16
        %v900 = vrot.slane %v898, 5
        %v901 = vsel %vm565, %v896, %v900
        %v903 = vshrl.u32 %v543, 16
        %v905 = vrot.slane %v903, 4
        %v906 = vshll.u32 %v543, 16
        %v908 = vrot.slane %v906, 5
        %v909 = vor.u32 %v905, %v908
        %v910 = vrot.slane %v909, 4
        %v912 = vshll.u32 %v544, 16
        %v914 = vrot.slane %v912, 5
        %v915 = vsel %vm565, %v910, %v914
        %v916 = vshrl.u32 %v544, 16
        %v918 = vrot.slane %v916, 4
        %v919 = vor.u32 %v918, %v914
        %v920 = vrot.slane %v919, 4
        %v922 = vshll.u32 %v561, 16
        %v924 = vrot.slane %v922, 5
        %v925 = vsel %vm565, %v920, %v924
        %v927 = vshrl.u32 %v545, 16
        %v929 = vrot.slane %v927, 4
        %v930 = vshll.u32 %v545, 16
        %v932 = vrot.slane %v930, 5
        %v933 = vor.u32 %v929, %v932
        %v934 = vrot.slane %v933, 4
        %v936 = vshll.u32 %v546, 16
        %v938 = vrot.slane %v936, 5
        %v939 = vsel %vm565, %v934, %v938
        %v940 = vshrl.u32 %v546, 16
        %v942 = vrot.slane %v940, 4
        %v943 = vor.u32 %v942, %v938
        %v944 = vrot.slane %v943, 4
        %v946 = vshll.u32 %v562, 16
        %v948 = vrot.slane %v946, 5
        %v949 = vsel %vm565, %v944, %v948
        %v950 = vld [vmem:[%s276] sm:$0xe]
        %v951 = vld [vmem:[%s276 + $0xc] sm:$0xe]
        %v952 = vld [vmem:[%s276 + $0x18] sm:$0xe]
        %v953 = vld [vmem:[%s276 + $0x24] sm:$0xe]
        %v954 = vld [vmem:[%s276 + $0x30] sm:$0xe]
        %v955 = vld [vmem:[%s276 + $0x3c] sm:$0xe]
        %v956 = vld [vmem:[%s276 + $0x48] sm:$0xe]
        %v957 = vld [vmem:[%s276 + $0x54] sm:$0xe]
        %v958 = vld [vmem:[%s276 + $0x60] sm:$0xe]
        %v959 = vld [vmem:[%s276 + $0x6c] sm:$0xe]
        %v960 = vld [vmem:[%s276 + $0x78] sm:$0xe]
        %v961 = vld [vmem:[%s276 + $0x84] sm:$0xe]
        %v962 = vld [vmem:[%s276 + $0x90] sm:$0xe]
        %v963 = vld [vmem:[%s276 + $0x9c] sm:$0xe]
        %v964 = vld [vmem:[%s276 + $0xa8] sm:$0xe]
        %v965 = vld [vmem:[%s276 + $0xb4] sm:$0xe]
        %vm1014 = vcmask 1042432
        %vm1015 = vcmask 1046532
        %vm1016 = vmor %vm1014, %vm1015
        %v1017 = vrot.slane %v950, 5
        %v1018 = vrot.slane %v1017, 4
        %v1019 = vrot.slane %v516, 5
        %v1020 = vsel %vm1016, %v1018, %v1019
        %v1021 = vrot.slane %v1019, 4
        %v1022 = vrot.slane %v547, 5
        %v1023 = vsel %vm1016, %v1021, %v1022
        %v1024 = vrot.slane %v951, 5
        %v1025 = vrot.slane %v1024, 4
        %v1026 = vrot.slane %v518, 5
        %v1027 = vsel %vm1016, %v1025, %v1026
        %v1028 = vrot.slane %v1026, 4
        %v1029 = vrot.slane %v548, 5
        %v1030 = vsel %vm1016, %v1028, %v1029
        %v1031 = vrot.slane %v952, 5
        %v1032 = vrot.slane %v1031, 4
        %v1033 = vrot.slane %v520, 5
        %v1034 = vsel %vm1016, %v1032, %v1033
        %v1035 = vrot.slane %v1033, 4
        %v1036 = vrot.slane %v549, 5
        %v1037 = vsel %vm1016, %v1035, %v1036
        %v1038 = vrot.slane %v953, 5
        %v1039 = vrot.slane %v1038, 4
        %v1040 = vrot.slane %v522, 5
        %v1041 = vsel %vm1016, %v1039, %v1040
        %v1042 = vrot.slane %v1040, 4
        %v1043 = vrot.slane %v550, 5
        %v1044 = vsel %vm1016, %v1042, %v1043
        %v1045 = vrot.slane %v954, 5
        %v1046 = vrot.slane %v1045, 4
        %v1047 = vrot.slane %v524, 5
        %v1048 = vsel %vm1016, %v1046, %v1047
        %v1049 = vrot.slane %v1047, 4
        %v1050 = vrot.slane %v551, 5
        %v1051 = vsel %vm1016, %v1049, %v1050
        %v1052 = vrot.slane %v955, 5
        %v1053 = vrot.slane %v1052, 4
        %v1054 = vrot.slane %v526, 5
        %v1055 = vsel %vm1016, %v1053, %v1054
        %v1056 = vrot.slane %v1054, 4
        %v1057 = vrot.slane %v552, 5
        %v1058 = vsel %vm1016, %v1056, %v1057
        %v1059 = vrot.slane %v956, 5
        %v1060 = vrot.slane %v1059, 4
        %v1061 = vrot.slane %v528, 5
        %v1062 = vsel %vm1016, %v1060, %v1061
        %v1063 = vrot.slane %v1061, 4
        %v1064 = vrot.slane %v553, 5
        %v1065 = vsel %vm1016, %v1063, %v1064
        %v1066 = vrot.slane %v957, 5
        %v1067 = vrot.slane %v1066, 4
        %v1068 = vrot.slane %v530, 5
        %v1069 = vsel %vm1016, %v1067, %v1068
        %v1070 = vrot.slane %v1068, 4
        %v1071 = vrot.slane %v554, 5
        %v1072 = vsel %vm1016, %v1070, %v1071
        %v1073 = vrot.slane %v958, 5
        %v1074 = vrot.slane %v1073, 4
        %v1075 = vrot.slane %v532, 5
        %v1076 = vsel %vm1016, %v1074, %v1075
        %v1077 = vrot.slane %v1075, 4
        %v1078 = vrot.slane %v555, 5
        %v1079 = vsel %vm1016, %v1077, %v1078
        %v1080 = vrot.slane %v959, 5
        %v1081 = vrot.slane %v1080, 4
        %v1082 = vrot.slane %v534, 5
        %v1083 = vsel %vm1016, %v1081, %v1082
        %v1084 = vrot.slane %v1082, 4
        %v1085 = vrot.slane %v556, 5
        %v1086 = vsel %vm1016, %v1084, %v1085
        %v1087 = vrot.slane %v960, 5
        %v1088 = vrot.slane %v1087, 4
        %v1089 = vrot.slane %v536, 5
        %v1090 = vsel %vm1016, %v1088, %v1089
        %v1091 = vrot.slane %v1089, 4
        %v1092 = vrot.slane %v557, 5
        %v1093 = vsel %vm1016, %v1091, %v1092
        %v1094 = vrot.slane %v961, 5
        %v1095 = vrot.slane %v1094, 4
        %v1096 = vrot.slane %v538, 5
        %v1097 = vsel %vm1016, %v1095, %v1096
        %v1098 = vrot.slane %v1096, 4
        %v1099 = vrot.slane %v558, 5
        %v1100 = vsel %vm1016, %v1098, %v1099
        %v1101 = vrot.slane %v962, 5
        %v1102 = vrot.slane %v1101, 4
        %v1103 = vrot.slane %v540, 5
        %v1104 = vsel %vm1016, %v1102, %v1103
        %v1105 = vrot.slane %v1103, 4
        %v1106 = vrot.slane %v559, 5
        %v1107 = vsel %vm1016, %v1105, %v1106
        %v1108 = vrot.slane %v963, 5
        %v1109 = vrot.slane %v1108, 4
        %v1110 = vrot.slane %v542, 5
        %v1111 = vsel %vm1016, %v1109, %v1110
        %v1112 = vrot.slane %v1110, 4
        %v1113 = vrot.slane %v560, 5
        %v1114 = vsel %vm1016, %v1112, %v1113
        %v1115 = vrot.slane %v964, 5
        %v1116 = vrot.slane %v1115, 4
        %v1117 = vrot.slane %v544, 5
        %v1118 = vsel %vm1016, %v1116, %v1117
        %v1119 = vrot.slane %v1117, 4
        %v1120 = vrot.slane %v561, 5
        %v1121 = vsel %vm1016, %v1119, %v1120
        %v1122 = vrot.slane %v965, 5
        %v1123 = vrot.slane %v1122, 4
        %v1124 = vrot.slane %v546, 5
        %v1125 = vsel %vm1016, %v1123, %v1124
        %v1126 = vrot.slane %v1124, 4
        %v1127 = vrot.slane %v562, 5
        %v1128 = vsel %vm1016, %v1126, %v1127
        %s1129 = scalar_lea.vmem %s276, 12
        %v1130 = vld [vmem:[%s1129] sm:$0xf]
        %v1131 = vld [vmem:[%s1129 + $0x4] sm:$0xf]
        %v1132 = vld [vmem:[%s1129 + $0xc] sm:$0xf]
        %v1133 = vld [vmem:[%s1129 + $0x10] sm:$0xf]
        %v1134 = vld [vmem:[%s1129 + $0x18] sm:$0xf]
        %v1135 = vld [vmem:[%s1129 + $0x1c] sm:$0xf]
        %v1136 = vld [vmem:[%s1129 + $0x24] sm:$0xf]
        %v1137 = vld [vmem:[%s1129 + $0x28] sm:$0xf]
        %v1138 = vld [vmem:[%s1129 + $0x30] sm:$0xf]
        %v1139 = vld [vmem:[%s1129 + $0x34] sm:$0xf]
        %v1140 = vld [vmem:[%s1129 + $0x3c] sm:$0xf]
        %v1141 = vld [vmem:[%s1129 + $0x40] sm:$0xf]
        %v1142 = vld [vmem:[%s1129 + $0x48] sm:$0xf]
        %v1143 = vld [vmem:[%s1129 + $0x4c] sm:$0xf]
        %v1144 = vld [vmem:[%s1129 + $0x54] sm:$0xf]
        %v1145 = vld [vmem:[%s1129 + $0x58] sm:$0xf]
        %v1146 = vld [vmem:[%s1129 + $0x60] sm:$0xf]
        %v1147 = vld [vmem:[%s1129 + $0x64] sm:$0xf]
        %v1148 = vld [vmem:[%s1129 + $0x6c] sm:$0xf]
        %v1149 = vld [vmem:[%s1129 + $0x70] sm:$0xf]
        %v1150 = vld [vmem:[%s1129 + $0x78] sm:$0xf]
        %v1151 = vld [vmem:[%s1129 + $0x7c] sm:$0xf]
        %v1152 = vld [vmem:[%s1129 + $0x84] sm:$0xf]
        %v1153 = vld [vmem:[%s1129 + $0x88] sm:$0xf]
        %v1154 = vld [vmem:[%s1129 + $0x90] sm:$0xf]
        %v1155 = vld [vmem:[%s1129 + $0x94] sm:$0xf]
        %v1156 = vld [vmem:[%s1129 + $0x9c] sm:$0xf]
        %v1157 = vld [vmem:[%s1129 + $0xa0] sm:$0xf]
        %v1158 = vld [vmem:[%s1129 + $0xa8] sm:$0xf]
        %v1159 = vld [vmem:[%s1129 + $0xac] sm:$0xf]
        %v1160 = vld [vmem:[%s1129 + $0xb4] sm:$0xf]
        %v1161 = vld [vmem:[%s1129 + $0xb8] sm:$0xf]
        %v1162 = vld [vmem:[%s1129 + $0x8] sm:$0x1]
        %v1163 = vld [vmem:[%s1129 + $0x14] sm:$0x1]
        %v1164 = vld [vmem:[%s1129 + $0x20] sm:$0x1]
        %v1165 = vld [vmem:[%s1129 + $0x2c] sm:$0x1]
        %v1166 = vld [vmem:[%s1129 + $0x38] sm:$0x1]
        %v1167 = vld [vmem:[%s1129 + $0x44] sm:$0x1]
        %v1168 = vld [vmem:[%s1129 + $0x50] sm:$0x1]
        %v1169 = vld [vmem:[%s1129 + $0x5c] sm:$0x1]
        %v1170 = vld [vmem:[%s1129 + $0x68] sm:$0x1]
        %v1171 = vld [vmem:[%s1129 + $0x74] sm:$0x1]
        %v1172 = vld [vmem:[%s1129 + $0x80] sm:$0x1]
        %v1173 = vld [vmem:[%s1129 + $0x8c] sm:$0x1]
        %v1174 = vld [vmem:[%s1129 + $0x98] sm:$0x1]
        %v1175 = vld [vmem:[%s1129 + $0xa4] sm:$0x1]
        %v1176 = vld [vmem:[%s1129 + $0xb0] sm:$0x1]
        %v1177 = vld [vmem:[%s1129 + $0xbc] sm:$0x1]
        %v1179 = vshrl.u32 %v1130, 16
        %v1181 = vrot.slane %v1179, 4
        %v1182 = vshll.u32 %v1130, 16
        %v1184 = vrot.slane %v1182, 5
        %v1185 = vor.u32 %v1181, %v1184
        %v1186 = vrot.slane %v1185, 4
        %v1188 = vshll.u32 %v1131, 16
        %v1190 = vrot.slane %v1188, 5
        %v1191 = vsel %vm565, %v1186, %v1190
        %v1192 = vshrl.u32 %v1131, 16
        %v1194 = vrot.slane %v1192, 4
        %v1195 = vor.u32 %v1194, %v1190
        %v1196 = vrot.slane %v1195, 4
        %v1198 = vshll.u32 %v1162, 16
        %v1200 = vrot.slane %v1198, 5
        %v1201 = vsel %vm565, %v1196, %v1200
        %v1203 = vshrl.u32 %v1132, 16
        %v1205 = vrot.slane %v1203, 4
        %v1206 = vshll.u32 %v1132, 16
        %v1208 = vrot.slane %v1206, 5
        %v1209 = vor.u32 %v1205, %v1208
        %v1210 = vrot.slane %v1209, 4
        %v1212 = vshll.u32 %v1133, 16
        %v1214 = vrot.slane %v1212, 5
        %v1215 = vsel %vm565, %v1210, %v1214
        %v1216 = vshrl.u32 %v1133, 16
        %v1218 = vrot.slane %v1216, 4
        %v1219 = vor.u32 %v1218, %v1214
        %v1220 = vrot.slane %v1219, 4
        %v1222 = vshll.u32 %v1163, 16
        %v1224 = vrot.slane %v1222, 5
        %v1225 = vsel %vm565, %v1220, %v1224
        %v1227 = vshrl.u32 %v1134, 16
        %v1229 = vrot.slane %v1227, 4
        %v1230 = vshll.u32 %v1134, 16
        %v1232 = vrot.slane %v1230, 5
        %v1233 = vor.u32 %v1229, %v1232
        %v1234 = vrot.slane %v1233, 4
        %v1236 = vshll.u32 %v1135, 16
        %v1238 = vrot.slane %v1236, 5
        %v1239 = vsel %vm565, %v1234, %v1238
        %v1240 = vshrl.u32 %v1135, 16
        %v1242 = vrot.slane %v1240, 4
        %v1243 = vor.u32 %v1242, %v1238
        %v1244 = vrot.slane %v1243, 4
        %v1246 = vshll.u32 %v1164, 16
        %v1248 = vrot.slane %v1246, 5
        %v1249 = vsel %vm565, %v1244, %v1248
        %v1251 = vshrl.u32 %v1136, 16
        %v1253 = vrot.slane %v1251, 4
        %v1254 = vshll.u32 %v1136, 16
        %v1256 = vrot.slane %v1254, 5
        %v1257 = vor.u32 %v1253, %v1256
        %v1258 = vrot.slane %v1257, 4
        %v1260 = vshll.u32 %v1137, 16
        %v1262 = vrot.slane %v1260, 5
        %v1263 = vsel %vm565, %v1258, %v1262
        %v1264 = vshrl.u32 %v1137, 16
        %v1266 = vrot.slane %v1264, 4
        %v1267 = vor.u32 %v1266, %v1262
        %v1268 = vrot.slane %v1267, 4
        %v1270 = vshll.u32 %v1165, 16
        %v1272 = vrot.slane %v1270, 5
        %v1273 = vsel %vm565, %v1268, %v1272
        %v1275 = vshrl.u32 %v1138, 16
        %v1277 = vrot.slane %v1275, 4
        %v1278 = vshll.u32 %v1138, 16
        %v1280 = vrot.slane %v1278, 5
        %v1281 = vor.u32 %v1277, %v1280
        %v1282 = vrot.slane %v1281, 4
        %v1284 = vshll.u32 %v1139, 16
        %v1286 = vrot.slane %v1284, 5
        %v1287 = vsel %vm565, %v1282, %v1286
        %v1288 = vshrl.u32 %v1139, 16
        %v1290 = vrot.slane %v1288, 4
        %v1291 = vor.u32 %v1290, %v1286
        %v1292 = vrot.slane %v1291, 4
        %v1294 = vshll.u32 %v1166, 16
        %v1296 = vrot.slane %v1294, 5
        %v1297 = vsel %vm565, %v1292, %v1296
        %v1299 = vshrl.u32 %v1140, 16
        %v1301 = vrot.slane %v1299, 4
        %v1302 = vshll.u32 %v1140, 16
        %v1304 = vrot.slane %v1302, 5
        %v1305 = vor.u32 %v1301, %v1304
        %v1306 = vrot.slane %v1305, 4
        %v1308 = vshll.u32 %v1141, 16
        %v1310 = vrot.slane %v1308, 5
        %v1311 = vsel %vm565, %v1306, %v1310
        %v1312 = vshrl.u32 %v1141, 16
        %v1314 = vrot.slane %v1312, 4
        %v1315 = vor.u32 %v1314, %v1310
        %v1316 = vrot.slane %v1315, 4
        %v1318 = vshll.u32 %v1167, 16
        %v1320 = vrot.slane %v1318, 5
        %v1321 = vsel %vm565, %v1316, %v1320
        %v1323 = vshrl.u32 %v1142, 16
        %v1325 = vrot.slane %v1323, 4
        %v1326 = vshll.u32 %v1142, 16
        %v1328 = vrot.slane %v1326, 5
        %v1329 = vor.u32 %v1325, %v1328
        %v1330 = vrot.slane %v1329, 4
        %v1332 = vshll.u32 %v1143, 16
        %v1334 = vrot.slane %v1332, 5
        %v1335 = vsel %vm565, %v1330, %v1334
        %v1336 = vshrl.u32 %v1143, 16
        %v1338 = vrot.slane %v1336, 4
        %v1339 = vor.u32 %v1338, %v1334
        %v1340 = vrot.slane %v1339, 4
        %v1342 = vshll.u32 %v1168, 16
        %v1344 = vrot.slane %v1342, 5
        %v1345 = vsel %vm565, %v1340, %v1344
        %v1347 = vshrl.u32 %v1144, 16
        %v1349 = vrot.slane %v1347, 4
        %v1350 = vshll.u32 %v1144, 16
        %v1352 = vrot.slane %v1350, 5
        %v1353 = vor.u32 %v1349, %v1352
        %v1354 = vrot.slane %v1353, 4
        %v1356 = vshll.u32 %v1145, 16
        %v1358 = vrot.slane %v1356, 5
        %v1359 = vsel %vm565, %v1354, %v1358
        %v1360 = vshrl.u32 %v1145, 16
        %v1362 = vrot.slane %v1360, 4
        %v1363 = vor.u32 %v1362, %v1358
        %v1364 = vrot.slane %v1363, 4
        %v1366 = vshll.u32 %v1169, 16
        %v1368 = vrot.slane %v1366, 5
        %v1369 = vsel %vm565, %v1364, %v1368
        %v1371 = vshrl.u32 %v1146, 16
        %v1373 = vrot.slane %v1371, 4
        %v1374 = vshll.u32 %v1146, 16
        %v1376 = vrot.slane %v1374, 5
        %v1377 = vor.u32 %v1373, %v1376
        %v1378 = vrot.slane %v1377, 4
        %v1380 = vshll.u32 %v1147, 16
        %v1382 = vrot.slane %v1380, 5
        %v1383 = vsel %vm565, %v1378, %v1382
        %v1384 = vshrl.u32 %v1147, 16
        %v1386 = vrot.slane %v1384, 4
        %v1387 = vor.u32 %v1386, %v1382
        %v1388 = vrot.slane %v1387, 4
        %v1390 = vshll.u32 %v1170, 16
        %v1392 = vrot.slane %v1390, 5
        %v1393 = vsel %vm565, %v1388, %v1392
        %v1395 = vshrl.u32 %v1148, 16
        %v1397 = vrot.slane %v1395, 4
        %v1398 = vshll.u32 %v1148, 16
        %v1400 = vrot.slane %v1398, 5
        %v1401 = vor.u32 %v1397, %v1400
        %v1402 = vrot.slane %v1401, 4
        %v1404 = vshll.u32 %v1149, 16
        %v1406 = vrot.slane %v1404, 5
        %v1407 = vsel %vm565, %v1402, %v1406
        %v1408 = vshrl.u32 %v1149, 16
        %v1410 = vrot.slane %v1408, 4
        %v1411 = vor.u32 %v1410, %v1406
        %v1412 = vrot.slane %v1411, 4
        %v1414 = vshll.u32 %v1171, 16
        %v1416 = vrot.slane %v1414, 5
        %v1417 = vsel %vm565, %v1412, %v1416
        %v1419 = vshrl.u32 %v1150, 16
        %v1421 = vrot.slane %v1419, 4
        %v1422 = vshll.u32 %v1150, 16
        %v1424 = vrot.slane %v1422, 5
        %v1425 = vor.u32 %v1421, %v1424
        %v1426 = vrot.slane %v1425, 4
        %v1428 = vshll.u32 %v1151, 16
        %v1430 = vrot.slane %v1428, 5
        %v1431 = vsel %vm565, %v1426, %v1430
        %v1432 = vshrl.u32 %v1151, 16
        %v1434 = vrot.slane %v1432, 4
        %v1435 = vor.u32 %v1434, %v1430
        %v1436 = vrot.slane %v1435, 4
        %v1438 = vshll.u32 %v1172, 16
        %v1440 = vrot.slane %v1438, 5
        %v1441 = vsel %vm565, %v1436, %v1440
        %v1443 = vshrl.u32 %v1152, 16
        %v1445 = vrot.slane %v1443, 4
        %v1446 = vshll.u32 %v1152, 16
        %v1448 = vrot.slane %v1446, 5
        %v1449 = vor.u32 %v1445, %v1448
        %v1450 = vrot.slane %v1449, 4
        %v1452 = vshll.u32 %v1153, 16
        %v1454 = vrot.slane %v1452, 5
        %v1455 = vsel %vm565, %v1450, %v1454
        %v1456 = vshrl.u32 %v1153, 16
        %v1458 = vrot.slane %v1456, 4
        %v1459 = vor.u32 %v1458, %v1454
        %v1460 = vrot.slane %v1459, 4
        %v1462 = vshll.u32 %v1173, 16
        %v1464 = vrot.slane %v1462, 5
        %v1465 = vsel %vm565, %v1460, %v1464
        %v1467 = vshrl.u32 %v1154, 16
        %v1469 = vrot.slane %v1467, 4
        %v1470 = vshll.u32 %v1154, 16
        %v1472 = vrot.slane %v1470, 5
        %v1473 = vor.u32 %v1469, %v1472
        %v1474 = vrot.slane %v1473, 4
        %v1476 = vshll.u32 %v1155, 16
        %v1478 = vrot.slane %v1476, 5
        %v1479 = vsel %vm565, %v1474, %v1478
        %v1480 = vshrl.u32 %v1155, 16
        %v1482 = vrot.slane %v1480, 4
        %v1483 = vor.u32 %v1482, %v1478
        %v1484 = vrot.slane %v1483, 4
        %v1486 = vshll.u32 %v1174, 16
        %v1488 = vrot.slane %v1486, 5
        %v1489 = vsel %vm565, %v1484, %v1488
        %v1491 = vshrl.u32 %v1156, 16
        %v1493 = vrot.slane %v1491, 4
        %v1494 = vshll.u32 %v1156, 16
        %v1496 = vrot.slane %v1494, 5
        %v1497 = vor.u32 %v1493, %v1496
        %v1498 = vrot.slane %v1497, 4
        %v1500 = vshll.u32 %v1157, 16
        %v1502 = vrot.slane %v1500, 5
        %v1503 = vsel %vm565, %v1498, %v1502
        %v1504 = vshrl.u32 %v1157, 16
        %v1506 = vrot.slane %v1504, 4
        %v1507 = vor.u32 %v1506, %v1502
        %v1508 = vrot.slane %v1507, 4
        %v1510 = vshll.u32 %v1175, 16
        %v1512 = vrot.slane %v1510, 5
        %v1513 = vsel %vm565, %v1508, %v1512
        %v1515 = vshrl.u32 %v1158, 16
        %v1517 = vrot.slane %v1515, 4
        %v1518 = vshll.u32 %v1158, 16
        %v1520 = vrot.slane %v1518, 5
        %v1521 = vor.u32 %v1517, %v1520
        %v1522 = vrot.slane %v1521, 4
        %v1524 = vshll.u32 %v1159, 16
        %v1526 = vrot.slane %v1524, 5
        %v1527 = vsel %vm565, %v1522, %v1526
        %v1528 = vshrl.u32 %v1159, 16
        %v1530 = vrot.slane %v1528, 4
        %v1531 = vor.u32 %v1530, %v1526
        %v1532 = vrot.slane %v1531, 4
        %v1534 = vshll.u32 %v1176, 16
        %v1536 = vrot.slane %v1534, 5
        %v1537 = vsel %vm565, %v1532, %v1536
        %v1539 = vshrl.u32 %v1160, 16
        %v1541 = vrot.slane %v1539, 4
        %v1542 = vshll.u32 %v1160, 16
        %v1544 = vrot.slane %v1542, 5
        %v1545 = vor.u32 %v1541, %v1544
        %v1546 = vrot.slane %v1545, 4
        %v1548 = vshll.u32 %v1161, 16
        %v1550 = vrot.slane %v1548, 5
        %v1551 = vsel %vm565, %v1546, %v1550
        %v1552 = vshrl.u32 %v1161, 16
        %v1554 = vrot.slane %v1552, 4
        %v1555 = vor.u32 %v1554, %v1550
        %v1556 = vrot.slane %v1555, 4
        %v1558 = vshll.u32 %v1177, 16
        %v1560 = vrot.slane %v1558, 5
        %v1561 = vsel %vm565, %v1556, %v1560
        %v1562 = vld [vmem:[%s1129] sm:$0xe]
        %v1563 = vld [vmem:[%s1129 + $0xc] sm:$0xe]
        %v1564 = vld [vmem:[%s1129 + $0x18] sm:$0xe]
        %v1565 = vld [vmem:[%s1129 + $0x24] sm:$0xe]
        %v1566 = vld [vmem:[%s1129 + $0x30] sm:$0xe]
        %v1567 = vld [vmem:[%s1129 + $0x3c] sm:$0xe]
        %v1568 = vld [vmem:[%s1129 + $0x48] sm:$0xe]
        %v1569 = vld [vmem:[%s1129 + $0x54] sm:$0xe]
        %v1570 = vld [vmem:[%s1129 + $0x60] sm:$0xe]
        %v1571 = vld [vmem:[%s1129 + $0x6c] sm:$0xe]
        %v1572 = vld [vmem:[%s1129 + $0x78] sm:$0xe]
        %v1573 = vld [vmem:[%s1129 + $0x84] sm:$0xe]
        %v1574 = vld [vmem:[%s1129 + $0x90] sm:$0xe]
        %v1575 = vld [vmem:[%s1129 + $0x9c] sm:$0xe]
        %v1576 = vld [vmem:[%s1129 + $0xa8] sm:$0xe]
        %v1577 = vld [vmem:[%s1129 + $0xb4] sm:$0xe]
        %v1626 = vrot.slane %v1562, 5
        %v1627 = vrot.slane %v1626, 4
        %v1628 = vrot.slane %v1131, 5
        %v1629 = vsel %vm1016, %v1627, %v1628
        %v1630 = vrot.slane %v1628, 4
        %v1631 = vrot.slane %v1162, 5
        %v1632 = vsel %vm1016, %v1630, %v1631
        %v1633 = vrot.slane %v1563, 5
        %v1634 = vrot.slane %v1633, 4
        %v1635 = vrot.slane %v1133, 5
        %v1636 = vsel %vm1016, %v1634, %v1635
        %v1637 = vrot.slane %v1635, 4
        %v1638 = vrot.slane %v1163, 5
        %v1639 = vsel %vm1016, %v1637, %v1638
        %v1640 = vrot.slane %v1564, 5
        %v1641 = vrot.slane %v1640, 4
        %v1642 = vrot.slane %v1135, 5
        %v1643 = vsel %vm1016, %v1641, %v1642
        %v1644 = vrot.slane %v1642, 4
        %v1645 = vrot.slane %v1164, 5
        %v1646 = vsel %vm1016, %v1644, %v1645
        %v1647 = vrot.slane %v1565, 5
        %v1648 = vrot.slane %v1647, 4
        %v1649 = vrot.slane %v1137, 5
        %v1650 = vsel %vm1016, %v1648, %v1649
        %v1651 = vrot.slane %v1649, 4
        %v1652 = vrot.slane %v1165, 5
        %v1653 = vsel %vm1016, %v1651, %v1652
        %v1654 = vrot.slane %v1566, 5
        %v1655 = vrot.slane %v1654, 4
        %v1656 = vrot.slane %v1139, 5
        %v1657 = vsel %vm1016, %v1655, %v1656
        %v1658 = vrot.slane %v1656, 4
        %v1659 = vrot.slane %v1166, 5
        %v1660 = vsel %vm1016, %v1658, %v1659
        %v1661 = vrot.slane %v1567, 5
        %v1662 = vrot.slane %v1661, 4
        %v1663 = vrot.slane %v1141, 5
        %v1664 = vsel %vm1016, %v1662, %v1663
        %v1665 = vrot.slane %v1663, 4
        %v1666 = vrot.slane %v1167, 5
        %v1667 = vsel %vm1016, %v1665, %v1666
        %v1668 = vrot.slane %v1568, 5
        %v1669 = vrot.slane %v1668, 4
        %v1670 = vrot.slane %v1143, 5
        %v1671 = vsel %vm1016, %v1669, %v1670
        %v1672 = vrot.slane %v1670, 4
        %v1673 = vrot.slane %v1168, 5
        %v1674 = vsel %vm1016, %v1672, %v1673
        %v1675 = vrot.slane %v1569, 5
        %v1676 = vrot.slane %v1675, 4
        %v1677 = vrot.slane %v1145, 5
        %v1678 = vsel %vm1016, %v1676, %v1677
        %v1679 = vrot.slane %v1677, 4
        %v1680 = vrot.slane %v1169, 5
        %v1681 = vsel %vm1016, %v1679, %v1680
        %v1682 = vrot.slane %v1570, 5
        %v1683 = vrot.slane %v1682, 4
        %v1684 = vrot.slane %v1147, 5
        %v1685 = vsel %vm1016, %v1683, %v1684
        %v1686 = vrot.slane %v1684, 4
        %v1687 = vrot.slane %v1170, 5
        %v1688 = vsel %vm1016, %v1686, %v1687
        %v1689 = vrot.slane %v1571, 5
        %v1690 = vrot.slane %v1689, 4
        %v1691 = vrot.slane %v1149, 5
        %v1692 = vsel %vm1016, %v1690, %v1691
        %v1693 = vrot.slane %v1691, 4
        %v1694 = vrot.slane %v1171, 5
        %v1695 = vsel %vm1016, %v1693, %v1694
        %v1696 = vrot.slane %v1572, 5
        %v1697 = vrot.slane %v1696, 4
        %v1698 = vrot.slane %v1151, 5
        %v1699 = vsel %vm1016, %v1697, %v1698
        %v1700 = vrot.slane %v1698, 4
        %v1701 = vrot.slane %v1172, 5
        %v1702 = vsel %vm1016, %v1700, %v1701
        %v1703 = vrot.slane %v1573, 5
        %v1704 = vrot.slane %v1703, 4
        %v1705 = vrot.slane %v1153, 5
        %v1706 = vsel %vm1016, %v1704, %v1705
        %v1707 = vrot.slane %v1705, 4
        %v1708 = vrot.slane %v1173, 5
        %v1709 = vsel %vm1016, %v1707, %v1708
        %v1710 = vrot.slane %v1574, 5
        %v1711 = vrot.slane %v1710, 4
        %v1712 = vrot.slane %v1155, 5
        %v1713 = vsel %vm1016, %v1711, %v1712
        %v1714 = vrot.slane %v1712, 4
        %v1715 = vrot.slane %v1174, 5
        %v1716 = vsel %vm1016, %v1714, %v1715
        %v1717 = vrot.slane %v1575, 5
        %v1718 = vrot.slane %v1717, 4
        %v1719 = vrot.slane %v1157, 5
        %v1720 = vsel %vm1016, %v1718, %v1719
        %v1721 = vrot.slane %v1719, 4
        %v1722 = vrot.slane %v1175, 5
        %v1723 = vsel %vm1016, %v1721, %v1722
        %v1724 = vrot.slane %v1576, 5
        %v1725 = vrot.slane %v1724, 4
        %v1726 = vrot.slane %v1159, 5
        %v1727 = vsel %vm1016, %v1725, %v1726
        %v1728 = vrot.slane %v1726, 4
        %v1729 = vrot.slane %v1176, 5
        %v1730 = vsel %vm1016, %v1728, %v1729
        %v1731 = vrot.slane %v1577, 5
        %v1732 = vrot.slane %v1731, 4
        %v1733 = vrot.slane %v1161, 5
        %v1734 = vsel %vm1016, %v1732, %v1733
        %v1735 = vrot.slane %v1733, 4
        %v1736 = vrot.slane %v1177, 5
        %v1737 = vsel %vm1016, %v1735, %v1736
        %s1738 = scalar_lea.vmem %s276, 24
        %v1739 = vld [vmem:[%s1738] sm:$0xf]
        %v1740 = vld [vmem:[%s1738 + $0x4] sm:$0xf]
        %v1741 = vld [vmem:[%s1738 + $0xc] sm:$0xf]
        %v1742 = vld [vmem:[%s1738 + $0x10] sm:$0xf]
        %v1743 = vld [vmem:[%s1738 + $0x18] sm:$0xf]
        %v1744 = vld [vmem:[%s1738 + $0x1c] sm:$0xf]
        %v1745 = vld [vmem:[%s1738 + $0x24] sm:$0xf]
        %v1746 = vld [vmem:[%s1738 + $0x28] sm:$0xf]
        %v1747 = vld [vmem:[%s1738 + $0x30] sm:$0xf]
        %v1748 = vld [vmem:[%s1738 + $0x34] sm:$0xf]
        %v1749 = vld [vmem:[%s1738 + $0x3c] sm:$0xf]
        %v1750 = vld [vmem:[%s1738 + $0x40] sm:$0xf]
        %v1751 = vld [vmem:[%s1738 + $0x48] sm:$0xf]
        %v1752 = vld [vmem:[%s1738 + $0x4c] sm:$0xf]
        %v1753 = vld [vmem:[%s1738 + $0x54] sm:$0xf]
        %v1754 = vld [vmem:[%s1738 + $0x58] sm:$0xf]
        %v1755 = vld [vmem:[%s1738 + $0x60] sm:$0xf]
        %v1756 = vld [vmem:[%s1738 + $0x64] sm:$0xf]
        %v1757 = vld [vmem:[%s1738 + $0x6c] sm:$0xf]
        %v1758 = vld [vmem:[%s1738 + $0x70] sm:$0xf]
        %v1759 = vld [vmem:[%s1738 + $0x78] sm:$0xf]
        %v1760 = vld [vmem:[%s1738 + $0x7c] sm:$0xf]
        %v1761 = vld [vmem:[%s1738 + $0x84] sm:$0xf]
        %v1762 = vld [vmem:[%s1738 + $0x88] sm:$0xf]
        %v1763 = vld [vmem:[%s1738 + $0x90] sm:$0xf]
        %v1764 = vld [vmem:[%s1738 + $0x94] sm:$0xf]
        %v1765 = vld [vmem:[%s1738 + $0x9c] sm:$0xf]
        %v1766 = vld [vmem:[%s1738 + $0xa0] sm:$0xf]
        %v1767 = vld [vmem:[%s1738 + $0xa8] sm:$0xf]
        %v1768 = vld [vmem:[%s1738 + $0xac] sm:$0xf]
        %v1769 = vld [vmem:[%s1738 + $0xb4] sm:$0xf]
        %v1770 = vld [vmem:[%s1738 + $0xb8] sm:$0xf]
        %v1771 = vld [vmem:[%s1738 + $0x8] sm:$0x1]
        %v1772 = vld [vmem:[%s1738 + $0x14] sm:$0x1]
        %v1773 = vld [vmem:[%s1738 + $0x20] sm:$0x1]
        %v1774 = vld [vmem:[%s1738 + $0x2c] sm:$0x1]
        %v1775 = vld [vmem:[%s1738 + $0x38] sm:$0x1]
        %v1776 = vld [vmem:[%s1738 + $0x44] sm:$0x1]
        %v1777 = vld [vmem:[%s1738 + $0x50] sm:$0x1]
        %v1778 = vld [vmem:[%s1738 + $0x5c] sm:$0x1]
        %v1779 = vld [vmem:[%s1738 + $0x68] sm:$0x1]
        %v1780 = vld [vmem:[%s1738 + $0x74] sm:$0x1]
        %v1781 = vld [vmem:[%s1738 + $0x80] sm:$0x1]
        %v1782 = vld [vmem:[%s1738 + $0x8c] sm:$0x1]
        %v1783 = vld [vmem:[%s1738 + $0x98] sm:$0x1]
        %v1784 = vld [vmem:[%s1738 + $0xa4] sm:$0x1]
        %v1785 = vld [vmem:[%s1738 + $0xb0] sm:$0x1]
        %v1786 = vld [vmem:[%s1738 + $0xbc] sm:$0x1]
        %v1788 = vshrl.u32 %v1739, 16
        %v1790 = vrot.slane %v1788, 4
        %v1791 = vshll.u32 %v1739, 16
        %v1793 = vrot.slane %v1791, 5
        %v1794 = vor.u32 %v1790, %v1793
        %v1795 = vrot.slane %v1794, 4
        %v1797 = vshll.u32 %v1740, 16
        %v1799 = vrot.slane %v1797, 5
        %v1800 = vsel %vm565, %v1795, %v1799
        %v1801 = vshrl.u32 %v1740, 16
        %v1803 = vrot.slane %v1801, 4
        %v1804 = vor.u32 %v1803, %v1799
        %v1805 = vrot.slane %v1804, 4
        %v1807 = vshll.u32 %v1771, 16
        %v1809 = vrot.slane %v1807, 5
        %v1810 = vsel %vm565, %v1805, %v1809
        %v1812 = vshrl.u32 %v1741, 16
        %v1814 = vrot.slane %v1812, 4
        %v1815 = vshll.u32 %v1741, 16
        %v1817 = vrot.slane %v1815, 5
        %v1818 = vor.u32 %v1814, %v1817
        %v1819 = vrot.slane %v1818, 4
        %v1821 = vshll.u32 %v1742, 16
        %v1823 = vrot.slane %v1821, 5
        %v1824 = vsel %vm565, %v1819, %v1823
        %v1825 = vshrl.u32 %v1742, 16
        %v1827 = vrot.slane %v1825, 4
        %v1828 = vor.u32 %v1827, %v1823
        %v1829 = vrot.slane %v1828, 4
        %v1831 = vshll.u32 %v1772, 16
        %v1833 = vrot.slane %v1831, 5
        %v1834 = vsel %vm565, %v1829, %v1833
        %v1836 = vshrl.u32 %v1743, 16
        %v1838 = vrot.slane %v1836, 4
        %v1839 = vshll.u32 %v1743, 16
        %v1841 = vrot.slane %v1839, 5
        %v1842 = vor.u32 %v1838, %v1841
        %v1843 = vrot.slane %v1842, 4
        %v1845 = vshll.u32 %v1744, 16
        %v1847 = vrot.slane %v1845, 5
        %v1848 = vsel %vm565, %v1843, %v1847
        %v1849 = vshrl.u32 %v1744, 16
        %v1851 = vrot.slane %v1849, 4
        %v1852 = vor.u32 %v1851, %v1847
        %v1853 = vrot.slane %v1852, 4
        %v1855 = vshll.u32 %v1773, 16
        %v1857 = vrot.slane %v1855, 5
        %v1858 = vsel %vm565, %v1853, %v1857
        %v1860 = vshrl.u32 %v1745, 16
        %v1862 = vrot.slane %v1860, 4
        %v1863 = vshll.u32 %v1745, 16
        %v1865 = vrot.slane %v1863, 5
        %v1866 = vor.u32 %v1862, %v1865
        %v1867 = vrot.slane %v1866, 4
        %v1869 = vshll.u32 %v1746, 16
        %v1871 = vrot.slane %v1869, 5
        %v1872 = vsel %vm565, %v1867, %v1871
        %v1873 = vshrl.u32 %v1746, 16
        %v1875 = vrot.slane %v1873, 4
        %v1876 = vor.u32 %v1875, %v1871
        %v1877 = vrot.slane %v1876, 4
        %v1879 = vshll.u32 %v1774, 16
        %v1881 = vrot.slane %v1879, 5
        %v1882 = vsel %vm565, %v1877, %v1881
        %v1884 = vshrl.u32 %v1747, 16
        %v1886 = vrot.slane %v1884, 4
        %v1887 = vshll.u32 %v1747, 16
        %v1889 = vrot.slane %v1887, 5
        %v1890 = vor.u32 %v1886, %v1889
        %v1891 = vrot.slane %v1890, 4
        %v1893 = vshll.u32 %v1748, 16
        %v1895 = vrot.slane %v1893, 5
        %v1896 = vsel %vm565, %v1891, %v1895
        %v1897 = vshrl.u32 %v1748, 16
        %v1899 = vrot.slane %v1897, 4
        %v1900 = vor.u32 %v1899, %v1895
        %v1901 = vrot.slane %v1900, 4
        %v1903 = vshll.u32 %v1775, 16
        %v1905 = vrot.slane %v1903, 5
        %v1906 = vsel %vm565, %v1901, %v1905
        %v1908 = vshrl.u32 %v1749, 16
        %v1910 = vrot.slane %v1908, 4
        %v1911 = vshll.u32 %v1749, 16
        %v1913 = vrot.slane %v1911, 5
        %v1914 = vor.u32 %v1910, %v1913
        %v1915 = vrot.slane %v1914, 4
        %v1917 = vshll.u32 %v1750, 16
        %v1919 = vrot.slane %v1917, 5
        %v1920 = vsel %vm565, %v1915, %v1919
        %v1921 = vshrl.u32 %v1750, 16
        %v1923 = vrot.slane %v1921, 4
        %v1924 = vor.u32 %v1923, %v1919
        %v1925 = vrot.slane %v1924, 4
        %v1927 = vshll.u32 %v1776, 16
        %v1929 = vrot.slane %v1927, 5
        %v1930 = vsel %vm565, %v1925, %v1929
        %v1932 = vshrl.u32 %v1751, 16
        %v1934 = vrot.slane %v1932, 4
        %v1935 = vshll.u32 %v1751, 16
        %v1937 = vrot.slane %v1935, 5
        %v1938 = vor.u32 %v1934, %v1937
        %v1939 = vrot.slane %v1938, 4
        %v1941 = vshll.u32 %v1752, 16
        %v1943 = vrot.slane %v1941, 5
        %v1944 = vsel %vm565, %v1939, %v1943
        %v1945 = vshrl.u32 %v1752, 16
        %v1947 = vrot.slane %v1945, 4
        %v1948 = vor.u32 %v1947, %v1943
        %v1949 = vrot.slane %v1948, 4
        %v1951 = vshll.u32 %v1777, 16
        %v1953 = vrot.slane %v1951, 5
        %v1954 = vsel %vm565, %v1949, %v1953
        %v1956 = vshrl.u32 %v1753, 16
        %v1958 = vrot.slane %v1956, 4
        %v1959 = vshll.u32 %v1753, 16
        %v1961 = vrot.slane %v1959, 5
        %v1962 = vor.u32 %v1958, %v1961
        %v1963 = vrot.slane %v1962, 4
        %v1965 = vshll.u32 %v1754, 16
        %v1967 = vrot.slane %v1965, 5
        %v1968 = vsel %vm565, %v1963, %v1967
        %v1969 = vshrl.u32 %v1754, 16
        %v1971 = vrot.slane %v1969, 4
        %v1972 = vor.u32 %v1971, %v1967
        %v1973 = vrot.slane %v1972, 4
        %v1975 = vshll.u32 %v1778, 16
        %v1977 = vrot.slane %v1975, 5
        %v1978 = vsel %vm565, %v1973, %v1977
        %v1980 = vshrl.u32 %v1755, 16
        %v1982 = vrot.slane %v1980, 4
        %v1983 = vshll.u32 %v1755, 16
        %v1985 = vrot.slane %v1983, 5
        %v1986 = vor.u32 %v1982, %v1985
        %v1987 = vrot.slane %v1986, 4
        %v1989 = vshll.u32 %v1756, 16
        %v1991 = vrot.slane %v1989, 5
        %v1992 = vsel %vm565, %v1987, %v1991
        %v1993 = vshrl.u32 %v1756, 16
        %v1995 = vrot.slane %v1993, 4
        %v1996 = vor.u32 %v1995, %v1991
        %v1997 = vrot.slane %v1996, 4
        %v1999 = vshll.u32 %v1779, 16
        %v2001 = vrot.slane %v1999, 5
        %v2002 = vsel %vm565, %v1997, %v2001
        %v2004 = vshrl.u32 %v1757, 16
        %v2006 = vrot.slane %v2004, 4
        %v2007 = vshll.u32 %v1757, 16
        %v2009 = vrot.slane %v2007, 5
        %v2010 = vor.u32 %v2006, %v2009
        %v2011 = vrot.slane %v2010, 4
        %v2013 = vshll.u32 %v1758, 16
        %v2015 = vrot.slane %v2013, 5
        %v2016 = vsel %vm565, %v2011, %v2015
        %v2017 = vshrl.u32 %v1758, 16
        %v2019 = vrot.slane %v2017, 4
        %v2020 = vor.u32 %v2019, %v2015
        %v2021 = vrot.slane %v2020, 4
        %v2023 = vshll.u32 %v1780, 16
        %v2025 = vrot.slane %v2023, 5
        %v2026 = vsel %vm565, %v2021, %v2025
        %v2028 = vshrl.u32 %v1759, 16
        %v2030 = vrot.slane %v2028, 4
        %v2031 = vshll.u32 %v1759, 16
        %v2033 = vrot.slane %v2031, 5
        %v2034 = vor.u32 %v2030, %v2033
        %v2035 = vrot.slane %v2034, 4
        %v2037 = vshll.u32 %v1760, 16
        %v2039 = vrot.slane %v2037, 5
        %v2040 = vsel %vm565, %v2035, %v2039
        %v2041 = vshrl.u32 %v1760, 16
        %v2043 = vrot.slane %v2041, 4
        %v2044 = vor.u32 %v2043, %v2039
        %v2045 = vrot.slane %v2044, 4
        %v2047 = vshll.u32 %v1781, 16
        %v2049 = vrot.slane %v2047, 5
        %v2050 = vsel %vm565, %v2045, %v2049
        %v2052 = vshrl.u32 %v1761, 16
        %v2054 = vrot.slane %v2052, 4
        %v2055 = vshll.u32 %v1761, 16
        %v2057 = vrot.slane %v2055, 5
        %v2058 = vor.u32 %v2054, %v2057
        %v2059 = vrot.slane %v2058, 4
        %v2061 = vshll.u32 %v1762, 16
        %v2063 = vrot.slane %v2061, 5
        %v2064 = vsel %vm565, %v2059, %v2063
        %v2065 = vshrl.u32 %v1762, 16
        %v2067 = vrot.slane %v2065, 4
        %v2068 = vor.u32 %v2067, %v2063
        %v2069 = vrot.slane %v2068, 4
        %v2071 = vshll.u32 %v1782, 16
        %v2073 = vrot.slane %v2071, 5
        %v2074 = vsel %vm565, %v2069, %v2073
        %v2076 = vshrl.u32 %v1763, 16
        %v2078 = vrot.slane %v2076, 4
        %v2079 = vshll.u32 %v1763, 16
        %v2081 = vrot.slane %v2079, 5
        %v2082 = vor.u32 %v2078, %v2081
        %v2083 = vrot.slane %v2082, 4
        %v2085 = vshll.u32 %v1764, 16
        %v2087 = vrot.slane %v2085, 5
        %v2088 = vsel %vm565, %v2083, %v2087
        %v2089 = vshrl.u32 %v1764, 16
        %v2091 = vrot.slane %v2089, 4
        %v2092 = vor.u32 %v2091, %v2087
        %v2093 = vrot.slane %v2092, 4
        %v2095 = vshll.u32 %v1783, 16
        %v2097 = vrot.slane %v2095, 5
        %v2098 = vsel %vm565, %v2093, %v2097
        %v2100 = vshrl.u32 %v1765, 16
        %v2102 = vrot.slane %v2100, 4
        %v2103 = vshll.u32 %v1765, 16
        %v2105 = vrot.slane %v2103, 5
        %v2106 = vor.u32 %v2102, %v2105
        %v2107 = vrot.slane %v2106, 4
        %v2109 = vshll.u32 %v1766, 16
        %v2111 = vrot.slane %v2109, 5
        %v2112 = vsel %vm565, %v2107, %v2111
        %v2113 = vshrl.u32 %v1766, 16
        %v2115 = vrot.slane %v2113, 4
        %v2116 = vor.u32 %v2115, %v2111
        %v2117 = vrot.slane %v2116, 4
        %v2119 = vshll.u32 %v1784, 16
        %v2121 = vrot.slane %v2119, 5
        %v2122 = vsel %vm565, %v2117, %v2121
        %v2124 = vshrl.u32 %v1767, 16
        %v2126 = vrot.slane %v2124, 4
        %v2127 = vshll.u32 %v1767, 16
        %v2129 = vrot.slane %v2127, 5
        %v2130 = vor.u32 %v2126, %v2129
        %v2131 = vrot.slane %v2130, 4
        %v2133 = vshll.u32 %v1768, 16
        %v2135 = vrot.slane %v2133, 5
        %v2136 = vsel %vm565, %v2131, %v2135
        %v2137 = vshrl.u32 %v1768, 16
        %v2139 = vrot.slane %v2137, 4
        %v2140 = vor.u32 %v2139, %v2135
        %v2141 = vrot.slane %v2140, 4
        %v2143 = vshll.u32 %v1785, 16
        %v2145 = vrot.slane %v2143, 5
        %v2146 = vsel %vm565, %v2141, %v2145
        %v2148 = vshrl.u32 %v1769, 16
        %v2150 = vrot.slane %v2148, 4
        %v2151 = vshll.u32 %v1769, 16
        %v2153 = vrot.slane %v2151, 5
        %v2154 = vor.u32 %v2150, %v2153
        %v2155 = vrot.slane %v2154, 4
        %v2157 = vshll.u32 %v1770, 16
        %v2159 = vrot.slane %v2157, 5
        %v2160 = vsel %vm565, %v2155, %v2159
        %v2161 = vshrl.u32 %v1770, 16
        %v2163 = vrot.slane %v2161, 4
        %v2164 = vor.u32 %v2163, %v2159
        %v2165 = vrot.slane %v2164, 4
        %v2167 = vshll.u32 %v1786, 16
        %v2169 = vrot.slane %v2167, 5
        %v2170 = vsel %vm565, %v2165, %v2169
        %v2171 = vld [vmem:[%s1738] sm:$0xe]
        %v2172 = vld [vmem:[%s1738 + $0xc] sm:$0xe]
        %v2173 = vld [vmem:[%s1738 + $0x18] sm:$0xe]
        %v2174 = vld [vmem:[%s1738 + $0x24] sm:$0xe]
        %v2175 = vld [vmem:[%s1738 + $0x30] sm:$0xe]
        %v2176 = vld [vmem:[%s1738 + $0x3c] sm:$0xe]
        %v2177 = vld [vmem:[%s1738 + $0x48] sm:$0xe]
        %v2178 = vld [vmem:[%s1738 + $0x54] sm:$0xe]
        %v2179 = vld [vmem:[%s1738 + $0x60] sm:$0xe]
        %v2180 = vld [vmem:[%s1738 + $0x6c] sm:$0xe]
        %v2181 = vld [vmem:[%s1738 + $0x78] sm:$0xe]
        %v2182 = vld [vmem:[%s1738 + $0x84] sm:$0xe]
        %v2183 = vld [vmem:[%s1738 + $0x90] sm:$0xe]
        %v2184 = vld [vmem:[%s1738 + $0x9c] sm:$0xe]
        %v2185 = vld [vmem:[%s1738 + $0xa8] sm:$0xe]
        %v2186 = vld [vmem:[%s1738 + $0xb4] sm:$0xe]
        %v2235 = vrot.slane %v2171, 5
        %v2236 = vrot.slane %v2235, 4
        %v2237 = vrot.slane %v1740, 5
        %v2238 = vsel %vm1016, %v2236, %v2237
        %v2239 = vrot.slane %v2237, 4
        %v2240 = vrot.slane %v1771, 5
        %v2241 = vsel %vm1016, %v2239, %v2240
        %v2242 = vrot.slane %v2172, 5
        %v2243 = vrot.slane %v2242, 4
        %v2244 = vrot.slane %v1742, 5
        %v2245 = vsel %vm1016, %v2243, %v2244
        %v2246 = vrot.slane %v2244, 4
        %v2247 = vrot.slane %v1772, 5
        %v2248 = vsel %vm1016, %v2246, %v2247
        %v2249 = vrot.slane %v2173, 5
        %v2250 = vrot.slane %v2249, 4
        %v2251 = vrot.slane %v1744, 5
        %v2252 = vsel %vm1016, %v2250, %v2251
        %v2253 = vrot.slane %v2251, 4
        %v2254 = vrot.slane %v1773, 5
        %v2255 = vsel %vm1016, %v2253, %v2254
        %v2256 = vrot.slane %v2174, 5
        %v2257 = vrot.slane %v2256, 4
        %v2258 = vrot.slane %v1746, 5
        %v2259 = vsel %vm1016, %v2257, %v2258
        %v2260 = vrot.slane %v2258, 4
        %v2261 = vrot.slane %v1774, 5
        %v2262 = vsel %vm1016, %v2260, %v2261
        %v2263 = vrot.slane %v2175, 5
        %v2264 = vrot.slane %v2263, 4
        %v2265 = vrot.slane %v1748, 5
        %v2266 = vsel %vm1016, %v2264, %v2265
        %v2267 = vrot.slane %v2265, 4
        %v2268 = vrot.slane %v1775, 5
        %v2269 = vsel %vm1016, %v2267, %v2268
        %v2270 = vrot.slane %v2176, 5
        %v2271 = vrot.slane %v2270, 4
        %v2272 = vrot.slane %v1750, 5
        %v2273 = vsel %vm1016, %v2271, %v2272
        %v2274 = vrot.slane %v2272, 4
        %v2275 = vrot.slane %v1776, 5
        %v2276 = vsel %vm1016, %v2274, %v2275
        %v2277 = vrot.slane %v2177, 5
        %v2278 = vrot.slane %v2277, 4
        %v2279 = vrot.slane %v1752, 5
        %v2280 = vsel %vm1016, %v2278, %v2279
        %v2281 = vrot.slane %v2279, 4
        %v2282 = vrot.slane %v1777, 5
        %v2283 = vsel %vm1016, %v2281, %v2282
        %v2284 = vrot.slane %v2178, 5
        %v2285 = vrot.slane %v2284, 4
        %v2286 = vrot.slane %v1754, 5
        %v2287 = vsel %vm1016, %v2285, %v2286
        %v2288 = vrot.slane %v2286, 4
        %v2289 = vrot.slane %v1778, 5
        %v2290 = vsel %vm1016, %v2288, %v2289
        %v2291 = vrot.slane %v2179, 5
        %v2292 = vrot.slane %v2291, 4
        %v2293 = vrot.slane %v1756, 5
        %v2294 = vsel %vm1016, %v2292, %v2293
        %v2295 = vrot.slane %v2293, 4
        %v2296 = vrot.slane %v1779, 5
        %v2297 = vsel %vm1016, %v2295, %v2296
        %v2298 = vrot.slane %v2180, 5
        %v2299 = vrot.slane %v2298, 4
        %v2300 = vrot.slane %v1758, 5
        %v2301 = vsel %vm1016, %v2299, %v2300
        %v2302 = vrot.slane %v2300, 4
        %v2303 = vrot.slane %v1780, 5
        %v2304 = vsel %vm1016, %v2302, %v2303
        %v2305 = vrot.slane %v2181, 5
        %v2306 = vrot.slane %v2305, 4
        %v2307 = vrot.slane %v1760, 5
        %v2308 = vsel %vm1016, %v2306, %v2307
        %v2309 = vrot.slane %v2307, 4
        %v2310 = vrot.slane %v1781, 5
        %v2311 = vsel %vm1016, %v2309, %v2310
        %v2312 = vrot.slane %v2182, 5
        %v2313 = vrot.slane %v2312, 4
        %v2314 = vrot.slane %v1762, 5
        %v2315 = vsel %vm1016, %v2313, %v2314
        %v2316 = vrot.slane %v2314, 4
        %v2317 = vrot.slane %v1782, 5
        %v2318 = vsel %vm1016, %v2316, %v2317
        %v2319 = vrot.slane %v2183, 5
        %v2320 = vrot.slane %v2319, 4
        %v2321 = vrot.slane %v1764, 5
        %v2322 = vsel %vm1016, %v2320, %v2321
        %v2323 = vrot.slane %v2321, 4
        %v2324 = vrot.slane %v1783, 5
        %v2325 = vsel %vm1016, %v2323, %v2324
        %v2326 = vrot.slane %v2184, 5
        %v2327 = vrot.slane %v2326, 4
        %v2328 = vrot.slane %v1766, 5
        %v2329 = vsel %vm1016, %v2327, %v2328
        %v2330 = vrot.slane %v2328, 4
        %v2331 = vrot.slane %v1784, 5
        %v2332 = vsel %vm1016, %v2330, %v2331
        %v2333 = vrot.slane %v2185, 5
        %v2334 = vrot.slane %v2333, 4
        %v2335 = vrot.slane %v1768, 5
        %v2336 = vsel %vm1016, %v2334, %v2335
        %v2337 = vrot.slane %v2335, 4
        %v2338 = vrot.slane %v1785, 5
        %v2339 = vsel %vm1016, %v2337, %v2338
        %v2340 = vrot.slane %v2186, 5
        %v2341 = vrot.slane %v2340, 4
        %v2342 = vrot.slane %v1770, 5
        %v2343 = vsel %vm1016, %v2341, %v2342
        %v2344 = vrot.slane %v2342, 4
        %v2345 = vrot.slane %v1786, 5
        %v2346 = vsel %vm1016, %v2344, %v2345
        %v2363 = vunpack.c.l.b16 %v515
        %v2364 = vunpack.c.l.b16 %v516
        %v2365 = vunpack.c.l.b16 %v517
        %v2366 = vunpack.c.l.b16 %v518
        %v2367 = vunpack.c.l.b16 %v519
        %v2368 = vunpack.c.l.b16 %v520
        %v2369 = vunpack.c.l.b16 %v521
        %v2370 = vunpack.c.l.b16 %v522
        %v2371 = vunpack.c.l.b16 %v523
        %v2372 = vunpack.c.l.b16 %v524
        %v2373 = vunpack.c.l.b16 %v525
        %v2374 = vunpack.c.l.b16 %v526
        %v2375 = vunpack.c.l.b16 %v527
        %v2376 = vunpack.c.l.b16 %v528
        %v2377 = vunpack.c.l.b16 %v529
        %v2378 = vunpack.c.l.b16 %v530
        %v2379 = vunpack.c.l.b16 %v531
        %v2380 = vunpack.c.l.b16 %v532
        %v2381 = vunpack.c.l.b16 %v533
        %v2382 = vunpack.c.l.b16 %v534
        %v2383 = vunpack.c.l.b16 %v535
        %v2384 = vunpack.c.l.b16 %v536
        %v2385 = vunpack.c.l.b16 %v537
        %v2386 = vunpack.c.l.b16 %v538
        %v2387 = vunpack.c.l.b16 %v539
        %v2388 = vunpack.c.l.b16 %v540
        %v2389 = vunpack.c.l.b16 %v541
        %v2390 = vunpack.c.l.b16 %v542
        %v2391 = vunpack.c.l.b16 %v543
        %v2392 = vunpack.c.l.b16 %v544
        %v2393 = vunpack.c.l.b16 %v545
        %v2394 = vunpack.c.l.b16 %v546
        %v2395 = vpack.c.b16 %v2364, %v2363
        %v2396 = vpack.c.b16 %v2366, %v2365
        %v2397 = vpack.c.b16 %v2368, %v2367
        %v2398 = vpack.c.b16 %v2370, %v2369
        %v2399 = vpack.c.b16 %v2372, %v2371
        %v2400 = vpack.c.b16 %v2374, %v2373
        %v2401 = vpack.c.b16 %v2376, %v2375
        %v2402 = vpack.c.b16 %v2378, %v2377
        %v2403 = vpack.c.b16 %v2380, %v2379
        %v2404 = vpack.c.b16 %v2382, %v2381
        %v2405 = vpack.c.b16 %v2384, %v2383
        %v2406 = vpack.c.b16 %v2386, %v2385
        %v2407 = vpack.c.b16 %v2388, %v2387
        %v2408 = vpack.c.b16 %v2390, %v2389
        %v2409 = vpack.c.b16 %v2392, %v2391
        %v2410 = vpack.c.b16 %v2394, %v2393
        %v2411 = vunpack.c.l.b16 %v579
        %v2412 = vunpack.c.l.b16 %v589
        %v2413 = vunpack.c.l.b16 %v603
        %v2414 = vunpack.c.l.b16 %v613
        %v2415 = vunpack.c.l.b16 %v627
        %v2416 = vunpack.c.l.b16 %v637
        %v2417 = vunpack.c.l.b16 %v651
        %v2418 = vunpack.c.l.b16 %v661
        %v2419 = vunpack.c.l.b16 %v675
        %v2420 = vunpack.c.l.b16 %v685
        %v2421 = vunpack.c.l.b16 %v699
        %v2422 = vunpack.c.l.b16 %v709
        %v2423 = vunpack.c.l.b16 %v723
        %v2424 = vunpack.c.l.b16 %v733
        %v2425 = vunpack.c.l.b16 %v747
        %v2426 = vunpack.c.l.b16 %v757
        %v2427 = vunpack.c.l.b16 %v771
        %v2428 = vunpack.c.l.b16 %v781
        %v2429 = vunpack.c.l.b16 %v795
        %v2430 = vunpack.c.l.b16 %v805
        %v2431 = vunpack.c.l.b16 %v819
        %v2432 = vunpack.c.l.b16 %v829
        %v2433 = vunpack.c.l.b16 %v843
        %v2434 = vunpack.c.l.b16 %v853
        %v2435 = vunpack.c.l.b16 %v867
        %v2436 = vunpack.c.l.b16 %v877
        %v2437 = vunpack.c.l.b16 %v891
        %v2438 = vunpack.c.l.b16 %v901
        %v2439 = vunpack.c.l.b16 %v915
        %v2440 = vunpack.c.l.b16 %v925
        %v2441 = vunpack.c.l.b16 %v939
        %v2442 = vunpack.c.l.b16 %v949
        %v2443 = vpack.c.b16 %v2412, %v2411
        %v2444 = vpack.c.b16 %v2414, %v2413
        %v2445 = vpack.c.b16 %v2416, %v2415
        %v2446 = vpack.c.b16 %v2418, %v2417
        %v2447 = vpack.c.b16 %v2420, %v2419
        %v2448 = vpack.c.b16 %v2422, %v2421
        %v2449 = vpack.c.b16 %v2424, %v2423
        %v2450 = vpack.c.b16 %v2426, %v2425
        %v2451 = vpack.c.b16 %v2428, %v2427
        %v2452 = vpack.c.b16 %v2430, %v2429
        %v2453 = vpack.c.b16 %v2432, %v2431
        %v2454 = vpack.c.b16 %v2434, %v2433
        %v2455 = vpack.c.b16 %v2436, %v2435
        %v2456 = vpack.c.b16 %v2438, %v2437
        %v2457 = vpack.c.b16 %v2440, %v2439
        %v2458 = vpack.c.b16 %v2442, %v2441
        %2459 = vrot.lane.b32.xlu0 %v2443, 64
        %v2460 = vpop.permute.xlu0 %2459
        %2461 = vrot.lane.b32.xlu0 %v2444, 64
        %v2462 = vpop.permute.xlu0 %2461
        %2463 = vrot.lane.b32.xlu0 %v2445, 64
        %v2464 = vpop.permute.xlu0 %2463
        %2465 = vrot.lane.b32.xlu0 %v2446, 64
        %v2466 = vpop.permute.xlu0 %2465
        %2467 = vrot.lane.b32.xlu0 %v2447, 64
        %v2468 = vpop.permute.xlu0 %2467
        %2469 = vrot.lane.b32.xlu0 %v2448, 64
        %v2470 = vpop.permute.xlu0 %2469
        %2471 = vrot.lane.b32.xlu0 %v2449, 64
        %v2472 = vpop.permute.xlu0 %2471
        %2473 = vrot.lane.b32.xlu0 %v2450, 64
        %v2474 = vpop.permute.xlu0 %2473
        %2475 = vrot.lane.b32.xlu0 %v2451, 64
        %v2476 = vpop.permute.xlu0 %2475
        %2477 = vrot.lane.b32.xlu0 %v2452, 64
        %v2478 = vpop.permute.xlu0 %2477
        %2479 = vrot.lane.b32.xlu0 %v2453, 64
        %v2480 = vpop.permute.xlu0 %2479
        %2481 = vrot.lane.b32.xlu0 %v2454, 64
        %v2482 = vpop.permute.xlu0 %2481
        %2483 = vrot.lane.b32.xlu0 %v2455, 64
        %v2484 = vpop.permute.xlu0 %2483
        %2485 = vrot.lane.b32.xlu0 %v2456, 64
        %v2486 = vpop.permute.xlu0 %2485
        %2487 = vrot.lane.b32.xlu0 %v2457, 64
        %v2488 = vpop.permute.xlu0 %2487
        %2489 = vrot.lane.b32.xlu0 %v2458, 64
        %v2490 = vpop.permute.xlu0 %2489
        %v2491 = vunpack.c.l.b16 %v1020
        %v2492 = vunpack.c.l.b16 %v1023
        %v2493 = vunpack.c.l.b16 %v1027
        %v2494 = vunpack.c.l.b16 %v1030
        %v2495 = vunpack.c.l.b16 %v1034
        %v2496 = vunpack.c.l.b16 %v1037
        %v2497 = vunpack.c.l.b16 %v1041
        %v2498 = vunpack.c.l.b16 %v1044
        %v2499 = vunpack.c.l.b16 %v1048
        %v2500 = vunpack.c.l.b16 %v1051
        %v2501 = vunpack.c.l.b16 %v1055
        %v2502 = vunpack.c.l.b16 %v1058
        %v2503 = vunpack.c.l.b16 %v1062
        %v2504 = vunpack.c.l.b16 %v1065
        %v2505 = vunpack.c.l.b16 %v1069
        %v2506 = vunpack.c.l.b16 %v1072
        %v2507 = vunpack.c.l.b16 %v1076
        %v2508 = vunpack.c.l.b16 %v1079
        %v2509 = vunpack.c.l.b16 %v1083
        %v2510 = vunpack.c.l.b16 %v1086
        %v2511 = vunpack.c.l.b16 %v1090
        %v2512 = vunpack.c.l.b16 %v1093
        %v2513 = vunpack.c.l.b16 %v1097
        %v2514 = vunpack.c.l.b16 %v1100
        %v2515 = vunpack.c.l.b16 %v1104
        %v2516 = vunpack.c.l.b16 %v1107
        %v2517 = vunpack.c.l.b16 %v1111
        %v2518 = vunpack.c.l.b16 %v1114
        %v2519 = vunpack.c.l.b16 %v1118
        %v2520 = vunpack.c.l.b16 %v1121
        %v2521 = vunpack.c.l.b16 %v1125
        %v2522 = vunpack.c.l.b16 %v1128
        %v2523 = vpack.c.b16 %v2492, %v2491
        %v2524 = vpack.c.b16 %v2494, %v2493
        %v2525 = vpack.c.b16 %v2496, %v2495
        %v2526 = vpack.c.b16 %v2498, %v2497
        %v2527 = vpack.c.b16 %v2500, %v2499
        %v2528 = vpack.c.b16 %v2502, %v2501
        %v2529 = vpack.c.b16 %v2504, %v2503
        %v2530 = vpack.c.b16 %v2506, %v2505
        %v2531 = vpack.c.b16 %v2508, %v2507
        %v2532 = vpack.c.b16 %v2510, %v2509
        %v2533 = vpack.c.b16 %v2512, %v2511
        %v2534 = vpack.c.b16 %v2514, %v2513
        %v2535 = vpack.c.b16 %v2516, %v2515
        %v2536 = vpack.c.b16 %v2518, %v2517
        %v2537 = vpack.c.b16 %v2520, %v2519
        %v2538 = vpack.c.b16 %v2522, %v2521
        %v2555 = vunpack.c.l.b16 %v1130
        %v2556 = vunpack.c.l.b16 %v1131
        %v2557 = vunpack.c.l.b16 %v1132
        %v2558 = vunpack.c.l.b16 %v1133
        %v2559 = vunpack.c.l.b16 %v1134
        %v2560 = vunpack.c.l.b16 %v1135
        %v2561 = vunpack.c.l.b16 %v1136
        %v2562 = vunpack.c.l.b16 %v1137
        %v2563 = vunpack.c.l.b16 %v1138
        %v2564 = vunpack.c.l.b16 %v1139
        %v2565 = vunpack.c.l.b16 %v1140
        %v2566 = vunpack.c.l.b16 %v1141
        %v2567 = vunpack.c.l.b16 %v1142
        %v2568 = vunpack.c.l.b16 %v1143
        %v2569 = vunpack.c.l.b16 %v1144
        %v2570 = vunpack.c.l.b16 %v1145
        %v2571 = vunpack.c.l.b16 %v1146
        %v2572 = vunpack.c.l.b16 %v1147
        %v2573 = vunpack.c.l.b16 %v1148
        %v2574 = vunpack.c.l.b16 %v1149
        %v2575 = vunpack.c.l.b16 %v1150
        %v2576 = vunpack.c.l.b16 %v1151
        %v2577 = vunpack.c.l.b16 %v1152
        %v2578 = vunpack.c.l.b16 %v1153
        %v2579 = vunpack.c.l.b16 %v1154
        %v2580 = vunpack.c.l.b16 %v1155
        %v2581 = vunpack.c.l.b16 %v1156
        %v2582 = vunpack.c.l.b16 %v1157
        %v2583 = vunpack.c.l.b16 %v1158
        %v2584 = vunpack.c.l.b16 %v1159
        %v2585 = vunpack.c.l.b16 %v1160
        %v2586 = vunpack.c.l.b16 %v1161
        %v2587 = vpack.c.b16 %v2556, %v2555
        %v2588 = vpack.c.b16 %v2558, %v2557
        %v2589 = vpack.c.b16 %v2560, %v2559
        %v2590 = vpack.c.b16 %v2562, %v2561
        %v2591 = vpack.c.b16 %v2564, %v2563
        %v2592 = vpack.c.b16 %v2566, %v2565
        %v2593 = vpack.c.b16 %v2568, %v2567
        %v2594 = vpack.c.b16 %v2570, %v2569
        %v2595 = vpack.c.b16 %v2572, %v2571
        %v2596 = vpack.c.b16 %v2574, %v2573
        %v2597 = vpack.c.b16 %v2576, %v2575
        %v2598 = vpack.c.b16 %v2578, %v2577
        %v2599 = vpack.c.b16 %v2580, %v2579
        %v2600 = vpack.c.b16 %v2582, %v2581
        %v2601 = vpack.c.b16 %v2584, %v2583
        %v2602 = vpack.c.b16 %v2586, %v2585
        %2603 = vrot.lane.b32.xlu0 %v2587, 64
        %v2604 = vpop.permute.xlu0 %2603
        %2605 = vrot.lane.b32.xlu0 %v2588, 64
        %v2606 = vpop.permute.xlu0 %2605
        %2607 = vrot.lane.b32.xlu0 %v2589, 64
        %v2608 = vpop.permute.xlu0 %2607
        %2609 = vrot.lane.b32.xlu0 %v2590, 64
        %v2610 = vpop.permute.xlu0 %2609
        %2611 = vrot.lane.b32.xlu0 %v2591, 64
        %v2612 = vpop.permute.xlu0 %2611
        %2613 = vrot.lane.b32.xlu0 %v2592, 64
        %v2614 = vpop.permute.xlu0 %2613
        %2615 = vrot.lane.b32.xlu0 %v2593, 64
        %v2616 = vpop.permute.xlu0 %2615
        %2617 = vrot.lane.b32.xlu0 %v2594, 64
        %v2618 = vpop.permute.xlu0 %2617
        %2619 = vrot.lane.b32.xlu0 %v2595, 64
        %v2620 = vpop.permute.xlu0 %2619
        %2621 = vrot.lane.b32.xlu0 %v2596, 64
        %v2622 = vpop.permute.xlu0 %2621
        %2623 = vrot.lane.b32.xlu0 %v2597, 64
        %v2624 = vpop.permute.xlu0 %2623
        %2625 = vrot.lane.b32.xlu0 %v2598, 64
        %v2626 = vpop.permute.xlu0 %2625
        %2627 = vrot.lane.b32.xlu0 %v2599, 64
        %v2628 = vpop.permute.xlu0 %2627
        %2629 = vrot.lane.b32.xlu0 %v2600, 64
        %v2630 = vpop.permute.xlu0 %2629
        %2631 = vrot.lane.b32.xlu0 %v2601, 64
        %v2632 = vpop.permute.xlu0 %2631
        %2633 = vrot.lane.b32.xlu0 %v2602, 64
        %v2634 = vpop.permute.xlu0 %2633
        %v2635 = vunpack.c.l.b16 %v1191
        %v2636 = vunpack.c.l.b16 %v1201
        %v2637 = vunpack.c.l.b16 %v1215
        %v2638 = vunpack.c.l.b16 %v1225
        %v2639 = vunpack.c.l.b16 %v1239
        %v2640 = vunpack.c.l.b16 %v1249
        %v2641 = vunpack.c.l.b16 %v1263
        %v2642 = vunpack.c.l.b16 %v1273
        %v2643 = vunpack.c.l.b16 %v1287
        %v2644 = vunpack.c.l.b16 %v1297
        %v2645 = vunpack.c.l.b16 %v1311
        %v2646 = vunpack.c.l.b16 %v1321
        %v2647 = vunpack.c.l.b16 %v1335
        %v2648 = vunpack.c.l.b16 %v1345
        %v2649 = vunpack.c.l.b16 %v1359
        %v2650 = vunpack.c.l.b16 %v1369
        %v2651 = vunpack.c.l.b16 %v1383
        %v2652 = vunpack.c.l.b16 %v1393
        %v2653 = vunpack.c.l.b16 %v1407
        %v2654 = vunpack.c.l.b16 %v1417
        %v2655 = vunpack.c.l.b16 %v1431
        %v2656 = vunpack.c.l.b16 %v1441
        %v2657 = vunpack.c.l.b16 %v1455
        %v2658 = vunpack.c.l.b16 %v1465
        %v2659 = vunpack.c.l.b16 %v1479
        %v2660 = vunpack.c.l.b16 %v1489
        %v2661 = vunpack.c.l.b16 %v1503
        %v2662 = vunpack.c.l.b16 %v1513
        %v2663 = vunpack.c.l.b16 %v1527
        %v2664 = vunpack.c.l.b16 %v1537
        %v2665 = vunpack.c.l.b16 %v1551
        %v2666 = vunpack.c.l.b16 %v1561
        %v2667 = vpack.c.b16 %v2636, %v2635
        %v2668 = vpack.c.b16 %v2638, %v2637
        %v2669 = vpack.c.b16 %v2640, %v2639
        %v2670 = vpack.c.b16 %v2642, %v2641
        %v2671 = vpack.c.b16 %v2644, %v2643
        %v2672 = vpack.c.b16 %v2646, %v2645
        %v2673 = vpack.c.b16 %v2648, %v2647
        %v2674 = vpack.c.b16 %v2650, %v2649
        %v2675 = vpack.c.b16 %v2652, %v2651
        %v2676 = vpack.c.b16 %v2654, %v2653
        %v2677 = vpack.c.b16 %v2656, %v2655
        %v2678 = vpack.c.b16 %v2658, %v2657
        %v2679 = vpack.c.b16 %v2660, %v2659
        %v2680 = vpack.c.b16 %v2662, %v2661
        %v2681 = vpack.c.b16 %v2664, %v2663
        %v2682 = vpack.c.b16 %v2666, %v2665
        %v2683 = vunpack.c.l.b16 %v1629
        %v2684 = vunpack.c.l.b16 %v1632
        %v2685 = vunpack.c.l.b16 %v1636
        %v2686 = vunpack.c.l.b16 %v1639
        %v2687 = vunpack.c.l.b16 %v1643
        %v2688 = vunpack.c.l.b16 %v1646
        %v2689 = vunpack.c.l.b16 %v1650
        %v2690 = vunpack.c.l.b16 %v1653
        %v2691 = vunpack.c.l.b16 %v1657
        %v2692 = vunpack.c.l.b16 %v1660
        %v2693 = vunpack.c.l.b16 %v1664
        %v2694 = vunpack.c.l.b16 %v1667
        %v2695 = vunpack.c.l.b16 %v1671
        %v2696 = vunpack.c.l.b16 %v1674
        %v2697 = vunpack.c.l.b16 %v1678
        %v2698 = vunpack.c.l.b16 %v1681
        %v2699 = vunpack.c.l.b16 %v1685
        %v2700 = vunpack.c.l.b16 %v1688
        %v2701 = vunpack.c.l.b16 %v1692
        %v2702 = vunpack.c.l.b16 %v1695
        %v2703 = vunpack.c.l.b16 %v1699
        %v2704 = vunpack.c.l.b16 %v1702
        %v2705 = vunpack.c.l.b16 %v1706
        %v2706 = vunpack.c.l.b16 %v1709
        %v2707 = vunpack.c.l.b16 %v1713
        %v2708 = vunpack.c.l.b16 %v1716
        %v2709 = vunpack.c.l.b16 %v1720
        %v2710 = vunpack.c.l.b16 %v1723
        %v2711 = vunpack.c.l.b16 %v1727
        %v2712 = vunpack.c.l.b16 %v1730
        %v2713 = vunpack.c.l.b16 %v1734
        %v2714 = vunpack.c.l.b16 %v1737
        %v2715 = vpack.c.b16 %v2684, %v2683
        %v2716 = vpack.c.b16 %v2686, %v2685
        %v2717 = vpack.c.b16 %v2688, %v2687
        %v2718 = vpack.c.b16 %v2690, %v2689
        %v2719 = vpack.c.b16 %v2692, %v2691
        %v2720 = vpack.c.b16 %v2694, %v2693
        %v2721 = vpack.c.b16 %v2696, %v2695
        %v2722 = vpack.c.b16 %v2698, %v2697
        %v2723 = vpack.c.b16 %v2700, %v2699
        %v2724 = vpack.c.b16 %v2702, %v2701
        %v2725 = vpack.c.b16 %v2704, %v2703
        %v2726 = vpack.c.b16 %v2706, %v2705
        %v2727 = vpack.c.b16 %v2708, %v2707
        %v2728 = vpack.c.b16 %v2710, %v2709
        %v2729 = vpack.c.b16 %v2712, %v2711
        %v2730 = vpack.c.b16 %v2714, %v2713
        %2731 = vrot.lane.b32.xlu0 %v2715, 64
        %v2732 = vpop.permute.xlu0 %2731
        %2733 = vrot.lane.b32.xlu0 %v2716, 64
        %v2734 = vpop.permute.xlu0 %2733
        %2735 = vrot.lane.b32.xlu0 %v2717, 64
        %v2736 = vpop.permute.xlu0 %2735
        %2737 = vrot.lane.b32.xlu0 %v2718, 64
        %v2738 = vpop.permute.xlu0 %2737
        %2739 = vrot.lane.b32.xlu0 %v2719, 64
        %v2740 = vpop.permute.xlu0 %2739
        %2741 = vrot.lane.b32.xlu0 %v2720, 64
        %v2742 = vpop.permute.xlu0 %2741
        %2743 = vrot.lane.b32.xlu0 %v2721, 64
        %v2744 = vpop.permute.xlu0 %2743
        %2745 = vrot.lane.b32.xlu0 %v2722, 64
        %v2746 = vpop.permute.xlu0 %2745
        %2747 = vrot.lane.b32.xlu0 %v2723, 64
        %v2748 = vpop.permute.xlu0 %2747
        %2749 = vrot.lane.b32.xlu0 %v2724, 64
        %v2750 = vpop.permute.xlu0 %2749
        %2751 = vrot.lane.b32.xlu0 %v2725, 64
        %v2752 = vpop.permute.xlu0 %2751
        %2753 = vrot.lane.b32.xlu0 %v2726, 64
        %v2754 = vpop.permute.xlu0 %2753
        %2755 = vrot.lane.b32.xlu0 %v2727, 64
        %v2756 = vpop.permute.xlu0 %2755
        %2757 = vrot.lane.b32.xlu0 %v2728, 64
        %v2758 = vpop.permute.xlu0 %2757
        %2759 = vrot.lane.b32.xlu0 %v2729, 64
        %v2760 = vpop.permute.xlu0 %2759
        %2761 = vrot.lane.b32.xlu0 %v2730, 64
        %v2762 = vpop.permute.xlu0 %2761
        %v2779 = vunpack.c.l.b16 %v1739
        %v2780 = vunpack.c.l.b16 %v1740
        %v2781 = vunpack.c.l.b16 %v1741
        %v2782 = vunpack.c.l.b16 %v1742
        %v2783 = vunpack.c.l.b16 %v1743
        %v2784 = vunpack.c.l.b16 %v1744
        %v2785 = vunpack.c.l.b16 %v1745
        %v2786 = vunpack.c.l.b16 %v1746
        %v2787 = vunpack.c.l.b16 %v1747
        %v2788 = vunpack.c.l.b16 %v1748
        %v2789 = vunpack.c.l.b16 %v1749
        %v2790 = vunpack.c.l.b16 %v1750
        %v2791 = vunpack.c.l.b16 %v1751
        %v2792 = vunpack.c.l.b16 %v1752
        %v2793 = vunpack.c.l.b16 %v1753
        %v2794 = vunpack.c.l.b16 %v1754
        %v2795 = vunpack.c.l.b16 %v1755
        %v2796 = vunpack.c.l.b16 %v1756
        %v2797 = vunpack.c.l.b16 %v1757
        %v2798 = vunpack.c.l.b16 %v1758
        %v2799 = vunpack.c.l.b16 %v1759
        %v2800 = vunpack.c.l.b16 %v1760
        %v2801 = vunpack.c.l.b16 %v1761
        %v2802 = vunpack.c.l.b16 %v1762
        %v2803 = vunpack.c.l.b16 %v1763
        %v2804 = vunpack.c.l.b16 %v1764
        %v2805 = vunpack.c.l.b16 %v1765
        %v2806 = vunpack.c.l.b16 %v1766
        %v2807 = vunpack.c.l.b16 %v1767
        %v2808 = vunpack.c.l.b16 %v1768
        %v2809 = vunpack.c.l.b16 %v1769
        %v2810 = vunpack.c.l.b16 %v1770
        %v2811 = vpack.c.b16 %v2780, %v2779
        %v2812 = vpack.c.b16 %v2782, %v2781
        %v2813 = vpack.c.b16 %v2784, %v2783
        %v2814 = vpack.c.b16 %v2786, %v2785
        %v2815 = vpack.c.b16 %v2788, %v2787
        %v2816 = vpack.c.b16 %v2790, %v2789
        %v2817 = vpack.c.b16 %v2792, %v2791
        %v2818 = vpack.c.b16 %v2794, %v2793
        %v2819 = vpack.c.b16 %v2796, %v2795
        %v2820 = vpack.c.b16 %v2798, %v2797
        %v2821 = vpack.c.b16 %v2800, %v2799
        %v2822 = vpack.c.b16 %v2802, %v2801
        %v2823 = vpack.c.b16 %v2804, %v2803
        %v2824 = vpack.c.b16 %v2806, %v2805
        %v2825 = vpack.c.b16 %v2808, %v2807
        %v2826 = vpack.c.b16 %v2810, %v2809
        %v2827 = vunpack.c.l.b16 %v1800
        %v2828 = vunpack.c.l.b16 %v1810
        %v2829 = vunpack.c.l.b16 %v1824
        %v2830 = vunpack.c.l.b16 %v1834
        %v2831 = vunpack.c.l.b16 %v1848
        %v2832 = vunpack.c.l.b16 %v1858
        %v2833 = vunpack.c.l.b16 %v1872
        %v2834 = vunpack.c.l.b16 %v1882
        %v2835 = vunpack.c.l.b16 %v1896
        %v2836 = vunpack.c.l.b16 %v1906
        %v2837 = vunpack.c.l.b16 %v1920
        %v2838 = vunpack.c.l.b16 %v1930
        %v2839 = vunpack.c.l.b16 %v1944
        %v2840 = vunpack.c.l.b16 %v1954
        %v2841 = vunpack.c.l.b16 %v1968
        %v2842 = vunpack.c.l.b16 %v1978
        %v2843 = vunpack.c.l.b16 %v1992
        %v2844 = vunpack.c.l.b16 %v2002
        %v2845 = vunpack.c.l.b16 %v2016
        %v2846 = vunpack.c.l.b16 %v2026
        %v2847 = vunpack.c.l.b16 %v2040
        %v2848 = vunpack.c.l.b16 %v2050
        %v2849 = vunpack.c.l.b16 %v2064
        %v2850 = vunpack.c.l.b16 %v2074
        %v2851 = vunpack.c.l.b16 %v2088
        %v2852 = vunpack.c.l.b16 %v2098
        %v2853 = vunpack.c.l.b16 %v2112
        %v2854 = vunpack.c.l.b16 %v2122
        %v2855 = vunpack.c.l.b16 %v2136
        %v2856 = vunpack.c.l.b16 %v2146
        %v2857 = vunpack.c.l.b16 %v2160
        %v2858 = vunpack.c.l.b16 %v2170
        %v2859 = vpack.c.b16 %v2828, %v2827
        %v2860 = vpack.c.b16 %v2830, %v2829
        %v2861 = vpack.c.b16 %v2832, %v2831
        %v2862 = vpack.c.b16 %v2834, %v2833
        %v2863 = vpack.c.b16 %v2836, %v2835
        %v2864 = vpack.c.b16 %v2838, %v2837
        %v2865 = vpack.c.b16 %v2840, %v2839
        %v2866 = vpack.c.b16 %v2842, %v2841
        %v2867 = vpack.c.b16 %v2844, %v2843
        %v2868 = vpack.c.b16 %v2846, %v2845
        %v2869 = vpack.c.b16 %v2848, %v2847
        %v2870 = vpack.c.b16 %v2850, %v2849
        %v2871 = vpack.c.b16 %v2852, %v2851
        %v2872 = vpack.c.b16 %v2854, %v2853
        %v2873 = vpack.c.b16 %v2856, %v2855
        %v2874 = vpack.c.b16 %v2858, %v2857
        %2875 = vrot.lane.b32.xlu0 %v2859, 64
        %v2876 = vpop.permute.xlu0 %2875
        %2877 = vrot.lane.b32.xlu0 %v2860, 64
        %v2878 = vpop.permute.xlu0 %2877
        %2879 = vrot.lane.b32.xlu0 %v2861, 64
        %v2880 = vpop.permute.xlu0 %2879
        %2881 = vrot.lane.b32.xlu0 %v2862, 64
        %v2882 = vpop.permute.xlu0 %2881
        %2883 = vrot.lane.b32.xlu0 %v2863, 64
        %v2884 = vpop.permute.xlu0 %2883
        %2885 = vrot.lane.b32.xlu0 %v2864, 64
        %v2886 = vpop.permute.xlu0 %2885
        %2887 = vrot.lane.b32.xlu0 %v2865, 64
        %v2888 = vpop.permute.xlu0 %2887
        %2889 = vrot.lane.b32.xlu0 %v2866, 64
        %v2890 = vpop.permute.xlu0 %2889
        %2891 = vrot.lane.b32.xlu0 %v2867, 64
        %v2892 = vpop.permute.xlu0 %2891
        %2893 = vrot.lane.b32.xlu0 %v2868, 64
        %v2894 = vpop.permute.xlu0 %2893
        %2895 = vrot.lane.b32.xlu0 %v2869, 64
        %v2896 = vpop.permute.xlu0 %2895
        %2897 = vrot.lane.b32.xlu0 %v2870, 64
        %v2898 = vpop.permute.xlu0 %2897
        %2899 = vrot.lane.b32.xlu0 %v2871, 64
        %v2900 = vpop.permute.xlu0 %2899
        %2901 = vrot.lane.b32.xlu0 %v2872, 64
        %v2902 = vpop.permute.xlu0 %2901
        %2903 = vrot.lane.b32.xlu0 %v2873, 64
        %v2904 = vpop.permute.xlu0 %2903
        %2905 = vrot.lane.b32.xlu0 %v2874, 64
        %v2906 = vpop.permute.xlu0 %2905
        %v2907 = vunpack.c.l.b16 %v2238
        %v2908 = vunpack.c.l.b16 %v2241
        %v2909 = vunpack.c.l.b16 %v2245
        %v2910 = vunpack.c.l.b16 %v2248
        %v2911 = vunpack.c.l.b16 %v2252
        %v2912 = vunpack.c.l.b16 %v2255
        %v2913 = vunpack.c.l.b16 %v2259
        %v2914 = vunpack.c.l.b16 %v2262
        %v2915 = vunpack.c.l.b16 %v2266
        %v2916 = vunpack.c.l.b16 %v2269
        %v2917 = vunpack.c.l.b16 %v2273
        %v2918 = vunpack.c.l.b16 %v2276
        %v2919 = vunpack.c.l.b16 %v2280
        %v2920 = vunpack.c.l.b16 %v2283
        %v2921 = vunpack.c.l.b16 %v2287
        %v2922 = vunpack.c.l.b16 %v2290
        %v2923 = vunpack.c.l.b16 %v2294
        %v2924 = vunpack.c.l.b16 %v2297
        %v2925 = vunpack.c.l.b16 %v2301
        %v2926 = vunpack.c.l.b16 %v2304
        %v2927 = vunpack.c.l.b16 %v2308
        %v2928 = vunpack.c.l.b16 %v2311
        %v2929 = vunpack.c.l.b16 %v2315
        %v2930 = vunpack.c.l.b16 %v2318
        %v2931 = vunpack.c.l.b16 %v2322
        %v2932 = vunpack.c.l.b16 %v2325
        %v2933 = vunpack.c.l.b16 %v2329
        %v2934 = vunpack.c.l.b16 %v2332
        %v2935 = vunpack.c.l.b16 %v2336
        %v2936 = vunpack.c.l.b16 %v2339
        %v2937 = vunpack.c.l.b16 %v2343
        %v2938 = vunpack.c.l.b16 %v2346
        %v2939 = vpack.c.b16 %v2908, %v2907
        %v2940 = vpack.c.b16 %v2910, %v2909
        %v2941 = vpack.c.b16 %v2912, %v2911
        %v2942 = vpack.c.b16 %v2914, %v2913
        %v2943 = vpack.c.b16 %v2916, %v2915
        %v2944 = vpack.c.b16 %v2918, %v2917
        %v2945 = vpack.c.b16 %v2920, %v2919
        %v2946 = vpack.c.b16 %v2922, %v2921
        %v2947 = vpack.c.b16 %v2924, %v2923
        %v2948 = vpack.c.b16 %v2926, %v2925
        %v2949 = vpack.c.b16 %v2928, %v2927
        %v2950 = vpack.c.b16 %v2930, %v2929
        %v2951 = vpack.c.b16 %v2932, %v2931
        %v2952 = vpack.c.b16 %v2934, %v2933
        %v2953 = vpack.c.b16 %v2936, %v2935
        %v2954 = vpack.c.b16 %v2938, %v2937
        %vm2955 = vcmask 523264
        %v2958 = vsel %vm2955, %v2395, %v2460
        %v2962 = vsel %vm2955, %v2396, %v2462
        %v2966 = vsel %vm2955, %v2397, %v2464
        %v2970 = vsel %vm2955, %v2398, %v2466
        %v2974 = vsel %vm2955, %v2399, %v2468
        %v2978 = vsel %vm2955, %v2400, %v2470
        %v2982 = vsel %vm2955, %v2401, %v2472
        %v2986 = vsel %vm2955, %v2402, %v2474
        %v2990 = vsel %vm2955, %v2403, %v2476
        %v2994 = vsel %vm2955, %v2404, %v2478
        %v2998 = vsel %vm2955, %v2405, %v2480
        %v3002 = vsel %vm2955, %v2406, %v2482
        %v3006 = vsel %vm2955, %v2407, %v2484
        %v3010 = vsel %vm2955, %v2408, %v2486
        %v3014 = vsel %vm2955, %v2409, %v2488
        %v3018 = vsel %vm2955, %v2410, %v2490
        %v3022 = vsel %vm2955, %v2523, %v2604
        %v3026 = vsel %vm2955, %v2524, %v2606
        %v3030 = vsel %vm2955, %v2525, %v2608
        %v3034 = vsel %vm2955, %v2526, %v2610
        %v3038 = vsel %vm2955, %v2527, %v2612
        %v3042 = vsel %vm2955, %v2528, %v2614
        %v3046 = vsel %vm2955, %v2529, %v2616
        %v3050 = vsel %vm2955, %v2530, %v2618
        %v3054 = vsel %vm2955, %v2531, %v2620
        %v3058 = vsel %vm2955, %v2532, %v2622
        %v3062 = vsel %vm2955, %v2533, %v2624
        %v3066 = vsel %vm2955, %v2534, %v2626
        %v3070 = vsel %vm2955, %v2535, %v2628
        %v3074 = vsel %vm2955, %v2536, %v2630
        %v3078 = vsel %vm2955, %v2537, %v2632
        %v3082 = vsel %vm2955, %v2538, %v2634
        %v3086 = vsel %vm2955, %v2667, %v2732
        %v3090 = vsel %vm2955, %v2668, %v2734
        %v3094 = vsel %vm2955, %v2669, %v2736
        %v3098 = vsel %vm2955, %v2670, %v2738
        %v3102 = vsel %vm2955, %v2671, %v2740
        %v3106 = vsel %vm2955, %v2672, %v2742
        %v3110 = vsel %vm2955, %v2673, %v2744
        %v3114 = vsel %vm2955, %v2674, %v2746
        %v3118 = vsel %vm2955, %v2675, %v2748
        %v3122 = vsel %vm2955, %v2676, %v2750
        %v3126 = vsel %vm2955, %v2677, %v2752
        %v3130 = vsel %vm2955, %v2678, %v2754
        %v3134 = vsel %vm2955, %v2679, %v2756
        %v3138 = vsel %vm2955, %v2680, %v2758
        %v3142 = vsel %vm2955, %v2681, %v2760
        %v3146 = vsel %vm2955, %v2682, %v2762
        %v3150 = vsel %vm2955, %v2811, %v2876
        %v3154 = vsel %vm2955, %v2812, %v2878
        %v3158 = vsel %vm2955, %v2813, %v2880
        %v3162 = vsel %vm2955, %v2814, %v2882
        %v3166 = vsel %vm2955, %v2815, %v2884
        %v3170 = vsel %vm2955, %v2816, %v2886
        %v3174 = vsel %vm2955, %v2817, %v2888
        %v3178 = vsel %vm2955, %v2818, %v2890
        %v3182 = vsel %vm2955, %v2819, %v2892
        %v3186 = vsel %vm2955, %v2820, %v2894
        %v3190 = vsel %vm2955, %v2821, %v2896
        %v3194 = vsel %vm2955, %v2822, %v2898
        %v3198 = vsel %vm2955, %v2823, %v2900
        %v3202 = vsel %vm2955, %v2824, %v2902
        %v3206 = vsel %vm2955, %v2825, %v2904
        %v3210 = vsel %vm2955, %v2826, %v2906
        %v3212 = vld [vmem:[%s1] sm:$0xf]
        %v3213 = vld [vmem:[%s1 + $0x4] sm:$0xf]
        %v3214 = vld [vmem:[%s1 + $0x8] sm:$0xf]
        %v3215 = vld [vmem:[%s1 + $0xc] sm:$0xf]
        %v3216 = vld [vmem:[%s1 + $0x10] sm:$0xf]
        %v3217 = vld [vmem:[%s1 + $0x14] sm:$0xf]
        %v3218 = vld [vmem:[%s1 + $0x18] sm:$0xf]
        %v3219 = vld [vmem:[%s1 + $0x1c] sm:$0xf]
        %v3220 = vld [vmem:[%s1 + $0x20] sm:$0xf]
        %v3221 = vld [vmem:[%s1 + $0x24] sm:$0xf]
        %v3222 = vld [vmem:[%s1 + $0x28] sm:$0xf]
        %v3223 = vld [vmem:[%s1 + $0x2c] sm:$0xf]
        %v3224 = vld [vmem:[%s1 + $0x30] sm:$0xf]
        %v3225 = vld [vmem:[%s1 + $0x34] sm:$0xf]
        %v3226 = vld [vmem:[%s1 + $0x38] sm:$0xf]
        %v3227 = vld [vmem:[%s1 + $0x3c] sm:$0xf]
        %v3228 = vld [vmem:[%s1 + $0x40] sm:$0xf]
        %v3229 = vld [vmem:[%s1 + $0x44] sm:$0xf]
        %v3230 = vld [vmem:[%s1 + $0x48] sm:$0xf]
        %v3231 = vld [vmem:[%s1 + $0x4c] sm:$0xf]
        %v3232 = vld [vmem:[%s1 + $0x50] sm:$0xf]
        %v3233 = vld [vmem:[%s1 + $0x54] sm:$0xf]
        %v3234 = vld [vmem:[%s1 + $0x58] sm:$0xf]
        %v3235 = vld [vmem:[%s1 + $0x5c] sm:$0xf]
        %v3236 = vld [vmem:[%s1 + $0x60] sm:$0xf]
        %v3237 = vld [vmem:[%s1 + $0x64] sm:$0xf]
        %v3238 = vld [vmem:[%s1 + $0x68] sm:$0xf]
        %v3239 = vld [vmem:[%s1 + $0x6c] sm:$0xf]
        %v3240 = vld [vmem:[%s1 + $0x70] sm:$0xf]
        %v3241 = vld [vmem:[%s1 + $0x74] sm:$0xf]
        %v3242 = vld [vmem:[%s1 + $0x78] sm:$0xf]
        %v3243 = vld [vmem:[%s1 + $0x7c] sm:$0xf]
        %v3244 = vld [vmem:[%s1 + $0x80] sm:$0xf]
        %v3245 = vld [vmem:[%s1 + $0x84] sm:$0xf]
        %v3246 = vld [vmem:[%s1 + $0x88] sm:$0xf]
        %v3247 = vld [vmem:[%s1 + $0x8c] sm:$0xf]
        %v3248 = vld [vmem:[%s1 + $0x90] sm:$0xf]
        %v3249 = vld [vmem:[%s1 + $0x94] sm:$0xf]
        %v3250 = vld [vmem:[%s1 + $0x98] sm:$0xf]
        %v3251 = vld [vmem:[%s1 + $0x9c] sm:$0xf]
        %v3252 = vld [vmem:[%s1 + $0xa0] sm:$0xf]
        %v3253 = vld [vmem:[%s1 + $0xa4] sm:$0xf]
        %v3254 = vld [vmem:[%s1 + $0xa8] sm:$0xf]
        %v3255 = vld [vmem:[%s1 + $0xac] sm:$0xf]
        %v3256 = vld [vmem:[%s1 + $0xb0] sm:$0xf]
        %v3257 = vld [vmem:[%s1 + $0xb4] sm:$0xf]
        %v3258 = vld [vmem:[%s1 + $0xb8] sm:$0xf]
        %v3259 = vld [vmem:[%s1 + $0xbc] sm:$0xf]
        %v3260 = vld [vmem:[%s1 + $0xc0] sm:$0xf]
        %v3261 = vld [vmem:[%s1 + $0xc4] sm:$0xf]
        %v3262 = vld [vmem:[%s1 + $0xc8] sm:$0xf]
        %v3263 = vld [vmem:[%s1 + $0xcc] sm:$0xf]
        %v3264 = vld [vmem:[%s1 + $0xd0] sm:$0xf]
        %v3265 = vld [vmem:[%s1 + $0xd4] sm:$0xf]
        %v3266 = vld [vmem:[%s1 + $0xd8] sm:$0xf]
        %v3267 = vld [vmem:[%s1 + $0xdc] sm:$0xf]
        %v3268 = vld [vmem:[%s1 + $0xe0] sm:$0xf]
        %v3269 = vld [vmem:[%s1 + $0xe4] sm:$0xf]
        %v3270 = vld [vmem:[%s1 + $0xe8] sm:$0xf]
        %v3271 = vld [vmem:[%s1 + $0xec] sm:$0xf]
        %v3272 = vld [vmem:[%s1 + $0xf0] sm:$0xf]
        %v3273 = vld [vmem:[%s1 + $0xf4] sm:$0xf]
        %v3274 = vld [vmem:[%s1 + $0xf8] sm:$0xf]
        %v3275 = vld [vmem:[%s1 + $0xfc] sm:$0xf]
        %v3276 = vld [vmem:[%s1 + $0x100] sm:$0xf]
        %v3277 = vld [vmem:[%s1 + $0x104] sm:$0xf]
        %v3278 = vld [vmem:[%s1 + $0x108] sm:$0xf]
        %v3279 = vld [vmem:[%s1 + $0x10c] sm:$0xf]
        %v3280 = vld [vmem:[%s1 + $0x110] sm:$0xf]
        %v3281 = vld [vmem:[%s1 + $0x114] sm:$0xf]
        %v3282 = vld [vmem:[%s1 + $0x118] sm:$0xf]
        %v3283 = vld [vmem:[%s1 + $0x11c] sm:$0xf]
        %v3284 = vld [vmem:[%s2] sm:$0x1]
        %v3286 = vlaneseq
        %v3287 = vshrl.u32 %v3286, 7
        %v3288 = vsub.s32 0, %v3287
        %v3289 = vrot.slane %v3284, %v3288
        %v3363 = vunpack.c.l.b16 %v3212
        %v3364 = vunpack.c.l.b16 %v3213
        %v3365 = vunpack.c.l.b16 %v3214
        %v3366 = vunpack.c.l.b16 %v3215
        %v3367 = vunpack.c.l.b16 %v3216
        %v3368 = vunpack.c.l.b16 %v3217
        %v3369 = vunpack.c.l.b16 %v3218
        %v3370 = vunpack.c.l.b16 %v3219
        %v3371 = vunpack.c.l.b16 %v3220
        %v3372 = vunpack.c.l.b16 %v3221
        %v3373 = vunpack.c.l.b16 %v3222
        %v3374 = vunpack.c.l.b16 %v3223
        %v3375 = vunpack.c.l.b16 %v3224
        %v3376 = vunpack.c.l.b16 %v3225
        %v3377 = vunpack.c.l.b16 %v3226
        %v3378 = vunpack.c.l.b16 %v3227
        %v3379 = vunpack.c.l.b16 %v3228
        %v3380 = vunpack.c.l.b16 %v3229
        %v3381 = vunpack.c.l.b16 %v3230
        %v3382 = vunpack.c.l.b16 %v3231
        %v3383 = vunpack.c.l.b16 %v3232
        %v3384 = vunpack.c.l.b16 %v3233
        %v3385 = vunpack.c.l.b16 %v3234
        %v3386 = vunpack.c.l.b16 %v3235
        %v3387 = vunpack.c.l.b16 %v3236
        %v3388 = vunpack.c.l.b16 %v3237
        %v3389 = vunpack.c.l.b16 %v3238
        %v3390 = vunpack.c.l.b16 %v3239
        %v3391 = vunpack.c.l.b16 %v3240
        %v3392 = vunpack.c.l.b16 %v3241
        %v3393 = vunpack.c.l.b16 %v3242
        %v3394 = vunpack.c.l.b16 %v3243
        %v3395 = vunpack.c.l.b16 %v3244
        %v3396 = vunpack.c.l.b16 %v3245
        %v3397 = vunpack.c.l.b16 %v3246
        %v3398 = vunpack.c.l.b16 %v3247
        %v3399 = vunpack.c.l.b16 %v3248
        %v3400 = vunpack.c.l.b16 %v3249
        %v3401 = vunpack.c.l.b16 %v3250
        %v3402 = vunpack.c.l.b16 %v3251
        %v3403 = vunpack.c.l.b16 %v3252
        %v3404 = vunpack.c.l.b16 %v3253
        %v3405 = vunpack.c.l.b16 %v3254
        %v3406 = vunpack.c.l.b16 %v3255
        %v3407 = vunpack.c.l.b16 %v3256
        %v3408 = vunpack.c.l.b16 %v3257
        %v3409 = vunpack.c.l.b16 %v3258
        %v3410 = vunpack.c.l.b16 %v3259
        %v3411 = vunpack.c.l.b16 %v3260
        %v3412 = vunpack.c.l.b16 %v3261
        %v3413 = vunpack.c.l.b16 %v3262
        %v3414 = vunpack.c.l.b16 %v3263
        %v3415 = vunpack.c.l.b16 %v3264
        %v3416 = vunpack.c.l.b16 %v3265
        %v3417 = vunpack.c.l.b16 %v3266
        %v3418 = vunpack.c.l.b16 %v3267
        %v3419 = vunpack.c.l.b16 %v3268
        %v3420 = vunpack.c.l.b16 %v3269
        %v3421 = vunpack.c.l.b16 %v3270
        %v3422 = vunpack.c.l.b16 %v3271
        %v3423 = vunpack.c.l.b16 %v3272
        %v3424 = vunpack.c.l.b16 %v3273
        %v3425 = vunpack.c.l.b16 %v3274
        %v3426 = vunpack.c.l.b16 %v3275
        %v3427 = vunpack.c.l.b16 %v3276
        %v3428 = vunpack.c.l.b16 %v3277
        %v3429 = vunpack.c.l.b16 %v3278
        %v3430 = vunpack.c.l.b16 %v3279
        %v3431 = vunpack.c.l.b16 %v3280
        %v3432 = vunpack.c.l.b16 %v3281
        %v3433 = vunpack.c.l.b16 %v3282
        %v3434 = vunpack.c.l.b16 %v3283
        %v3435 = vpack.c.b16 %v3364, %v3363
        %v3436 = vpack.c.b16 %v3366, %v3365
        %v3437 = vpack.c.b16 %v3368, %v3367
        %v3438 = vpack.c.b16 %v3370, %v3369
        %v3439 = vpack.c.b16 %v3372, %v3371
        %v3440 = vpack.c.b16 %v3374, %v3373
        %v3441 = vpack.c.b16 %v3376, %v3375
        %v3442 = vpack.c.b16 %v3378, %v3377
        %v3443 = vpack.c.b16 %v3380, %v3379
        %v3444 = vpack.c.b16 %v3382, %v3381
        %v3445 = vpack.c.b16 %v3384, %v3383
        %v3446 = vpack.c.b16 %v3386, %v3385
        %v3447 = vpack.c.b16 %v3388, %v3387
        %v3448 = vpack.c.b16 %v3390, %v3389
        %v3449 = vpack.c.b16 %v3392, %v3391
        %v3450 = vpack.c.b16 %v3394, %v3393
        %v3451 = vpack.c.b16 %v3396, %v3395
        %v3452 = vpack.c.b16 %v3398, %v3397
        %v3453 = vpack.c.b16 %v3400, %v3399
        %v3454 = vpack.c.b16 %v3402, %v3401
        %v3455 = vpack.c.b16 %v3404, %v3403
        %v3456 = vpack.c.b16 %v3406, %v3405
        %v3457 = vpack.c.b16 %v3408, %v3407
        %v3458 = vpack.c.b16 %v3410, %v3409
        %v3459 = vpack.c.b16 %v3412, %v3411
        %v3460 = vpack.c.b16 %v3414, %v3413
        %v3461 = vpack.c.b16 %v3416, %v3415
        %v3462 = vpack.c.b16 %v3418, %v3417
        %v3463 = vpack.c.b16 %v3420, %v3419
        %v3464 = vpack.c.b16 %v3422, %v3421
        %v3465 = vpack.c.b16 %v3424, %v3423
        %v3466 = vpack.c.b16 %v3426, %v3425
        %v3467 = vpack.c.b16 %v3428, %v3427
        %v3468 = vpack.c.b16 %v3430, %v3429
        %v3469 = vpack.c.b16 %v3432, %v3431
        %v3470 = vpack.c.b16 %v3434, %v3433
        %v3508 = vsel %vm2955, %v2939, 0
        %v3511 = vsel %vm2955, %v2940, 0
        %v3514 = vsel %vm2955, %v2941, 0
        %v3517 = vsel %vm2955, %v2942, 0
        %v3520 = vsel %vm2955, %v2943, 0
        %v3523 = vsel %vm2955, %v2944, 0
        %v3526 = vsel %vm2955, %v2945, 0
        %v3529 = vsel %vm2955, %v2946, 0
        %v3532 = vsel %vm2955, %v2947, 0
        %v3535 = vsel %vm2955, %v2948, 0
        %v3538 = vsel %vm2955, %v2949, 0
        %v3541 = vsel %vm2955, %v2950, 0
        %v3544 = vsel %vm2955, %v2951, 0
        %v3547 = vsel %vm2955, %v2952, 0
        %v3550 = vsel %vm2955, %v2953, 0
        %v3553 = vsel %vm2955, %v2954, 0
        %3555 = vmatprep.subr.bf16.mxu0 0
        %3556 = vmatpush1.bf16.msra.mxu0 %v3435
        %3557 = vmatprep.subr.bf16.mxu0 0
        %3558 = vmatpush1.bf16.msra.mxu0 %v3436
        %3559 = vmatprep.subr.bf16.mxu0 0
        %3560 = vmatpush1.bf16.msra.mxu0 %v3437
        %3561 = vmatprep.subr.bf16.mxu0 0
        %3562 = vmatpush1.bf16.msra.mxu0 %v3438
        %3563 = vmatprep.subr.bf16.mxu0 0
        %3564 = vmatpush1.bf16.msra.mxu0 %v3439
        %3565 = vmatprep.subr.bf16.mxu0 0
        %3566 = vmatpush1.bf16.msra.mxu0 %v3440
        %3567 = vmatprep.subr.bf16.mxu0 0
        %3568 = vmatpush1.bf16.msra.mxu0 %v3441
        %3569 = vmatprep.subr.bf16.mxu0 0
        %3570 = vmatpush1.bf16.msra.mxu0 %v3442
        %3571 = vmatprep.subr.bf16.mxu0 0
        %3572 = vmatpush1.bf16.msra.mxu0 %v3443
        %3573 = vmatprep.subr.bf16.mxu0 0
        %3574 = vmatpush1.bf16.msra.mxu0 %v3444
        %3575 = vmatprep.subr.bf16.mxu0 0
        %3576 = vmatpush1.bf16.msra.mxu0 %v3445
        %3577 = vmatprep.subr.bf16.mxu0 0
        %3578 = vmatpush1.bf16.msra.mxu0 %v3446
        %3579 = vmatprep.subr.bf16.mxu0 0
        %3580 = vmatpush1.bf16.msra.mxu0 %v3447
        %3581 = vmatprep.subr.bf16.mxu0 0
        %3582 = vmatpush1.bf16.msra.mxu0 %v3448
        %3583 = vmatprep.subr.bf16.mxu0 0
        %3584 = vmatpush1.bf16.msra.mxu0 %v3449
        %3585 = vmatprep.subr.bf16.mxu0 0
        %3586 = vmatpush1.bf16.msra.mxu0 %v3450
        %3587 = vmatprep.mubr.bf16.mxu0 %v3022
        %3588 = vmatmul.mubr.bf16.gmra.mrb[0].mxu0 %v2958
        %v3589 = vpop.f32.mrb[0].mxu0
        %v3590 = vadd.f32 %v3289, %v3589
        %v3591 = vpop.f32.mrb[0].mxu0
        %v3592 = vpop.f32.mrb[0].mxu0
        %v3593 = vadd.f32 %v3289, %v3592
        %v3594 = vpop.f32.mrb[0].mxu0
        %3595 = vmatprep.mubr.bf16.mxu0 %v3026
        %3596 = vmatmul.mubr.bf16.gmra.mrb[0].mxu0 %v2962
        %v3597 = vpop.f32.mrb[0].mxu0
        %v3598 = vadd.f32 %v3289, %v3597
        %v3599 = vpop.f32.mrb[0].mxu0
        %v3600 = vpop.f32.mrb[0].mxu0
        %v3601 = vadd.f32 %v3289, %v3600
        %v3602 = vpop.f32.mrb[0].mxu0
        %3603 = vmatprep.mubr.bf16.mxu0 %v3030
        %3604 = vmatmul.mubr.bf16.gmra.mrb[0].mxu0 %v2966
        %v3605 = vpop.f32.mrb[0].mxu0
        %v3606 = vadd.f32 %v3289, %v3605
        %v3607 = vpop.f32.mrb[0].mxu0
        %v3608 = vpop.f32.mrb[0].mxu0
        %v3609 = vadd.f32 %v3289, %v3608
        %v3610 = vpop.f32.mrb[0].mxu0
        %3611 = vmatprep.mubr.bf16.mxu0 %v3034
        %3612 = vmatmul.mubr.bf16.gmra.mrb[0].mxu0 %v2970
        %v3613 = vpop.f32.mrb[0].mxu0
        %v3614 = vadd.f32 %v3289, %v3613
        %v3615 = vpop.f32.mrb[0].mxu0
        %v3616 = vpop.f32.mrb[0].mxu0
        %v3617 = vadd.f32 %v3289, %v3616
        %v3618 = vpop.f32.mrb[0].mxu0
        %3619 = vmatprep.mubr.bf16.mxu0 %v3038
        %3620 = vmatmul.mubr.bf16.gmra.mrb[0].mxu0 %v2974
        %v3621 = vpop.f32.mrb[0].mxu0
        %v3622 = vadd.f32 %v3289, %v3621
        %v3623 = vpop.f32.mrb[0].mxu0
        %v3624 = vpop.f32.mrb[0].mxu0
        %v3625 = vadd.f32 %v3289, %v3624
        %v3626 = vpop.f32.mrb[0].mxu0
        %3627 = vmatprep.mubr.bf16.mxu0 %v3042
        %3628 = vmatmul.mubr.bf16.gmra.mrb[0].mxu0 %v2978
        %v3629 = vpop.f32.mrb[0].mxu0
        %v3630 = vadd.f32 %v3289, %v3629
        %v3631 = vpop.f32.mrb[0].mxu0
        %v3632 = vpop.f32.mrb[0].mxu0
        %v3633 = vadd.f32 %v3289, %v3632
        %v3634 = vpop.f32.mrb[0].mxu0
        %3635 = vmatprep.mubr.bf16.mxu0 %v3046
        %3636 = vmatmul.mubr.bf16.gmra.mrb[0].mxu0 %v2982
        %v3637 = vpop.f32.mrb[0].mxu0
        %v3638 = vadd.f32 %v3289, %v3637
        %v3639 = vpop.f32.mrb[0].mxu0
        %v3640 = vpop.f32.mrb[0].mxu0
        %v3641 = vadd.f32 %v3289, %v3640
        %v3642 = vpop.f32.mrb[0].mxu0
        %3643 = vmatprep.mubr.bf16.mxu0 %v3050
        %3644 = vmatmul.mubr.bf16.gmra.mrb[0].mxu0 %v2986
        %v3645 = vpop.f32.mrb[0].mxu0
        %v3646 = vadd.f32 %v3289, %v3645
        %v3647 = vpop.f32.mrb[0].mxu0
        %v3648 = vpop.f32.mrb[0].mxu0
        %v3649 = vadd.f32 %v3289, %v3648
        %v3650 = vpop.f32.mrb[0].mxu0
        %3651 = vmatprep.mubr.bf16.mxu0 %v3054
        %3652 = vmatmul.mubr.bf16.gmra.mrb[0].mxu0 %v2990
        %v3653 = vpop.f32.mrb[0].mxu0
        %v3654 = vadd.f32 %v3289, %v3653
        %v3655 = vpop.f32.mrb[0].mxu0
        %v3656 = vpop.f32.mrb[0].mxu0
        %v3657 = vadd.f32 %v3289, %v3656
        %v3658 = vpop.f32.mrb[0].mxu0
        %3659 = vmatprep.mubr.bf16.mxu0 %v3058
        %3660 = vmatmul.mubr.bf16.gmra.mrb[0].mxu0 %v2994
        %v3661 = vpop.f32.mrb[0].mxu0
        %v3662 = vadd.f32 %v3289, %v3661
        %v3663 = vpop.f32.mrb[0].mxu0
        %v3664 = vpop.f32.mrb[0].mxu0
        %v3665 = vadd.f32 %v3289, %v3664
        %v3666 = vpop.f32.mrb[0].mxu0
        %3667 = vmatprep.mubr.bf16.mxu0 %v3062
        %3668 = vmatmul.mubr.bf16.gmra.mrb[0].mxu0 %v2998
        %v3669 = vpop.f32.mrb[0].mxu0
        %v3670 = vadd.f32 %v3289, %v3669
        %v3671 = vpop.f32.mrb[0].mxu0
        %v3672 = vpop.f32.mrb[0].mxu0
        %v3673 = vadd.f32 %v3289, %v3672
        %v3674 = vpop.f32.mrb[0].mxu0
        %3675 = vmatprep.mubr.bf16.mxu0 %v3066
        %3676 = vmatmul.mubr.bf16.gmra.mrb[0].mxu0 %v3002
        %v3677 = vpop.f32.mrb[0].mxu0
        %v3678 = vadd.f32 %v3289, %v3677
        %v3679 = vpop.f32.mrb[0].mxu0
        %v3680 = vpop.f32.mrb[0].mxu0
        %v3681 = vadd.f32 %v3289, %v3680
        %v3682 = vpop.f32.mrb[0].mxu0
        %3683 = vmatprep.mubr.bf16.mxu0 %v3070
        %3684 = vmatmul.mubr.bf16.gmra.mrb[0].mxu0 %v3006
        %v3685 = vpop.f32.mrb[0].mxu0
        %v3686 = vadd.f32 %v3289, %v3685
        %v3687 = vpop.f32.mrb[0].mxu0
        %v3688 = vpop.f32.mrb[0].mxu0
        %v3689 = vadd.f32 %v3289, %v3688
        %v3690 = vpop.f32.mrb[0].mxu0
        %3691 = vmatprep.mubr.bf16.mxu0 %v3074
        %3692 = vmatmul.mubr.bf16.gmra.mrb[0].mxu0 %v3010
        %v3693 = vpop.f32.mrb[0].mxu0
        %v3694 = vadd.f32 %v3289, %v3693
        %v3695 = vpop.f32.mrb[0].mxu0
        %v3696 = vpop.f32.mrb[0].mxu0
        %v3697 = vadd.f32 %v3289, %v3696
        %v3698 = vpop.f32.mrb[0].mxu0
        %3699 = vmatprep.mubr.bf16.mxu0 %v3078
        %3700 = vmatmul.mubr.bf16.gmra.mrb[0].mxu0 %v3014
        %v3701 = vpop.f32.mrb[0].mxu0
        %v3702 = vadd.f32 %v3289, %v3701
        %v3703 = vpop.f32.mrb[0].mxu0
        %v3704 = vpop.f32.mrb[0].mxu0
        %v3705 = vadd.f32 %v3289, %v3704
        %v3706 = vpop.f32.mrb[0].mxu0
        %3707 = vmatprep.mubr.bf16.mxu0 %v3082
        %3708 = vmatmul.mubr.bf16.gmra.mrb[0].mxu0 %v3018
        %v3709 = vpop.f32.mrb[0].mxu0
        %v3710 = vadd.f32 %v3289, %v3709
        %v3711 = vpop.f32.mrb[0].mxu0
        %v3712 = vpop.f32.mrb[0].mxu0
        %v3713 = vadd.f32 %v3289, %v3712
        %v3714 = vpop.f32.mrb[0].mxu0
        %3715 = vdwg.mxu0
        %3716 = vmatprep.subr.bf16.mxu0 0
        %3717 = vmatpush1.bf16.msra.mxu0 %v3451
        %3718 = vmatprep.subr.bf16.mxu0 0
        %3719 = vmatpush1.bf16.msra.mxu0 %v3452
        %3720 = vmatprep.subr.bf16.mxu0 0
        %3721 = vmatpush1.bf16.msra.mxu0 %v3453
        %3722 = vmatprep.subr.bf16.mxu0 0
        %3723 = vmatpush1.bf16.msra.mxu0 %v3454
        %3724 = vmatprep.subr.bf16.mxu0 0
        %3725 = vmatpush1.bf16.msra.mxu0 %v3455
        %3726 = vmatprep.subr.bf16.mxu0 0
        %3727 = vmatpush1.bf16.msra.mxu0 %v3456
        %3728 = vmatprep.subr.bf16.mxu0 0
        %3729 = vmatpush1.bf16.msra.mxu0 %v3457
        %3730 = vmatprep.subr.bf16.mxu0 0
        %3731 = vmatpush1.bf16.msra.mxu0 %v3458
        %3732 = vmatprep.subr.bf16.mxu0 0
        %3733 = vmatpush1.bf16.msra.mxu0 %v3459
        %3734 = vmatprep.subr.bf16.mxu0 0
        %3735 = vmatpush1.bf16.msra.mxu0 %v3460
        %3736 = vmatprep.subr.bf16.mxu0 0
        %3737 = vmatpush1.bf16.msra.mxu0 %v3461
        %3738 = vmatprep.subr.bf16.mxu0 0
        %3739 = vmatpush1.bf16.msra.mxu0 %v3462
        %3740 = vmatprep.subr.bf16.mxu0 0
        %3741 = vmatpush1.bf16.msra.mxu0 %v3463
        %3742 = vmatprep.subr.bf16.mxu0 0
        %3743 = vmatpush1.bf16.msra.mxu0 %v3464
        %3744 = vmatprep.subr.bf16.mxu0 0
        %3745 = vmatpush1.bf16.msra.mxu0 %v3465
        %3746 = vmatprep.subr.bf16.mxu0 0
        %3747 = vmatpush1.bf16.msra.mxu0 %v3466
        %3748 = vmatprep.mubr.bf16.mxu0 %v3150
        %3749 = vmatmul.mubr.bf16.gmra.mrb[0].mxu0 %v3086
        %v3750 = vpop.f32.mrb[0].mxu0
        %v3751 = vadd.f32 %v3590, %v3750
        %v3752 = vpop.f32.mrb[0].mxu0
        %v3753 = vpop.f32.mrb[0].mxu0
        %v3754 = vadd.f32 %v3593, %v3753
        %v3755 = vpop.f32.mrb[0].mxu0
        %3756 = vmatprep.mubr.bf16.mxu0 %v3154
        %3757 = vmatmul.mubr.bf16.gmra.mrb[0].mxu0 %v3090
        %v3758 = vpop.f32.mrb[0].mxu0
        %v3759 = vadd.f32 %v3598, %v3758
        %v3760 = vpop.f32.mrb[0].mxu0
        %v3761 = vpop.f32.mrb[0].mxu0
        %v3762 = vadd.f32 %v3601, %v3761
        %v3763 = vpop.f32.mrb[0].mxu0
        %3764 = vmatprep.mubr.bf16.mxu0 %v3158
        %3765 = vmatmul.mubr.bf16.gmra.mrb[0].mxu0 %v3094
        %v3766 = vpop.f32.mrb[0].mxu0
        %v3767 = vadd.f32 %v3606, %v3766
        %v3768 = vpop.f32.mrb[0].mxu0
        %v3769 = vpop.f32.mrb[0].mxu0
        %v3770 = vadd.f32 %v3609, %v3769
        %v3771 = vpop.f32.mrb[0].mxu0
        %3772 = vmatprep.mubr.bf16.mxu0 %v3162
        %3773 = vmatmul.mubr.bf16.gmra.mrb[0].mxu0 %v3098
        %v3774 = vpop.f32.mrb[0].mxu0
        %v3775 = vadd.f32 %v3614, %v3774
        %v3776 = vpop.f32.mrb[0].mxu0
        %v3777 = vpop.f32.mrb[0].mxu0
        %v3778 = vadd.f32 %v3617, %v3777
        %v3779 = vpop.f32.mrb[0].mxu0
        %3780 = vmatprep.mubr.bf16.mxu0 %v3166
        %3781 = vmatmul.mubr.bf16.gmra.mrb[0].mxu0 %v3102
        %v3782 = vpop.f32.mrb[0].mxu0
        %v3783 = vadd.f32 %v3622, %v3782
        %v3784 = vpop.f32.mrb[0].mxu0
        %v3785 = vpop.f32.mrb[0].mxu0
        %v3786 = vadd.f32 %v3625, %v3785
        %v3787 = vpop.f32.mrb[0].mxu0
        %3788 = vmatprep.mubr.bf16.mxu0 %v3170
        %3789 = vmatmul.mubr.bf16.gmra.mrb[0].mxu0 %v3106
        %v3790 = vpop.f32.mrb[0].mxu0
        %v3791 = vadd.f32 %v3630, %v3790
        %v3792 = vpop.f32.mrb[0].mxu0
        %v3793 = vpop.f32.mrb[0].mxu0
        %v3794 = vadd.f32 %v3633, %v3793
        %v3795 = vpop.f32.mrb[0].mxu0
        %3796 = vmatprep.mubr.bf16.mxu0 %v3174
        %3797 = vmatmul.mubr.bf16.gmra.mrb[0].mxu0 %v3110
        %v3798 = vpop.f32.mrb[0].mxu0
        %v3799 = vadd.f32 %v3638, %v3798
        %v3800 = vpop.f32.mrb[0].mxu0
        %v3801 = vpop.f32.mrb[0].mxu0
        %v3802 = vadd.f32 %v3641, %v3801
        %v3803 = vpop.f32.mrb[0].mxu0
        %3804 = vmatprep.mubr.bf16.mxu0 %v3178
        %3805 = vmatmul.mubr.bf16.gmra.mrb[0].mxu0 %v3114
        %v3806 = vpop.f32.mrb[0].mxu0
        %v3807 = vadd.f32 %v3646, %v3806
        %v3808 = vpop.f32.mrb[0].mxu0
        %v3809 = vpop.f32.mrb[0].mxu0
        %v3810 = vadd.f32 %v3649, %v3809
        %v3811 = vpop.f32.mrb[0].mxu0
        %3812 = vmatprep.mubr.bf16.mxu0 %v3182
        %3813 = vmatmul.mubr.bf16.gmra.mrb[0].mxu0 %v3118
        %v3814 = vpop.f32.mrb[0].mxu0
        %v3815 = vadd.f32 %v3654, %v3814
        %v3816 = vpop.f32.mrb[0].mxu0
        %v3817 = vpop.f32.mrb[0].mxu0
        %v3818 = vadd.f32 %v3657, %v3817
        %v3819 = vpop.f32.mrb[0].mxu0
        %3820 = vmatprep.mubr.bf16.mxu0 %v3186
        %3821 = vmatmul.mubr.bf16.gmra.mrb[0].mxu0 %v3122
        %v3822 = vpop.f32.mrb[0].mxu0
        %v3823 = vadd.f32 %v3662, %v3822
        %v3824 = vpop.f32.mrb[0].mxu0
        %v3825 = vpop.f32.mrb[0].mxu0
        %v3826 = vadd.f32 %v3665, %v3825
        %v3827 = vpop.f32.mrb[0].mxu0
        %3828 = vmatprep.mubr.bf16.mxu0 %v3190
        %3829 = vmatmul.mubr.bf16.gmra.mrb[0].mxu0 %v3126
        %v3830 = vpop.f32.mrb[0].mxu0
        %v3831 = vadd.f32 %v3670, %v3830
        %v3832 = vpop.f32.mrb[0].mxu0
        %v3833 = vpop.f32.mrb[0].mxu0
        %v3834 = vadd.f32 %v3673, %v3833
        %v3835 = vpop.f32.mrb[0].mxu0
        %3836 = vmatprep.mubr.bf16.mxu0 %v3194
        %3837 = vmatmul.mubr.bf16.gmra.mrb[0].mxu0 %v3130
        %v3838 = vpop.f32.mrb[0].mxu0
        %v3839 = vadd.f32 %v3678, %v3838
        %v3840 = vpop.f32.mrb[0].mxu0
        %v3841 = vpop.f32.mrb[0].mxu0
        %v3842 = vadd.f32 %v3681, %v3841
        %v3843 = vpop.f32.mrb[0].mxu0
        %3844 = vmatprep.mubr.bf16.mxu0 %v3198
        %3845 = vmatmul.mubr.bf16.gmra.mrb[0].mxu0 %v3134
        %v3846 = vpop.f32.mrb[0].mxu0
        %v3847 = vadd.f32 %v3686, %v3846
        %v3848 = vpop.f32.mrb[0].mxu0
        %v3849 = vpop.f32.mrb[0].mxu0
        %v3850 = vadd.f32 %v3689, %v3849
        %v3851 = vpop.f32.mrb[0].mxu0
        %3852 = vmatprep.mubr.bf16.mxu0 %v3202
        %3853 = vmatmul.mubr.bf16.gmra.mrb[0].mxu0 %v3138
        %v3854 = vpop.f32.mrb[0].mxu0
        %v3855 = vadd.f32 %v3694, %v3854
        %v3856 = vpop.f32.mrb[0].mxu0
        %v3857 = vpop.f32.mrb[0].mxu0
        %v3858 = vadd.f32 %v3697, %v3857
        %v3859 = vpop.f32.mrb[0].mxu0
        %3860 = vmatprep.mubr.bf16.mxu0 %v3206
        %3861 = vmatmul.mubr.bf16.gmra.mrb[0].mxu0 %v3142
        %v3862 = vpop.f32.mrb[0].mxu0
        %v3863 = vadd.f32 %v3702, %v3862
        %v3864 = vpop.f32.mrb[0].mxu0
        %v3865 = vpop.f32.mrb[0].mxu0
        %v3866 = vadd.f32 %v3705, %v3865
        %v3867 = vpop.f32.mrb[0].mxu0
        %3868 = vmatprep.mubr.bf16.mxu0 %v3210
        %3869 = vmatmul.mubr.bf16.gmra.mrb[0].mxu0 %v3146
        %v3870 = vpop.f32.mrb[0].mxu0
        %v3871 = vadd.f32 %v3710, %v3870
        %v3872 = vpop.f32.mrb[0].mxu0
        %v3873 = vpop.f32.mrb[0].mxu0
        %v3874 = vadd.f32 %v3713, %v3873
        %v3875 = vpop.f32.mrb[0].mxu0
        %3876 = vdwg.mxu0
        %3877 = vmatprep.subr.bf16.mxu0 0
        %3878 = vmatpush1.bf16.msra.mxu0 %v3467
        %3879 = vmatprep.subr.bf16.mxu0 0
        %3880 = vmatpush1.bf16.msra.mxu0 %v3468
        %3881 = vmatprep.subr.bf16.mxu0 0
        %3882 = vmatpush1.bf16.msra.mxu0 %v3469
        %3883 = vmatprep.subr.bf16.mxu0 0
        %3884 = vmatpush1.bf16.msra.mxu0 %v3470
        %3885 = vmatprep.subr.bf16.mxu0 0
        %3886 = vmatpush1.bf16.msra.mxu0 0
        %3887 = vmatprep.subr.bf16.mxu0 0
        %3888 = vmatpush1.bf16.msra.mxu0 0
        %3889 = vmatprep.subr.bf16.mxu0 0
        %3890 = vmatpush1.bf16.msra.mxu0 0
        %3891 = vmatprep.subr.bf16.mxu0 0
        %3892 = vmatpush1.bf16.msra.mxu0 0
        %3893 = vmatprep.subr.bf16.mxu0 0
        %3894 = vmatpush1.bf16.msra.mxu0 0
        %3895 = vmatprep.subr.bf16.mxu0 0
        %3896 = vmatpush1.bf16.msra.mxu0 0
        %3897 = vmatprep.subr.bf16.mxu0 0
        %3898 = vmatpush1.bf16.msra.mxu0 0
        %3899 = vmatprep.subr.bf16.mxu0 0
        %3900 = vmatpush1.bf16.msra.mxu0 0
        %3901 = vmatprep.subr.bf16.mxu0 0
        %3902 = vmatpush1.bf16.msra.mxu0 0
        %3903 = vmatprep.subr.bf16.mxu0 0
        %3904 = vmatpush1.bf16.msra.mxu0 0
        %3905 = vmatprep.subr.bf16.mxu0 0
        %3906 = vmatpush1.bf16.msra.mxu0 0
        %3907 = vmatprep.subr.bf16.mxu0 0
        %3908 = vmatpush1.bf16.msra.mxu0 0
        %3909 = vmatprep.mubr.bf16.mxu0 0
        %3910 = vmatmul.mubr.bf16.gmra.mrb[0].mxu0 %v3508
        %v3911 = vpop.f32.mrb[0].mxu0
        %v3912 = vadd.f32 %v3751, %v3911
        %v3913 = vpop.f32.mrb[0].mxu0
        %v3914 = vpop.f32.mrb[0].mxu0
        %v3915 = vadd.f32 %v3754, %v3914
        %v3916 = vpop.f32.mrb[0].mxu0
        %3917 = vmatprep.mubr.bf16.mxu0 0
        %3918 = vmatmul.mubr.bf16.gmra.mrb[0].mxu0 %v3511
        %v3919 = vpop.f32.mrb[0].mxu0
        %v3920 = vadd.f32 %v3759, %v3919
        %v3921 = vpop.f32.mrb[0].mxu0
        %v3922 = vpop.f32.mrb[0].mxu0
        %v3923 = vadd.f32 %v3762, %v3922
        %v3924 = vpop.f32.mrb[0].mxu0
        %3925 = vmatprep.mubr.bf16.mxu0 0
        %3926 = vmatmul.mubr.bf16.gmra.mrb[0].mxu0 %v3514
        %v3927 = vpop.f32.mrb[0].mxu0
        %v3928 = vadd.f32 %v3767, %v3927
        %v3929 = vpop.f32.mrb[0].mxu0
        %v3930 = vpop.f32.mrb[0].mxu0
        %v3931 = vadd.f32 %v3770, %v3930
        %v3932 = vpop.f32.mrb[0].mxu0
        %3933 = vmatprep.mubr.bf16.mxu0 0
        %3934 = vmatmul.mubr.bf16.gmra.mrb[0].mxu0 %v3517
        %v3935 = vpop.f32.mrb[0].mxu0
        %v3936 = vadd.f32 %v3775, %v3935
        %v3937 = vpop.f32.mrb[0].mxu0
        %v3938 = vpop.f32.mrb[0].mxu0
        %v3939 = vadd.f32 %v3778, %v3938
        %v3940 = vpop.f32.mrb[0].mxu0
        %3941 = vmatprep.mubr.bf16.mxu0 0
        %3942 = vmatmul.mubr.bf16.gmra.mrb[0].mxu0 %v3520
        %v3943 = vpop.f32.mrb[0].mxu0
        %v3944 = vadd.f32 %v3783, %v3943
        %v3945 = vpop.f32.mrb[0].mxu0
        %v3946 = vpop.f32.mrb[0].mxu0
        %v3947 = vadd.f32 %v3786, %v3946
        %v3948 = vpop.f32.mrb[0].mxu0
        %3949 = vmatprep.mubr.bf16.mxu0 0
        %3950 = vmatmul.mubr.bf16.gmra.mrb[0].mxu0 %v3523
        %v3951 = vpop.f32.mrb[0].mxu0
        %v3952 = vadd.f32 %v3791, %v3951
        %v3953 = vpop.f32.mrb[0].mxu0
        %v3954 = vpop.f32.mrb[0].mxu0
        %v3955 = vadd.f32 %v3794, %v3954
        %v3956 = vpop.f32.mrb[0].mxu0
        %3957 = vmatprep.mubr.bf16.mxu0 0
        %3958 = vmatmul.mubr.bf16.gmra.mrb[0].mxu0 %v3526
        %v3959 = vpop.f32.mrb[0].mxu0
        %v3960 = vadd.f32 %v3799, %v3959
        %v3961 = vpop.f32.mrb[0].mxu0
        %v3962 = vpop.f32.mrb[0].mxu0
        %v3963 = vadd.f32 %v3802, %v3962
        %v3964 = vpop.f32.mrb[0].mxu0
        %3965 = vmatprep.mubr.bf16.mxu0 0
        %3966 = vmatmul.mubr.bf16.gmra.mrb[0].mxu0 %v3529
        %v3967 = vpop.f32.mrb[0].mxu0
        %v3968 = vadd.f32 %v3807, %v3967
        %v3969 = vpop.f32.mrb[0].mxu0
        %v3970 = vpop.f32.mrb[0].mxu0
        %v3971 = vadd.f32 %v3810, %v3970
        %v3972 = vpop.f32.mrb[0].mxu0
        %3973 = vmatprep.mubr.bf16.mxu0 0
        %3974 = vmatmul.mubr.bf16.gmra.mrb[0].mxu0 %v3532
        %v3975 = vpop.f32.mrb[0].mxu0
        %v3976 = vadd.f32 %v3815, %v3975
        %v3977 = vpop.f32.mrb[0].mxu0
        %v3978 = vpop.f32.mrb[0].mxu0
        %v3979 = vadd.f32 %v3818, %v3978
        %v3980 = vpop.f32.mrb[0].mxu0
        %3981 = vmatprep.mubr.bf16.mxu0 0
        %3982 = vmatmul.mubr.bf16.gmra.mrb[0].mxu0 %v3535
        %v3983 = vpop.f32.mrb[0].mxu0
        %v3984 = vadd.f32 %v3823, %v3983
        %v3985 = vpop.f32.mrb[0].mxu0
        %v3986 = vpop.f32.mrb[0].mxu0
        %v3987 = vadd.f32 %v3826, %v3986
        %v3988 = vpop.f32.mrb[0].mxu0
        %3989 = vmatprep.mubr.bf16.mxu0 0
        %3990 = vmatmul.mubr.bf16.gmra.mrb[0].mxu0 %v3538
        %v3991 = vpop.f32.mrb[0].mxu0
        %v3992 = vadd.f32 %v3831, %v3991
        %v3993 = vpop.f32.mrb[0].mxu0
        %v3994 = vpop.f32.mrb[0].mxu0
        %v3995 = vadd.f32 %v3834, %v3994
        %v3996 = vpop.f32.mrb[0].mxu0
        %3997 = vmatprep.mubr.bf16.mxu0 0
        %3998 = vmatmul.mubr.bf16.gmra.mrb[0].mxu0 %v3541
        %v3999 = vpop.f32.mrb[0].mxu0
        %v4000 = vadd.f32 %v3839, %v3999
        %v4001 = vpop.f32.mrb[0].mxu0
        %v4002 = vpop.f32.mrb[0].mxu0
        %v4003 = vadd.f32 %v3842, %v4002
        %v4004 = vpop.f32.mrb[0].mxu0
        %4005 = vmatprep.mubr.bf16.mxu0 0
        %4006 = vmatmul.mubr.bf16.gmra.mrb[0].mxu0 %v3544
        %v4007 = vpop.f32.mrb[0].mxu0
        %v4008 = vadd.f32 %v3847, %v4007
        %v4009 = vpop.f32.mrb[0].mxu0
        %v4010 = vpop.f32.mrb[0].mxu0
        %v4011 = vadd.f32 %v3850, %v4010
        %v4012 = vpop.f32.mrb[0].mxu0
        %4013 = vmatprep.mubr.bf16.mxu0 0
        %4014 = vmatmul.mubr.bf16.gmra.mrb[0].mxu0 %v3547
        %v4015 = vpop.f32.mrb[0].mxu0
        %v4016 = vadd.f32 %v3855, %v4015
        %v4017 = vpop.f32.mrb[0].mxu0
        %v4018 = vpop.f32.mrb[0].mxu0
        %v4019 = vadd.f32 %v3858, %v4018
        %v4020 = vpop.f32.mrb[0].mxu0
        %4021 = vmatprep.mubr.bf16.mxu0 0
        %4022 = vmatmul.mubr.bf16.gmra.mrb[0].mxu0 %v3550
        %v4023 = vpop.f32.mrb[0].mxu0
        %v4024 = vadd.f32 %v3863, %v4023
        %v4025 = vpop.f32.mrb[0].mxu0
        %v4026 = vpop.f32.mrb[0].mxu0
        %v4027 = vadd.f32 %v3866, %v4026
        %v4028 = vpop.f32.mrb[0].mxu0
        %4029 = vmatprep.mubr.bf16.mxu0 0
        %4030 = vmatmul.mubr.bf16.gmra.mrb[0].mxu0 %v3553
        %v4031 = vpop.f32.mrb[0].mxu0
        %v4032 = vadd.f32 %v3871, %v4031
        %v4033 = vpop.f32.mrb[0].mxu0
        %v4034 = vpop.f32.mrb[0].mxu0
        %v4035 = vadd.f32 %v3874, %v4034
        %v4036 = vpop.f32.mrb[0].mxu0
        %4037 = vdwg.mxu0
        %vm4038 = vcmp.gt.f32.partialorder %v3912, 0.0
        %vm4039 = vcmp.gt.f32.partialorder %v3915, 0.0
        %vm4040 = vcmp.gt.f32.partialorder %v3920, 0.0
        %vm4041 = vcmp.gt.f32.partialorder %v3923, 0.0
        %vm4042 = vcmp.gt.f32.partialorder %v3928, 0.0
        %vm4043 = vcmp.gt.f32.partialorder %v3931, 0.0
        %vm4044 = vcmp.gt.f32.partialorder %v3936, 0.0
        %vm4045 = vcmp.gt.f32.partialorder %v3939, 0.0
        %vm4046 = vcmp.gt.f32.partialorder %v3944, 0.0
        %vm4047 = vcmp.gt.f32.partialorder %v3947, 0.0
        %vm4048 = vcmp.gt.f32.partialorder %v3952, 0.0
        %vm4049 = vcmp.gt.f32.partialorder %v3955, 0.0
        %vm4050 = vcmp.gt.f32.partialorder %v3960, 0.0
        %vm4051 = vcmp.gt.f32.partialorder %v3963, 0.0
        %vm4052 = vcmp.gt.f32.partialorder %v3968, 0.0
        %vm4053 = vcmp.gt.f32.partialorder %v3971, 0.0
        %vm4054 = vcmp.gt.f32.partialorder %v3976, 0.0
        %vm4055 = vcmp.gt.f32.partialorder %v3979, 0.0
        %vm4056 = vcmp.gt.f32.partialorder %v3984, 0.0
        %vm4057 = vcmp.gt.f32.partialorder %v3987, 0.0
        %vm4058 = vcmp.gt.f32.partialorder %v3992, 0.0
        %vm4059 = vcmp.gt.f32.partialorder %v3995, 0.0
        %vm4060 = vcmp.gt.f32.partialorder %v4000, 0.0
        %vm4061 = vcmp.gt.f32.partialorder %v4003, 0.0
        %vm4062 = vcmp.gt.f32.partialorder %v4008, 0.0
        %vm4063 = vcmp.gt.f32.partialorder %v4011, 0.0
        %vm4064 = vcmp.gt.f32.partialorder %v4016, 0.0
        %vm4065 = vcmp.gt.f32.partialorder %v4019, 0.0
        %vm4066 = vcmp.gt.f32.partialorder %v4024, 0.0
        %vm4067 = vcmp.gt.f32.partialorder %v4027, 0.0
        %vm4068 = vcmp.gt.f32.partialorder %v4032, 0.0
        %vm4069 = vcmp.gt.f32.partialorder %v4035, 0.0
        %v4070 = vmul.f32 %v3912, 0.1
        %v4071 = vmul.f32 %v3915, 0.1
        %v4072 = vmul.f32 %v3920, 0.1
        %v4073 = vmul.f32 %v3923, 0.1
        %v4074 = vmul.f32 %v3928, 0.1
        %v4075 = vmul.f32 %v3931, 0.1
        %v4076 = vmul.f32 %v3936, 0.1
        %v4077 = vmul.f32 %v3939, 0.1
        %v4078 = vmul.f32 %v3944, 0.1
        %v4079 = vmul.f32 %v3947, 0.1
        %v4080 = vmul.f32 %v3952, 0.1
        %v4081 = vmul.f32 %v3955, 0.1
        %v4082 = vmul.f32 %v3960, 0.1
        %v4083 = vmul.f32 %v3963, 0.1
        %v4084 = vmul.f32 %v3968, 0.1
        %v4085 = vmul.f32 %v3971, 0.1
        %v4086 = vmul.f32 %v3976, 0.1
        %v4087 = vmul.f32 %v3979, 0.1
        %v4088 = vmul.f32 %v3984, 0.1
        %v4089 = vmul.f32 %v3987, 0.1
        %v4090 = vmul.f32 %v3992, 0.1
        %v4091 = vmul.f32 %v3995, 0.1
        %v4092 = vmul.f32 %v4000, 0.1
        %v4093 = vmul.f32 %v4003, 0.1
        %v4094 = vmul.f32 %v4008, 0.1
        %v4095 = vmul.f32 %v4011, 0.1
        %v4096 = vmul.f32 %v4016, 0.1
        %v4097 = vmul.f32 %v4019, 0.1
        %v4098 = vmul.f32 %v4024, 0.1
        %v4099 = vmul.f32 %v4027, 0.1
        %v4100 = vmul.f32 %v4032, 0.1
        %v4101 = vmul.f32 %v4035, 0.1
        %v4102 = vsel %vm4038, %v3912, %v4070
        %v4103 = vsel %vm4039, %v3915, %v4071
        %v4104 = vsel %vm4040, %v3920, %v4072
        %v4105 = vsel %vm4041, %v3923, %v4073
        %v4106 = vsel %vm4042, %v3928, %v4074
        %v4107 = vsel %vm4043, %v3931, %v4075
        %v4108 = vsel %vm4044, %v3936, %v4076
        %v4109 = vsel %vm4045, %v3939, %v4077
        %v4110 = vsel %vm4046, %v3944, %v4078
        %v4111 = vsel %vm4047, %v3947, %v4079
        %v4112 = vsel %vm4048, %v3952, %v4080
        %v4113 = vsel %vm4049, %v3955, %v4081
        %v4114 = vsel %vm4050, %v3960, %v4082
        %v4115 = vsel %vm4051, %v3963, %v4083
        %v4116 = vsel %vm4052, %v3968, %v4084
        %v4117 = vsel %vm4053, %v3971, %v4085
        %v4118 = vsel %vm4054, %v3976, %v4086
        %v4119 = vsel %vm4055, %v3979, %v4087
        %v4120 = vsel %vm4056, %v3984, %v4088
        %v4121 = vsel %vm4057, %v3987, %v4089
        %v4122 = vsel %vm4058, %v3992, %v4090
        %v4123 = vsel %vm4059, %v3995, %v4091
        %v4124 = vsel %vm4060, %v4000, %v4092
        %v4125 = vsel %vm4061, %v4003, %v4093
        %v4126 = vsel %vm4062, %v4008, %v4094
        %v4127 = vsel %vm4063, %v4011, %v4095
        %v4128 = vsel %vm4064, %v4016, %v4096
        %v4129 = vsel %vm4065, %v4019, %v4097
        %v4130 = vsel %vm4066, %v4024, %v4098
        %v4131 = vsel %vm4067, %v4027, %v4099
        %v4132 = vsel %vm4068, %v4032, %v4100
        %v4133 = vsel %vm4069, %v4035, %v4101
        %v4134 = vpack.c.bf16 %v4103, %v4102
        %v4135 = vpack.c.bf16 %v4105, %v4104
        %v4136 = vpack.c.bf16 %v4107, %v4106
        %v4137 = vpack.c.bf16 %v4109, %v4108
        %v4138 = vpack.c.bf16 %v4111, %v4110
        %v4139 = vpack.c.bf16 %v4113, %v4112
        %v4140 = vpack.c.bf16 %v4115, %v4114
        %v4141 = vpack.c.bf16 %v4117, %v4116
        %v4142 = vpack.c.bf16 %v4119, %v4118
        %v4143 = vpack.c.bf16 %v4121, %v4120
        %v4144 = vpack.c.bf16 %v4123, %v4122
        %v4145 = vpack.c.bf16 %v4125, %v4124
        %v4146 = vpack.c.bf16 %v4127, %v4126
        %v4147 = vpack.c.bf16 %v4129, %v4128
        %v4148 = vpack.c.bf16 %v4131, %v4130
        %v4149 = vpack.c.bf16 %v4133, %v4132
        %v4166 = vunpack.c.l.b16 %v4134
        %v4167 = vunpack.c.h.b16 %v4134
        %v4168 = vunpack.c.l.b16 %v4135
        %v4169 = vunpack.c.h.b16 %v4135
        %v4170 = vunpack.c.l.b16 %v4136
        %v4171 = vunpack.c.h.b16 %v4136
        %v4172 = vunpack.c.l.b16 %v4137
        %v4173 = vunpack.c.h.b16 %v4137
        %v4174 = vunpack.c.l.b16 %v4138
        %v4175 = vunpack.c.h.b16 %v4138
        %v4176 = vunpack.c.l.b16 %v4139
        %v4177 = vunpack.c.h.b16 %v4139
        %v4178 = vunpack.c.l.b16 %v4140
        %v4179 = vunpack.c.h.b16 %v4140
        %v4180 = vunpack.c.l.b16 %v4141
        %v4181 = vunpack.c.h.b16 %v4141
        %v4182 = vunpack.c.l.b16 %v4142
        %v4183 = vunpack.c.h.b16 %v4142
        %v4184 = vunpack.c.l.b16 %v4143
        %v4185 = vunpack.c.h.b16 %v4143
        %v4186 = vunpack.c.l.b16 %v4144
        %v4187 = vunpack.c.h.b16 %v4144
        %v4188 = vunpack.c.l.b16 %v4145
        %v4189 = vunpack.c.h.b16 %v4145
        %v4190 = vunpack.c.l.b16 %v4146
        %v4191 = vunpack.c.h.b16 %v4146
        %v4192 = vunpack.c.l.b16 %v4147
        %v4193 = vunpack.c.h.b16 %v4147
        %v4194 = vunpack.c.l.b16 %v4148
        %v4195 = vunpack.c.h.b16 %v4148
        %v4196 = vunpack.c.l.b16 %v4149
        %v4197 = vunpack.c.h.b16 %v4149
        %v4198 = vpack.c.b16 %v4166, %v4166
        %v4199 = vpack.c.b16 %v4167, %v4167
        %v4200 = vpack.c.b16 %v4168, %v4168
        %v4201 = vpack.c.b16 %v4169, %v4169
        %v4202 = vpack.c.b16 %v4170, %v4170
        %v4203 = vpack.c.b16 %v4171, %v4171
        %v4204 = vpack.c.b16 %v4172, %v4172
        %v4205 = vpack.c.b16 %v4173, %v4173
        %v4206 = vpack.c.b16 %v4174, %v4174
        %v4207 = vpack.c.b16 %v4175, %v4175
        %v4208 = vpack.c.b16 %v4176, %v4176
        %v4209 = vpack.c.b16 %v4177, %v4177
        %v4210 = vpack.c.b16 %v4178, %v4178
        %v4211 = vpack.c.b16 %v4179, %v4179
        %v4212 = vpack.c.b16 %v4180, %v4180
        %v4213 = vpack.c.b16 %v4181, %v4181
        %v4214 = vpack.c.b16 %v4182, %v4182
        %v4215 = vpack.c.b16 %v4183, %v4183
        %v4216 = vpack.c.b16 %v4184, %v4184
        %v4217 = vpack.c.b16 %v4185, %v4185
        %v4218 = vpack.c.b16 %v4186, %v4186
        %v4219 = vpack.c.b16 %v4187, %v4187
        %v4220 = vpack.c.b16 %v4188, %v4188
        %v4221 = vpack.c.b16 %v4189, %v4189
        %v4222 = vpack.c.b16 %v4190, %v4190
        %v4223 = vpack.c.b16 %v4191, %v4191
        %v4224 = vpack.c.b16 %v4192, %v4192
        %v4225 = vpack.c.b16 %v4193, %v4193
        %v4226 = vpack.c.b16 %v4194, %v4194
        %v4227 = vpack.c.b16 %v4195, %v4195
        %v4228 = vpack.c.b16 %v4196, %v4196
        %v4229 = vpack.c.b16 %v4197, %v4197
        %vm4230 = vsmask.f32 4368
        %vm4231 = vmor %vm288, %vm4230
        %v4233 = vshrl.u32 %v4198, 16
        %v4235 = vrot.slane %v4233, 7
        %v4236 = vshll.u32 %v4198, 16
        %v4238 = vor.u32 %v4235, %v4236
        %v4239 = vrot.slane %v4235, 4
        %v4241 = vshrl.u32 %v4199, 16
        %v4243 = vrot.slane %v4241, 7
        %v4244 = vshll.u32 %v4199, 16
        %v4246 = vor.u32 %v4243, %v4244
        %v4247 = vsel %vm4231, %v4239, %v4246
        %v4248 = vrot.slane %v4243, 4
        %v4250 = vshrl.u32 %v4200, 16
        %v4252 = vrot.slane %v4250, 7
        %v4253 = vshll.u32 %v4200, 16
        %v4255 = vor.u32 %v4252, %v4253
        %v4256 = vrot.slane %v4252, 4
        %v4258 = vshrl.u32 %v4201, 16
        %v4260 = vrot.slane %v4258, 7
        %v4261 = vshll.u32 %v4201, 16
        %v4263 = vor.u32 %v4260, %v4261
        %v4264 = vsel %vm4231, %v4256, %v4263
        %v4265 = vrot.slane %v4260, 4
        %v4267 = vshrl.u32 %v4202, 16
        %v4269 = vrot.slane %v4267, 7
        %v4270 = vshll.u32 %v4202, 16
        %v4272 = vor.u32 %v4269, %v4270
        %v4273 = vrot.slane %v4269, 4
        %v4275 = vshrl.u32 %v4203, 16
        %v4277 = vrot.slane %v4275, 7
        %v4278 = vshll.u32 %v4203, 16
        %v4280 = vor.u32 %v4277, %v4278
        %v4281 = vsel %vm4231, %v4273, %v4280
        %v4282 = vrot.slane %v4277, 4
        %v4284 = vshrl.u32 %v4204, 16
        %v4286 = vrot.slane %v4284, 7
        %v4287 = vshll.u32 %v4204, 16
        %v4289 = vor.u32 %v4286, %v4287
        %v4290 = vrot.slane %v4286, 4
        %v4292 = vshrl.u32 %v4205, 16
        %v4294 = vrot.slane %v4292, 7
        %v4295 = vshll.u32 %v4205, 16
        %v4297 = vor.u32 %v4294, %v4295
        %v4298 = vsel %vm4231, %v4290, %v4297
        %v4299 = vrot.slane %v4294, 4
        %v4301 = vshrl.u32 %v4206, 16
        %v4303 = vrot.slane %v4301, 7
        %v4304 = vshll.u32 %v4206, 16
        %v4306 = vor.u32 %v4303, %v4304
        %v4307 = vrot.slane %v4303, 4
        %v4309 = vshrl.u32 %v4207, 16
        %v4311 = vrot.slane %v4309, 7
        %v4312 = vshll.u32 %v4207, 16
        %v4314 = vor.u32 %v4311, %v4312
        %v4315 = vsel %vm4231, %v4307, %v4314
        %v4316 = vrot.slane %v4311, 4
        %v4318 = vshrl.u32 %v4208, 16
        %v4320 = vrot.slane %v4318, 7
        %v4321 = vshll.u32 %v4208, 16
        %v4323 = vor.u32 %v4320, %v4321
        %v4324 = vrot.slane %v4320, 4
        %v4326 = vshrl.u32 %v4209, 16
        %v4328 = vrot.slane %v4326, 7
        %v4329 = vshll.u32 %v4209, 16
        %v4331 = vor.u32 %v4328, %v4329
        %v4332 = vsel %vm4231, %v4324, %v4331
        %v4333 = vrot.slane %v4328, 4
        %v4335 = vshrl.u32 %v4210, 16
        %v4337 = vrot.slane %v4335, 7
        %v4338 = vshll.u32 %v4210, 16
        %v4340 = vor.u32 %v4337, %v4338
        %v4341 = vrot.slane %v4337, 4
        %v4343 = vshrl.u32 %v4211, 16
        %v4345 = vrot.slane %v4343, 7
        %v4346 = vshll.u32 %v4211, 16
        %v4348 = vor.u32 %v4345, %v4346
        %v4349 = vsel %vm4231, %v4341, %v4348
        %v4350 = vrot.slane %v4345, 4
        %v4352 = vshrl.u32 %v4212, 16
        %v4354 = vrot.slane %v4352, 7
        %v4355 = vshll.u32 %v4212, 16
        %v4357 = vor.u32 %v4354, %v4355
        %v4358 = vrot.slane %v4354, 4
        %v4360 = vshrl.u32 %v4213, 16
        %v4362 = vrot.slane %v4360, 7
        %v4363 = vshll.u32 %v4213, 16
        %v4365 = vor.u32 %v4362, %v4363
        %v4366 = vsel %vm4231, %v4358, %v4365
        %v4367 = vrot.slane %v4362, 4
        %v4369 = vshrl.u32 %v4214, 16
        %v4371 = vrot.slane %v4369, 7
        %v4372 = vshll.u32 %v4214, 16
        %v4374 = vor.u32 %v4371, %v4372
        %v4375 = vrot.slane %v4371, 4
        %v4377 = vshrl.u32 %v4215, 16
        %v4379 = vrot.slane %v4377, 7
        %v4380 = vshll.u32 %v4215, 16
        %v4382 = vor.u32 %v4379, %v4380
        %v4383 = vsel %vm4231, %v4375, %v4382
        %v4384 = vrot.slane %v4379, 4
        %v4386 = vshrl.u32 %v4216, 16
        %v4388 = vrot.slane %v4386, 7
        %v4389 = vshll.u32 %v4216, 16
        %v4391 = vor.u32 %v4388, %v4389
        %v4392 = vrot.slane %v4388, 4
        %v4394 = vshrl.u32 %v4217, 16
        %v4396 = vrot.slane %v4394, 7
        %v4397 = vshll.u32 %v4217, 16
        %v4399 = vor.u32 %v4396, %v4397
        %v4400 = vsel %vm4231, %v4392, %v4399
        %v4401 = vrot.slane %v4396, 4
        %v4403 = vshrl.u32 %v4218, 16
        %v4405 = vrot.slane %v4403, 7
        %v4406 = vshll.u32 %v4218, 16
        %v4408 = vor.u32 %v4405, %v4406
        %v4409 = vrot.slane %v4405, 4
        %v4411 = vshrl.u32 %v4219, 16
        %v4413 = vrot.slane %v4411, 7
        %v4414 = vshll.u32 %v4219, 16
        %v4416 = vor.u32 %v4413, %v4414
        %v4417 = vsel %vm4231, %v4409, %v4416
        %v4418 = vrot.slane %v4413, 4
        %v4420 = vshrl.u32 %v4220, 16
        %v4422 = vrot.slane %v4420, 7
        %v4423 = vshll.u32 %v4220, 16
        %v4425 = vor.u32 %v4422, %v4423
        %v4426 = vrot.slane %v4422, 4
        %v4428 = vshrl.u32 %v4221, 16
        %v4430 = vrot.slane %v4428, 7
        %v4431 = vshll.u32 %v4221, 16
        %v4433 = vor.u32 %v4430, %v4431
        %v4434 = vsel %vm4231, %v4426, %v4433
        %v4435 = vrot.slane %v4430, 4
        %v4437 = vshrl.u32 %v4222, 16
        %v4439 = vrot.slane %v4437, 7
        %v4440 = vshll.u32 %v4222, 16
        %v4442 = vor.u32 %v4439, %v4440
        %v4443 = vrot.slane %v4439, 4
        %v4445 = vshrl.u32 %v4223, 16
        %v4447 = vrot.slane %v4445, 7
        %v4448 = vshll.u32 %v4223, 16
        %v4450 = vor.u32 %v4447, %v4448
        %v4451 = vsel %vm4231, %v4443, %v4450
        %v4452 = vrot.slane %v4447, 4
        %v4454 = vshrl.u32 %v4224, 16
        %v4456 = vrot.slane %v4454, 7
        %v4457 = vshll.u32 %v4224, 16
        %v4459 = vor.u32 %v4456, %v4457
        %v4460 = vrot.slane %v4456, 4
        %v4462 = vshrl.u32 %v4225, 16
        %v4464 = vrot.slane %v4462, 7
        %v4465 = vshll.u32 %v4225, 16
        %v4467 = vor.u32 %v4464, %v4465
        %v4468 = vsel %vm4231, %v4460, %v4467
        %v4469 = vrot.slane %v4464, 4
        %v4471 = vshrl.u32 %v4226, 16
        %v4473 = vrot.slane %v4471, 7
        %v4474 = vshll.u32 %v4226, 16
        %v4476 = vor.u32 %v4473, %v4474
        %v4477 = vrot.slane %v4473, 4
        %v4479 = vshrl.u32 %v4227, 16
        %v4481 = vrot.slane %v4479, 7
        %v4482 = vshll.u32 %v4227, 16
        %v4484 = vor.u32 %v4481, %v4482
        %v4485 = vsel %vm4231, %v4477, %v4484
        %v4486 = vrot.slane %v4481, 4
        %v4488 = vshrl.u32 %v4228, 16
        %v4490 = vrot.slane %v4488, 7
        %v4491 = vshll.u32 %v4228, 16
        %v4493 = vor.u32 %v4490, %v4491
        %v4494 = vrot.slane %v4490, 4
        %v4496 = vshrl.u32 %v4229, 16
        %v4498 = vrot.slane %v4496, 7
        %v4499 = vshll.u32 %v4229, 16
        %v4501 = vor.u32 %v4498, %v4499
        %v4502 = vsel %vm4231, %v4494, %v4501
        %v4503 = vrot.slane %v4498, 4
        %4504 = vrot.lane.b32.xlu0 %v4238, 96
        %v4505 = vpop.permute.xlu0 %4504
        %4506 = vrot.lane.b32.xlu0 %v4247, 96
        %v4507 = vpop.permute.xlu0 %4506
        %4508 = vrot.lane.b32.xlu0 %v4248, 96
        %v4509 = vpop.permute.xlu0 %4508
        %4510 = vrot.lane.b32.xlu0 %v4255, 96
        %v4511 = vpop.permute.xlu0 %4510
        %4512 = vrot.lane.b32.xlu0 %v4264, 96
        %v4513 = vpop.permute.xlu0 %4512
        %4514 = vrot.lane.b32.xlu0 %v4265, 96
        %v4515 = vpop.permute.xlu0 %4514
        %4516 = vrot.lane.b32.xlu0 %v4272, 96
        %v4517 = vpop.permute.xlu0 %4516
        %4518 = vrot.lane.b32.xlu0 %v4281, 96
        %v4519 = vpop.permute.xlu0 %4518
        %4520 = vrot.lane.b32.xlu0 %v4282, 96
        %v4521 = vpop.permute.xlu0 %4520
        %4522 = vrot.lane.b32.xlu0 %v4289, 96
        %v4523 = vpop.permute.xlu0 %4522
        %4524 = vrot.lane.b32.xlu0 %v4298, 96
        %v4525 = vpop.permute.xlu0 %4524
        %4526 = vrot.lane.b32.xlu0 %v4299, 96
        %v4527 = vpop.permute.xlu0 %4526
        %4528 = vrot.lane.b32.xlu0 %v4306, 96
        %v4529 = vpop.permute.xlu0 %4528
        %4530 = vrot.lane.b32.xlu0 %v4315, 96
        %v4531 = vpop.permute.xlu0 %4530
        %4532 = vrot.lane.b32.xlu0 %v4316, 96
        %v4533 = vpop.permute.xlu0 %4532
        %4534 = vrot.lane.b32.xlu0 %v4323, 96
        %v4535 = vpop.permute.xlu0 %4534
        %4536 = vrot.lane.b32.xlu0 %v4332, 96
        %v4537 = vpop.permute.xlu0 %4536
        %4538 = vrot.lane.b32.xlu0 %v4333, 96
        %v4539 = vpop.permute.xlu0 %4538
        %4540 = vrot.lane.b32.xlu0 %v4340, 96
        %v4541 = vpop.permute.xlu0 %4540
        %4542 = vrot.lane.b32.xlu0 %v4349, 96
        %v4543 = vpop.permute.xlu0 %4542
        %4544 = vrot.lane.b32.xlu0 %v4350, 96
        %v4545 = vpop.permute.xlu0 %4544
        %4546 = vrot.lane.b32.xlu0 %v4357, 96
        %v4547 = vpop.permute.xlu0 %4546
        %4548 = vrot.lane.b32.xlu0 %v4366, 96
        %v4549 = vpop.permute.xlu0 %4548
        %4550 = vrot.lane.b32.xlu0 %v4367, 96
        %v4551 = vpop.permute.xlu0 %4550
        %4552 = vrot.lane.b32.xlu0 %v4374, 96
        %v4553 = vpop.permute.xlu0 %4552
        %4554 = vrot.lane.b32.xlu0 %v4383, 96
        %v4555 = vpop.permute.xlu0 %4554
        %4556 = vrot.lane.b32.xlu0 %v4384, 96
        %v4557 = vpop.permute.xlu0 %4556
        %4558 = vrot.lane.b32.xlu0 %v4391, 96
        %v4559 = vpop.permute.xlu0 %4558
        %4560 = vrot.lane.b32.xlu0 %v4400, 96
        %v4561 = vpop.permute.xlu0 %4560
        %4562 = vrot.lane.b32.xlu0 %v4401, 96
        %v4563 = vpop.permute.xlu0 %4562
        %4564 = vrot.lane.b32.xlu0 %v4408, 96
        %v4565 = vpop.permute.xlu0 %4564
        %4566 = vrot.lane.b32.xlu0 %v4417, 96
        %v4567 = vpop.permute.xlu0 %4566
        %4568 = vrot.lane.b32.xlu0 %v4418, 96
        %v4569 = vpop.permute.xlu0 %4568
        %4570 = vrot.lane.b32.xlu0 %v4425, 96
        %v4571 = vpop.permute.xlu0 %4570
        %4572 = vrot.lane.b32.xlu0 %v4434, 96
        %v4573 = vpop.permute.xlu0 %4572
        %4574 = vrot.lane.b32.xlu0 %v4435, 96
        %v4575 = vpop.permute.xlu0 %4574
        %4576 = vrot.lane.b32.xlu0 %v4442, 96
        %v4577 = vpop.permute.xlu0 %4576
        %4578 = vrot.lane.b32.xlu0 %v4451, 96
        %v4579 = vpop.permute.xlu0 %4578
        %4580 = vrot.lane.b32.xlu0 %v4452, 96
        %v4581 = vpop.permute.xlu0 %4580
        %4582 = vrot.lane.b32.xlu0 %v4459, 96
        %v4583 = vpop.permute.xlu0 %4582
        %4584 = vrot.lane.b32.xlu0 %v4468, 96
        %v4585 = vpop.permute.xlu0 %4584
        %4586 = vrot.lane.b32.xlu0 %v4469, 96
        %v4587 = vpop.permute.xlu0 %4586
        %4588 = vrot.lane.b32.xlu0 %v4476, 96
        %v4589 = vpop.permute.xlu0 %4588
        %4590 = vrot.lane.b32.xlu0 %v4485, 96
        %v4591 = vpop.permute.xlu0 %4590
        %4592 = vrot.lane.b32.xlu0 %v4486, 96
        %v4593 = vpop.permute.xlu0 %4592
        %4594 = vrot.lane.b32.xlu0 %v4493, 96
        %v4595 = vpop.permute.xlu0 %4594
        %4596 = vrot.lane.b32.xlu0 %v4502, 96
        %v4597 = vpop.permute.xlu0 %4596
        %4598 = vrot.lane.b32.xlu0 %v4503, 96
        %v4599 = vpop.permute.xlu0 %4598
        %s4648 = scalar_lea.vmem [#allocation2], 12
        %vm4649 = vcmask 125952
        %vm4650 = vmand %vm4649, %vm344
        %v4651 = vld [vmem:[%s4648] sm:$0xf]
        %v4652 = vsel %vm4650, %v4505, %v4651
        %4653 = vst [vmem:[%s4648] sm:$0xf] %v4652
        %4654 = vst.msk [vmem:[%s4648 + $0x4] sm:$0xf] %vm278, %v4507
        %v4655 = vld [vmem:[%s4648 + $0x8] sm:$0x1]
        %v4656 = vsel %vm289, %v4509, %v4655
        %4657 = vst [vmem:[%s4648 + $0x8] sm:$0x1] %v4656
        %v4658 = vld [vmem:[%s4648 + $0xc] sm:$0xf]
        %v4659 = vsel %vm4650, %v4511, %v4658
        %4660 = vst [vmem:[%s4648 + $0xc] sm:$0xf] %v4659
        %4661 = vst.msk [vmem:[%s4648 + $0x10] sm:$0xf] %vm278, %v4513
        %v4662 = vld [vmem:[%s4648 + $0x14] sm:$0x1]
        %v4663 = vsel %vm289, %v4515, %v4662
        %4664 = vst [vmem:[%s4648 + $0x14] sm:$0x1] %v4663
        %v4665 = vld [vmem:[%s4648 + $0x18] sm:$0xf]
        %v4666 = vsel %vm4650, %v4517, %v4665
        %4667 = vst [vmem:[%s4648 + $0x18] sm:$0xf] %v4666
        %4668 = vst.msk [vmem:[%s4648 + $0x1c] sm:$0xf] %vm278, %v4519
        %v4669 = vld [vmem:[%s4648 + $0x20] sm:$0x1]
        %v4670 = vsel %vm289, %v4521, %v4669
        %4671 = vst [vmem:[%s4648 + $0x20] sm:$0x1] %v4670
        %v4672 = vld [vmem:[%s4648 + $0x24] sm:$0xf]
        %v4673 = vsel %vm4650, %v4523, %v4672
        %4674 = vst [vmem:[%s4648 + $0x24] sm:$0xf] %v4673
        %4675 = vst.msk [vmem:[%s4648 + $0x28] sm:$0xf] %vm278, %v4525
        %v4676 = vld [vmem:[%s4648 + $0x2c] sm:$0x1]
        %v4677 = vsel %vm289, %v4527, %v4676
        %4678 = vst [vmem:[%s4648 + $0x2c] sm:$0x1] %v4677
        %v4679 = vld [vmem:[%s4648 + $0x30] sm:$0xf]
        %v4680 = vsel %vm4650, %v4529, %v4679
        %4681 = vst [vmem:[%s4648 + $0x30] sm:$0xf] %v4680
        %4682 = vst.msk [vmem:[%s4648 + $0x34] sm:$0xf] %vm278, %v4531
        %v4683 = vld [vmem:[%s4648 + $0x38] sm:$0x1]
        %v4684 = vsel %vm289, %v4533, %v4683
        %4685 = vst [vmem:[%s4648 + $0x38] sm:$0x1] %v4684
        %v4686 = vld [vmem:[%s4648 + $0x3c] sm:$0xf]
        %v4687 = vsel %vm4650, %v4535, %v4686
        %4688 = vst [vmem:[%s4648 + $0x3c] sm:$0xf] %v4687
        %4689 = vst.msk [vmem:[%s4648 + $0x40] sm:$0xf] %vm278, %v4537
        %v4690 = vld [vmem:[%s4648 + $0x44] sm:$0x1]
        %v4691 = vsel %vm289, %v4539, %v4690
        %4692 = vst [vmem:[%s4648 + $0x44] sm:$0x1] %v4691
        %v4693 = vld [vmem:[%s4648 + $0x48] sm:$0xf]
        %v4694 = vsel %vm4650, %v4541, %v4693
        %4695 = vst [vmem:[%s4648 + $0x48] sm:$0xf] %v4694
        %4696 = vst.msk [vmem:[%s4648 + $0x4c] sm:$0xf] %vm278, %v4543
        %v4697 = vld [vmem:[%s4648 + $0x50] sm:$0x1]
        %v4698 = vsel %vm289, %v4545, %v4697
        %4699 = vst [vmem:[%s4648 + $0x50] sm:$0x1] %v4698
        %v4700 = vld [vmem:[%s4648 + $0x54] sm:$0xf]
        %v4701 = vsel %vm4650, %v4547, %v4700
        %4702 = vst [vmem:[%s4648 + $0x54] sm:$0xf] %v4701
        %4703 = vst.msk [vmem:[%s4648 + $0x58] sm:$0xf] %vm278, %v4549
        %v4704 = vld [vmem:[%s4648 + $0x5c] sm:$0x1]
        %v4705 = vsel %vm289, %v4551, %v4704
        %4706 = vst [vmem:[%s4648 + $0x5c] sm:$0x1] %v4705
        %v4707 = vld [vmem:[%s4648 + $0x60] sm:$0xf]
        %v4708 = vsel %vm4650, %v4553, %v4707
        %4709 = vst [vmem:[%s4648 + $0x60] sm:$0xf] %v4708
        %4710 = vst.msk [vmem:[%s4648 + $0x64] sm:$0xf] %vm278, %v4555
        %v4711 = vld [vmem:[%s4648 + $0x68] sm:$0x1]
        %v4712 = vsel %vm289, %v4557, %v4711
        %4713 = vst [vmem:[%s4648 + $0x68] sm:$0x1] %v4712
        %v4714 = vld [vmem:[%s4648 + $0x6c] sm:$0xf]
        %v4715 = vsel %vm4650, %v4559, %v4714
        %4716 = vst [vmem:[%s4648 + $0x6c] sm:$0xf] %v4715
        %4717 = vst.msk [vmem:[%s4648 + $0x70] sm:$0xf] %vm278, %v4561
        %v4718 = vld [vmem:[%s4648 + $0x74] sm:$0x1]
        %v4719 = vsel %vm289, %v4563, %v4718
        %4720 = vst [vmem:[%s4648 + $0x74] sm:$0x1] %v4719
        %v4721 = vld [vmem:[%s4648 + $0x78] sm:$0xf]
        %v4722 = vsel %vm4650, %v4565, %v4721
        %4723 = vst [vmem:[%s4648 + $0x78] sm:$0xf] %v4722
        %4724 = vst.msk [vmem:[%s4648 + $0x7c] sm:$0xf] %vm278, %v4567
        %v4725 = vld [vmem:[%s4648 + $0x80] sm:$0x1]
        %v4726 = vsel %vm289, %v4569, %v4725
        %4727 = vst [vmem:[%s4648 + $0x80] sm:$0x1] %v4726
        %v4728 = vld [vmem:[%s4648 + $0x84] sm:$0xf]
        %v4729 = vsel %vm4650, %v4571, %v4728
        %4730 = vst [vmem:[%s4648 + $0x84] sm:$0xf] %v4729
        %4731 = vst.msk [vmem:[%s4648 + $0x88] sm:$0xf] %vm278, %v4573
        %v4732 = vld [vmem:[%s4648 + $0x8c] sm:$0x1]
        %v4733 = vsel %vm289, %v4575, %v4732
        %4734 = vst [vmem:[%s4648 + $0x8c] sm:$0x1] %v4733
        %v4735 = vld [vmem:[%s4648 + $0x90] sm:$0xf]
        %v4736 = vsel %vm4650, %v4577, %v4735
        %4737 = vst [vmem:[%s4648 + $0x90] sm:$0xf] %v4736
        %4738 = vst.msk [vmem:[%s4648 + $0x94] sm:$0xf] %vm278, %v4579
        %v4739 = vld [vmem:[%s4648 + $0x98] sm:$0x1]
        %v4740 = vsel %vm289, %v4581, %v4739
        %4741 = vst [vmem:[%s4648 + $0x98] sm:$0x1] %v4740
        %v4742 = vld [vmem:[%s4648 + $0x9c] sm:$0xf]
        %v4743 = vsel %vm4650, %v4583, %v4742
        %4744 = vst [vmem:[%s4648 + $0x9c] sm:$0xf] %v4743
        %4745 = vst.msk [vmem:[%s4648 + $0xa0] sm:$0xf] %vm278, %v4585
        %v4746 = vld [vmem:[%s4648 + $0xa4] sm:$0x1]
        %v4747 = vsel %vm289, %v4587, %v4746
        %4748 = vst [vmem:[%s4648 + $0xa4] sm:$0x1] %v4747
        %v4749 = vld [vmem:[%s4648 + $0xa8] sm:$0xf]
        %v4750 = vsel %vm4650, %v4589, %v4749
        %4751 = vst [vmem:[%s4648 + $0xa8] sm:$0xf] %v4750
        %4752 = vst.msk [vmem:[%s4648 + $0xac] sm:$0xf] %vm278, %v4591
        %v4753 = vld [vmem:[%s4648 + $0xb0] sm:$0x1]
        %v4754 = vsel %vm289, %v4593, %v4753
        %4755 = vst [vmem:[%s4648 + $0xb0] sm:$0x1] %v4754
        %v4756 = vld [vmem:[%s4648 + $0xb4] sm:$0xf]
        %v4757 = vsel %vm4650, %v4595, %v4756
        %4758 = vst [vmem:[%s4648 + $0xb4] sm:$0xf] %v4757
        %4759 = vst.msk [vmem:[%s4648 + $0xb8] sm:$0xf] %vm278, %v4597
        %v4760 = vld [vmem:[%s4648 + $0xbc] sm:$0x1]
        %v4761 = vsel %vm289, %v4599, %v4760
        %4762 = vst [vmem:[%s4648 + $0xbc] sm:$0x1] %v4761
        %v4763 = vld [vmem:[#allocation2] sm:$0xf]
        %v4764 = vld [vmem:[#allocation2 + $0x4] sm:$0xf]
        %v4765 = vld [vmem:[#allocation2 + $0xc] sm:$0xf]
        %v4766 = vld [vmem:[#allocation2 + $0x10] sm:$0xf]
        %v4767 = vld [vmem:[#allocation2 + $0x18] sm:$0xf]
        %v4768 = vld [vmem:[#allocation2 + $0x1c] sm:$0xf]
        %v4769 = vld [vmem:[#allocation2 + $0x24] sm:$0xf]
        %v4770 = vld [vmem:[#allocation2 + $0x28] sm:$0xf]
        %v4771 = vld [vmem:[#allocation2 + $0x30] sm:$0xf]
        %v4772 = vld [vmem:[#allocation2 + $0x34] sm:$0xf]
        %v4773 = vld [vmem:[#allocation2 + $0x3c] sm:$0xf]
        %v4774 = vld [vmem:[#allocation2 + $0x40] sm:$0xf]
        %v4775 = vld [vmem:[#allocation2 + $0x48] sm:$0xf]
        %v4776 = vld [vmem:[#allocation2 + $0x4c] sm:$0xf]
        %v4777 = vld [vmem:[#allocation2 + $0x54] sm:$0xf]
        %v4778 = vld [vmem:[#allocation2 + $0x58] sm:$0xf]
        %v4779 = vld [vmem:[#allocation2 + $0x60] sm:$0xf]
        %v4780 = vld [vmem:[#allocation2 + $0x64] sm:$0xf]
        %v4781 = vld [vmem:[#allocation2 + $0x6c] sm:$0xf]
        %v4782 = vld [vmem:[#allocation2 + $0x70] sm:$0xf]
        %v4783 = vld [vmem:[#allocation2 + $0x78] sm:$0xf]
        %v4784 = vld [vmem:[#allocation2 + $0x7c] sm:$0xf]
        %v4785 = vld [vmem:[#allocation2 + $0x84] sm:$0xf]
        %v4786 = vld [vmem:[#allocation2 + $0x88] sm:$0xf]
        %v4787 = vld [vmem:[#allocation2 + $0x90] sm:$0xf]
        %v4788 = vld [vmem:[#allocation2 + $0x94] sm:$0xf]
        %v4789 = vld [vmem:[#allocation2 + $0x9c] sm:$0xf]
        %v4790 = vld [vmem:[#allocation2 + $0xa0] sm:$0xf]
        %v4791 = vld [vmem:[#allocation2 + $0xa8] sm:$0xf]
        %v4792 = vld [vmem:[#allocation2 + $0xac] sm:$0xf]
        %v4793 = vld [vmem:[#allocation2 + $0xb4] sm:$0xf]
        %v4794 = vld [vmem:[#allocation2 + $0xb8] sm:$0xf]
        %v4795 = vld [vmem:[#allocation2 + $0x8] sm:$0x1]
        %v4796 = vld [vmem:[#allocation2 + $0x14] sm:$0x1]
        %v4797 = vld [vmem:[#allocation2 + $0x20] sm:$0x1]
        %v4798 = vld [vmem:[#allocation2 + $0x2c] sm:$0x1]
        %v4799 = vld [vmem:[#allocation2 + $0x38] sm:$0x1]
        %v4800 = vld [vmem:[#allocation2 + $0x44] sm:$0x1]
        %v4801 = vld [vmem:[#allocation2 + $0x50] sm:$0x1]
        %v4802 = vld [vmem:[#allocation2 + $0x5c] sm:$0x1]
        %v4803 = vld [vmem:[#allocation2 + $0x68] sm:$0x1]
        %v4804 = vld [vmem:[#allocation2 + $0x74] sm:$0x1]
        %v4805 = vld [vmem:[#allocation2 + $0x80] sm:$0x1]
        %v4806 = vld [vmem:[#allocation2 + $0x8c] sm:$0x1]
        %v4807 = vld [vmem:[#allocation2 + $0x98] sm:$0x1]
        %v4808 = vld [vmem:[#allocation2 + $0xa4] sm:$0x1]
        %v4809 = vld [vmem:[#allocation2 + $0xb0] sm:$0x1]
        %v4810 = vld [vmem:[#allocation2 + $0xbc] sm:$0x1]
        %v4812 = vshrl.u32 %v4763, 16
        %v4814 = vrot.slane %v4812, 4
        %v4815 = vshll.u32 %v4763, 16
        %v4817 = vrot.slane %v4815, 5
        %v4818 = vor.u32 %v4814, %v4817
        %v4819 = vrot.slane %v4818, 4
        %v4821 = vshll.u32 %v4764, 16
        %v4823 = vrot.slane %v4821, 5
        %v4824 = vsel %vm565, %v4819, %v4823
        %v4825 = vshrl.u32 %v4764, 16
        %v4827 = vrot.slane %v4825, 4
        %v4828 = vor.u32 %v4827, %v4823
        %v4829 = vrot.slane %v4828, 4
        %v4831 = vshll.u32 %v4795, 16
        %v4833 = vrot.slane %v4831, 5
        %v4834 = vsel %vm565, %v4829, %v4833
        %v4836 = vshrl.u32 %v4765, 16
        %v4838 = vrot.slane %v4836, 4
        %v4839 = vshll.u32 %v4765, 16
        %v4841 = vrot.slane %v4839, 5
        %v4842 = vor.u32 %v4838, %v4841
        %v4843 = vrot.slane %v4842, 4
        %v4845 = vshll.u32 %v4766, 16
        %v4847 = vrot.slane %v4845, 5
        %v4848 = vsel %vm565, %v4843, %v4847
        %v4849 = vshrl.u32 %v4766, 16
        %v4851 = vrot.slane %v4849, 4
        %v4852 = vor.u32 %v4851, %v4847
        %v4853 = vrot.slane %v4852, 4
        %v4855 = vshll.u32 %v4796, 16
        %v4857 = vrot.slane %v4855, 5
        %v4858 = vsel %vm565, %v4853, %v4857
        %v4860 = vshrl.u32 %v4767, 16
        %v4862 = vrot.slane %v4860, 4
        %v4863 = vshll.u32 %v4767, 16
        %v4865 = vrot.slane %v4863, 5
        %v4866 = vor.u32 %v4862, %v4865
        %v4867 = vrot.slane %v4866, 4
        %v4869 = vshll.u32 %v4768, 16
        %v4871 = vrot.slane %v4869, 5
        %v4872 = vsel %vm565, %v4867, %v4871
        %v4873 = vshrl.u32 %v4768, 16
        %v4875 = vrot.slane %v4873, 4
        %v4876 = vor.u32 %v4875, %v4871
        %v4877 = vrot.slane %v4876, 4
        %v4879 = vshll.u32 %v4797, 16
        %v4881 = vrot.slane %v4879, 5
        %v4882 = vsel %vm565, %v4877, %v4881
        %v4884 = vshrl.u32 %v4769, 16
        %v4886 = vrot.slane %v4884, 4
        %v4887 = vshll.u32 %v4769, 16
        %v4889 = vrot.slane %v4887, 5
        %v4890 = vor.u32 %v4886, %v4889
        %v4891 = vrot.slane %v4890, 4
        %v4893 = vshll.u32 %v4770, 16
        %v4895 = vrot.slane %v4893, 5
        %v4896 = vsel %vm565, %v4891, %v4895
        %v4897 = vshrl.u32 %v4770, 16
        %v4899 = vrot.slane %v4897, 4
        %v4900 = vor.u32 %v4899, %v4895
        %v4901 = vrot.slane %v4900, 4
        %v4903 = vshll.u32 %v4798, 16
        %v4905 = vrot.slane %v4903, 5
        %v4906 = vsel %vm565, %v4901, %v4905
        %v4908 = vshrl.u32 %v4771, 16
        %v4910 = vrot.slane %v4908, 4
        %v4911 = vshll.u32 %v4771, 16
        %v4913 = vrot.slane %v4911, 5
        %v4914 = vor.u32 %v4910, %v4913
        %v4915 = vrot.slane %v4914, 4
        %v4917 = vshll.u32 %v4772, 16
        %v4919 = vrot.slane %v4917, 5
        %v4920 = vsel %vm565, %v4915, %v4919
        %v4921 = vshrl.u32 %v4772, 16
        %v4923 = vrot.slane %v4921, 4
        %v4924 = vor.u32 %v4923, %v4919
        %v4925 = vrot.slane %v4924, 4
        %v4927 = vshll.u32 %v4799, 16
        %v4929 = vrot.slane %v4927, 5
        %v4930 = vsel %vm565, %v4925, %v4929
        %v4932 = vshrl.u32 %v4773, 16
        %v4934 = vrot.slane %v4932, 4
        %v4935 = vshll.u32 %v4773, 16
        %v4937 = vrot.slane %v4935, 5
        %v4938 = vor.u32 %v4934, %v4937
        %v4939 = vrot.slane %v4938, 4
        %v4941 = vshll.u32 %v4774, 16
        %v4943 = vrot.slane %v4941, 5
        %v4944 = vsel %vm565, %v4939, %v4943
        %v4945 = vshrl.u32 %v4774, 16
        %v4947 = vrot.slane %v4945, 4
        %v4948 = vor.u32 %v4947, %v4943
        %v4949 = vrot.slane %v4948, 4
        %v4951 = vshll.u32 %v4800, 16
        %v4953 = vrot.slane %v4951, 5
        %v4954 = vsel %vm565, %v4949, %v4953
        %v4956 = vshrl.u32 %v4775, 16
        %v4958 = vrot.slane %v4956, 4
        %v4959 = vshll.u32 %v4775, 16
        %v4961 = vrot.slane %v4959, 5
        %v4962 = vor.u32 %v4958, %v4961
        %v4963 = vrot.slane %v4962, 4
        %v4965 = vshll.u32 %v4776, 16
        %v4967 = vrot.slane %v4965, 5
        %v4968 = vsel %vm565, %v4963, %v4967
        %v4969 = vshrl.u32 %v4776, 16
        %v4971 = vrot.slane %v4969, 4
        %v4972 = vor.u32 %v4971, %v4967
        %v4973 = vrot.slane %v4972, 4
        %v4975 = vshll.u32 %v4801, 16
        %v4977 = vrot.slane %v4975, 5
        %v4978 = vsel %vm565, %v4973, %v4977
        %v4980 = vshrl.u32 %v4777, 16
        %v4982 = vrot.slane %v4980, 4
        %v4983 = vshll.u32 %v4777, 16
        %v4985 = vrot.slane %v4983, 5
        %v4986 = vor.u32 %v4982, %v4985
        %v4987 = vrot.slane %v4986, 4
        %v4989 = vshll.u32 %v4778, 16
        %v4991 = vrot.slane %v4989, 5
        %v4992 = vsel %vm565, %v4987, %v4991
        %v4993 = vshrl.u32 %v4778, 16
        %v4995 = vrot.slane %v4993, 4
        %v4996 = vor.u32 %v4995, %v4991
        %v4997 = vrot.slane %v4996, 4
        %v4999 = vshll.u32 %v4802, 16
        %v5001 = vrot.slane %v4999, 5
        %v5002 = vsel %vm565, %v4997, %v5001
        %v5004 = vshrl.u32 %v4779, 16
        %v5006 = vrot.slane %v5004, 4
        %v5007 = vshll.u32 %v4779, 16
        %v5009 = vrot.slane %v5007, 5
        %v5010 = vor.u32 %v5006, %v5009
        %v5011 = vrot.slane %v5010, 4
        %v5013 = vshll.u32 %v4780, 16
        %v5015 = vrot.slane %v5013, 5
        %v5016 = vsel %vm565, %v5011, %v5015
        %v5017 = vshrl.u32 %v4780, 16
        %v5019 = vrot.slane %v5017, 4
        %v5020 = vor.u32 %v5019, %v5015
        %v5021 = vrot.slane %v5020, 4
        %v5023 = vshll.u32 %v4803, 16
        %v5025 = vrot.slane %v5023, 5
        %v5026 = vsel %vm565, %v5021, %v5025
        %v5028 = vshrl.u32 %v4781, 16
        %v5030 = vrot.slane %v5028, 4
        %v5031 = vshll.u32 %v4781, 16
        %v5033 = vrot.slane %v5031, 5
        %v5034 = vor.u32 %v5030, %v5033
        %v5035 = vrot.slane %v5034, 4
        %v5037 = vshll.u32 %v4782, 16
        %v5039 = vrot.slane %v5037, 5
        %v5040 = vsel %vm565, %v5035, %v5039
        %v5041 = vshrl.u32 %v4782, 16
        %v5043 = vrot.slane %v5041, 4
        %v5044 = vor.u32 %v5043, %v5039
        %v5045 = vrot.slane %v5044, 4
        %v5047 = vshll.u32 %v4804, 16
        %v5049 = vrot.slane %v5047, 5
        %v5050 = vsel %vm565, %v5045, %v5049
        %v5052 = vshrl.u32 %v4783, 16
        %v5054 = vrot.slane %v5052, 4
        %v5055 = vshll.u32 %v4783, 16
        %v5057 = vrot.slane %v5055, 5
        %v5058 = vor.u32 %v5054, %v5057
        %v5059 = vrot.slane %v5058, 4
        %v5061 = vshll.u32 %v4784, 16
        %v5063 = vrot.slane %v5061, 5
        %v5064 = vsel %vm565, %v5059, %v5063
        %v5065 = vshrl.u32 %v4784, 16
        %v5067 = vrot.slane %v5065, 4
        %v5068 = vor.u32 %v5067, %v5063
        %v5069 = vrot.slane %v5068, 4
        %v5071 = vshll.u32 %v4805, 16
        %v5073 = vrot.slane %v5071, 5
        %v5074 = vsel %vm565, %v5069, %v5073
        %v5076 = vshrl.u32 %v4785, 16
        %v5078 = vrot.slane %v5076, 4
        %v5079 = vshll.u32 %v4785, 16
        %v5081 = vrot.slane %v5079, 5
        %v5082 = vor.u32 %v5078, %v5081
        %v5083 = vrot.slane %v5082, 4
        %v5085 = vshll.u32 %v4786, 16
        %v5087 = vrot.slane %v5085, 5
        %v5088 = vsel %vm565, %v5083, %v5087
        %v5089 = vshrl.u32 %v4786, 16
        %v5091 = vrot.slane %v5089, 4
        %v5092 = vor.u32 %v5091, %v5087
        %v5093 = vrot.slane %v5092, 4
        %v5095 = vshll.u32 %v4806, 16
        %v5097 = vrot.slane %v5095, 5
        %v5098 = vsel %vm565, %v5093, %v5097
        %v5100 = vshrl.u32 %v4787, 16
        %v5102 = vrot.slane %v5100, 4
        %v5103 = vshll.u32 %v4787, 16
        %v5105 = vrot.slane %v5103, 5
        %v5106 = vor.u32 %v5102, %v5105
        %v5107 = vrot.slane %v5106, 4
        %v5109 = vshll.u32 %v4788, 16
        %v5111 = vrot.slane %v5109, 5
        %v5112 = vsel %vm565, %v5107, %v5111
        %v5113 = vshrl.u32 %v4788, 16
        %v5115 = vrot.slane %v5113, 4
        %v5116 = vor.u32 %v5115, %v5111
        %v5117 = vrot.slane %v5116, 4
        %v5119 = vshll.u32 %v4807, 16
        %v5121 = vrot.slane %v5119, 5
        %v5122 = vsel %vm565, %v5117, %v5121
        %v5124 = vshrl.u32 %v4789, 16
        %v5126 = vrot.slane %v5124, 4
        %v5127 = vshll.u32 %v4789, 16
        %v5129 = vrot.slane %v5127, 5
        %v5130 = vor.u32 %v5126, %v5129
        %v5131 = vrot.slane %v5130, 4
        %v5133 = vshll.u32 %v4790, 16
        %v5135 = vrot.slane %v5133, 5
        %v5136 = vsel %vm565, %v5131, %v5135
        %v5137 = vshrl.u32 %v4790, 16
        %v5139 = vrot.slane %v5137, 4
        %v5140 = vor.u32 %v5139, %v5135
        %v5141 = vrot.slane %v5140, 4
        %v5143 = vshll.u32 %v4808, 16
        %v5145 = vrot.slane %v5143, 5
        %v5146 = vsel %vm565, %v5141, %v5145
        %v5148 = vshrl.u32 %v4791, 16
        %v5150 = vrot.slane %v5148, 4
        %v5151 = vshll.u32 %v4791, 16
        %v5153 = vrot.slane %v5151, 5
        %v5154 = vor.u32 %v5150, %v5153
        %v5155 = vrot.slane %v5154, 4
        %v5157 = vshll.u32 %v4792, 16
        %v5159 = vrot.slane %v5157, 5
        %v5160 = vsel %vm565, %v5155, %v5159
        %v5161 = vshrl.u32 %v4792, 16
        %v5163 = vrot.slane %v5161, 4
        %v5164 = vor.u32 %v5163, %v5159
        %v5165 = vrot.slane %v5164, 4
        %v5167 = vshll.u32 %v4809, 16
        %v5169 = vrot.slane %v5167, 5
        %v5170 = vsel %vm565, %v5165, %v5169
        %v5172 = vshrl.u32 %v4793, 16
        %v5174 = vrot.slane %v5172, 4
        %v5175 = vshll.u32 %v4793, 16
        %v5177 = vrot.slane %v5175, 5
        %v5178 = vor.u32 %v5174, %v5177
        %v5179 = vrot.slane %v5178, 4
        %v5181 = vshll.u32 %v4794, 16
        %v5183 = vrot.slane %v5181, 5
        %v5184 = vsel %vm565, %v5179, %v5183
        %v5185 = vshrl.u32 %v4794, 16
        %v5187 = vrot.slane %v5185, 4
        %v5188 = vor.u32 %v5187, %v5183
        %v5189 = vrot.slane %v5188, 4
        %v5191 = vshll.u32 %v4810, 16
        %v5193 = vrot.slane %v5191, 5
        %v5194 = vsel %vm565, %v5189, %v5193
        %v5195 = vld [vmem:[#allocation2] sm:$0xe]
        %v5196 = vld [vmem:[#allocation2 + $0xc] sm:$0xe]
        %v5197 = vld [vmem:[#allocation2 + $0x18] sm:$0xe]
        %v5198 = vld [vmem:[#allocation2 + $0x24] sm:$0xe]
        %v5199 = vld [vmem:[#allocation2 + $0x30] sm:$0xe]
        %v5200 = vld [vmem:[#allocation2 + $0x3c] sm:$0xe]
        %v5201 = vld [vmem:[#allocation2 + $0x48] sm:$0xe]
        %v5202 = vld [vmem:[#allocation2 + $0x54] sm:$0xe]
        %v5203 = vld [vmem:[#allocation2 + $0x60] sm:$0xe]
        %v5204 = vld [vmem:[#allocation2 + $0x6c] sm:$0xe]
        %v5205 = vld [vmem:[#allocation2 + $0x78] sm:$0xe]
        %v5206 = vld [vmem:[#allocation2 + $0x84] sm:$0xe]
        %v5207 = vld [vmem:[#allocation2 + $0x90] sm:$0xe]
        %v5208 = vld [vmem:[#allocation2 + $0x9c] sm:$0xe]
        %v5209 = vld [vmem:[#allocation2 + $0xa8] sm:$0xe]
        %v5210 = vld [vmem:[#allocation2 + $0xb4] sm:$0xe]
        %v5259 = vrot.slane %v5195, 5
        %v5260 = vrot.slane %v5259, 4
        %v5261 = vrot.slane %v4764, 5
        %v5262 = vsel %vm1016, %v5260, %v5261
        %v5263 = vrot.slane %v5261, 4
        %v5264 = vrot.slane %v4795, 5
        %v5265 = vsel %vm1016, %v5263, %v5264
        %v5266 = vrot.slane %v5196, 5
        %v5267 = vrot.slane %v5266, 4
        %v5268 = vrot.slane %v4766, 5
        %v5269 = vsel %vm1016, %v5267, %v5268
        %v5270 = vrot.slane %v5268, 4
        %v5271 = vrot.slane %v4796, 5
        %v5272 = vsel %vm1016, %v5270, %v5271
        %v5273 = vrot.slane %v5197, 5
        %v5274 = vrot.slane %v5273, 4
        %v5275 = vrot.slane %v4768, 5
        %v5276 = vsel %vm1016, %v5274, %v5275
        %v5277 = vrot.slane %v5275, 4
        %v5278 = vrot.slane %v4797, 5
        %v5279 = vsel %vm1016, %v5277, %v5278
        %v5280 = vrot.slane %v5198, 5
        %v5281 = vrot.slane %v5280, 4
        %v5282 = vrot.slane %v4770, 5
        %v5283 = vsel %vm1016, %v5281, %v5282
        %v5284 = vrot.slane %v5282, 4
        %v5285 = vrot.slane %v4798, 5
        %v5286 = vsel %vm1016, %v5284, %v5285
        %v5287 = vrot.slane %v5199, 5
        %v5288 = vrot.slane %v5287, 4
        %v5289 = vrot.slane %v4772, 5
        %v5290 = vsel %vm1016, %v5288, %v5289
        %v5291 = vrot.slane %v5289, 4
        %v5292 = vrot.slane %v4799, 5
        %v5293 = vsel %vm1016, %v5291, %v5292
        %v5294 = vrot.slane %v5200, 5
        %v5295 = vrot.slane %v5294, 4
        %v5296 = vrot.slane %v4774, 5
        %v5297 = vsel %vm1016, %v5295, %v5296
        %v5298 = vrot.slane %v5296, 4
        %v5299 = vrot.slane %v4800, 5
        %v5300 = vsel %vm1016, %v5298, %v5299
        %v5301 = vrot.slane %v5201, 5
        %v5302 = vrot.slane %v5301, 4
        %v5303 = vrot.slane %v4776, 5
        %v5304 = vsel %vm1016, %v5302, %v5303
        %v5305 = vrot.slane %v5303, 4
        %v5306 = vrot.slane %v4801, 5
        %v5307 = vsel %vm1016, %v5305, %v5306
        %v5308 = vrot.slane %v5202, 5
        %v5309 = vrot.slane %v5308, 4
        %v5310 = vrot.slane %v4778, 5
        %v5311 = vsel %vm1016, %v5309, %v5310
        %v5312 = vrot.slane %v5310, 4
        %v5313 = vrot.slane %v4802, 5
        %v5314 = vsel %vm1016, %v5312, %v5313
        %v5315 = vrot.slane %v5203, 5
        %v5316 = vrot.slane %v5315, 4
        %v5317 = vrot.slane %v4780, 5
        %v5318 = vsel %vm1016, %v5316, %v5317
        %v5319 = vrot.slane %v5317, 4
        %v5320 = vrot.slane %v4803, 5
        %v5321 = vsel %vm1016, %v5319, %v5320
        %v5322 = vrot.slane %v5204, 5
        %v5323 = vrot.slane %v5322, 4
        %v5324 = vrot.slane %v4782, 5
        %v5325 = vsel %vm1016, %v5323, %v5324
        %v5326 = vrot.slane %v5324, 4
        %v5327 = vrot.slane %v4804, 5
        %v5328 = vsel %vm1016, %v5326, %v5327
        %v5329 = vrot.slane %v5205, 5
        %v5330 = vrot.slane %v5329, 4
        %v5331 = vrot.slane %v4784, 5
        %v5332 = vsel %vm1016, %v5330, %v5331
        %v5333 = vrot.slane %v5331, 4
        %v5334 = vrot.slane %v4805, 5
        %v5335 = vsel %vm1016, %v5333, %v5334
        %v5336 = vrot.slane %v5206, 5
        %v5337 = vrot.slane %v5336, 4
        %v5338 = vrot.slane %v4786, 5
        %v5339 = vsel %vm1016, %v5337, %v5338
        %v5340 = vrot.slane %v5338, 4
        %v5341 = vrot.slane %v4806, 5
        %v5342 = vsel %vm1016, %v5340, %v5341
        %v5343 = vrot.slane %v5207, 5
        %v5344 = vrot.slane %v5343, 4
        %v5345 = vrot.slane %v4788, 5
        %v5346 = vsel %vm1016, %v5344, %v5345
        %v5347 = vrot.slane %v5345, 4
        %v5348 = vrot.slane %v4807, 5
        %v5349 = vsel %vm1016, %v5347, %v5348
        %v5350 = vrot.slane %v5208, 5
        %v5351 = vrot.slane %v5350, 4
        %v5352 = vrot.slane %v4790, 5
        %v5353 = vsel %vm1016, %v5351, %v5352
        %v5354 = vrot.slane %v5352, 4
        %v5355 = vrot.slane %v4808, 5
        %v5356 = vsel %vm1016, %v5354, %v5355
        %v5357 = vrot.slane %v5209, 5
        %v5358 = vrot.slane %v5357, 4
        %v5359 = vrot.slane %v4792, 5
        %v5360 = vsel %vm1016, %v5358, %v5359
        %v5361 = vrot.slane %v5359, 4
        %v5362 = vrot.slane %v4809, 5
        %v5363 = vsel %vm1016, %v5361, %v5362
        %v5364 = vrot.slane %v5210, 5
        %v5365 = vrot.slane %v5364, 4
        %v5366 = vrot.slane %v4794, 5
        %v5367 = vsel %vm1016, %v5365, %v5366
        %v5368 = vrot.slane %v5366, 4
        %v5369 = vrot.slane %v4810, 5
        %v5370 = vsel %vm1016, %v5368, %v5369
        %v5371 = vld [vmem:[%s4648] sm:$0xf]
        %v5372 = vld [vmem:[%s4648 + $0x4] sm:$0xf]
        %v5373 = vld [vmem:[%s4648 + $0xc] sm:$0xf]
        %v5374 = vld [vmem:[%s4648 + $0x10] sm:$0xf]
        %v5375 = vld [vmem:[%s4648 + $0x18] sm:$0xf]
        %v5376 = vld [vmem:[%s4648 + $0x1c] sm:$0xf]
        %v5377 = vld [vmem:[%s4648 + $0x24] sm:$0xf]
        %v5378 = vld [vmem:[%s4648 + $0x28] sm:$0xf]
        %v5379 = vld [vmem:[%s4648 + $0x30] sm:$0xf]
        %v5380 = vld [vmem:[%s4648 + $0x34] sm:$0xf]
        %v5381 = vld [vmem:[%s4648 + $0x3c] sm:$0xf]
        %v5382 = vld [vmem:[%s4648 + $0x40] sm:$0xf]
        %v5383 = vld [vmem:[%s4648 + $0x48] sm:$0xf]
        %v5384 = vld [vmem:[%s4648 + $0x4c] sm:$0xf]
        %v5385 = vld [vmem:[%s4648 + $0x54] sm:$0xf]
        %v5386 = vld [vmem:[%s4648 + $0x58] sm:$0xf]
        %v5387 = vld [vmem:[%s4648 + $0x60] sm:$0xf]
        %v5388 = vld [vmem:[%s4648 + $0x64] sm:$0xf]
        %v5389 = vld [vmem:[%s4648 + $0x6c] sm:$0xf]
        %v5390 = vld [vmem:[%s4648 + $0x70] sm:$0xf]
        %v5391 = vld [vmem:[%s4648 + $0x78] sm:$0xf]
        %v5392 = vld [vmem:[%s4648 + $0x7c] sm:$0xf]
        %v5393 = vld [vmem:[%s4648 + $0x84] sm:$0xf]
        %v5394 = vld [vmem:[%s4648 + $0x88] sm:$0xf]
        %v5395 = vld [vmem:[%s4648 + $0x90] sm:$0xf]
        %v5396 = vld [vmem:[%s4648 + $0x94] sm:$0xf]
        %v5397 = vld [vmem:[%s4648 + $0x9c] sm:$0xf]
        %v5398 = vld [vmem:[%s4648 + $0xa0] sm:$0xf]
        %v5399 = vld [vmem:[%s4648 + $0xa8] sm:$0xf]
        %v5400 = vld [vmem:[%s4648 + $0xac] sm:$0xf]
        %v5401 = vld [vmem:[%s4648 + $0xb4] sm:$0xf]
        %v5402 = vld [vmem:[%s4648 + $0xb8] sm:$0xf]
        %v5403 = vld [vmem:[%s4648 + $0x8] sm:$0x1]
        %v5404 = vld [vmem:[%s4648 + $0x14] sm:$0x1]
        %v5405 = vld [vmem:[%s4648 + $0x20] sm:$0x1]
        %v5406 = vld [vmem:[%s4648 + $0x2c] sm:$0x1]
        %v5407 = vld [vmem:[%s4648 + $0x38] sm:$0x1]
        %v5408 = vld [vmem:[%s4648 + $0x44] sm:$0x1]
        %v5409 = vld [vmem:[%s4648 + $0x50] sm:$0x1]
        %v5410 = vld [vmem:[%s4648 + $0x5c] sm:$0x1]
        %v5411 = vld [vmem:[%s4648 + $0x68] sm:$0x1]
        %v5412 = vld [vmem:[%s4648 + $0x74] sm:$0x1]
        %v5413 = vld [vmem:[%s4648 + $0x80] sm:$0x1]
        %v5414 = vld [vmem:[%s4648 + $0x8c] sm:$0x1]
        %v5415 = vld [vmem:[%s4648 + $0x98] sm:$0x1]
        %v5416 = vld [vmem:[%s4648 + $0xa4] sm:$0x1]
        %v5417 = vld [vmem:[%s4648 + $0xb0] sm:$0x1]
        %v5418 = vld [vmem:[%s4648 + $0xbc] sm:$0x1]
        %v5420 = vshrl.u32 %v5371, 16
        %v5422 = vrot.slane %v5420, 4
        %v5423 = vshll.u32 %v5371, 16
        %v5425 = vrot.slane %v5423, 5
        %v5426 = vor.u32 %v5422, %v5425
        %v5427 = vrot.slane %v5426, 4
        %v5429 = vshll.u32 %v5372, 16
        %v5431 = vrot.slane %v5429, 5
        %v5432 = vsel %vm565, %v5427, %v5431
        %v5433 = vshrl.u32 %v5372, 16
        %v5435 = vrot.slane %v5433, 4
        %v5436 = vor.u32 %v5435, %v5431
        %v5437 = vrot.slane %v5436, 4
        %v5439 = vshll.u32 %v5403, 16
        %v5441 = vrot.slane %v5439, 5
        %v5442 = vsel %vm565, %v5437, %v5441
        %v5444 = vshrl.u32 %v5373, 16
        %v5446 = vrot.slane %v5444, 4
        %v5447 = vshll.u32 %v5373, 16
        %v5449 = vrot.slane %v5447, 5
        %v5450 = vor.u32 %v5446, %v5449
        %v5451 = vrot.slane %v5450, 4
        %v5453 = vshll.u32 %v5374, 16
        %v5455 = vrot.slane %v5453, 5
        %v5456 = vsel %vm565, %v5451, %v5455
        %v5457 = vshrl.u32 %v5374, 16
        %v5459 = vrot.slane %v5457, 4
        %v5460 = vor.u32 %v5459, %v5455
        %v5461 = vrot.slane %v5460, 4
        %v5463 = vshll.u32 %v5404, 16
        %v5465 = vrot.slane %v5463, 5
        %v5466 = vsel %vm565, %v5461, %v5465
        %v5468 = vshrl.u32 %v5375, 16
        %v5470 = vrot.slane %v5468, 4
        %v5471 = vshll.u32 %v5375, 16
        %v5473 = vrot.slane %v5471, 5
        %v5474 = vor.u32 %v5470, %v5473
        %v5475 = vrot.slane %v5474, 4
        %v5477 = vshll.u32 %v5376, 16
        %v5479 = vrot.slane %v5477, 5
        %v5480 = vsel %vm565, %v5475, %v5479
        %v5481 = vshrl.u32 %v5376, 16
        %v5483 = vrot.slane %v5481, 4
        %v5484 = vor.u32 %v5483, %v5479
        %v5485 = vrot.slane %v5484, 4
        %v5487 = vshll.u32 %v5405, 16
        %v5489 = vrot.slane %v5487, 5
        %v5490 = vsel %vm565, %v5485, %v5489
        %v5492 = vshrl.u32 %v5377, 16
        %v5494 = vrot.slane %v5492, 4
        %v5495 = vshll.u32 %v5377, 16
        %v5497 = vrot.slane %v5495, 5
        %v5498 = vor.u32 %v5494, %v5497
        %v5499 = vrot.slane %v5498, 4
        %v5501 = vshll.u32 %v5378, 16
        %v5503 = vrot.slane %v5501, 5
        %v5504 = vsel %vm565, %v5499, %v5503
        %v5505 = vshrl.u32 %v5378, 16
        %v5507 = vrot.slane %v5505, 4
        %v5508 = vor.u32 %v5507, %v5503
        %v5509 = vrot.slane %v5508, 4
        %v5511 = vshll.u32 %v5406, 16
        %v5513 = vrot.slane %v5511, 5
        %v5514 = vsel %vm565, %v5509, %v5513
        %v5516 = vshrl.u32 %v5379, 16
        %v5518 = vrot.slane %v5516, 4
        %v5519 = vshll.u32 %v5379, 16
        %v5521 = vrot.slane %v5519, 5
        %v5522 = vor.u32 %v5518, %v5521
        %v5523 = vrot.slane %v5522, 4
        %v5525 = vshll.u32 %v5380, 16
        %v5527 = vrot.slane %v5525, 5
        %v5528 = vsel %vm565, %v5523, %v5527
        %v5529 = vshrl.u32 %v5380, 16
        %v5531 = vrot.slane %v5529, 4
        %v5532 = vor.u32 %v5531, %v5527
        %v5533 = vrot.slane %v5532, 4
        %v5535 = vshll.u32 %v5407, 16
        %v5537 = vrot.slane %v5535, 5
        %v5538 = vsel %vm565, %v5533, %v5537
        %v5540 = vshrl.u32 %v5381, 16
        %v5542 = vrot.slane %v5540, 4
        %v5543 = vshll.u32 %v5381, 16
        %v5545 = vrot.slane %v5543, 5
        %v5546 = vor.u32 %v5542, %v5545
        %v5547 = vrot.slane %v5546, 4
        %v5549 = vshll.u32 %v5382, 16
        %v5551 = vrot.slane %v5549, 5
        %v5552 = vsel %vm565, %v5547, %v5551
        %v5553 = vshrl.u32 %v5382, 16
        %v5555 = vrot.slane %v5553, 4
        %v5556 = vor.u32 %v5555, %v5551
        %v5557 = vrot.slane %v5556, 4
        %v5559 = vshll.u32 %v5408, 16
        %v5561 = vrot.slane %v5559, 5
        %v5562 = vsel %vm565, %v5557, %v5561
        %v5564 = vshrl.u32 %v5383, 16
        %v5566 = vrot.slane %v5564, 4
        %v5567 = vshll.u32 %v5383, 16
        %v5569 = vrot.slane %v5567, 5
        %v5570 = vor.u32 %v5566, %v5569
        %v5571 = vrot.slane %v5570, 4
        %v5573 = vshll.u32 %v5384, 16
        %v5575 = vrot.slane %v5573, 5
        %v5576 = vsel %vm565, %v5571, %v5575
        %v5577 = vshrl.u32 %v5384, 16
        %v5579 = vrot.slane %v5577, 4
        %v5580 = vor.u32 %v5579, %v5575
        %v5581 = vrot.slane %v5580, 4
        %v5583 = vshll.u32 %v5409, 16
        %v5585 = vrot.slane %v5583, 5
        %v5586 = vsel %vm565, %v5581, %v5585
        %v5588 = vshrl.u32 %v5385, 16
        %v5590 = vrot.slane %v5588, 4
        %v5591 = vshll.u32 %v5385, 16
        %v5593 = vrot.slane %v5591, 5
        %v5594 = vor.u32 %v5590, %v5593
        %v5595 = vrot.slane %v5594, 4
        %v5597 = vshll.u32 %v5386, 16
        %v5599 = vrot.slane %v5597, 5
        %v5600 = vsel %vm565, %v5595, %v5599
        %v5601 = vshrl.u32 %v5386, 16
        %v5603 = vrot.slane %v5601, 4
        %v5604 = vor.u32 %v5603, %v5599
        %v5605 = vrot.slane %v5604, 4
        %v5607 = vshll.u32 %v5410, 16
        %v5609 = vrot.slane %v5607, 5
        %v5610 = vsel %vm565, %v5605, %v5609
        %v5612 = vshrl.u32 %v5387, 16
        %v5614 = vrot.slane %v5612, 4
        %v5615 = vshll.u32 %v5387, 16
        %v5617 = vrot.slane %v5615, 5
        %v5618 = vor.u32 %v5614, %v5617
        %v5619 = vrot.slane %v5618, 4
        %v5621 = vshll.u32 %v5388, 16
        %v5623 = vrot.slane %v5621, 5
        %v5624 = vsel %vm565, %v5619, %v5623
        %v5625 = vshrl.u32 %v5388, 16
        %v5627 = vrot.slane %v5625, 4
        %v5628 = vor.u32 %v5627, %v5623
        %v5629 = vrot.slane %v5628, 4
        %v5631 = vshll.u32 %v5411, 16
        %v5633 = vrot.slane %v5631, 5
        %v5634 = vsel %vm565, %v5629, %v5633
        %v5636 = vshrl.u32 %v5389, 16
        %v5638 = vrot.slane %v5636, 4
        %v5639 = vshll.u32 %v5389, 16
        %v5641 = vrot.slane %v5639, 5
        %v5642 = vor.u32 %v5638, %v5641
        %v5643 = vrot.slane %v5642, 4
        %v5645 = vshll.u32 %v5390, 16
        %v5647 = vrot.slane %v5645, 5
        %v5648 = vsel %vm565, %v5643, %v5647
        %v5649 = vshrl.u32 %v5390, 16
        %v5651 = vrot.slane %v5649, 4
        %v5652 = vor.u32 %v5651, %v5647
        %v5653 = vrot.slane %v5652, 4
        %v5655 = vshll.u32 %v5412, 16
        %v5657 = vrot.slane %v5655, 5
        %v5658 = vsel %vm565, %v5653, %v5657
        %v5660 = vshrl.u32 %v5391, 16
        %v5662 = vrot.slane %v5660, 4
        %v5663 = vshll.u32 %v5391, 16
        %v5665 = vrot.slane %v5663, 5
        %v5666 = vor.u32 %v5662, %v5665
        %v5667 = vrot.slane %v5666, 4
        %v5669 = vshll.u32 %v5392, 16
        %v5671 = vrot.slane %v5669, 5
        %v5672 = vsel %vm565, %v5667, %v5671
        %v5673 = vshrl.u32 %v5392, 16
        %v5675 = vrot.slane %v5673, 4
        %v5676 = vor.u32 %v5675, %v5671
        %v5677 = vrot.slane %v5676, 4
        %v5679 = vshll.u32 %v5413, 16
        %v5681 = vrot.slane %v5679, 5
        %v5682 = vsel %vm565, %v5677, %v5681
        %v5684 = vshrl.u32 %v5393, 16
        %v5686 = vrot.slane %v5684, 4
        %v5687 = vshll.u32 %v5393, 16
        %v5689 = vrot.slane %v5687, 5
        %v5690 = vor.u32 %v5686, %v5689
        %v5691 = vrot.slane %v5690, 4
        %v5693 = vshll.u32 %v5394, 16
        %v5695 = vrot.slane %v5693, 5
        %v5696 = vsel %vm565, %v5691, %v5695
        %v5697 = vshrl.u32 %v5394, 16
        %v5699 = vrot.slane %v5697, 4
        %v5700 = vor.u32 %v5699, %v5695
        %v5701 = vrot.slane %v5700, 4
        %v5703 = vshll.u32 %v5414, 16
        %v5705 = vrot.slane %v5703, 5
        %v5706 = vsel %vm565, %v5701, %v5705
        %v5708 = vshrl.u32 %v5395, 16
        %v5710 = vrot.slane %v5708, 4
        %v5711 = vshll.u32 %v5395, 16
        %v5713 = vrot.slane %v5711, 5
        %v5714 = vor.u32 %v5710, %v5713
        %v5715 = vrot.slane %v5714, 4
        %v5717 = vshll.u32 %v5396, 16
        %v5719 = vrot.slane %v5717, 5
        %v5720 = vsel %vm565, %v5715, %v5719
        %v5721 = vshrl.u32 %v5396, 16
        %v5723 = vrot.slane %v5721, 4
        %v5724 = vor.u32 %v5723, %v5719
        %v5725 = vrot.slane %v5724, 4
        %v5727 = vshll.u32 %v5415, 16
        %v5729 = vrot.slane %v5727, 5
        %v5730 = vsel %vm565, %v5725, %v5729
        %v5732 = vshrl.u32 %v5397, 16
        %v5734 = vrot.slane %v5732, 4
        %v5735 = vshll.u32 %v5397, 16
        %v5737 = vrot.slane %v5735, 5
        %v5738 = vor.u32 %v5734, %v5737
        %v5739 = vrot.slane %v5738, 4
        %v5741 = vshll.u32 %v5398, 16
        %v5743 = vrot.slane %v5741, 5
        %v5744 = vsel %vm565, %v5739, %v5743
        %v5745 = vshrl.u32 %v5398, 16
        %v5747 = vrot.slane %v5745, 4
        %v5748 = vor.u32 %v5747, %v5743
        %v5749 = vrot.slane %v5748, 4
        %v5751 = vshll.u32 %v5416, 16
        %v5753 = vrot.slane %v5751, 5
        %v5754 = vsel %vm565, %v5749, %v5753
        %v5756 = vshrl.u32 %v5399, 16
        %v5758 = vrot.slane %v5756, 4
        %v5759 = vshll.u32 %v5399, 16
        %v5761 = vrot.slane %v5759, 5
        %v5762 = vor.u32 %v5758, %v5761
        %v5763 = vrot.slane %v5762, 4
        %v5765 = vshll.u32 %v5400, 16
        %v5767 = vrot.slane %v5765, 5
        %v5768 = vsel %vm565, %v5763, %v5767
        %v5769 = vshrl.u32 %v5400, 16
        %v5771 = vrot.slane %v5769, 4
        %v5772 = vor.u32 %v5771, %v5767
        %v5773 = vrot.slane %v5772, 4
        %v5775 = vshll.u32 %v5417, 16
        %v5777 = vrot.slane %v5775, 5
        %v5778 = vsel %vm565, %v5773, %v5777
        %v5780 = vshrl.u32 %v5401, 16
        %v5782 = vrot.slane %v5780, 4
        %v5783 = vshll.u32 %v5401, 16
        %v5785 = vrot.slane %v5783, 5
        %v5786 = vor.u32 %v5782, %v5785
        %v5787 = vrot.slane %v5786, 4
        %v5789 = vshll.u32 %v5402, 16
        %v5791 = vrot.slane %v5789, 5
        %v5792 = vsel %vm565, %v5787, %v5791
        %v5793 = vshrl.u32 %v5402, 16
        %v5795 = vrot.slane %v5793, 4
        %v5796 = vor.u32 %v5795, %v5791
        %v5797 = vrot.slane %v5796, 4
        %v5799 = vshll.u32 %v5418, 16
        %v5801 = vrot.slane %v5799, 5
        %v5802 = vsel %vm565, %v5797, %v5801
        %v5803 = vld [vmem:[%s4648] sm:$0xe]
        %v5804 = vld [vmem:[%s4648 + $0xc] sm:$0xe]
        %v5805 = vld [vmem:[%s4648 + $0x18] sm:$0xe]
        %v5806 = vld [vmem:[%s4648 + $0x24] sm:$0xe]
        %v5807 = vld [vmem:[%s4648 + $0x30] sm:$0xe]
        %v5808 = vld [vmem:[%s4648 + $0x3c] sm:$0xe]
        %v5809 = vld [vmem:[%s4648 + $0x48] sm:$0xe]
        %v5810 = vld [vmem:[%s4648 + $0x54] sm:$0xe]
        %v5811 = vld [vmem:[%s4648 + $0x60] sm:$0xe]
        %v5812 = vld [vmem:[%s4648 + $0x6c] sm:$0xe]
        %v5813 = vld [vmem:[%s4648 + $0x78] sm:$0xe]
        %v5814 = vld [vmem:[%s4648 + $0x84] sm:$0xe]
        %v5815 = vld [vmem:[%s4648 + $0x90] sm:$0xe]
        %v5816 = vld [vmem:[%s4648 + $0x9c] sm:$0xe]
        %v5817 = vld [vmem:[%s4648 + $0xa8] sm:$0xe]
        %v5818 = vld [vmem:[%s4648 + $0xb4] sm:$0xe]
        %v5867 = vrot.slane %v5803, 5
        %v5868 = vrot.slane %v5867, 4
        %v5869 = vrot.slane %v5372, 5
        %v5870 = vsel %vm1016, %v5868, %v5869
        %v5871 = vrot.slane %v5869, 4
        %v5872 = vrot.slane %v5403, 5
        %v5873 = vsel %vm1016, %v5871, %v5872
        %v5874 = vrot.slane %v5804, 5
        %v5875 = vrot.slane %v5874, 4
        %v5876 = vrot.slane %v5374, 5
        %v5877 = vsel %vm1016, %v5875, %v5876
        %v5878 = vrot.slane %v5876, 4
        %v5879 = vrot.slane %v5404, 5
        %v5880 = vsel %vm1016, %v5878, %v5879
        %v5881 = vrot.slane %v5805, 5
        %v5882 = vrot.slane %v5881, 4
        %v5883 = vrot.slane %v5376, 5
        %v5884 = vsel %vm1016, %v5882, %v5883
        %v5885 = vrot.slane %v5883, 4
        %v5886 = vrot.slane %v5405, 5
        %v5887 = vsel %vm1016, %v5885, %v5886
        %v5888 = vrot.slane %v5806, 5
        %v5889 = vrot.slane %v5888, 4
        %v5890 = vrot.slane %v5378, 5
        %v5891 = vsel %vm1016, %v5889, %v5890
        %v5892 = vrot.slane %v5890, 4
        %v5893 = vrot.slane %v5406, 5
        %v5894 = vsel %vm1016, %v5892, %v5893
        %v5895 = vrot.slane %v5807, 5
        %v5896 = vrot.slane %v5895, 4
        %v5897 = vrot.slane %v5380, 5
        %v5898 = vsel %vm1016, %v5896, %v5897
        %v5899 = vrot.slane %v5897, 4
        %v5900 = vrot.slane %v5407, 5
        %v5901 = vsel %vm1016, %v5899, %v5900
        %v5902 = vrot.slane %v5808, 5
        %v5903 = vrot.slane %v5902, 4
        %v5904 = vrot.slane %v5382, 5
        %v5905 = vsel %vm1016, %v5903, %v5904
        %v5906 = vrot.slane %v5904, 4
        %v5907 = vrot.slane %v5408, 5
        %v5908 = vsel %vm1016, %v5906, %v5907
        %v5909 = vrot.slane %v5809, 5
        %v5910 = vrot.slane %v5909, 4
        %v5911 = vrot.slane %v5384, 5
        %v5912 = vsel %vm1016, %v5910, %v5911
        %v5913 = vrot.slane %v5911, 4
        %v5914 = vrot.slane %v5409, 5
        %v5915 = vsel %vm1016, %v5913, %v5914
        %v5916 = vrot.slane %v5810, 5
        %v5917 = vrot.slane %v5916, 4
        %v5918 = vrot.slane %v5386, 5
        %v5919 = vsel %vm1016, %v5917, %v5918
        %v5920 = vrot.slane %v5918, 4
        %v5921 = vrot.slane %v5410, 5
        %v5922 = vsel %vm1016, %v5920, %v5921
        %v5923 = vrot.slane %v5811, 5
        %v5924 = vrot.slane %v5923, 4
        %v5925 = vrot.slane %v5388, 5
        %v5926 = vsel %vm1016, %v5924, %v5925
        %v5927 = vrot.slane %v5925, 4
        %v5928 = vrot.slane %v5411, 5
        %v5929 = vsel %vm1016, %v5927, %v5928
        %v5930 = vrot.slane %v5812, 5
        %v5931 = vrot.slane %v5930, 4
        %v5932 = vrot.slane %v5390, 5
        %v5933 = vsel %vm1016, %v5931, %v5932
        %v5934 = vrot.slane %v5932, 4
        %v5935 = vrot.slane %v5412, 5
        %v5936 = vsel %vm1016, %v5934, %v5935
        %v5937 = vrot.slane %v5813, 5
        %v5938 = vrot.slane %v5937, 4
        %v5939 = vrot.slane %v5392, 5
        %v5940 = vsel %vm1016, %v5938, %v5939
        %v5941 = vrot.slane %v5939, 4
        %v5942 = vrot.slane %v5413, 5
        %v5943 = vsel %vm1016, %v5941, %v5942
        %v5944 = vrot.slane %v5814, 5
        %v5945 = vrot.slane %v5944, 4
        %v5946 = vrot.slane %v5394, 5
        %v5947 = vsel %vm1016, %v5945, %v5946
        %v5948 = vrot.slane %v5946, 4
        %v5949 = vrot.slane %v5414, 5
        %v5950 = vsel %vm1016, %v5948, %v5949
        %v5951 = vrot.slane %v5815, 5
        %v5952 = vrot.slane %v5951, 4
        %v5953 = vrot.slane %v5396, 5
        %v5954 = vsel %vm1016, %v5952, %v5953
        %v5955 = vrot.slane %v5953, 4
        %v5956 = vrot.slane %v5415, 5
        %v5957 = vsel %vm1016, %v5955, %v5956
        %v5958 = vrot.slane %v5816, 5
        %v5959 = vrot.slane %v5958, 4
        %v5960 = vrot.slane %v5398, 5
        %v5961 = vsel %vm1016, %v5959, %v5960
        %v5962 = vrot.slane %v5960, 4
        %v5963 = vrot.slane %v5416, 5
        %v5964 = vsel %vm1016, %v5962, %v5963
        %v5965 = vrot.slane %v5817, 5
        %v5966 = vrot.slane %v5965, 4
        %v5967 = vrot.slane %v5400, 5
        %v5968 = vsel %vm1016, %v5966, %v5967
        %v5969 = vrot.slane %v5967, 4
        %v5970 = vrot.slane %v5417, 5
        %v5971 = vsel %vm1016, %v5969, %v5970
        %v5972 = vrot.slane %v5818, 5
        %v5973 = vrot.slane %v5972, 4
        %v5974 = vrot.slane %v5402, 5
        %v5975 = vsel %vm1016, %v5973, %v5974
        %v5976 = vrot.slane %v5974, 4
        %v5977 = vrot.slane %v5418, 5
        %v5978 = vsel %vm1016, %v5976, %v5977
        %s5979 = scalar_lea.vmem [#allocation2], 24
        %v5980 = vld [vmem:[%s5979] sm:$0xf]
        %v5981 = vld [vmem:[%s5979 + $0x4] sm:$0xf]
        %v5982 = vld [vmem:[%s5979 + $0xc] sm:$0xf]
        %v5983 = vld [vmem:[%s5979 + $0x10] sm:$0xf]
        %v5984 = vld [vmem:[%s5979 + $0x18] sm:$0xf]
        %v5985 = vld [vmem:[%s5979 + $0x1c] sm:$0xf]
        %v5986 = vld [vmem:[%s5979 + $0x24] sm:$0xf]
        %v5987 = vld [vmem:[%s5979 + $0x28] sm:$0xf]
        %v5988 = vld [vmem:[%s5979 + $0x30] sm:$0xf]
        %v5989 = vld [vmem:[%s5979 + $0x34] sm:$0xf]
        %v5990 = vld [vmem:[%s5979 + $0x3c] sm:$0xf]
        %v5991 = vld [vmem:[%s5979 + $0x40] sm:$0xf]
        %v5992 = vld [vmem:[%s5979 + $0x48] sm:$0xf]
        %v5993 = vld [vmem:[%s5979 + $0x4c] sm:$0xf]
        %v5994 = vld [vmem:[%s5979 + $0x54] sm:$0xf]
        %v5995 = vld [vmem:[%s5979 + $0x58] sm:$0xf]
        %v5996 = vld [vmem:[%s5979 + $0x60] sm:$0xf]
        %v5997 = vld [vmem:[%s5979 + $0x64] sm:$0xf]
        %v5998 = vld [vmem:[%s5979 + $0x6c] sm:$0xf]
        %v5999 = vld [vmem:[%s5979 + $0x70] sm:$0xf]
        %v6000 = vld [vmem:[%s5979 + $0x78] sm:$0xf]
        %v6001 = vld [vmem:[%s5979 + $0x7c] sm:$0xf]
        %v6002 = vld [vmem:[%s5979 + $0x84] sm:$0xf]
        %v6003 = vld [vmem:[%s5979 + $0x88] sm:$0xf]
        %v6004 = vld [vmem:[%s5979 + $0x90] sm:$0xf]
        %v6005 = vld [vmem:[%s5979 + $0x94] sm:$0xf]
        %v6006 = vld [vmem:[%s5979 + $0x9c] sm:$0xf]
        %v6007 = vld [vmem:[%s5979 + $0xa0] sm:$0xf]
        %v6008 = vld [vmem:[%s5979 + $0xa8] sm:$0xf]
        %v6009 = vld [vmem:[%s5979 + $0xac] sm:$0xf]
        %v6010 = vld [vmem:[%s5979 + $0xb4] sm:$0xf]
        %v6011 = vld [vmem:[%s5979 + $0xb8] sm:$0xf]
        %v6012 = vld [vmem:[%s5979 + $0x8] sm:$0x1]
        %v6013 = vld [vmem:[%s5979 + $0x14] sm:$0x1]
        %v6014 = vld [vmem:[%s5979 + $0x20] sm:$0x1]
        %v6015 = vld [vmem:[%s5979 + $0x2c] sm:$0x1]
        %v6016 = vld [vmem:[%s5979 + $0x38] sm:$0x1]
        %v6017 = vld [vmem:[%s5979 + $0x44] sm:$0x1]
        %v6018 = vld [vmem:[%s5979 + $0x50] sm:$0x1]
        %v6019 = vld [vmem:[%s5979 + $0x5c] sm:$0x1]
        %v6020 = vld [vmem:[%s5979 + $0x68] sm:$0x1]
        %v6021 = vld [vmem:[%s5979 + $0x74] sm:$0x1]
        %v6022 = vld [vmem:[%s5979 + $0x80] sm:$0x1]
        %v6023 = vld [vmem:[%s5979 + $0x8c] sm:$0x1]
        %v6024 = vld [vmem:[%s5979 + $0x98] sm:$0x1]
        %v6025 = vld [vmem:[%s5979 + $0xa4] sm:$0x1]
        %v6026 = vld [vmem:[%s5979 + $0xb0] sm:$0x1]
        %v6027 = vld [vmem:[%s5979 + $0xbc] sm:$0x1]
        %v6029 = vshrl.u32 %v5980, 16
        %v6031 = vrot.slane %v6029, 4
        %v6032 = vshll.u32 %v5980, 16
        %v6034 = vrot.slane %v6032, 5
        %v6035 = vor.u32 %v6031, %v6034
        %v6036 = vrot.slane %v6035, 4
        %v6038 = vshll.u32 %v5981, 16
        %v6040 = vrot.slane %v6038, 5
        %v6041 = vsel %vm565, %v6036, %v6040
        %v6042 = vshrl.u32 %v5981, 16
        %v6044 = vrot.slane %v6042, 4
        %v6045 = vor.u32 %v6044, %v6040
        %v6046 = vrot.slane %v6045, 4
        %v6048 = vshll.u32 %v6012, 16
        %v6050 = vrot.slane %v6048, 5
        %v6051 = vsel %vm565, %v6046, %v6050
        %v6053 = vshrl.u32 %v5982, 16
        %v6055 = vrot.slane %v6053, 4
        %v6056 = vshll.u32 %v5982, 16
        %v6058 = vrot.slane %v6056, 5
        %v6059 = vor.u32 %v6055, %v6058
        %v6060 = vrot.slane %v6059, 4
        %v6062 = vshll.u32 %v5983, 16
        %v6064 = vrot.slane %v6062, 5
        %v6065 = vsel %vm565, %v6060, %v6064
        %v6066 = vshrl.u32 %v5983, 16
        %v6068 = vrot.slane %v6066, 4
        %v6069 = vor.u32 %v6068, %v6064
        %v6070 = vrot.slane %v6069, 4
        %v6072 = vshll.u32 %v6013, 16
        %v6074 = vrot.slane %v6072, 5
        %v6075 = vsel %vm565, %v6070, %v6074
        %v6077 = vshrl.u32 %v5984, 16
        %v6079 = vrot.slane %v6077, 4
        %v6080 = vshll.u32 %v5984, 16
        %v6082 = vrot.slane %v6080, 5
        %v6083 = vor.u32 %v6079, %v6082
        %v6084 = vrot.slane %v6083, 4
        %v6086 = vshll.u32 %v5985, 16
        %v6088 = vrot.slane %v6086, 5
        %v6089 = vsel %vm565, %v6084, %v6088
        %v6090 = vshrl.u32 %v5985, 16
        %v6092 = vrot.slane %v6090, 4
        %v6093 = vor.u32 %v6092, %v6088
        %v6094 = vrot.slane %v6093, 4
        %v6096 = vshll.u32 %v6014, 16
        %v6098 = vrot.slane %v6096, 5
        %v6099 = vsel %vm565, %v6094, %v6098
        %v6101 = vshrl.u32 %v5986, 16
        %v6103 = vrot.slane %v6101, 4
        %v6104 = vshll.u32 %v5986, 16
        %v6106 = vrot.slane %v6104, 5
        %v6107 = vor.u32 %v6103, %v6106
        %v6108 = vrot.slane %v6107, 4
        %v6110 = vshll.u32 %v5987, 16
        %v6112 = vrot.slane %v6110, 5
        %v6113 = vsel %vm565, %v6108, %v6112
        %v6114 = vshrl.u32 %v5987, 16
        %v6116 = vrot.slane %v6114, 4
        %v6117 = vor.u32 %v6116, %v6112
        %v6118 = vrot.slane %v6117, 4
        %v6120 = vshll.u32 %v6015, 16
        %v6122 = vrot.slane %v6120, 5
        %v6123 = vsel %vm565, %v6118, %v6122
        %v6125 = vshrl.u32 %v5988, 16
        %v6127 = vrot.slane %v6125, 4
        %v6128 = vshll.u32 %v5988, 16
        %v6130 = vrot.slane %v6128, 5
        %v6131 = vor.u32 %v6127, %v6130
        %v6132 = vrot.slane %v6131, 4
        %v6134 = vshll.u32 %v5989, 16
        %v6136 = vrot.slane %v6134, 5
        %v6137 = vsel %vm565, %v6132, %v6136
        %v6138 = vshrl.u32 %v5989, 16
        %v6140 = vrot.slane %v6138, 4
        %v6141 = vor.u32 %v6140, %v6136
        %v6142 = vrot.slane %v6141, 4
        %v6144 = vshll.u32 %v6016, 16
        %v6146 = vrot.slane %v6144, 5
        %v6147 = vsel %vm565, %v6142, %v6146
        %v6149 = vshrl.u32 %v5990, 16
        %v6151 = vrot.slane %v6149, 4
        %v6152 = vshll.u32 %v5990, 16
        %v6154 = vrot.slane %v6152, 5
        %v6155 = vor.u32 %v6151, %v6154
        %v6156 = vrot.slane %v6155, 4
        %v6158 = vshll.u32 %v5991, 16
        %v6160 = vrot.slane %v6158, 5
        %v6161 = vsel %vm565, %v6156, %v6160
        %v6162 = vshrl.u32 %v5991, 16
        %v6164 = vrot.slane %v6162, 4
        %v6165 = vor.u32 %v6164, %v6160
        %v6166 = vrot.slane %v6165, 4
        %v6168 = vshll.u32 %v6017, 16
        %v6170 = vrot.slane %v6168, 5
        %v6171 = vsel %vm565, %v6166, %v6170
        %v6173 = vshrl.u32 %v5992, 16
        %v6175 = vrot.slane %v6173, 4
        %v6176 = vshll.u32 %v5992, 16
        %v6178 = vrot.slane %v6176, 5
        %v6179 = vor.u32 %v6175, %v6178
        %v6180 = vrot.slane %v6179, 4
        %v6182 = vshll.u32 %v5993, 16
        %v6184 = vrot.slane %v6182, 5
        %v6185 = vsel %vm565, %v6180, %v6184
        %v6186 = vshrl.u32 %v5993, 16
        %v6188 = vrot.slane %v6186, 4
        %v6189 = vor.u32 %v6188, %v6184
        %v6190 = vrot.slane %v6189, 4
        %v6192 = vshll.u32 %v6018, 16
        %v6194 = vrot.slane %v6192, 5
        %v6195 = vsel %vm565, %v6190, %v6194
        %v6197 = vshrl.u32 %v5994, 16
        %v6199 = vrot.slane %v6197, 4
        %v6200 = vshll.u32 %v5994, 16
        %v6202 = vrot.slane %v6200, 5
        %v6203 = vor.u32 %v6199, %v6202
        %v6204 = vrot.slane %v6203, 4
        %v6206 = vshll.u32 %v5995, 16
        %v6208 = vrot.slane %v6206, 5
        %v6209 = vsel %vm565, %v6204, %v6208
        %v6210 = vshrl.u32 %v5995, 16
        %v6212 = vrot.slane %v6210, 4
        %v6213 = vor.u32 %v6212, %v6208
        %v6214 = vrot.slane %v6213, 4
        %v6216 = vshll.u32 %v6019, 16
        %v6218 = vrot.slane %v6216, 5
        %v6219 = vsel %vm565, %v6214, %v6218
        %v6221 = vshrl.u32 %v5996, 16
        %v6223 = vrot.slane %v6221, 4
        %v6224 = vshll.u32 %v5996, 16
        %v6226 = vrot.slane %v6224, 5
        %v6227 = vor.u32 %v6223, %v6226
        %v6228 = vrot.slane %v6227, 4
        %v6230 = vshll.u32 %v5997, 16
        %v6232 = vrot.slane %v6230, 5
        %v6233 = vsel %vm565, %v6228, %v6232
        %v6234 = vshrl.u32 %v5997, 16
        %v6236 = vrot.slane %v6234, 4
        %v6237 = vor.u32 %v6236, %v6232
        %v6238 = vrot.slane %v6237, 4
        %v6240 = vshll.u32 %v6020, 16
        %v6242 = vrot.slane %v6240, 5
        %v6243 = vsel %vm565, %v6238, %v6242
        %v6245 = vshrl.u32 %v5998, 16
        %v6247 = vrot.slane %v6245, 4
        %v6248 = vshll.u32 %v5998, 16
        %v6250 = vrot.slane %v6248, 5
        %v6251 = vor.u32 %v6247, %v6250
        %v6252 = vrot.slane %v6251, 4
        %v6254 = vshll.u32 %v5999, 16
        %v6256 = vrot.slane %v6254, 5
        %v6257 = vsel %vm565, %v6252, %v6256
        %v6258 = vshrl.u32 %v5999, 16
        %v6260 = vrot.slane %v6258, 4
        %v6261 = vor.u32 %v6260, %v6256
        %v6262 = vrot.slane %v6261, 4
        %v6264 = vshll.u32 %v6021, 16
        %v6266 = vrot.slane %v6264, 5
        %v6267 = vsel %vm565, %v6262, %v6266
        %v6269 = vshrl.u32 %v6000, 16
        %v6271 = vrot.slane %v6269, 4
        %v6272 = vshll.u32 %v6000, 16
        %v6274 = vrot.slane %v6272, 5
        %v6275 = vor.u32 %v6271, %v6274
        %v6276 = vrot.slane %v6275, 4
        %v6278 = vshll.u32 %v6001, 16
        %v6280 = vrot.slane %v6278, 5
        %v6281 = vsel %vm565, %v6276, %v6280
        %v6282 = vshrl.u32 %v6001, 16
        %v6284 = vrot.slane %v6282, 4
        %v6285 = vor.u32 %v6284, %v6280
        %v6286 = vrot.slane %v6285, 4
        %v6288 = vshll.u32 %v6022, 16
        %v6290 = vrot.slane %v6288, 5
        %v6291 = vsel %vm565, %v6286, %v6290
        %v6293 = vshrl.u32 %v6002, 16
        %v6295 = vrot.slane %v6293, 4
        %v6296 = vshll.u32 %v6002, 16
        %v6298 = vrot.slane %v6296, 5
        %v6299 = vor.u32 %v6295, %v6298
        %v6300 = vrot.slane %v6299, 4
        %v6302 = vshll.u32 %v6003, 16
        %v6304 = vrot.slane %v6302, 5
        %v6305 = vsel %vm565, %v6300, %v6304
        %v6306 = vshrl.u32 %v6003, 16
        %v6308 = vrot.slane %v6306, 4
        %v6309 = vor.u32 %v6308, %v6304
        %v6310 = vrot.slane %v6309, 4
        %v6312 = vshll.u32 %v6023, 16
        %v6314 = vrot.slane %v6312, 5
        %v6315 = vsel %vm565, %v6310, %v6314
        %v6317 = vshrl.u32 %v6004, 16
        %v6319 = vrot.slane %v6317, 4
        %v6320 = vshll.u32 %v6004, 16
        %v6322 = vrot.slane %v6320, 5
        %v6323 = vor.u32 %v6319, %v6322
        %v6324 = vrot.slane %v6323, 4
        %v6326 = vshll.u32 %v6005, 16
        %v6328 = vrot.slane %v6326, 5
        %v6329 = vsel %vm565, %v6324, %v6328
        %v6330 = vshrl.u32 %v6005, 16
        %v6332 = vrot.slane %v6330, 4
        %v6333 = vor.u32 %v6332, %v6328
        %v6334 = vrot.slane %v6333, 4
        %v6336 = vshll.u32 %v6024, 16
        %v6338 = vrot.slane %v6336, 5
        %v6339 = vsel %vm565, %v6334, %v6338
        %v6341 = vshrl.u32 %v6006, 16
        %v6343 = vrot.slane %v6341, 4
        %v6344 = vshll.u32 %v6006, 16
        %v6346 = vrot.slane %v6344, 5
        %v6347 = vor.u32 %v6343, %v6346
        %v6348 = vrot.slane %v6347, 4
        %v6350 = vshll.u32 %v6007, 16
        %v6352 = vrot.slane %v6350, 5
        %v6353 = vsel %vm565, %v6348, %v6352
        %v6354 = vshrl.u32 %v6007, 16
        %v6356 = vrot.slane %v6354, 4
        %v6357 = vor.u32 %v6356, %v6352
        %v6358 = vrot.slane %v6357, 4
        %v6360 = vshll.u32 %v6025, 16
        %v6362 = vrot.slane %v6360, 5
        %v6363 = vsel %vm565, %v6358, %v6362
        %v6365 = vshrl.u32 %v6008, 16
        %v6367 = vrot.slane %v6365, 4
        %v6368 = vshll.u32 %v6008, 16
        %v6370 = vrot.slane %v6368, 5
        %v6371 = vor.u32 %v6367, %v6370
        %v6372 = vrot.slane %v6371, 4
        %v6374 = vshll.u32 %v6009, 16
        %v6376 = vrot.slane %v6374, 5
        %v6377 = vsel %vm565, %v6372, %v6376
        %v6378 = vshrl.u32 %v6009, 16
        %v6380 = vrot.slane %v6378, 4
        %v6381 = vor.u32 %v6380, %v6376
        %v6382 = vrot.slane %v6381, 4
        %v6384 = vshll.u32 %v6026, 16
        %v6386 = vrot.slane %v6384, 5
        %v6387 = vsel %vm565, %v6382, %v6386
        %v6389 = vshrl.u32 %v6010, 16
        %v6391 = vrot.slane %v6389, 4
        %v6392 = vshll.u32 %v6010, 16
        %v6394 = vrot.slane %v6392, 5
        %v6395 = vor.u32 %v6391, %v6394
        %v6396 = vrot.slane %v6395, 4
        %v6398 = vshll.u32 %v6011, 16
        %v6400 = vrot.slane %v6398, 5
        %v6401 = vsel %vm565, %v6396, %v6400
        %v6402 = vshrl.u32 %v6011, 16
        %v6404 = vrot.slane %v6402, 4
        %v6405 = vor.u32 %v6404, %v6400
        %v6406 = vrot.slane %v6405, 4
        %v6408 = vshll.u32 %v6027, 16
        %v6410 = vrot.slane %v6408, 5
        %v6411 = vsel %vm565, %v6406, %v6410
        %v6412 = vld [vmem:[%s5979] sm:$0xe]
        %v6413 = vld [vmem:[%s5979 + $0xc] sm:$0xe]
        %v6414 = vld [vmem:[%s5979 + $0x18] sm:$0xe]
        %v6415 = vld [vmem:[%s5979 + $0x24] sm:$0xe]
        %v6416 = vld [vmem:[%s5979 + $0x30] sm:$0xe]
        %v6417 = vld [vmem:[%s5979 + $0x3c] sm:$0xe]
        %v6418 = vld [vmem:[%s5979 + $0x48] sm:$0xe]
        %v6419 = vld [vmem:[%s5979 + $0x54] sm:$0xe]
        %v6420 = vld [vmem:[%s5979 + $0x60] sm:$0xe]
        %v6421 = vld [vmem:[%s5979 + $0x6c] sm:$0xe]
        %v6422 = vld [vmem:[%s5979 + $0x78] sm:$0xe]
        %v6423 = vld [vmem:[%s5979 + $0x84] sm:$0xe]
        %v6424 = vld [vmem:[%s5979 + $0x90] sm:$0xe]
        %v6425 = vld [vmem:[%s5979 + $0x9c] sm:$0xe]
        %v6426 = vld [vmem:[%s5979 + $0xa8] sm:$0xe]
        %v6427 = vld [vmem:[%s5979 + $0xb4] sm:$0xe]
        %v6476 = vrot.slane %v6412, 5
        %v6477 = vrot.slane %v6476, 4
        %v6478 = vrot.slane %v5981, 5
        %v6479 = vsel %vm1016, %v6477, %v6478
        %v6480 = vrot.slane %v6478, 4
        %v6481 = vrot.slane %v6012, 5
        %v6482 = vsel %vm1016, %v6480, %v6481
        %v6483 = vrot.slane %v6413, 5
        %v6484 = vrot.slane %v6483, 4
        %v6485 = vrot.slane %v5983, 5
        %v6486 = vsel %vm1016, %v6484, %v6485
        %v6487 = vrot.slane %v6485, 4
        %v6488 = vrot.slane %v6013, 5
        %v6489 = vsel %vm1016, %v6487, %v6488
        %v6490 = vrot.slane %v6414, 5
        %v6491 = vrot.slane %v6490, 4
        %v6492 = vrot.slane %v5985, 5
        %v6493 = vsel %vm1016, %v6491, %v6492
        %v6494 = vrot.slane %v6492, 4
        %v6495 = vrot.slane %v6014, 5
        %v6496 = vsel %vm1016, %v6494, %v6495
        %v6497 = vrot.slane %v6415, 5
        %v6498 = vrot.slane %v6497, 4
        %v6499 = vrot.slane %v5987, 5
        %v6500 = vsel %vm1016, %v6498, %v6499
        %v6501 = vrot.slane %v6499, 4
        %v6502 = vrot.slane %v6015, 5
        %v6503 = vsel %vm1016, %v6501, %v6502
        %v6504 = vrot.slane %v6416, 5
        %v6505 = vrot.slane %v6504, 4
        %v6506 = vrot.slane %v5989, 5
        %v6507 = vsel %vm1016, %v6505, %v6506
        %v6508 = vrot.slane %v6506, 4
        %v6509 = vrot.slane %v6016, 5
        %v6510 = vsel %vm1016, %v6508, %v6509
        %v6511 = vrot.slane %v6417, 5
        %v6512 = vrot.slane %v6511, 4
        %v6513 = vrot.slane %v5991, 5
        %v6514 = vsel %vm1016, %v6512, %v6513
        %v6515 = vrot.slane %v6513, 4
        %v6516 = vrot.slane %v6017, 5
        %v6517 = vsel %vm1016, %v6515, %v6516
        %v6518 = vrot.slane %v6418, 5
        %v6519 = vrot.slane %v6518, 4
        %v6520 = vrot.slane %v5993, 5
        %v6521 = vsel %vm1016, %v6519, %v6520
        %v6522 = vrot.slane %v6520, 4
        %v6523 = vrot.slane %v6018, 5
        %v6524 = vsel %vm1016, %v6522, %v6523
        %v6525 = vrot.slane %v6419, 5
        %v6526 = vrot.slane %v6525, 4
        %v6527 = vrot.slane %v5995, 5
        %v6528 = vsel %vm1016, %v6526, %v6527
        %v6529 = vrot.slane %v6527, 4
        %v6530 = vrot.slane %v6019, 5
        %v6531 = vsel %vm1016, %v6529, %v6530
        %v6532 = vrot.slane %v6420, 5
        %v6533 = vrot.slane %v6532, 4
        %v6534 = vrot.slane %v5997, 5
        %v6535 = vsel %vm1016, %v6533, %v6534
        %v6536 = vrot.slane %v6534, 4
        %v6537 = vrot.slane %v6020, 5
        %v6538 = vsel %vm1016, %v6536, %v6537
        %v6539 = vrot.slane %v6421, 5
        %v6540 = vrot.slane %v6539, 4
        %v6541 = vrot.slane %v5999, 5
        %v6542 = vsel %vm1016, %v6540, %v6541
        %v6543 = vrot.slane %v6541, 4
        %v6544 = vrot.slane %v6021, 5
        %v6545 = vsel %vm1016, %v6543, %v6544
        %v6546 = vrot.slane %v6422, 5
        %v6547 = vrot.slane %v6546, 4
        %v6548 = vrot.slane %v6001, 5
        %v6549 = vsel %vm1016, %v6547, %v6548
        %v6550 = vrot.slane %v6548, 4
        %v6551 = vrot.slane %v6022, 5
        %v6552 = vsel %vm1016, %v6550, %v6551
        %v6553 = vrot.slane %v6423, 5
        %v6554 = vrot.slane %v6553, 4
        %v6555 = vrot.slane %v6003, 5
        %v6556 = vsel %vm1016, %v6554, %v6555
        %v6557 = vrot.slane %v6555, 4
        %v6558 = vrot.slane %v6023, 5
        %v6559 = vsel %vm1016, %v6557, %v6558
        %v6560 = vrot.slane %v6424, 5
        %v6561 = vrot.slane %v6560, 4
        %v6562 = vrot.slane %v6005, 5
        %v6563 = vsel %vm1016, %v6561, %v6562
        %v6564 = vrot.slane %v6562, 4
        %v6565 = vrot.slane %v6024, 5
        %v6566 = vsel %vm1016, %v6564, %v6565
        %v6567 = vrot.slane %v6425, 5
        %v6568 = vrot.slane %v6567, 4
        %v6569 = vrot.slane %v6007, 5
        %v6570 = vsel %vm1016, %v6568, %v6569
        %v6571 = vrot.slane %v6569, 4
        %v6572 = vrot.slane %v6025, 5
        %v6573 = vsel %vm1016, %v6571, %v6572
        %v6574 = vrot.slane %v6426, 5
        %v6575 = vrot.slane %v6574, 4
        %v6576 = vrot.slane %v6009, 5
        %v6577 = vsel %vm1016, %v6575, %v6576
        %v6578 = vrot.slane %v6576, 4
        %v6579 = vrot.slane %v6026, 5
        %v6580 = vsel %vm1016, %v6578, %v6579
        %v6581 = vrot.slane %v6427, 5
        %v6582 = vrot.slane %v6581, 4
        %v6583 = vrot.slane %v6011, 5
        %v6584 = vsel %vm1016, %v6582, %v6583
        %v6585 = vrot.slane %v6583, 4
        %v6586 = vrot.slane %v6027, 5
        %v6587 = vsel %vm1016, %v6585, %v6586
        %v6604 = vunpack.c.l.b16 %v4763
        %v6605 = vunpack.c.l.b16 %v4764
        %v6606 = vunpack.c.l.b16 %v4765
        %v6607 = vunpack.c.l.b16 %v4766
        %v6608 = vunpack.c.l.b16 %v4767
        %v6609 = vunpack.c.l.b16 %v4768
        %v6610 = vunpack.c.l.b16 %v4769
        %v6611 = vunpack.c.l.b16 %v4770
        %v6612 = vunpack.c.l.b16 %v4771
        %v6613 = vunpack.c.l.b16 %v4772
        %v6614 = vunpack.c.l.b16 %v4773
        %v6615 = vunpack.c.l.b16 %v4774
        %v6616 = vunpack.c.l.b16 %v4775
        %v6617 = vunpack.c.l.b16 %v4776
        %v6618 = vunpack.c.l.b16 %v4777
        %v6619 = vunpack.c.l.b16 %v4778
        %v6620 = vunpack.c.l.b16 %v4779
        %v6621 = vunpack.c.l.b16 %v4780
        %v6622 = vunpack.c.l.b16 %v4781
        %v6623 = vunpack.c.l.b16 %v4782
        %v6624 = vunpack.c.l.b16 %v4783
        %v6625 = vunpack.c.l.b16 %v4784
        %v6626 = vunpack.c.l.b16 %v4785
        %v6627 = vunpack.c.l.b16 %v4786
        %v6628 = vunpack.c.l.b16 %v4787
        %v6629 = vunpack.c.l.b16 %v4788
        %v6630 = vunpack.c.l.b16 %v4789
        %v6631 = vunpack.c.l.b16 %v4790
        %v6632 = vunpack.c.l.b16 %v4791
        %v6633 = vunpack.c.l.b16 %v4792
        %v6634 = vunpack.c.l.b16 %v4793
        %v6635 = vunpack.c.l.b16 %v4794
        %v6636 = vpack.c.b16 %v6605, %v6604
        %v6637 = vpack.c.b16 %v6607, %v6606
        %v6638 = vpack.c.b16 %v6609, %v6608
        %v6639 = vpack.c.b16 %v6611, %v6610
        %v6640 = vpack.c.b16 %v6613, %v6612
        %v6641 = vpack.c.b16 %v6615, %v6614
        %v6642 = vpack.c.b16 %v6617, %v6616
        %v6643 = vpack.c.b16 %v6619, %v6618
        %v6644 = vpack.c.b16 %v6621, %v6620
        %v6645 = vpack.c.b16 %v6623, %v6622
        %v6646 = vpack.c.b16 %v6625, %v6624
        %v6647 = vpack.c.b16 %v6627, %v6626
        %v6648 = vpack.c.b16 %v6629, %v6628
        %v6649 = vpack.c.b16 %v6631, %v6630
        %v6650 = vpack.c.b16 %v6633, %v6632
        %v6651 = vpack.c.b16 %v6635, %v6634
        %v6652 = vunpack.c.l.b16 %v4824
        %v6653 = vunpack.c.l.b16 %v4834
        %v6654 = vunpack.c.l.b16 %v4848
        %v6655 = vunpack.c.l.b16 %v4858
        %v6656 = vunpack.c.l.b16 %v4872
        %v6657 = vunpack.c.l.b16 %v4882
        %v6658 = vunpack.c.l.b16 %v4896
        %v6659 = vunpack.c.l.b16 %v4906
        %v6660 = vunpack.c.l.b16 %v4920
        %v6661 = vunpack.c.l.b16 %v4930
        %v6662 = vunpack.c.l.b16 %v4944
        %v6663 = vunpack.c.l.b16 %v4954
        %v6664 = vunpack.c.l.b16 %v4968
        %v6665 = vunpack.c.l.b16 %v4978
        %v6666 = vunpack.c.l.b16 %v4992
        %v6667 = vunpack.c.l.b16 %v5002
        %v6668 = vunpack.c.l.b16 %v5016
        %v6669 = vunpack.c.l.b16 %v5026
        %v6670 = vunpack.c.l.b16 %v5040
        %v6671 = vunpack.c.l.b16 %v5050
        %v6672 = vunpack.c.l.b16 %v5064
        %v6673 = vunpack.c.l.b16 %v5074
        %v6674 = vunpack.c.l.b16 %v5088
        %v6675 = vunpack.c.l.b16 %v5098
        %v6676 = vunpack.c.l.b16 %v5112
        %v6677 = vunpack.c.l.b16 %v5122
        %v6678 = vunpack.c.l.b16 %v5136
        %v6679 = vunpack.c.l.b16 %v5146
        %v6680 = vunpack.c.l.b16 %v5160
        %v6681 = vunpack.c.l.b16 %v5170
        %v6682 = vunpack.c.l.b16 %v5184
        %v6683 = vunpack.c.l.b16 %v5194
        %v6684 = vpack.c.b16 %v6653, %v6652
        %v6685 = vpack.c.b16 %v6655, %v6654
        %v6686 = vpack.c.b16 %v6657, %v6656
        %v6687 = vpack.c.b16 %v6659, %v6658
        %v6688 = vpack.c.b16 %v6661, %v6660
        %v6689 = vpack.c.b16 %v6663, %v6662
        %v6690 = vpack.c.b16 %v6665, %v6664
        %v6691 = vpack.c.b16 %v6667, %v6666
        %v6692 = vpack.c.b16 %v6669, %v6668
        %v6693 = vpack.c.b16 %v6671, %v6670
        %v6694 = vpack.c.b16 %v6673, %v6672
        %v6695 = vpack.c.b16 %v6675, %v6674
        %v6696 = vpack.c.b16 %v6677, %v6676
        %v6697 = vpack.c.b16 %v6679, %v6678
        %v6698 = vpack.c.b16 %v6681, %v6680
        %v6699 = vpack.c.b16 %v6683, %v6682
        %6700 = vrot.lane.b32.xlu0 %v6684, 16
        %v6701 = vpop.permute.xlu0 %6700
        %6702 = vrot.lane.b32.xlu0 %v6685, 16
        %v6703 = vpop.permute.xlu0 %6702
        %6704 = vrot.lane.b32.xlu0 %v6686, 16
        %v6705 = vpop.permute.xlu0 %6704
        %6706 = vrot.lane.b32.xlu0 %v6687, 16
        %v6707 = vpop.permute.xlu0 %6706
        %6708 = vrot.lane.b32.xlu0 %v6688, 16
        %v6709 = vpop.permute.xlu0 %6708
        %6710 = vrot.lane.b32.xlu0 %v6689, 16
        %v6711 = vpop.permute.xlu0 %6710
        %6712 = vrot.lane.b32.xlu0 %v6690, 16
        %v6713 = vpop.permute.xlu0 %6712
        %6714 = vrot.lane.b32.xlu0 %v6691, 16
        %v6715 = vpop.permute.xlu0 %6714
        %6716 = vrot.lane.b32.xlu0 %v6692, 16
        %v6717 = vpop.permute.xlu0 %6716
        %6718 = vrot.lane.b32.xlu0 %v6693, 16
        %v6719 = vpop.permute.xlu0 %6718
        %6720 = vrot.lane.b32.xlu0 %v6694, 16
        %v6721 = vpop.permute.xlu0 %6720
        %6722 = vrot.lane.b32.xlu0 %v6695, 16
        %v6723 = vpop.permute.xlu0 %6722
        %6724 = vrot.lane.b32.xlu0 %v6696, 16
        %v6725 = vpop.permute.xlu0 %6724
        %6726 = vrot.lane.b32.xlu0 %v6697, 16
        %v6727 = vpop.permute.xlu0 %6726
        %6728 = vrot.lane.b32.xlu0 %v6698, 16
        %v6729 = vpop.permute.xlu0 %6728
        %6730 = vrot.lane.b32.xlu0 %v6699, 16
        %v6731 = vpop.permute.xlu0 %6730
        %v6732 = vunpack.c.l.b16 %v5262
        %v6733 = vunpack.c.l.b16 %v5265
        %v6734 = vunpack.c.l.b16 %v5269
        %v6735 = vunpack.c.l.b16 %v5272
        %v6736 = vunpack.c.l.b16 %v5276
        %v6737 = vunpack.c.l.b16 %v5279
        %v6738 = vunpack.c.l.b16 %v5283
        %v6739 = vunpack.c.l.b16 %v5286
        %v6740 = vunpack.c.l.b16 %v5290
        %v6741 = vunpack.c.l.b16 %v5293
        %v6742 = vunpack.c.l.b16 %v5297
        %v6743 = vunpack.c.l.b16 %v5300
        %v6744 = vunpack.c.l.b16 %v5304
        %v6745 = vunpack.c.l.b16 %v5307
        %v6746 = vunpack.c.l.b16 %v5311
        %v6747 = vunpack.c.l.b16 %v5314
        %v6748 = vunpack.c.l.b16 %v5318
        %v6749 = vunpack.c.l.b16 %v5321
        %v6750 = vunpack.c.l.b16 %v5325
        %v6751 = vunpack.c.l.b16 %v5328
        %v6752 = vunpack.c.l.b16 %v5332
        %v6753 = vunpack.c.l.b16 %v5335
        %v6754 = vunpack.c.l.b16 %v5339
        %v6755 = vunpack.c.l.b16 %v5342
        %v6756 = vunpack.c.l.b16 %v5346
        %v6757 = vunpack.c.l.b16 %v5349
        %v6758 = vunpack.c.l.b16 %v5353
        %v6759 = vunpack.c.l.b16 %v5356
        %v6760 = vunpack.c.l.b16 %v5360
        %v6761 = vunpack.c.l.b16 %v5363
        %v6762 = vunpack.c.l.b16 %v5367
        %v6763 = vunpack.c.l.b16 %v5370
        %v6764 = vpack.c.b16 %v6733, %v6732
        %v6765 = vpack.c.b16 %v6735, %v6734
        %v6766 = vpack.c.b16 %v6737, %v6736
        %v6767 = vpack.c.b16 %v6739, %v6738
        %v6768 = vpack.c.b16 %v6741, %v6740
        %v6769 = vpack.c.b16 %v6743, %v6742
        %v6770 = vpack.c.b16 %v6745, %v6744
        %v6771 = vpack.c.b16 %v6747, %v6746
        %v6772 = vpack.c.b16 %v6749, %v6748
        %v6773 = vpack.c.b16 %v6751, %v6750
        %v6774 = vpack.c.b16 %v6753, %v6752
        %v6775 = vpack.c.b16 %v6755, %v6754
        %v6776 = vpack.c.b16 %v6757, %v6756
        %v6777 = vpack.c.b16 %v6759, %v6758
        %v6778 = vpack.c.b16 %v6761, %v6760
        %v6779 = vpack.c.b16 %v6763, %v6762
        %6780 = vrot.lane.b32.xlu0 %v6764, 32
        %v6781 = vpop.permute.xlu0 %6780
        %6782 = vrot.lane.b32.xlu0 %v6765, 32
        %v6783 = vpop.permute.xlu0 %6782
        %6784 = vrot.lane.b32.xlu0 %v6766, 32
        %v6785 = vpop.permute.xlu0 %6784
        %6786 = vrot.lane.b32.xlu0 %v6767, 32
        %v6787 = vpop.permute.xlu0 %6786
        %6788 = vrot.lane.b32.xlu0 %v6768, 32
        %v6789 = vpop.permute.xlu0 %6788
        %6790 = vrot.lane.b32.xlu0 %v6769, 32
        %v6791 = vpop.permute.xlu0 %6790
        %6792 = vrot.lane.b32.xlu0 %v6770, 32
        %v6793 = vpop.permute.xlu0 %6792
        %6794 = vrot.lane.b32.xlu0 %v6771, 32
        %v6795 = vpop.permute.xlu0 %6794
        %6796 = vrot.lane.b32.xlu0 %v6772, 32
        %v6797 = vpop.permute.xlu0 %6796
        %6798 = vrot.lane.b32.xlu0 %v6773, 32
        %v6799 = vpop.permute.xlu0 %6798
        %6800 = vrot.lane.b32.xlu0 %v6774, 32
        %v6801 = vpop.permute.xlu0 %6800
        %6802 = vrot.lane.b32.xlu0 %v6775, 32
        %v6803 = vpop.permute.xlu0 %6802
        %6804 = vrot.lane.b32.xlu0 %v6776, 32
        %v6805 = vpop.permute.xlu0 %6804
        %6806 = vrot.lane.b32.xlu0 %v6777, 32
        %v6807 = vpop.permute.xlu0 %6806
        %6808 = vrot.lane.b32.xlu0 %v6778, 32
        %v6809 = vpop.permute.xlu0 %6808
        %6810 = vrot.lane.b32.xlu0 %v6779, 32
        %v6811 = vpop.permute.xlu0 %6810
        %v6828 = vunpack.c.l.b16 %v5371
        %v6829 = vunpack.c.l.b16 %v5372
        %v6830 = vunpack.c.l.b16 %v5373
        %v6831 = vunpack.c.l.b16 %v5374
        %v6832 = vunpack.c.l.b16 %v5375
        %v6833 = vunpack.c.l.b16 %v5376
        %v6834 = vunpack.c.l.b16 %v5377
        %v6835 = vunpack.c.l.b16 %v5378
        %v6836 = vunpack.c.l.b16 %v5379
        %v6837 = vunpack.c.l.b16 %v5380
        %v6838 = vunpack.c.l.b16 %v5381
        %v6839 = vunpack.c.l.b16 %v5382
        %v6840 = vunpack.c.l.b16 %v5383
        %v6841 = vunpack.c.l.b16 %v5384
        %v6842 = vunpack.c.l.b16 %v5385
        %v6843 = vunpack.c.l.b16 %v5386
        %v6844 = vunpack.c.l.b16 %v5387
        %v6845 = vunpack.c.l.b16 %v5388
        %v6846 = vunpack.c.l.b16 %v5389
        %v6847 = vunpack.c.l.b16 %v5390
        %v6848 = vunpack.c.l.b16 %v5391
        %v6849 = vunpack.c.l.b16 %v5392
        %v6850 = vunpack.c.l.b16 %v5393
        %v6851 = vunpack.c.l.b16 %v5394
        %v6852 = vunpack.c.l.b16 %v5395
        %v6853 = vunpack.c.l.b16 %v5396
        %v6854 = vunpack.c.l.b16 %v5397
        %v6855 = vunpack.c.l.b16 %v5398
        %v6856 = vunpack.c.l.b16 %v5399
        %v6857 = vunpack.c.l.b16 %v5400
        %v6858 = vunpack.c.l.b16 %v5401
        %v6859 = vunpack.c.l.b16 %v5402
        %v6860 = vpack.c.b16 %v6829, %v6828
        %v6861 = vpack.c.b16 %v6831, %v6830
        %v6862 = vpack.c.b16 %v6833, %v6832
        %v6863 = vpack.c.b16 %v6835, %v6834
        %v6864 = vpack.c.b16 %v6837, %v6836
        %v6865 = vpack.c.b16 %v6839, %v6838
        %v6866 = vpack.c.b16 %v6841, %v6840
        %v6867 = vpack.c.b16 %v6843, %v6842
        %v6868 = vpack.c.b16 %v6845, %v6844
        %v6869 = vpack.c.b16 %v6847, %v6846
        %v6870 = vpack.c.b16 %v6849, %v6848
        %v6871 = vpack.c.b16 %v6851, %v6850
        %v6872 = vpack.c.b16 %v6853, %v6852
        %v6873 = vpack.c.b16 %v6855, %v6854
        %v6874 = vpack.c.b16 %v6857, %v6856
        %v6875 = vpack.c.b16 %v6859, %v6858
        %6876 = vrot.lane.b32.xlu0 %v6860, 48
        %v6877 = vpop.permute.xlu0 %6876
        %6878 = vrot.lane.b32.xlu0 %v6861, 48
        %v6879 = vpop.permute.xlu0 %6878
        %6880 = vrot.lane.b32.xlu0 %v6862, 48
        %v6881 = vpop.permute.xlu0 %6880
        %6882 = vrot.lane.b32.xlu0 %v6863, 48
        %v6883 = vpop.permute.xlu0 %6882
        %6884 = vrot.lane.b32.xlu0 %v6864, 48
        %v6885 = vpop.permute.xlu0 %6884
        %6886 = vrot.lane.b32.xlu0 %v6865, 48
        %v6887 = vpop.permute.xlu0 %6886
        %6888 = vrot.lane.b32.xlu0 %v6866, 48
        %v6889 = vpop.permute.xlu0 %6888
        %6890 = vrot.lane.b32.xlu0 %v6867, 48
        %v6891 = vpop.permute.xlu0 %6890
        %6892 = vrot.lane.b32.xlu0 %v6868, 48
        %v6893 = vpop.permute.xlu0 %6892
        %6894 = vrot.lane.b32.xlu0 %v6869, 48
        %v6895 = vpop.permute.xlu0 %6894
        %6896 = vrot.lane.b32.xlu0 %v6870, 48
        %v6897 = vpop.permute.xlu0 %6896
        %6898 = vrot.lane.b32.xlu0 %v6871, 48
        %v6899 = vpop.permute.xlu0 %6898
        %6900 = vrot.lane.b32.xlu0 %v6872, 48
        %v6901 = vpop.permute.xlu0 %6900
        %6902 = vrot.lane.b32.xlu0 %v6873, 48
        %v6903 = vpop.permute.xlu0 %6902
        %6904 = vrot.lane.b32.xlu0 %v6874, 48
        %v6905 = vpop.permute.xlu0 %6904
        %6906 = vrot.lane.b32.xlu0 %v6875, 48
        %v6907 = vpop.permute.xlu0 %6906
        %v6908 = vunpack.c.l.b16 %v5432
        %v6909 = vunpack.c.l.b16 %v5442
        %v6910 = vunpack.c.l.b16 %v5456
        %v6911 = vunpack.c.l.b16 %v5466
        %v6912 = vunpack.c.l.b16 %v5480
        %v6913 = vunpack.c.l.b16 %v5490
        %v6914 = vunpack.c.l.b16 %v5504
        %v6915 = vunpack.c.l.b16 %v5514
        %v6916 = vunpack.c.l.b16 %v5528
        %v6917 = vunpack.c.l.b16 %v5538
        %v6918 = vunpack.c.l.b16 %v5552
        %v6919 = vunpack.c.l.b16 %v5562
        %v6920 = vunpack.c.l.b16 %v5576
        %v6921 = vunpack.c.l.b16 %v5586
        %v6922 = vunpack.c.l.b16 %v5600
        %v6923 = vunpack.c.l.b16 %v5610
        %v6924 = vunpack.c.l.b16 %v5624
        %v6925 = vunpack.c.l.b16 %v5634
        %v6926 = vunpack.c.l.b16 %v5648
        %v6927 = vunpack.c.l.b16 %v5658
        %v6928 = vunpack.c.l.b16 %v5672
        %v6929 = vunpack.c.l.b16 %v5682
        %v6930 = vunpack.c.l.b16 %v5696
        %v6931 = vunpack.c.l.b16 %v5706
        %v6932 = vunpack.c.l.b16 %v5720
        %v6933 = vunpack.c.l.b16 %v5730
        %v6934 = vunpack.c.l.b16 %v5744
        %v6935 = vunpack.c.l.b16 %v5754
        %v6936 = vunpack.c.l.b16 %v5768
        %v6937 = vunpack.c.l.b16 %v5778
        %v6938 = vunpack.c.l.b16 %v5792
        %v6939 = vunpack.c.l.b16 %v5802
        %v6940 = vpack.c.b16 %v6909, %v6908
        %v6941 = vpack.c.b16 %v6911, %v6910
        %v6942 = vpack.c.b16 %v6913, %v6912
        %v6943 = vpack.c.b16 %v6915, %v6914
        %v6944 = vpack.c.b16 %v6917, %v6916
        %v6945 = vpack.c.b16 %v6919, %v6918
        %v6946 = vpack.c.b16 %v6921, %v6920
        %v6947 = vpack.c.b16 %v6923, %v6922
        %v6948 = vpack.c.b16 %v6925, %v6924
        %v6949 = vpack.c.b16 %v6927, %v6926
        %v6950 = vpack.c.b16 %v6929, %v6928
        %v6951 = vpack.c.b16 %v6931, %v6930
        %v6952 = vpack.c.b16 %v6933, %v6932
        %v6953 = vpack.c.b16 %v6935, %v6934
        %v6954 = vpack.c.b16 %v6937, %v6936
        %v6955 = vpack.c.b16 %v6939, %v6938
        %6956 = vrot.lane.b32.xlu0 %v6940, 64
        %v6957 = vpop.permute.xlu0 %6956
        %6958 = vrot.lane.b32.xlu0 %v6941, 64
        %v6959 = vpop.permute.xlu0 %6958
        %6960 = vrot.lane.b32.xlu0 %v6942, 64
        %v6961 = vpop.permute.xlu0 %6960
        %6962 = vrot.lane.b32.xlu0 %v6943, 64
        %v6963 = vpop.permute.xlu0 %6962
        %6964 = vrot.lane.b32.xlu0 %v6944, 64
        %v6965 = vpop.permute.xlu0 %6964
        %6966 = vrot.lane.b32.xlu0 %v6945, 64
        %v6967 = vpop.permute.xlu0 %6966
        %6968 = vrot.lane.b32.xlu0 %v6946, 64
        %v6969 = vpop.permute.xlu0 %6968
        %6970 = vrot.lane.b32.xlu0 %v6947, 64
        %v6971 = vpop.permute.xlu0 %6970
        %6972 = vrot.lane.b32.xlu0 %v6948, 64
        %v6973 = vpop.permute.xlu0 %6972
        %6974 = vrot.lane.b32.xlu0 %v6949, 64
        %v6975 = vpop.permute.xlu0 %6974
        %6976 = vrot.lane.b32.xlu0 %v6950, 64
        %v6977 = vpop.permute.xlu0 %6976
        %6978 = vrot.lane.b32.xlu0 %v6951, 64
        %v6979 = vpop.permute.xlu0 %6978
        %6980 = vrot.lane.b32.xlu0 %v6952, 64
        %v6981 = vpop.permute.xlu0 %6980
        %6982 = vrot.lane.b32.xlu0 %v6953, 64
        %v6983 = vpop.permute.xlu0 %6982
        %6984 = vrot.lane.b32.xlu0 %v6954, 64
        %v6985 = vpop.permute.xlu0 %6984
        %6986 = vrot.lane.b32.xlu0 %v6955, 64
        %v6987 = vpop.permute.xlu0 %6986
        %v6988 = vunpack.c.l.b16 %v5870
        %v6989 = vunpack.c.l.b16 %v5873
        %v6990 = vunpack.c.l.b16 %v5877
        %v6991 = vunpack.c.l.b16 %v5880
        %v6992 = vunpack.c.l.b16 %v5884
        %v6993 = vunpack.c.l.b16 %v5887
        %v6994 = vunpack.c.l.b16 %v5891
        %v6995 = vunpack.c.l.b16 %v5894
        %v6996 = vunpack.c.l.b16 %v5898
        %v6997 = vunpack.c.l.b16 %v5901
        %v6998 = vunpack.c.l.b16 %v5905
        %v6999 = vunpack.c.l.b16 %v5908
        %v7000 = vunpack.c.l.b16 %v5912
        %v7001 = vunpack.c.l.b16 %v5915
        %v7002 = vunpack.c.l.b16 %v5919
        %v7003 = vunpack.c.l.b16 %v5922
        %v7004 = vunpack.c.l.b16 %v5926
        %v7005 = vunpack.c.l.b16 %v5929
        %v7006 = vunpack.c.l.b16 %v5933
        %v7007 = vunpack.c.l.b16 %v5936
        %v7008 = vunpack.c.l.b16 %v5940
        %v7009 = vunpack.c.l.b16 %v5943
        %v7010 = vunpack.c.l.b16 %v5947
        %v7011 = vunpack.c.l.b16 %v5950
        %v7012 = vunpack.c.l.b16 %v5954
        %v7013 = vunpack.c.l.b16 %v5957
        %v7014 = vunpack.c.l.b16 %v5961
        %v7015 = vunpack.c.l.b16 %v5964
        %v7016 = vunpack.c.l.b16 %v5968
        %v7017 = vunpack.c.l.b16 %v5971
        %v7018 = vunpack.c.l.b16 %v5975
        %v7019 = vunpack.c.l.b16 %v5978
        %v7020 = vpack.c.b16 %v6989, %v6988
        %v7021 = vpack.c.b16 %v6991, %v6990
        %v7022 = vpack.c.b16 %v6993, %v6992
        %v7023 = vpack.c.b16 %v6995, %v6994
        %v7024 = vpack.c.b16 %v6997, %v6996
        %v7025 = vpack.c.b16 %v6999, %v6998
        %v7026 = vpack.c.b16 %v7001, %v7000
        %v7027 = vpack.c.b16 %v7003, %v7002
        %v7028 = vpack.c.b16 %v7005, %v7004
        %v7029 = vpack.c.b16 %v7007, %v7006
        %v7030 = vpack.c.b16 %v7009, %v7008
        %v7031 = vpack.c.b16 %v7011, %v7010
        %v7032 = vpack.c.b16 %v7013, %v7012
        %v7033 = vpack.c.b16 %v7015, %v7014
        %v7034 = vpack.c.b16 %v7017, %v7016
        %v7035 = vpack.c.b16 %v7019, %v7018
        %7036 = vrot.lane.b32.xlu0 %v7020, 80
        %v7037 = vpop.permute.xlu0 %7036
        %7038 = vrot.lane.b32.xlu0 %v7021, 80
        %v7039 = vpop.permute.xlu0 %7038
        %7040 = vrot.lane.b32.xlu0 %v7022, 80
        %v7041 = vpop.permute.xlu0 %7040
        %7042 = vrot.lane.b32.xlu0 %v7023, 80
        %v7043 = vpop.permute.xlu0 %7042
        %7044 = vrot.lane.b32.xlu0 %v7024, 80
        %v7045 = vpop.permute.xlu0 %7044
        %7046 = vrot.lane.b32.xlu0 %v7025, 80
        %v7047 = vpop.permute.xlu0 %7046
        %7048 = vrot.lane.b32.xlu0 %v7026, 80
        %v7049 = vpop.permute.xlu0 %7048
        %7050 = vrot.lane.b32.xlu0 %v7027, 80
        %v7051 = vpop.permute.xlu0 %7050
        %7052 = vrot.lane.b32.xlu0 %v7028, 80
        %v7053 = vpop.permute.xlu0 %7052
        %7054 = vrot.lane.b32.xlu0 %v7029, 80
        %v7055 = vpop.permute.xlu0 %7054
        %7056 = vrot.lane.b32.xlu0 %v7030, 80
        %v7057 = vpop.permute.xlu0 %7056
        %7058 = vrot.lane.b32.xlu0 %v7031, 80
        %v7059 = vpop.permute.xlu0 %7058
        %7060 = vrot.lane.b32.xlu0 %v7032, 80
        %v7061 = vpop.permute.xlu0 %7060
        %7062 = vrot.lane.b32.xlu0 %v7033, 80
        %v7063 = vpop.permute.xlu0 %7062
        %7064 = vrot.lane.b32.xlu0 %v7034, 80
        %v7065 = vpop.permute.xlu0 %7064
        %7066 = vrot.lane.b32.xlu0 %v7035, 80
        %v7067 = vpop.permute.xlu0 %7066
        %v7084 = vunpack.c.l.b16 %v5980
        %v7085 = vunpack.c.l.b16 %v5981
        %v7086 = vunpack.c.l.b16 %v5982
        %v7087 = vunpack.c.l.b16 %v5983
        %v7088 = vunpack.c.l.b16 %v5984
        %v7089 = vunpack.c.l.b16 %v5985
        %v7090 = vunpack.c.l.b16 %v5986
        %v7091 = vunpack.c.l.b16 %v5987
        %v7092 = vunpack.c.l.b16 %v5988
        %v7093 = vunpack.c.l.b16 %v5989
        %v7094 = vunpack.c.l.b16 %v5990
        %v7095 = vunpack.c.l.b16 %v5991
        %v7096 = vunpack.c.l.b16 %v5992
        %v7097 = vunpack.c.l.b16 %v5993
        %v7098 = vunpack.c.l.b16 %v5994
        %v7099 = vunpack.c.l.b16 %v5995
        %v7100 = vunpack.c.l.b16 %v5996
        %v7101 = vunpack.c.l.b16 %v5997
        %v7102 = vunpack.c.l.b16 %v5998
        %v7103 = vunpack.c.l.b16 %v5999
        %v7104 = vunpack.c.l.b16 %v6000
        %v7105 = vunpack.c.l.b16 %v6001
        %v7106 = vunpack.c.l.b16 %v6002
        %v7107 = vunpack.c.l.b16 %v6003
        %v7108 = vunpack.c.l.b16 %v6004
        %v7109 = vunpack.c.l.b16 %v6005
        %v7110 = vunpack.c.l.b16 %v6006
        %v7111 = vunpack.c.l.b16 %v6007
        %v7112 = vunpack.c.l.b16 %v6008
        %v7113 = vunpack.c.l.b16 %v6009
        %v7114 = vunpack.c.l.b16 %v6010
        %v7115 = vunpack.c.l.b16 %v6011
        %v7116 = vpack.c.b16 %v7085, %v7084
        %v7117 = vpack.c.b16 %v7087, %v7086
        %v7118 = vpack.c.b16 %v7089, %v7088
        %v7119 = vpack.c.b16 %v7091, %v7090
        %v7120 = vpack.c.b16 %v7093, %v7092
        %v7121 = vpack.c.b16 %v7095, %v7094
        %v7122 = vpack.c.b16 %v7097, %v7096
        %v7123 = vpack.c.b16 %v7099, %v7098
        %v7124 = vpack.c.b16 %v7101, %v7100
        %v7125 = vpack.c.b16 %v7103, %v7102
        %v7126 = vpack.c.b16 %v7105, %v7104
        %v7127 = vpack.c.b16 %v7107, %v7106
        %v7128 = vpack.c.b16 %v7109, %v7108
        %v7129 = vpack.c.b16 %v7111, %v7110
        %v7130 = vpack.c.b16 %v7113, %v7112
        %v7131 = vpack.c.b16 %v7115, %v7114
        %7132 = vrot.lane.b32.xlu0 %v7116, 96
        %v7133 = vpop.permute.xlu0 %7132
        %7134 = vrot.lane.b32.xlu0 %v7117, 96
        %v7135 = vpop.permute.xlu0 %7134
        %7136 = vrot.lane.b32.xlu0 %v7118, 96
        %v7137 = vpop.permute.xlu0 %7136
        %7138 = vrot.lane.b32.xlu0 %v7119, 96
        %v7139 = vpop.permute.xlu0 %7138
        %7140 = vrot.lane.b32.xlu0 %v7120, 96
        %v7141 = vpop.permute.xlu0 %7140
        %7142 = vrot.lane.b32.xlu0 %v7121, 96
        %v7143 = vpop.permute.xlu0 %7142
        %7144 = vrot.lane.b32.xlu0 %v7122, 96
        %v7145 = vpop.permute.xlu0 %7144
        %7146 = vrot.lane.b32.xlu0 %v7123, 96
        %v7147 = vpop.permute.xlu0 %7146
        %7148 = vrot.lane.b32.xlu0 %v7124, 96
        %v7149 = vpop.permute.xlu0 %7148
        %7150 = vrot.lane.b32.xlu0 %v7125, 96
        %v7151 = vpop.permute.xlu0 %7150
        %7152 = vrot.lane.b32.xlu0 %v7126, 96
        %v7153 = vpop.permute.xlu0 %7152
        %7154 = vrot.lane.b32.xlu0 %v7127, 96
        %v7155 = vpop.permute.xlu0 %7154
        %7156 = vrot.lane.b32.xlu0 %v7128, 96
        %v7157 = vpop.permute.xlu0 %7156
        %7158 = vrot.lane.b32.xlu0 %v7129, 96
        %v7159 = vpop.permute.xlu0 %7158
        %7160 = vrot.lane.b32.xlu0 %v7130, 96
        %v7161 = vpop.permute.xlu0 %7160
        %7162 = vrot.lane.b32.xlu0 %v7131, 96
        %v7163 = vpop.permute.xlu0 %7162
        %v7164 = vunpack.c.l.b16 %v6041
        %v7165 = vunpack.c.l.b16 %v6051
        %v7166 = vunpack.c.l.b16 %v6065
        %v7167 = vunpack.c.l.b16 %v6075
        %v7168 = vunpack.c.l.b16 %v6089
        %v7169 = vunpack.c.l.b16 %v6099
        %v7170 = vunpack.c.l.b16 %v6113
        %v7171 = vunpack.c.l.b16 %v6123
        %v7172 = vunpack.c.l.b16 %v6137
        %v7173 = vunpack.c.l.b16 %v6147
        %v7174 = vunpack.c.l.b16 %v6161
        %v7175 = vunpack.c.l.b16 %v6171
        %v7176 = vunpack.c.l.b16 %v6185
        %v7177 = vunpack.c.l.b16 %v6195
        %v7178 = vunpack.c.l.b16 %v6209
        %v7179 = vunpack.c.l.b16 %v6219
        %v7180 = vunpack.c.l.b16 %v6233
        %v7181 = vunpack.c.l.b16 %v6243
        %v7182 = vunpack.c.l.b16 %v6257
        %v7183 = vunpack.c.l.b16 %v6267
        %v7184 = vunpack.c.l.b16 %v6281
        %v7185 = vunpack.c.l.b16 %v6291
        %v7186 = vunpack.c.l.b16 %v6305
        %v7187 = vunpack.c.l.b16 %v6315
        %v7188 = vunpack.c.l.b16 %v6329
        %v7189 = vunpack.c.l.b16 %v6339
        %v7190 = vunpack.c.l.b16 %v6353
        %v7191 = vunpack.c.l.b16 %v6363
        %v7192 = vunpack.c.l.b16 %v6377
        %v7193 = vunpack.c.l.b16 %v6387
        %v7194 = vunpack.c.l.b16 %v6401
        %v7195 = vunpack.c.l.b16 %v6411
        %v7196 = vpack.c.b16 %v7165, %v7164
        %v7197 = vpack.c.b16 %v7167, %v7166
        %v7198 = vpack.c.b16 %v7169, %v7168
        %v7199 = vpack.c.b16 %v7171, %v7170
        %v7200 = vpack.c.b16 %v7173, %v7172
        %v7201 = vpack.c.b16 %v7175, %v7174
        %v7202 = vpack.c.b16 %v7177, %v7176
        %v7203 = vpack.c.b16 %v7179, %v7178
        %v7204 = vpack.c.b16 %v7181, %v7180
        %v7205 = vpack.c.b16 %v7183, %v7182
        %v7206 = vpack.c.b16 %v7185, %v7184
        %v7207 = vpack.c.b16 %v7187, %v7186
        %v7208 = vpack.c.b16 %v7189, %v7188
        %v7209 = vpack.c.b16 %v7191, %v7190
        %v7210 = vpack.c.b16 %v7193, %v7192
        %v7211 = vpack.c.b16 %v7195, %v7194
        %7212 = vrot.lane.b32.xlu0 %v7196, 112
        %v7213 = vpop.permute.xlu0 %7212
        %7214 = vrot.lane.b32.xlu0 %v7197, 112
        %v7215 = vpop.permute.xlu0 %7214
        %7216 = vrot.lane.b32.xlu0 %v7198, 112
        %v7217 = vpop.permute.xlu0 %7216
        %7218 = vrot.lane.b32.xlu0 %v7199, 112
        %v7219 = vpop.permute.xlu0 %7218
        %7220 = vrot.lane.b32.xlu0 %v7200, 112
        %v7221 = vpop.permute.xlu0 %7220
        %7222 = vrot.lane.b32.xlu0 %v7201, 112
        %v7223 = vpop.permute.xlu0 %7222
        %7224 = vrot.lane.b32.xlu0 %v7202, 112
        %v7225 = vpop.permute.xlu0 %7224
        %7226 = vrot.lane.b32.xlu0 %v7203, 112
        %v7227 = vpop.permute.xlu0 %7226
        %7228 = vrot.lane.b32.xlu0 %v7204, 112
        %v7229 = vpop.permute.xlu0 %7228
        %7230 = vrot.lane.b32.xlu0 %v7205, 112
        %v7231 = vpop.permute.xlu0 %7230
        %7232 = vrot.lane.b32.xlu0 %v7206, 112
        %v7233 = vpop.permute.xlu0 %7232
        %7234 = vrot.lane.b32.xlu0 %v7207, 112
        %v7235 = vpop.permute.xlu0 %7234
        %7236 = vrot.lane.b32.xlu0 %v7208, 112
        %v7237 = vpop.permute.xlu0 %7236
        %7238 = vrot.lane.b32.xlu0 %v7209, 112
        %v7239 = vpop.permute.xlu0 %7238
        %7240 = vrot.lane.b32.xlu0 %v7210, 112
        %v7241 = vpop.permute.xlu0 %7240
        %7242 = vrot.lane.b32.xlu0 %v7211, 112
        %v7243 = vpop.permute.xlu0 %7242
        %v7244 = vunpack.c.l.b16 %v6479
        %v7245 = vunpack.c.l.b16 %v6482
        %v7246 = vunpack.c.l.b16 %v6486
        %v7247 = vunpack.c.l.b16 %v6489
        %v7248 = vunpack.c.l.b16 %v6493
        %v7249 = vunpack.c.l.b16 %v6496
        %v7250 = vunpack.c.l.b16 %v6500
        %v7251 = vunpack.c.l.b16 %v6503
        %v7252 = vunpack.c.l.b16 %v6507
        %v7253 = vunpack.c.l.b16 %v6510
        %v7254 = vunpack.c.l.b16 %v6514
        %v7255 = vunpack.c.l.b16 %v6517
        %v7256 = vunpack.c.l.b16 %v6521
        %v7257 = vunpack.c.l.b16 %v6524
        %v7258 = vunpack.c.l.b16 %v6528
        %v7259 = vunpack.c.l.b16 %v6531
        %v7260 = vunpack.c.l.b16 %v6535
        %v7261 = vunpack.c.l.b16 %v6538
        %v7262 = vunpack.c.l.b16 %v6542
        %v7263 = vunpack.c.l.b16 %v6545
        %v7264 = vunpack.c.l.b16 %v6549
        %v7265 = vunpack.c.l.b16 %v6552
        %v7266 = vunpack.c.l.b16 %v6556
        %v7267 = vunpack.c.l.b16 %v6559
        %v7268 = vunpack.c.l.b16 %v6563
        %v7269 = vunpack.c.l.b16 %v6566
        %v7270 = vunpack.c.l.b16 %v6570
        %v7271 = vunpack.c.l.b16 %v6573
        %v7272 = vunpack.c.l.b16 %v6577
        %v7273 = vunpack.c.l.b16 %v6580
        %v7274 = vunpack.c.l.b16 %v6584
        %v7275 = vunpack.c.l.b16 %v6587
        %v7276 = vpack.c.b16 %v7245, %v7244
        %v7277 = vpack.c.b16 %v7247, %v7246
        %v7278 = vpack.c.b16 %v7249, %v7248
        %v7279 = vpack.c.b16 %v7251, %v7250
        %v7280 = vpack.c.b16 %v7253, %v7252
        %v7281 = vpack.c.b16 %v7255, %v7254
        %v7282 = vpack.c.b16 %v7257, %v7256
        %v7283 = vpack.c.b16 %v7259, %v7258
        %v7284 = vpack.c.b16 %v7261, %v7260
        %v7285 = vpack.c.b16 %v7263, %v7262
        %v7286 = vpack.c.b16 %v7265, %v7264
        %v7287 = vpack.c.b16 %v7267, %v7266
        %v7288 = vpack.c.b16 %v7269, %v7268
        %v7289 = vpack.c.b16 %v7271, %v7270
        %v7290 = vpack.c.b16 %v7273, %v7272
        %v7291 = vpack.c.b16 %v7275, %v7274
        %vm7292 = vcmask 130048
        %v7295 = vsel %vm7292, %v6636, %v6701
        %v7298 = vsel %vm7292, %v6637, %v6703
        %v7301 = vsel %vm7292, %v6638, %v6705
        %v7304 = vsel %vm7292, %v6639, %v6707
        %v7307 = vsel %vm7292, %v6640, %v6709
        %v7310 = vsel %vm7292, %v6641, %v6711
        %v7313 = vsel %vm7292, %v6642, %v6713
        %v7316 = vsel %vm7292, %v6643, %v6715
        %v7319 = vsel %vm7292, %v6644, %v6717
        %v7322 = vsel %vm7292, %v6645, %v6719
        %v7325 = vsel %vm7292, %v6646, %v6721
        %v7328 = vsel %vm7292, %v6647, %v6723
        %v7331 = vsel %vm7292, %v6648, %v6725
        %v7334 = vsel %vm7292, %v6649, %v6727
        %v7337 = vsel %vm7292, %v6650, %v6729
        %v7340 = vsel %vm7292, %v6651, %v6731
        %vm7341 = vcmask 261120
        %v7343 = vsel %vm7341, %v7295, %v6781
        %v7345 = vsel %vm7341, %v7298, %v6783
        %v7347 = vsel %vm7341, %v7301, %v6785
        %v7349 = vsel %vm7341, %v7304, %v6787
        %v7351 = vsel %vm7341, %v7307, %v6789
        %v7353 = vsel %vm7341, %v7310, %v6791
        %v7355 = vsel %vm7341, %v7313, %v6793
        %v7357 = vsel %vm7341, %v7316, %v6795
        %v7359 = vsel %vm7341, %v7319, %v6797
        %v7361 = vsel %vm7341, %v7322, %v6799
        %v7363 = vsel %vm7341, %v7325, %v6801
        %v7365 = vsel %vm7341, %v7328, %v6803
        %v7367 = vsel %vm7341, %v7331, %v6805
        %v7369 = vsel %vm7341, %v7334, %v6807
        %v7371 = vsel %vm7341, %v7337, %v6809
        %v7373 = vsel %vm7341, %v7340, %v6811
        %vm7374 = vcmask 392192
        %v7376 = vsel %vm7374, %v7343, %v6877
        %v7378 = vsel %vm7374, %v7345, %v6879
        %v7380 = vsel %vm7374, %v7347, %v6881
        %v7382 = vsel %vm7374, %v7349, %v6883
        %v7384 = vsel %vm7374, %v7351, %v6885
        %v7386 = vsel %vm7374, %v7353, %v6887
        %v7388 = vsel %vm7374, %v7355, %v6889
        %v7390 = vsel %vm7374, %v7357, %v6891
        %v7392 = vsel %vm7374, %v7359, %v6893
        %v7394 = vsel %vm7374, %v7361, %v6895
        %v7396 = vsel %vm7374, %v7363, %v6897
        %v7398 = vsel %vm7374, %v7365, %v6899
        %v7400 = vsel %vm7374, %v7367, %v6901
        %v7402 = vsel %vm7374, %v7369, %v6903
        %v7404 = vsel %vm7374, %v7371, %v6905
        %v7406 = vsel %vm7374, %v7373, %v6907
        %v7408 = vsel %vm2955, %v7376, %v6957
        %v7410 = vsel %vm2955, %v7378, %v6959
        %v7412 = vsel %vm2955, %v7380, %v6961
        %v7414 = vsel %vm2955, %v7382, %v6963
        %v7416 = vsel %vm2955, %v7384, %v6965
        %v7418 = vsel %vm2955, %v7386, %v6967
        %v7420 = vsel %vm2955, %v7388, %v6969
        %v7422 = vsel %vm2955, %v7390, %v6971
        %v7424 = vsel %vm2955, %v7392, %v6973
        %v7426 = vsel %vm2955, %v7394, %v6975
        %v7428 = vsel %vm2955, %v7396, %v6977
        %v7430 = vsel %vm2955, %v7398, %v6979
        %v7432 = vsel %vm2955, %v7400, %v6981
        %v7434 = vsel %vm2955, %v7402, %v6983
        %v7436 = vsel %vm2955, %v7404, %v6985
        %v7438 = vsel %vm2955, %v7406, %v6987
        %vm7439 = vcmask 654336
        %v7441 = vsel %vm7439, %v7408, %v7037
        %v7443 = vsel %vm7439, %v7410, %v7039
        %v7445 = vsel %vm7439, %v7412, %v7041
        %v7447 = vsel %vm7439, %v7414, %v7043
        %v7449 = vsel %vm7439, %v7416, %v7045
        %v7451 = vsel %vm7439, %v7418, %v7047
        %v7453 = vsel %vm7439, %v7420, %v7049
        %v7455 = vsel %vm7439, %v7422, %v7051
        %v7457 = vsel %vm7439, %v7424, %v7053
        %v7459 = vsel %vm7439, %v7426, %v7055
        %v7461 = vsel %vm7439, %v7428, %v7057
        %v7463 = vsel %vm7439, %v7430, %v7059
        %v7465 = vsel %vm7439, %v7432, %v7061
        %v7467 = vsel %vm7439, %v7434, %v7063
        %v7469 = vsel %vm7439, %v7436, %v7065
        %v7471 = vsel %vm7439, %v7438, %v7067
        %vm7472 = vcmask 785408
        %v7474 = vsel %vm7472, %v7441, %v7133
        %v7476 = vsel %vm7472, %v7443, %v7135
        %v7478 = vsel %vm7472, %v7445, %v7137
        %v7480 = vsel %vm7472, %v7447, %v7139
        %v7482 = vsel %vm7472, %v7449, %v7141
        %v7484 = vsel %vm7472, %v7451, %v7143
        %v7486 = vsel %vm7472, %v7453, %v7145
        %v7488 = vsel %vm7472, %v7455, %v7147
        %v7490 = vsel %vm7472, %v7457, %v7149
        %v7492 = vsel %vm7472, %v7459, %v7151
        %v7494 = vsel %vm7472, %v7461, %v7153
        %v7496 = vsel %vm7472, %v7463, %v7155
        %v7498 = vsel %vm7472, %v7465, %v7157
        %v7500 = vsel %vm7472, %v7467, %v7159
        %v7502 = vsel %vm7472, %v7469, %v7161
        %v7504 = vsel %vm7472, %v7471, %v7163
        %vm7505 = vcmask 916480
        %v7507 = vsel %vm7505, %v7474, %v7213
        %v7510 = vsel %vm7505, %v7476, %v7215
        %v7513 = vsel %vm7505, %v7478, %v7217
        %v7516 = vsel %vm7505, %v7480, %v7219
        %v7519 = vsel %vm7505, %v7482, %v7221
        %v7522 = vsel %vm7505, %v7484, %v7223
        %v7525 = vsel %vm7505, %v7486, %v7225
        %v7528 = vsel %vm7505, %v7488, %v7227
        %v7531 = vsel %vm7505, %v7490, %v7229
        %v7534 = vsel %vm7505, %v7492, %v7231
        %v7537 = vsel %vm7505, %v7494, %v7233
        %v7540 = vsel %vm7505, %v7496, %v7235
        %v7543 = vsel %vm7505, %v7498, %v7237
        %v7546 = vsel %vm7505, %v7500, %v7239
        %v7549 = vsel %vm7505, %v7502, %v7241
        %v7552 = vsel %vm7505, %v7504, %v7243
        %v7554 = vld [vmem:[%s3] sm:$0xf]
        %v7555 = vld [vmem:[%s3 + $0x4] sm:$0xf]
        %v7556 = vld [vmem:[%s3 + $0x8] sm:$0xf]
        %v7557 = vld [vmem:[%s3 + $0xc] sm:$0xf]
        %v7558 = vld [vmem:[%s3 + $0x10] sm:$0xf]
        %v7559 = vld [vmem:[%s3 + $0x14] sm:$0xf]
        %v7560 = vld [vmem:[%s3 + $0x18] sm:$0xf]
        %v7561 = vld [vmem:[%s3 + $0x1c] sm:$0xf]
        %v7562 = vld [vmem:[%s3 + $0x20] sm:$0xf]
        %v7563 = vld [vmem:[%s3 + $0x24] sm:$0xf]
        %v7564 = vld [vmem:[%s3 + $0x28] sm:$0xf]
        %v7565 = vld [vmem:[%s3 + $0x2c] sm:$0xf]
        %v7566 = vld [vmem:[%s3 + $0x30] sm:$0xf]
        %v7567 = vld [vmem:[%s3 + $0x34] sm:$0xf]
        %v7568 = vld [vmem:[%s3 + $0x38] sm:$0xf]
        %v7569 = vld [vmem:[%s3 + $0x3c] sm:$0xf]
        %v7570 = vld [vmem:[%s3 + $0x40] sm:$0xf]
        %v7571 = vld [vmem:[%s3 + $0x44] sm:$0xf]
        %v7572 = vld [vmem:[%s4] sm:$0x1]
        %v7574 = vlaneseq
        %v7575 = vshrl.u32 %v7574, 7
        %v7576 = vsub.s32 0, %v7575
        %v7577 = vrot.slane %v7572, %v7576
        %v7597 = vunpack.c.l.b16 %v7554
        %v7598 = vunpack.c.l.b16 %v7555
        %v7599 = vunpack.c.l.b16 %v7556
        %v7600 = vunpack.c.l.b16 %v7557
        %v7601 = vunpack.c.l.b16 %v7558
        %v7602 = vunpack.c.l.b16 %v7559
        %v7603 = vunpack.c.l.b16 %v7560
        %v7604 = vunpack.c.l.b16 %v7561
        %v7605 = vunpack.c.l.b16 %v7562
        %v7606 = vunpack.c.l.b16 %v7563
        %v7607 = vunpack.c.l.b16 %v7564
        %v7608 = vunpack.c.l.b16 %v7565
        %v7609 = vunpack.c.l.b16 %v7566
        %v7610 = vunpack.c.l.b16 %v7567
        %v7611 = vunpack.c.l.b16 %v7568
        %v7612 = vunpack.c.l.b16 %v7569
        %v7613 = vunpack.c.l.b16 %v7570
        %v7614 = vunpack.c.l.b16 %v7571
        %v7615 = vpack.c.b16 %v7598, %v7597
        %v7616 = vpack.c.b16 %v7600, %v7599
        %v7617 = vpack.c.b16 %v7602, %v7601
        %v7618 = vpack.c.b16 %v7604, %v7603
        %v7619 = vpack.c.b16 %v7606, %v7605
        %v7620 = vpack.c.b16 %v7608, %v7607
        %v7621 = vpack.c.b16 %v7610, %v7609
        %v7622 = vpack.c.b16 %v7612, %v7611
        %v7623 = vpack.c.b16 %v7614, %v7613
        %v7634 = vsel %vm7292, %v7276, 0
        %v7637 = vsel %vm7292, %v7277, 0
        %v7640 = vsel %vm7292, %v7278, 0
        %v7643 = vsel %vm7292, %v7279, 0
        %v7646 = vsel %vm7292, %v7280, 0
        %v7649 = vsel %vm7292, %v7281, 0
        %v7652 = vsel %vm7292, %v7282, 0
        %v7655 = vsel %vm7292, %v7283, 0
        %v7658 = vsel %vm7292, %v7284, 0
        %v7661 = vsel %vm7292, %v7285, 0
        %v7664 = vsel %vm7292, %v7286, 0
        %v7667 = vsel %vm7292, %v7287, 0
        %v7670 = vsel %vm7292, %v7288, 0
        %v7673 = vsel %vm7292, %v7289, 0
        %v7676 = vsel %vm7292, %v7290, 0
        %v7679 = vsel %vm7292, %v7291, 0
        %7681 = vmatprep.subr.bf16.mxu0 0
        %7682 = vmatpush1.bf16.msra.mxu0 %v7615
        %7683 = vmatprep.subr.bf16.mxu0 0
        %7684 = vmatpush1.bf16.msra.mxu0 %v7616
        %7685 = vmatprep.subr.bf16.mxu0 0
        %7686 = vmatpush1.bf16.msra.mxu0 %v7617
        %7687 = vmatprep.subr.bf16.mxu0 0
        %7688 = vmatpush1.bf16.msra.mxu0 %v7618
        %7689 = vmatprep.subr.bf16.mxu0 0
        %7690 = vmatpush1.bf16.msra.mxu0 %v7619
        %7691 = vmatprep.subr.bf16.mxu0 0
        %7692 = vmatpush1.bf16.msra.mxu0 %v7620
        %7693 = vmatprep.subr.bf16.mxu0 0
        %7694 = vmatpush1.bf16.msra.mxu0 %v7621
        %7695 = vmatprep.subr.bf16.mxu0 0
        %7696 = vmatpush1.bf16.msra.mxu0 %v7622
        %7697 = vmatprep.subr.bf16.mxu0 0
        %7698 = vmatpush1.bf16.msra.mxu0 %v7623
        %7699 = vmatprep.subr.bf16.mxu0 0
        %7700 = vmatpush1.bf16.msra.mxu0 0
        %7701 = vmatprep.subr.bf16.mxu0 0
        %7702 = vmatpush1.bf16.msra.mxu0 0
        %7703 = vmatprep.subr.bf16.mxu0 0
        %7704 = vmatpush1.bf16.msra.mxu0 0
        %7705 = vmatprep.subr.bf16.mxu0 0
        %7706 = vmatpush1.bf16.msra.mxu0 0
        %7707 = vmatprep.subr.bf16.mxu0 0
        %7708 = vmatpush1.bf16.msra.mxu0 0
        %7709 = vmatprep.subr.bf16.mxu0 0
        %7710 = vmatpush1.bf16.msra.mxu0 0
        %7711 = vmatprep.subr.bf16.mxu0 0
        %7712 = vmatpush1.bf16.msra.mxu0 0
        %7713 = vmatprep.mubr.bf16.mxu0 %v7634
        %7714 = vmatmul.mubr.bf16.gmra.mrb[0].mxu0 %v7507
        %v7715 = vpop.f32.mrb[0].mxu0
        %v7716 = vadd.f32 %v7577, %v7715
        %v7717 = vpop.f32.mrb[0].mxu0
        %v7718 = vpop.f32.mrb[0].mxu0
        %v7719 = vadd.f32 %v7577, %v7718
        %v7720 = vpop.f32.mrb[0].mxu0
        %7721 = vmatprep.mubr.bf16.mxu0 %v7637
        %7722 = vmatmul.mubr.bf16.gmra.mrb[0].mxu0 %v7510
        %v7723 = vpop.f32.mrb[0].mxu0
        %v7724 = vadd.f32 %v7577, %v7723
        %v7725 = vpop.f32.mrb[0].mxu0
        %v7726 = vpop.f32.mrb[0].mxu0
        %v7727 = vadd.f32 %v7577, %v7726
        %v7728 = vpop.f32.mrb[0].mxu0
        %7729 = vmatprep.mubr.bf16.mxu0 %v7640
        %7730 = vmatmul.mubr.bf16.gmra.mrb[0].mxu0 %v7513
        %v7731 = vpop.f32.mrb[0].mxu0
        %v7732 = vadd.f32 %v7577, %v7731
        %v7733 = vpop.f32.mrb[0].mxu0
        %v7734 = vpop.f32.mrb[0].mxu0
        %v7735 = vadd.f32 %v7577, %v7734
        %v7736 = vpop.f32.mrb[0].mxu0
        %7737 = vmatprep.mubr.bf16.mxu0 %v7643
        %7738 = vmatmul.mubr.bf16.gmra.mrb[0].mxu0 %v7516
        %v7739 = vpop.f32.mrb[0].mxu0
        %v7740 = vadd.f32 %v7577, %v7739
        %v7741 = vpop.f32.mrb[0].mxu0
        %v7742 = vpop.f32.mrb[0].mxu0
        %v7743 = vadd.f32 %v7577, %v7742
        %v7744 = vpop.f32.mrb[0].mxu0
        %7745 = vmatprep.mubr.bf16.mxu0 %v7646
        %7746 = vmatmul.mubr.bf16.gmra.mrb[0].mxu0 %v7519
        %v7747 = vpop.f32.mrb[0].mxu0
        %v7748 = vadd.f32 %v7577, %v7747
        %v7749 = vpop.f32.mrb[0].mxu0
        %v7750 = vpop.f32.mrb[0].mxu0
        %v7751 = vadd.f32 %v7577, %v7750
        %v7752 = vpop.f32.mrb[0].mxu0
        %7753 = vmatprep.mubr.bf16.mxu0 %v7649
        %7754 = vmatmul.mubr.bf16.gmra.mrb[0].mxu0 %v7522
        %v7755 = vpop.f32.mrb[0].mxu0
        %v7756 = vadd.f32 %v7577, %v7755
        %v7757 = vpop.f32.mrb[0].mxu0
        %v7758 = vpop.f32.mrb[0].mxu0
        %v7759 = vadd.f32 %v7577, %v7758
        %v7760 = vpop.f32.mrb[0].mxu0
        %7761 = vmatprep.mubr.bf16.mxu0 %v7652
        %7762 = vmatmul.mubr.bf16.gmra.mrb[0].mxu0 %v7525
        %v7763 = vpop.f32.mrb[0].mxu0
        %v7764 = vadd.f32 %v7577, %v7763
        %v7765 = vpop.f32.mrb[0].mxu0
        %v7766 = vpop.f32.mrb[0].mxu0
        %v7767 = vadd.f32 %v7577, %v7766
        %v7768 = vpop.f32.mrb[0].mxu0
        %7769 = vmatprep.mubr.bf16.mxu0 %v7655
        %7770 = vmatmul.mubr.bf16.gmra.mrb[0].mxu0 %v7528
        %v7771 = vpop.f32.mrb[0].mxu0
        %v7772 = vadd.f32 %v7577, %v7771
        %v7773 = vpop.f32.mrb[0].mxu0
        %v7774 = vpop.f32.mrb[0].mxu0
        %v7775 = vadd.f32 %v7577, %v7774
        %v7776 = vpop.f32.mrb[0].mxu0
        %7777 = vmatprep.mubr.bf16.mxu0 %v7658
        %7778 = vmatmul.mubr.bf16.gmra.mrb[0].mxu0 %v7531
        %v7779 = vpop.f32.mrb[0].mxu0
        %v7780 = vadd.f32 %v7577, %v7779
        %v7781 = vpop.f32.mrb[0].mxu0
        %v7782 = vpop.f32.mrb[0].mxu0
        %v7783 = vadd.f32 %v7577, %v7782
        %v7784 = vpop.f32.mrb[0].mxu0
        %7785 = vmatprep.mubr.bf16.mxu0 %v7661
        %7786 = vmatmul.mubr.bf16.gmra.mrb[0].mxu0 %v7534
        %v7787 = vpop.f32.mrb[0].mxu0
        %v7788 = vadd.f32 %v7577, %v7787
        %v7789 = vpop.f32.mrb[0].mxu0
        %v7790 = vpop.f32.mrb[0].mxu0
        %v7791 = vadd.f32 %v7577, %v7790
        %v7792 = vpop.f32.mrb[0].mxu0
        %7793 = vmatprep.mubr.bf16.mxu0 %v7664
        %7794 = vmatmul.mubr.bf16.gmra.mrb[0].mxu0 %v7537
        %v7795 = vpop.f32.mrb[0].mxu0
        %v7796 = vadd.f32 %v7577, %v7795
        %v7797 = vpop.f32.mrb[0].mxu0
        %v7798 = vpop.f32.mrb[0].mxu0
        %v7799 = vadd.f32 %v7577, %v7798
        %v7800 = vpop.f32.mrb[0].mxu0
        %7801 = vmatprep.mubr.bf16.mxu0 %v7667
        %7802 = vmatmul.mubr.bf16.gmra.mrb[0].mxu0 %v7540
        %v7803 = vpop.f32.mrb[0].mxu0
        %v7804 = vadd.f32 %v7577, %v7803
        %v7805 = vpop.f32.mrb[0].mxu0
        %v7806 = vpop.f32.mrb[0].mxu0
        %v7807 = vadd.f32 %v7577, %v7806
        %v7808 = vpop.f32.mrb[0].mxu0
        %7809 = vmatprep.mubr.bf16.mxu0 %v7670
        %7810 = vmatmul.mubr.bf16.gmra.mrb[0].mxu0 %v7543
        %v7811 = vpop.f32.mrb[0].mxu0
        %v7812 = vadd.f32 %v7577, %v7811
        %v7813 = vpop.f32.mrb[0].mxu0
        %v7814 = vpop.f32.mrb[0].mxu0
        %v7815 = vadd.f32 %v7577, %v7814
        %v7816 = vpop.f32.mrb[0].mxu0
        %7817 = vmatprep.mubr.bf16.mxu0 %v7673
        %7818 = vmatmul.mubr.bf16.gmra.mrb[0].mxu0 %v7546
        %v7819 = vpop.f32.mrb[0].mxu0
        %v7820 = vadd.f32 %v7577, %v7819
        %v7821 = vpop.f32.mrb[0].mxu0
        %v7822 = vpop.f32.mrb[0].mxu0
        %v7823 = vadd.f32 %v7577, %v7822
        %v7824 = vpop.f32.mrb[0].mxu0
        %7825 = vmatprep.mubr.bf16.mxu0 %v7676
        %7826 = vmatmul.mubr.bf16.gmra.mrb[0].mxu0 %v7549
        %v7827 = vpop.f32.mrb[0].mxu0
        %v7828 = vadd.f32 %v7577, %v7827
        %v7829 = vpop.f32.mrb[0].mxu0
        %v7830 = vpop.f32.mrb[0].mxu0
        %v7831 = vadd.f32 %v7577, %v7830
        %v7832 = vpop.f32.mrb[0].mxu0
        %7833 = vmatprep.mubr.bf16.mxu0 %v7679
        %7834 = vmatmul.mubr.bf16.gmra.mrb[0].mxu0 %v7552
        %v7835 = vpop.f32.mrb[0].mxu0
        %v7836 = vadd.f32 %v7577, %v7835
        %v7837 = vpop.f32.mrb[0].mxu0
        %v7838 = vpop.f32.mrb[0].mxu0
        %v7839 = vadd.f32 %v7577, %v7838
        %v7840 = vpop.f32.mrb[0].mxu0
        %7841 = vdwg.mxu0
        %vm7842 = vcmp.gt.f32.partialorder %v7716, 0.0
        %vm7843 = vcmp.gt.f32.partialorder %v7719, 0.0
        %vm7844 = vcmp.gt.f32.partialorder %v7724, 0.0
        %vm7845 = vcmp.gt.f32.partialorder %v7727, 0.0
        %vm7846 = vcmp.gt.f32.partialorder %v7732, 0.0
        %vm7847 = vcmp.gt.f32.partialorder %v7735, 0.0
        %vm7848 = vcmp.gt.f32.partialorder %v7740, 0.0
        %vm7849 = vcmp.gt.f32.partialorder %v7743, 0.0
        %vm7850 = vcmp.gt.f32.partialorder %v7748, 0.0
        %vm7851 = vcmp.gt.f32.partialorder %v7751, 0.0
        %vm7852 = vcmp.gt.f32.partialorder %v7756, 0.0
        %vm7853 = vcmp.gt.f32.partialorder %v7759, 0.0
        %vm7854 = vcmp.gt.f32.partialorder %v7764, 0.0
        %vm7855 = vcmp.gt.f32.partialorder %v7767, 0.0
        %vm7856 = vcmp.gt.f32.partialorder %v7772, 0.0
        %vm7857 = vcmp.gt.f32.partialorder %v7775, 0.0
        %vm7858 = vcmp.gt.f32.partialorder %v7780, 0.0
        %vm7859 = vcmp.gt.f32.partialorder %v7783, 0.0
        %vm7860 = vcmp.gt.f32.partialorder %v7788, 0.0
        %vm7861 = vcmp.gt.f32.partialorder %v7791, 0.0
        %vm7862 = vcmp.gt.f32.partialorder %v7796, 0.0
        %vm7863 = vcmp.gt.f32.partialorder %v7799, 0.0
        %vm7864 = vcmp.gt.f32.partialorder %v7804, 0.0
        %vm7865 = vcmp.gt.f32.partialorder %v7807, 0.0
        %vm7866 = vcmp.gt.f32.partialorder %v7812, 0.0
        %vm7867 = vcmp.gt.f32.partialorder %v7815, 0.0
        %vm7868 = vcmp.gt.f32.partialorder %v7820, 0.0
        %vm7869 = vcmp.gt.f32.partialorder %v7823, 0.0
        %vm7870 = vcmp.gt.f32.partialorder %v7828, 0.0
        %vm7871 = vcmp.gt.f32.partialorder %v7831, 0.0
        %vm7872 = vcmp.gt.f32.partialorder %v7836, 0.0
        %vm7873 = vcmp.gt.f32.partialorder %v7839, 0.0
        %v7874 = vmul.f32 %v7716, 0.1
        %v7875 = vmul.f32 %v7719, 0.1
        %v7876 = vmul.f32 %v7724, 0.1
        %v7877 = vmul.f32 %v7727, 0.1
        %v7878 = vmul.f32 %v7732, 0.1
        %v7879 = vmul.f32 %v7735, 0.1
        %v7880 = vmul.f32 %v7740, 0.1
        %v7881 = vmul.f32 %v7743, 0.1
        %v7882 = vmul.f32 %v7748, 0.1
        %v7883 = vmul.f32 %v7751, 0.1
        %v7884 = vmul.f32 %v7756, 0.1
        %v7885 = vmul.f32 %v7759, 0.1
        %v7886 = vmul.f32 %v7764, 0.1
        %v7887 = vmul.f32 %v7767, 0.1
        %v7888 = vmul.f32 %v7772, 0.1
        %v7889 = vmul.f32 %v7775, 0.1
        %v7890 = vmul.f32 %v7780, 0.1
        %v7891 = vmul.f32 %v7783, 0.1
        %v7892 = vmul.f32 %v7788, 0.1
        %v7893 = vmul.f32 %v7791, 0.1
        %v7894 = vmul.f32 %v7796, 0.1
        %v7895 = vmul.f32 %v7799, 0.1
        %v7896 = vmul.f32 %v7804, 0.1
        %v7897 = vmul.f32 %v7807, 0.1
        %v7898 = vmul.f32 %v7812, 0.1
        %v7899 = vmul.f32 %v7815, 0.1
        %v7900 = vmul.f32 %v7820, 0.1
        %v7901 = vmul.f32 %v7823, 0.1
        %v7902 = vmul.f32 %v7828, 0.1
        %v7903 = vmul.f32 %v7831, 0.1
        %v7904 = vmul.f32 %v7836, 0.1
        %v7905 = vmul.f32 %v7839, 0.1
        %v7906 = vsel %vm7842, %v7716, %v7874
        %v7907 = vsel %vm7843, %v7719, %v7875
        %v7908 = vsel %vm7844, %v7724, %v7876
        %v7909 = vsel %vm7845, %v7727, %v7877
        %v7910 = vsel %vm7846, %v7732, %v7878
        %v7911 = vsel %vm7847, %v7735, %v7879
        %v7912 = vsel %vm7848, %v7740, %v7880
        %v7913 = vsel %vm7849, %v7743, %v7881
        %v7914 = vsel %vm7850, %v7748, %v7882
        %v7915 = vsel %vm7851, %v7751, %v7883
        %v7916 = vsel %vm7852, %v7756, %v7884
        %v7917 = vsel %vm7853, %v7759, %v7885
        %v7918 = vsel %vm7854, %v7764, %v7886
        %v7919 = vsel %vm7855, %v7767, %v7887
        %v7920 = vsel %vm7856, %v7772, %v7888
        %v7921 = vsel %vm7857, %v7775, %v7889
        %v7922 = vsel %vm7858, %v7780, %v7890
        %v7923 = vsel %vm7859, %v7783, %v7891
        %v7924 = vsel %vm7860, %v7788, %v7892
        %v7925 = vsel %vm7861, %v7791, %v7893
        %v7926 = vsel %vm7862, %v7796, %v7894
        %v7927 = vsel %vm7863, %v7799, %v7895
        %v7928 = vsel %vm7864, %v7804, %v7896
        %v7929 = vsel %vm7865, %v7807, %v7897
        %v7930 = vsel %vm7866, %v7812, %v7898
        %v7931 = vsel %vm7867, %v7815, %v7899
        %v7932 = vsel %vm7868, %v7820, %v7900
        %v7933 = vsel %vm7869, %v7823, %v7901
        %v7934 = vsel %vm7870, %v7828, %v7902
        %v7935 = vsel %vm7871, %v7831, %v7903
        %v7936 = vsel %vm7872, %v7836, %v7904
        %v7937 = vsel %vm7873, %v7839, %v7905
        %v7938 = vpack.c.bf16 %v7907, %v7906
        %v7939 = vpack.c.bf16 %v7909, %v7908
        %v7940 = vpack.c.bf16 %v7911, %v7910
        %v7941 = vpack.c.bf16 %v7913, %v7912
        %v7942 = vpack.c.bf16 %v7915, %v7914
        %v7943 = vpack.c.bf16 %v7917, %v7916
        %v7944 = vpack.c.bf16 %v7919, %v7918
        %v7945 = vpack.c.bf16 %v7921, %v7920
        %v7946 = vpack.c.bf16 %v7923, %v7922
        %v7947 = vpack.c.bf16 %v7925, %v7924
        %v7948 = vpack.c.bf16 %v7927, %v7926
        %v7949 = vpack.c.bf16 %v7929, %v7928
        %v7950 = vpack.c.bf16 %v7931, %v7930
        %v7951 = vpack.c.bf16 %v7933, %v7932
        %v7952 = vpack.c.bf16 %v7935, %v7934
        %v7953 = vpack.c.bf16 %v7937, %v7936
        %v7970 = vunpack.c.l.b16 %v7938
        %v7971 = vunpack.c.h.b16 %v7938
        %v7972 = vunpack.c.l.b16 %v7939
        %v7973 = vunpack.c.h.b16 %v7939
        %v7974 = vunpack.c.l.b16 %v7940
        %v7975 = vunpack.c.h.b16 %v7940
        %v7976 = vunpack.c.l.b16 %v7941
        %v7977 = vunpack.c.h.b16 %v7941
        %v7978 = vunpack.c.l.b16 %v7942
        %v7979 = vunpack.c.h.b16 %v7942
        %v7980 = vunpack.c.l.b16 %v7943
        %v7981 = vunpack.c.h.b16 %v7943
        %v7982 = vunpack.c.l.b16 %v7944
        %v7983 = vunpack.c.h.b16 %v7944
        %v7984 = vunpack.c.l.b16 %v7945
        %v7985 = vunpack.c.h.b16 %v7945
        %v7986 = vunpack.c.l.b16 %v7946
        %v7987 = vunpack.c.h.b16 %v7946
        %v7988 = vunpack.c.l.b16 %v7947
        %v7989 = vunpack.c.h.b16 %v7947
        %v7990 = vunpack.c.l.b16 %v7948
        %v7991 = vunpack.c.h.b16 %v7948
        %v7992 = vunpack.c.l.b16 %v7949
        %v7993 = vunpack.c.h.b16 %v7949
        %v7994 = vunpack.c.l.b16 %v7950
        %v7995 = vunpack.c.h.b16 %v7950
        %v7996 = vunpack.c.l.b16 %v7951
        %v7997 = vunpack.c.h.b16 %v7951
        %v7998 = vunpack.c.l.b16 %v7952
        %v7999 = vunpack.c.h.b16 %v7952
        %v8000 = vunpack.c.l.b16 %v7953
        %v8001 = vunpack.c.h.b16 %v7953
        %v8002 = vpack.c.b16 %v7970, %v7970
        %v8003 = vpack.c.b16 %v7971, %v7971
        %v8004 = vpack.c.b16 %v7972, %v7972
        %v8005 = vpack.c.b16 %v7973, %v7973
        %v8006 = vpack.c.b16 %v7974, %v7974
        %v8007 = vpack.c.b16 %v7975, %v7975
        %v8008 = vpack.c.b16 %v7976, %v7976
        %v8009 = vpack.c.b16 %v7977, %v7977
        %v8010 = vpack.c.b16 %v7978, %v7978
        %v8011 = vpack.c.b16 %v7979, %v7979
        %v8012 = vpack.c.b16 %v7980, %v7980
        %v8013 = vpack.c.b16 %v7981, %v7981
        %v8014 = vpack.c.b16 %v7982, %v7982
        %v8015 = vpack.c.b16 %v7983, %v7983
        %v8016 = vpack.c.b16 %v7984, %v7984
        %v8017 = vpack.c.b16 %v7985, %v7985
        %v8018 = vpack.c.b16 %v7986, %v7986
        %v8019 = vpack.c.b16 %v7987, %v7987
        %v8020 = vpack.c.b16 %v7988, %v7988
        %v8021 = vpack.c.b16 %v7989, %v7989
        %v8022 = vpack.c.b16 %v7990, %v7990
        %v8023 = vpack.c.b16 %v7991, %v7991
        %v8024 = vpack.c.b16 %v7992, %v7992
        %v8025 = vpack.c.b16 %v7993, %v7993
        %v8026 = vpack.c.b16 %v7994, %v7994
        %v8027 = vpack.c.b16 %v7995, %v7995
        %v8028 = vpack.c.b16 %v7996, %v7996
        %v8029 = vpack.c.b16 %v7997, %v7997
        %v8030 = vpack.c.b16 %v7998, %v7998
        %v8031 = vpack.c.b16 %v7999, %v7999
        %v8032 = vpack.c.b16 %v8000, %v8000
        %v8033 = vpack.c.b16 %v8001, %v8001
        %v8035 = vshrl.u32 %v8002, 16
        %v8037 = vrot.slane %v8035, 7
        %v8038 = vshll.u32 %v8002, 16
        %v8040 = vor.u32 %v8037, %v8038
        %v8041 = vrot.slane %v8037, 4
        %v8043 = vshrl.u32 %v8003, 16
        %v8045 = vrot.slane %v8043, 7
        %v8046 = vshll.u32 %v8003, 16
        %v8048 = vor.u32 %v8045, %v8046
        %v8049 = vsel %vm4231, %v8041, %v8048
        %v8050 = vrot.slane %v8045, 4
        %v8052 = vshrl.u32 %v8004, 16
        %v8054 = vrot.slane %v8052, 7
        %v8055 = vshll.u32 %v8004, 16
        %v8057 = vor.u32 %v8054, %v8055
        %v8058 = vrot.slane %v8054, 4
        %v8060 = vshrl.u32 %v8005, 16
        %v8062 = vrot.slane %v8060, 7
        %v8063 = vshll.u32 %v8005, 16
        %v8065 = vor.u32 %v8062, %v8063
        %v8066 = vsel %vm4231, %v8058, %v8065
        %v8067 = vrot.slane %v8062, 4
        %v8069 = vshrl.u32 %v8006, 16
        %v8071 = vrot.slane %v8069, 7
        %v8072 = vshll.u32 %v8006, 16
        %v8074 = vor.u32 %v8071, %v8072
        %v8075 = vrot.slane %v8071, 4
        %v8077 = vshrl.u32 %v8007, 16
        %v8079 = vrot.slane %v8077, 7
        %v8080 = vshll.u32 %v8007, 16
        %v8082 = vor.u32 %v8079, %v8080
        %v8083 = vsel %vm4231, %v8075, %v8082
        %v8084 = vrot.slane %v8079, 4
        %v8086 = vshrl.u32 %v8008, 16
        %v8088 = vrot.slane %v8086, 7
        %v8089 = vshll.u32 %v8008, 16
        %v8091 = vor.u32 %v8088, %v8089
        %v8092 = vrot.slane %v8088, 4
        %v8094 = vshrl.u32 %v8009, 16
        %v8096 = vrot.slane %v8094, 7
        %v8097 = vshll.u32 %v8009, 16
        %v8099 = vor.u32 %v8096, %v8097
        %v8100 = vsel %vm4231, %v8092, %v8099
        %v8101 = vrot.slane %v8096, 4
        %v8103 = vshrl.u32 %v8010, 16
        %v8105 = vrot.slane %v8103, 7
        %v8106 = vshll.u32 %v8010, 16
        %v8108 = vor.u32 %v8105, %v8106
        %v8109 = vrot.slane %v8105, 4
        %v8111 = vshrl.u32 %v8011, 16
        %v8113 = vrot.slane %v8111, 7
        %v8114 = vshll.u32 %v8011, 16
        %v8116 = vor.u32 %v8113, %v8114
        %v8117 = vsel %vm4231, %v8109, %v8116
        %v8118 = vrot.slane %v8113, 4
        %v8120 = vshrl.u32 %v8012, 16
        %v8122 = vrot.slane %v8120, 7
        %v8123 = vshll.u32 %v8012, 16
        %v8125 = vor.u32 %v8122, %v8123
        %v8126 = vrot.slane %v8122, 4
        %v8128 = vshrl.u32 %v8013, 16
        %v8130 = vrot.slane %v8128, 7
        %v8131 = vshll.u32 %v8013, 16
        %v8133 = vor.u32 %v8130, %v8131
        %v8134 = vsel %vm4231, %v8126, %v8133
        %v8135 = vrot.slane %v8130, 4
        %v8137 = vshrl.u32 %v8014, 16
        %v8139 = vrot.slane %v8137, 7
        %v8140 = vshll.u32 %v8014, 16
        %v8142 = vor.u32 %v8139, %v8140
        %v8143 = vrot.slane %v8139, 4
        %v8145 = vshrl.u32 %v8015, 16
        %v8147 = vrot.slane %v8145, 7
        %v8148 = vshll.u32 %v8015, 16
        %v8150 = vor.u32 %v8147, %v8148
        %v8151 = vsel %vm4231, %v8143, %v8150
        %v8152 = vrot.slane %v8147, 4
        %v8154 = vshrl.u32 %v8016, 16
        %v8156 = vrot.slane %v8154, 7
        %v8157 = vshll.u32 %v8016, 16
        %v8159 = vor.u32 %v8156, %v8157
        %v8160 = vrot.slane %v8156, 4
        %v8162 = vshrl.u32 %v8017, 16
        %v8164 = vrot.slane %v8162, 7
        %v8165 = vshll.u32 %v8017, 16
        %v8167 = vor.u32 %v8164, %v8165
        %v8168 = vsel %vm4231, %v8160, %v8167
        %v8169 = vrot.slane %v8164, 4
        %v8171 = vshrl.u32 %v8018, 16
        %v8173 = vrot.slane %v8171, 7
        %v8174 = vshll.u32 %v8018, 16
        %v8176 = vor.u32 %v8173, %v8174
        %v8177 = vrot.slane %v8173, 4
        %v8179 = vshrl.u32 %v8019, 16
        %v8181 = vrot.slane %v8179, 7
        %v8182 = vshll.u32 %v8019, 16
        %v8184 = vor.u32 %v8181, %v8182
        %v8185 = vsel %vm4231, %v8177, %v8184
        %v8186 = vrot.slane %v8181, 4
        %v8188 = vshrl.u32 %v8020, 16
        %v8190 = vrot.slane %v8188, 7
        %v8191 = vshll.u32 %v8020, 16
        %v8193 = vor.u32 %v8190, %v8191
        %v8194 = vrot.slane %v8190, 4
        %v8196 = vshrl.u32 %v8021, 16
        %v8198 = vrot.slane %v8196, 7
        %v8199 = vshll.u32 %v8021, 16
        %v8201 = vor.u32 %v8198, %v8199
        %v8202 = vsel %vm4231, %v8194, %v8201
        %v8203 = vrot.slane %v8198, 4
        %v8205 = vshrl.u32 %v8022, 16
        %v8207 = vrot.slane %v8205, 7
        %v8208 = vshll.u32 %v8022, 16
        %v8210 = vor.u32 %v8207, %v8208
        %v8211 = vrot.slane %v8207, 4
        %v8213 = vshrl.u32 %v8023, 16
        %v8215 = vrot.slane %v8213, 7
        %v8216 = vshll.u32 %v8023, 16
        %v8218 = vor.u32 %v8215, %v8216
        %v8219 = vsel %vm4231, %v8211, %v8218
        %v8220 = vrot.slane %v8215, 4
        %v8222 = vshrl.u32 %v8024, 16
        %v8224 = vrot.slane %v8222, 7
        %v8225 = vshll.u32 %v8024, 16
        %v8227 = vor.u32 %v8224, %v8225
        %v8228 = vrot.slane %v8224, 4
        %v8230 = vshrl.u32 %v8025, 16
        %v8232 = vrot.slane %v8230, 7
        %v8233 = vshll.u32 %v8025, 16
        %v8235 = vor.u32 %v8232, %v8233
        %v8236 = vsel %vm4231, %v8228, %v8235
        %v8237 = vrot.slane %v8232, 4
        %v8239 = vshrl.u32 %v8026, 16
        %v8241 = vrot.slane %v8239, 7
        %v8242 = vshll.u32 %v8026, 16
        %v8244 = vor.u32 %v8241, %v8242
        %v8245 = vrot.slane %v8241, 4
        %v8247 = vshrl.u32 %v8027, 16
        %v8249 = vrot.slane %v8247, 7
        %v8250 = vshll.u32 %v8027, 16
        %v8252 = vor.u32 %v8249, %v8250
        %v8253 = vsel %vm4231, %v8245, %v8252
        %v8254 = vrot.slane %v8249, 4
        %v8256 = vshrl.u32 %v8028, 16
        %v8258 = vrot.slane %v8256, 7
        %v8259 = vshll.u32 %v8028, 16
        %v8261 = vor.u32 %v8258, %v8259
        %v8262 = vrot.slane %v8258, 4
        %v8264 = vshrl.u32 %v8029, 16
        %v8266 = vrot.slane %v8264, 7
        %v8267 = vshll.u32 %v8029, 16
        %v8269 = vor.u32 %v8266, %v8267
        %v8270 = vsel %vm4231, %v8262, %v8269
        %v8271 = vrot.slane %v8266, 4
        %v8273 = vshrl.u32 %v8030, 16
        %v8275 = vrot.slane %v8273, 7
        %v8276 = vshll.u32 %v8030, 16
        %v8278 = vor.u32 %v8275, %v8276
        %v8279 = vrot.slane %v8275, 4
        %v8281 = vshrl.u32 %v8031, 16
        %v8283 = vrot.slane %v8281, 7
        %v8284 = vshll.u32 %v8031, 16
        %v8286 = vor.u32 %v8283, %v8284
        %v8287 = vsel %vm4231, %v8279, %v8286
        %v8288 = vrot.slane %v8283, 4
        %v8290 = vshrl.u32 %v8032, 16
        %v8292 = vrot.slane %v8290, 7
        %v8293 = vshll.u32 %v8032, 16
        %v8295 = vor.u32 %v8292, %v8293
        %v8296 = vrot.slane %v8292, 4
        %v8298 = vshrl.u32 %v8033, 16
        %v8300 = vrot.slane %v8298, 7
        %v8301 = vshll.u32 %v8033, 16
        %v8303 = vor.u32 %v8300, %v8301
        %v8304 = vsel %vm4231, %v8296, %v8303
        %v8305 = vrot.slane %v8300, 4
        %8306 = vrot.lane.b32.xlu0 %v8040, 112
        %v8307 = vpop.permute.xlu0 %8306
        %8308 = vrot.lane.b32.xlu0 %v8049, 112
        %v8309 = vpop.permute.xlu0 %8308
        %8310 = vrot.lane.b32.xlu0 %v8050, 112
        %v8311 = vpop.permute.xlu0 %8310
        %8312 = vrot.lane.b32.xlu0 %v8057, 112
        %v8313 = vpop.permute.xlu0 %8312
        %8314 = vrot.lane.b32.xlu0 %v8066, 112
        %v8315 = vpop.permute.xlu0 %8314
        %8316 = vrot.lane.b32.xlu0 %v8067, 112
        %v8317 = vpop.permute.xlu0 %8316
        %8318 = vrot.lane.b32.xlu0 %v8074, 112
        %v8319 = vpop.permute.xlu0 %8318
        %8320 = vrot.lane.b32.xlu0 %v8083, 112
        %v8321 = vpop.permute.xlu0 %8320
        %8322 = vrot.lane.b32.xlu0 %v8084, 112
        %v8323 = vpop.permute.xlu0 %8322
        %8324 = vrot.lane.b32.xlu0 %v8091, 112
        %v8325 = vpop.permute.xlu0 %8324
        %8326 = vrot.lane.b32.xlu0 %v8100, 112
        %v8327 = vpop.permute.xlu0 %8326
        %8328 = vrot.lane.b32.xlu0 %v8101, 112
        %v8329 = vpop.permute.xlu0 %8328
        %8330 = vrot.lane.b32.xlu0 %v8108, 112
        %v8331 = vpop.permute.xlu0 %8330
        %8332 = vrot.lane.b32.xlu0 %v8117, 112
        %v8333 = vpop.permute.xlu0 %8332
        %8334 = vrot.lane.b32.xlu0 %v8118, 112
        %v8335 = vpop.permute.xlu0 %8334
        %8336 = vrot.lane.b32.xlu0 %v8125, 112
        %v8337 = vpop.permute.xlu0 %8336
        %8338 = vrot.lane.b32.xlu0 %v8134, 112
        %v8339 = vpop.permute.xlu0 %8338
        %8340 = vrot.lane.b32.xlu0 %v8135, 112
        %v8341 = vpop.permute.xlu0 %8340
        %8342 = vrot.lane.b32.xlu0 %v8142, 112
        %v8343 = vpop.permute.xlu0 %8342
        %8344 = vrot.lane.b32.xlu0 %v8151, 112
        %v8345 = vpop.permute.xlu0 %8344
        %8346 = vrot.lane.b32.xlu0 %v8152, 112
        %v8347 = vpop.permute.xlu0 %8346
        %8348 = vrot.lane.b32.xlu0 %v8159, 112
        %v8349 = vpop.permute.xlu0 %8348
        %8350 = vrot.lane.b32.xlu0 %v8168, 112
        %v8351 = vpop.permute.xlu0 %8350
        %8352 = vrot.lane.b32.xlu0 %v8169, 112
        %v8353 = vpop.permute.xlu0 %8352
        %8354 = vrot.lane.b32.xlu0 %v8176, 112
        %v8355 = vpop.permute.xlu0 %8354
        %8356 = vrot.lane.b32.xlu0 %v8185, 112
        %v8357 = vpop.permute.xlu0 %8356
        %8358 = vrot.lane.b32.xlu0 %v8186, 112
        %v8359 = vpop.permute.xlu0 %8358
        %8360 = vrot.lane.b32.xlu0 %v8193, 112
        %v8361 = vpop.permute.xlu0 %8360
        %8362 = vrot.lane.b32.xlu0 %v8202, 112
        %v8363 = vpop.permute.xlu0 %8362
        %8364 = vrot.lane.b32.xlu0 %v8203, 112
        %v8365 = vpop.permute.xlu0 %8364
        %8366 = vrot.lane.b32.xlu0 %v8210, 112
        %v8367 = vpop.permute.xlu0 %8366
        %8368 = vrot.lane.b32.xlu0 %v8219, 112
        %v8369 = vpop.permute.xlu0 %8368
        %8370 = vrot.lane.b32.xlu0 %v8220, 112
        %v8371 = vpop.permute.xlu0 %8370
        %8372 = vrot.lane.b32.xlu0 %v8227, 112
        %v8373 = vpop.permute.xlu0 %8372
        %8374 = vrot.lane.b32.xlu0 %v8236, 112
        %v8375 = vpop.permute.xlu0 %8374
        %8376 = vrot.lane.b32.xlu0 %v8237, 112
        %v8377 = vpop.permute.xlu0 %8376
        %8378 = vrot.lane.b32.xlu0 %v8244, 112
        %v8379 = vpop.permute.xlu0 %8378
        %8380 = vrot.lane.b32.xlu0 %v8253, 112
        %v8381 = vpop.permute.xlu0 %8380
        %8382 = vrot.lane.b32.xlu0 %v8254, 112
        %v8383 = vpop.permute.xlu0 %8382
        %8384 = vrot.lane.b32.xlu0 %v8261, 112
        %v8385 = vpop.permute.xlu0 %8384
        %8386 = vrot.lane.b32.xlu0 %v8270, 112
        %v8387 = vpop.permute.xlu0 %8386
        %8388 = vrot.lane.b32.xlu0 %v8271, 112
        %v8389 = vpop.permute.xlu0 %8388
        %8390 = vrot.lane.b32.xlu0 %v8278, 112
        %v8391 = vpop.permute.xlu0 %8390
        %8392 = vrot.lane.b32.xlu0 %v8287, 112
        %v8393 = vpop.permute.xlu0 %8392
        %8394 = vrot.lane.b32.xlu0 %v8288, 112
        %v8395 = vpop.permute.xlu0 %8394
        %8396 = vrot.lane.b32.xlu0 %v8295, 112
        %v8397 = vpop.permute.xlu0 %8396
        %8398 = vrot.lane.b32.xlu0 %v8304, 112
        %v8399 = vpop.permute.xlu0 %8398
        %8400 = vrot.lane.b32.xlu0 %v8305, 112
        %v8401 = vpop.permute.xlu0 %8400
        %s8450 = scalar_lea.vmem [#allocation3], 12
        %v8451 = vld [vmem:[%s8450] sm:$0xf]
        %v8452 = vsel %vm4650, %v8307, %v8451
        %8453 = vst [vmem:[%s8450] sm:$0xf] %v8452
        %8454 = vst.msk [vmem:[%s8450 + $0x4] sm:$0xf] %vm278, %v8309
        %v8455 = vld [vmem:[%s8450 + $0x8] sm:$0x1]
        %v8456 = vsel %vm289, %v8311, %v8455
        %8457 = vst [vmem:[%s8450 + $0x8] sm:$0x1] %v8456
        %v8458 = vld [vmem:[%s8450 + $0xc] sm:$0xf]
        %v8459 = vsel %vm4650, %v8313, %v8458
        %8460 = vst [vmem:[%s8450 + $0xc] sm:$0xf] %v8459
        %8461 = vst.msk [vmem:[%s8450 + $0x10] sm:$0xf] %vm278, %v8315
        %v8462 = vld [vmem:[%s8450 + $0x14] sm:$0x1]
        %v8463 = vsel %vm289, %v8317, %v8462
        %8464 = vst [vmem:[%s8450 + $0x14] sm:$0x1] %v8463
        %v8465 = vld [vmem:[%s8450 + $0x18] sm:$0xf]
        %v8466 = vsel %vm4650, %v8319, %v8465
        %8467 = vst [vmem:[%s8450 + $0x18] sm:$0xf] %v8466
        %8468 = vst.msk [vmem:[%s8450 + $0x1c] sm:$0xf] %vm278, %v8321
        %v8469 = vld [vmem:[%s8450 + $0x20] sm:$0x1]
        %v8470 = vsel %vm289, %v8323, %v8469
        %8471 = vst [vmem:[%s8450 + $0x20] sm:$0x1] %v8470
        %v8472 = vld [vmem:[%s8450 + $0x24] sm:$0xf]
        %v8473 = vsel %vm4650, %v8325, %v8472
        %8474 = vst [vmem:[%s8450 + $0x24] sm:$0xf] %v8473
        %8475 = vst.msk [vmem:[%s8450 + $0x28] sm:$0xf] %vm278, %v8327
        %v8476 = vld [vmem:[%s8450 + $0x2c] sm:$0x1]
        %v8477 = vsel %vm289, %v8329, %v8476
        %8478 = vst [vmem:[%s8450 + $0x2c] sm:$0x1] %v8477
        %v8479 = vld [vmem:[%s8450 + $0x30] sm:$0xf]
        %v8480 = vsel %vm4650, %v8331, %v8479
        %8481 = vst [vmem:[%s8450 + $0x30] sm:$0xf] %v8480
        %8482 = vst.msk [vmem:[%s8450 + $0x34] sm:$0xf] %vm278, %v8333
        %v8483 = vld [vmem:[%s8450 + $0x38] sm:$0x1]
        %v8484 = vsel %vm289, %v8335, %v8483
        %8485 = vst [vmem:[%s8450 + $0x38] sm:$0x1] %v8484
        %v8486 = vld [vmem:[%s8450 + $0x3c] sm:$0xf]
        %v8487 = vsel %vm4650, %v8337, %v8486
        %8488 = vst [vmem:[%s8450 + $0x3c] sm:$0xf] %v8487
        %8489 = vst.msk [vmem:[%s8450 + $0x40] sm:$0xf] %vm278, %v8339
        %v8490 = vld [vmem:[%s8450 + $0x44] sm:$0x1]
        %v8491 = vsel %vm289, %v8341, %v8490
        %8492 = vst [vmem:[%s8450 + $0x44] sm:$0x1] %v8491
        %v8493 = vld [vmem:[%s8450 + $0x48] sm:$0xf]
        %v8494 = vsel %vm4650, %v8343, %v8493
        %8495 = vst [vmem:[%s8450 + $0x48] sm:$0xf] %v8494
        %8496 = vst.msk [vmem:[%s8450 + $0x4c] sm:$0xf] %vm278, %v8345
        %v8497 = vld [vmem:[%s8450 + $0x50] sm:$0x1]
        %v8498 = vsel %vm289, %v8347, %v8497
        %8499 = vst [vmem:[%s8450 + $0x50] sm:$0x1] %v8498
        %v8500 = vld [vmem:[%s8450 + $0x54] sm:$0xf]
        %v8501 = vsel %vm4650, %v8349, %v8500
        %8502 = vst [vmem:[%s8450 + $0x54] sm:$0xf] %v8501
        %8503 = vst.msk [vmem:[%s8450 + $0x58] sm:$0xf] %vm278, %v8351
        %v8504 = vld [vmem:[%s8450 + $0x5c] sm:$0x1]
        %v8505 = vsel %vm289, %v8353, %v8504
        %8506 = vst [vmem:[%s8450 + $0x5c] sm:$0x1] %v8505
        %v8507 = vld [vmem:[%s8450 + $0x60] sm:$0xf]
        %v8508 = vsel %vm4650, %v8355, %v8507
        %8509 = vst [vmem:[%s8450 + $0x60] sm:$0xf] %v8508
        %8510 = vst.msk [vmem:[%s8450 + $0x64] sm:$0xf] %vm278, %v8357
        %v8511 = vld [vmem:[%s8450 + $0x68] sm:$0x1]
        %v8512 = vsel %vm289, %v8359, %v8511
        %8513 = vst [vmem:[%s8450 + $0x68] sm:$0x1] %v8512
        %v8514 = vld [vmem:[%s8450 + $0x6c] sm:$0xf]
        %v8515 = vsel %vm4650, %v8361, %v8514
        %8516 = vst [vmem:[%s8450 + $0x6c] sm:$0xf] %v8515
        %8517 = vst.msk [vmem:[%s8450 + $0x70] sm:$0xf] %vm278, %v8363
        %v8518 = vld [vmem:[%s8450 + $0x74] sm:$0x1]
        %v8519 = vsel %vm289, %v8365, %v8518
        %8520 = vst [vmem:[%s8450 + $0x74] sm:$0x1] %v8519
        %v8521 = vld [vmem:[%s8450 + $0x78] sm:$0xf]
        %v8522 = vsel %vm4650, %v8367, %v8521
        %8523 = vst [vmem:[%s8450 + $0x78] sm:$0xf] %v8522
        %8524 = vst.msk [vmem:[%s8450 + $0x7c] sm:$0xf] %vm278, %v8369
        %v8525 = vld [vmem:[%s8450 + $0x80] sm:$0x1]
        %v8526 = vsel %vm289, %v8371, %v8525
        %8527 = vst [vmem:[%s8450 + $0x80] sm:$0x1] %v8526
        %v8528 = vld [vmem:[%s8450 + $0x84] sm:$0xf]
        %v8529 = vsel %vm4650, %v8373, %v8528
        %8530 = vst [vmem:[%s8450 + $0x84] sm:$0xf] %v8529
        %8531 = vst.msk [vmem:[%s8450 + $0x88] sm:$0xf] %vm278, %v8375
        %v8532 = vld [vmem:[%s8450 + $0x8c] sm:$0x1]
        %v8533 = vsel %vm289, %v8377, %v8532
        %8534 = vst [vmem:[%s8450 + $0x8c] sm:$0x1] %v8533
        %v8535 = vld [vmem:[%s8450 + $0x90] sm:$0xf]
        %v8536 = vsel %vm4650, %v8379, %v8535
        %8537 = vst [vmem:[%s8450 + $0x90] sm:$0xf] %v8536
        %8538 = vst.msk [vmem:[%s8450 + $0x94] sm:$0xf] %vm278, %v8381
        %v8539 = vld [vmem:[%s8450 + $0x98] sm:$0x1]
        %v8540 = vsel %vm289, %v8383, %v8539
        %8541 = vst [vmem:[%s8450 + $0x98] sm:$0x1] %v8540
        %v8542 = vld [vmem:[%s8450 + $0x9c] sm:$0xf]
        %v8543 = vsel %vm4650, %v8385, %v8542
        %8544 = vst [vmem:[%s8450 + $0x9c] sm:$0xf] %v8543
        %8545 = vst.msk [vmem:[%s8450 + $0xa0] sm:$0xf] %vm278, %v8387
        %v8546 = vld [vmem:[%s8450 + $0xa4] sm:$0x1]
        %v8547 = vsel %vm289, %v8389, %v8546
        %8548 = vst [vmem:[%s8450 + $0xa4] sm:$0x1] %v8547
        %v8549 = vld [vmem:[%s8450 + $0xa8] sm:$0xf]
        %v8550 = vsel %vm4650, %v8391, %v8549
        %8551 = vst [vmem:[%s8450 + $0xa8] sm:$0xf] %v8550
        %8552 = vst.msk [vmem:[%s8450 + $0xac] sm:$0xf] %vm278, %v8393
        %v8553 = vld [vmem:[%s8450 + $0xb0] sm:$0x1]
        %v8554 = vsel %vm289, %v8395, %v8553
        %8555 = vst [vmem:[%s8450 + $0xb0] sm:$0x1] %v8554
        %v8556 = vld [vmem:[%s8450 + $0xb4] sm:$0xf]
        %v8557 = vsel %vm4650, %v8397, %v8556
        %8558 = vst [vmem:[%s8450 + $0xb4] sm:$0xf] %v8557
        %8559 = vst.msk [vmem:[%s8450 + $0xb8] sm:$0xf] %vm278, %v8399
        %v8560 = vld [vmem:[%s8450 + $0xbc] sm:$0x1]
        %v8561 = vsel %vm289, %v8401, %v8560
        %8562 = vst [vmem:[%s8450 + $0xbc] sm:$0x1] %v8561
        %v8563 = vld [vmem:[#allocation3] sm:$0xf]
        %v8564 = vld [vmem:[#allocation3 + $0x4] sm:$0xf]
        %v8565 = vld [vmem:[#allocation3 + $0xc] sm:$0xf]
        %v8566 = vld [vmem:[#allocation3 + $0x10] sm:$0xf]
        %v8567 = vld [vmem:[#allocation3 + $0x18] sm:$0xf]
        %v8568 = vld [vmem:[#allocation3 + $0x1c] sm:$0xf]
        %v8569 = vld [vmem:[#allocation3 + $0x24] sm:$0xf]
        %v8570 = vld [vmem:[#allocation3 + $0x28] sm:$0xf]
        %v8571 = vld [vmem:[#allocation3 + $0x30] sm:$0xf]
        %v8572 = vld [vmem:[#allocation3 + $0x34] sm:$0xf]
        %v8573 = vld [vmem:[#allocation3 + $0x3c] sm:$0xf]
        %v8574 = vld [vmem:[#allocation3 + $0x40] sm:$0xf]
        %v8575 = vld [vmem:[#allocation3 + $0x48] sm:$0xf]
        %v8576 = vld [vmem:[#allocation3 + $0x4c] sm:$0xf]
        %v8577 = vld [vmem:[#allocation3 + $0x54] sm:$0xf]
        %v8578 = vld [vmem:[#allocation3 + $0x58] sm:$0xf]
        %v8579 = vld [vmem:[#allocation3 + $0x60] sm:$0xf]
        %v8580 = vld [vmem:[#allocation3 + $0x64] sm:$0xf]
        %v8581 = vld [vmem:[#allocation3 + $0x6c] sm:$0xf]
        %v8582 = vld [vmem:[#allocation3 + $0x70] sm:$0xf]
        %v8583 = vld [vmem:[#allocation3 + $0x78] sm:$0xf]
        %v8584 = vld [vmem:[#allocation3 + $0x7c] sm:$0xf]
        %v8585 = vld [vmem:[#allocation3 + $0x84] sm:$0xf]
        %v8586 = vld [vmem:[#allocation3 + $0x88] sm:$0xf]
        %v8587 = vld [vmem:[#allocation3 + $0x90] sm:$0xf]
        %v8588 = vld [vmem:[#allocation3 + $0x94] sm:$0xf]
        %v8589 = vld [vmem:[#allocation3 + $0x9c] sm:$0xf]
        %v8590 = vld [vmem:[#allocation3 + $0xa0] sm:$0xf]
        %v8591 = vld [vmem:[#allocation3 + $0xa8] sm:$0xf]
        %v8592 = vld [vmem:[#allocation3 + $0xac] sm:$0xf]
        %v8593 = vld [vmem:[#allocation3 + $0xb4] sm:$0xf]
        %v8594 = vld [vmem:[#allocation3 + $0xb8] sm:$0xf]
        %v8595 = vld [vmem:[#allocation3 + $0x8] sm:$0x1]
        %v8596 = vld [vmem:[#allocation3 + $0x14] sm:$0x1]
        %v8597 = vld [vmem:[#allocation3 + $0x20] sm:$0x1]
        %v8598 = vld [vmem:[#allocation3 + $0x2c] sm:$0x1]
        %v8599 = vld [vmem:[#allocation3 + $0x38] sm:$0x1]
        %v8600 = vld [vmem:[#allocation3 + $0x44] sm:$0x1]
        %v8601 = vld [vmem:[#allocation3 + $0x50] sm:$0x1]
        %v8602 = vld [vmem:[#allocation3 + $0x5c] sm:$0x1]
        %v8603 = vld [vmem:[#allocation3 + $0x68] sm:$0x1]
        %v8604 = vld [vmem:[#allocation3 + $0x74] sm:$0x1]
        %v8605 = vld [vmem:[#allocation3 + $0x80] sm:$0x1]
        %v8606 = vld [vmem:[#allocation3 + $0x8c] sm:$0x1]
        %v8607 = vld [vmem:[#allocation3 + $0x98] sm:$0x1]
        %v8608 = vld [vmem:[#allocation3 + $0xa4] sm:$0x1]
        %v8609 = vld [vmem:[#allocation3 + $0xb0] sm:$0x1]
        %v8610 = vld [vmem:[#allocation3 + $0xbc] sm:$0x1]
        %v8612 = vshrl.u32 %v8563, 16
        %v8614 = vrot.slane %v8612, 4
        %v8615 = vshll.u32 %v8563, 16
        %v8617 = vrot.slane %v8615, 5
        %v8618 = vor.u32 %v8614, %v8617
        %v8619 = vrot.slane %v8618, 4
        %v8621 = vshll.u32 %v8564, 16
        %v8623 = vrot.slane %v8621, 5
        %v8624 = vsel %vm565, %v8619, %v8623
        %v8625 = vshrl.u32 %v8564, 16
        %v8627 = vrot.slane %v8625, 4
        %v8628 = vor.u32 %v8627, %v8623
        %v8629 = vrot.slane %v8628, 4
        %v8631 = vshll.u32 %v8595, 16
        %v8633 = vrot.slane %v8631, 5
        %v8634 = vsel %vm565, %v8629, %v8633
        %v8636 = vshrl.u32 %v8565, 16
        %v8638 = vrot.slane %v8636, 4
        %v8639 = vshll.u32 %v8565, 16
        %v8641 = vrot.slane %v8639, 5
        %v8642 = vor.u32 %v8638, %v8641
        %v8643 = vrot.slane %v8642, 4
        %v8645 = vshll.u32 %v8566, 16
        %v8647 = vrot.slane %v8645, 5
        %v8648 = vsel %vm565, %v8643, %v8647
        %v8649 = vshrl.u32 %v8566, 16
        %v8651 = vrot.slane %v8649, 4
        %v8652 = vor.u32 %v8651, %v8647
        %v8653 = vrot.slane %v8652, 4
        %v8655 = vshll.u32 %v8596, 16
        %v8657 = vrot.slane %v8655, 5
        %v8658 = vsel %vm565, %v8653, %v8657
        %v8660 = vshrl.u32 %v8567, 16
        %v8662 = vrot.slane %v8660, 4
        %v8663 = vshll.u32 %v8567, 16
        %v8665 = vrot.slane %v8663, 5
        %v8666 = vor.u32 %v8662, %v8665
        %v8667 = vrot.slane %v8666, 4
        %v8669 = vshll.u32 %v8568, 16
        %v8671 = vrot.slane %v8669, 5
        %v8672 = vsel %vm565, %v8667, %v8671
        %v8673 = vshrl.u32 %v8568, 16
        %v8675 = vrot.slane %v8673, 4
        %v8676 = vor.u32 %v8675, %v8671
        %v8677 = vrot.slane %v8676, 4
        %v8679 = vshll.u32 %v8597, 16
        %v8681 = vrot.slane %v8679, 5
        %v8682 = vsel %vm565, %v8677, %v8681
        %v8684 = vshrl.u32 %v8569, 16
        %v8686 = vrot.slane %v8684, 4
        %v8687 = vshll.u32 %v8569, 16
        %v8689 = vrot.slane %v8687, 5
        %v8690 = vor.u32 %v8686, %v8689
        %v8691 = vrot.slane %v8690, 4
        %v8693 = vshll.u32 %v8570, 16
        %v8695 = vrot.slane %v8693, 5
        %v8696 = vsel %vm565, %v8691, %v8695
        %v8697 = vshrl.u32 %v8570, 16
        %v8699 = vrot.slane %v8697, 4
        %v8700 = vor.u32 %v8699, %v8695
        %v8701 = vrot.slane %v8700, 4
        %v8703 = vshll.u32 %v8598, 16
        %v8705 = vrot.slane %v8703, 5
        %v8706 = vsel %vm565, %v8701, %v8705
        %v8708 = vshrl.u32 %v8571, 16
        %v8710 = vrot.slane %v8708, 4
        %v8711 = vshll.u32 %v8571, 16
        %v8713 = vrot.slane %v8711, 5
        %v8714 = vor.u32 %v8710, %v8713
        %v8715 = vrot.slane %v8714, 4
        %v8717 = vshll.u32 %v8572, 16
        %v8719 = vrot.slane %v8717, 5
        %v8720 = vsel %vm565, %v8715, %v8719
        %v8721 = vshrl.u32 %v8572, 16
        %v8723 = vrot.slane %v8721, 4
        %v8724 = vor.u32 %v8723, %v8719
        %v8725 = vrot.slane %v8724, 4
        %v8727 = vshll.u32 %v8599, 16
        %v8729 = vrot.slane %v8727, 5
        %v8730 = vsel %vm565, %v8725, %v8729
        %v8732 = vshrl.u32 %v8573, 16
        %v8734 = vrot.slane %v8732, 4
        %v8735 = vshll.u32 %v8573, 16
        %v8737 = vrot.slane %v8735, 5
        %v8738 = vor.u32 %v8734, %v8737
        %v8739 = vrot.slane %v8738, 4
        %v8741 = vshll.u32 %v8574, 16
        %v8743 = vrot.slane %v8741, 5
        %v8744 = vsel %vm565, %v8739, %v8743
        %v8745 = vshrl.u32 %v8574, 16
        %v8747 = vrot.slane %v8745, 4
        %v8748 = vor.u32 %v8747, %v8743
        %v8749 = vrot.slane %v8748, 4
        %v8751 = vshll.u32 %v8600, 16
        %v8753 = vrot.slane %v8751, 5
        %v8754 = vsel %vm565, %v8749, %v8753
        %v8756 = vshrl.u32 %v8575, 16
        %v8758 = vrot.slane %v8756, 4
        %v8759 = vshll.u32 %v8575, 16
        %v8761 = vrot.slane %v8759, 5
        %v8762 = vor.u32 %v8758, %v8761
        %v8763 = vrot.slane %v8762, 4
        %v8765 = vshll.u32 %v8576, 16
        %v8767 = vrot.slane %v8765, 5
        %v8768 = vsel %vm565, %v8763, %v8767
        %v8769 = vshrl.u32 %v8576, 16
        %v8771 = vrot.slane %v8769, 4
        %v8772 = vor.u32 %v8771, %v8767
        %v8773 = vrot.slane %v8772, 4
        %v8775 = vshll.u32 %v8601, 16
        %v8777 = vrot.slane %v8775, 5
        %v8778 = vsel %vm565, %v8773, %v8777
        %v8780 = vshrl.u32 %v8577, 16
        %v8782 = vrot.slane %v8780, 4
        %v8783 = vshll.u32 %v8577, 16
        %v8785 = vrot.slane %v8783, 5
        %v8786 = vor.u32 %v8782, %v8785
        %v8787 = vrot.slane %v8786, 4
        %v8789 = vshll.u32 %v8578, 16
        %v8791 = vrot.slane %v8789, 5
        %v8792 = vsel %vm565, %v8787, %v8791
        %v8793 = vshrl.u32 %v8578, 16
        %v8795 = vrot.slane %v8793, 4
        %v8796 = vor.u32 %v8795, %v8791
        %v8797 = vrot.slane %v8796, 4
        %v8799 = vshll.u32 %v8602, 16
        %v8801 = vrot.slane %v8799, 5
        %v8802 = vsel %vm565, %v8797, %v8801
        %v8804 = vshrl.u32 %v8579, 16
        %v8806 = vrot.slane %v8804, 4
        %v8807 = vshll.u32 %v8579, 16
        %v8809 = vrot.slane %v8807, 5
        %v8810 = vor.u32 %v8806, %v8809
        %v8811 = vrot.slane %v8810, 4
        %v8813 = vshll.u32 %v8580, 16
        %v8815 = vrot.slane %v8813, 5
        %v8816 = vsel %vm565, %v8811, %v8815
        %v8817 = vshrl.u32 %v8580, 16
        %v8819 = vrot.slane %v8817, 4
        %v8820 = vor.u32 %v8819, %v8815
        %v8821 = vrot.slane %v8820, 4
        %v8823 = vshll.u32 %v8603, 16
        %v8825 = vrot.slane %v8823, 5
        %v8826 = vsel %vm565, %v8821, %v8825
        %v8828 = vshrl.u32 %v8581, 16
        %v8830 = vrot.slane %v8828, 4
        %v8831 = vshll.u32 %v8581, 16
        %v8833 = vrot.slane %v8831, 5
        %v8834 = vor.u32 %v8830, %v8833
        %v8835 = vrot.slane %v8834, 4
        %v8837 = vshll.u32 %v8582, 16
        %v8839 = vrot.slane %v8837, 5
        %v8840 = vsel %vm565, %v8835, %v8839
        %v8841 = vshrl.u32 %v8582, 16
        %v8843 = vrot.slane %v8841, 4
        %v8844 = vor.u32 %v8843, %v8839
        %v8845 = vrot.slane %v8844, 4
        %v8847 = vshll.u32 %v8604, 16
        %v8849 = vrot.slane %v8847, 5
        %v8850 = vsel %vm565, %v8845, %v8849
        %v8852 = vshrl.u32 %v8583, 16
        %v8854 = vrot.slane %v8852, 4
        %v8855 = vshll.u32 %v8583, 16
        %v8857 = vrot.slane %v8855, 5
        %v8858 = vor.u32 %v8854, %v8857
        %v8859 = vrot.slane %v8858, 4
        %v8861 = vshll.u32 %v8584, 16
        %v8863 = vrot.slane %v8861, 5
        %v8864 = vsel %vm565, %v8859, %v8863
        %v8865 = vshrl.u32 %v8584, 16
        %v8867 = vrot.slane %v8865, 4
        %v8868 = vor.u32 %v8867, %v8863
        %v8869 = vrot.slane %v8868, 4
        %v8871 = vshll.u32 %v8605, 16
        %v8873 = vrot.slane %v8871, 5
        %v8874 = vsel %vm565, %v8869, %v8873
        %v8876 = vshrl.u32 %v8585, 16
        %v8878 = vrot.slane %v8876, 4
        %v8879 = vshll.u32 %v8585, 16
        %v8881 = vrot.slane %v8879, 5
        %v8882 = vor.u32 %v8878, %v8881
        %v8883 = vrot.slane %v8882, 4
        %v8885 = vshll.u32 %v8586, 16
        %v8887 = vrot.slane %v8885, 5
        %v8888 = vsel %vm565, %v8883, %v8887
        %v8889 = vshrl.u32 %v8586, 16
        %v8891 = vrot.slane %v8889, 4
        %v8892 = vor.u32 %v8891, %v8887
        %v8893 = vrot.slane %v8892, 4
        %v8895 = vshll.u32 %v8606, 16
        %v8897 = vrot.slane %v8895, 5
        %v8898 = vsel %vm565, %v8893, %v8897
        %v8900 = vshrl.u32 %v8587, 16
        %v8902 = vrot.slane %v8900, 4
        %v8903 = vshll.u32 %v8587, 16
        %v8905 = vrot.slane %v8903, 5
        %v8906 = vor.u32 %v8902, %v8905
        %v8907 = vrot.slane %v8906, 4
        %v8909 = vshll.u32 %v8588, 16
        %v8911 = vrot.slane %v8909, 5
        %v8912 = vsel %vm565, %v8907, %v8911
        %v8913 = vshrl.u32 %v8588, 16
        %v8915 = vrot.slane %v8913, 4
        %v8916 = vor.u32 %v8915, %v8911
        %v8917 = vrot.slane %v8916, 4
        %v8919 = vshll.u32 %v8607, 16
        %v8921 = vrot.slane %v8919, 5
        %v8922 = vsel %vm565, %v8917, %v8921
        %v8924 = vshrl.u32 %v8589, 16
        %v8926 = vrot.slane %v8924, 4
        %v8927 = vshll.u32 %v8589, 16
        %v8929 = vrot.slane %v8927, 5
        %v8930 = vor.u32 %v8926, %v8929
        %v8931 = vrot.slane %v8930, 4
        %v8933 = vshll.u32 %v8590, 16
        %v8935 = vrot.slane %v8933, 5
        %v8936 = vsel %vm565, %v8931, %v8935
        %v8937 = vshrl.u32 %v8590, 16
        %v8939 = vrot.slane %v8937, 4
        %v8940 = vor.u32 %v8939, %v8935
        %v8941 = vrot.slane %v8940, 4
        %v8943 = vshll.u32 %v8608, 16
        %v8945 = vrot.slane %v8943, 5
        %v8946 = vsel %vm565, %v8941, %v8945
        %v8948 = vshrl.u32 %v8591, 16
        %v8950 = vrot.slane %v8948, 4
        %v8951 = vshll.u32 %v8591, 16
        %v8953 = vrot.slane %v8951, 5
        %v8954 = vor.u32 %v8950, %v8953
        %v8955 = vrot.slane %v8954, 4
        %v8957 = vshll.u32 %v8592, 16
        %v8959 = vrot.slane %v8957, 5
        %v8960 = vsel %vm565, %v8955, %v8959
        %v8961 = vshrl.u32 %v8592, 16
        %v8963 = vrot.slane %v8961, 4
        %v8964 = vor.u32 %v8963, %v8959
        %v8965 = vrot.slane %v8964, 4
        %v8967 = vshll.u32 %v8609, 16
        %v8969 = vrot.slane %v8967, 5
        %v8970 = vsel %vm565, %v8965, %v8969
        %v8972 = vshrl.u32 %v8593, 16
        %v8974 = vrot.slane %v8972, 4
        %v8975 = vshll.u32 %v8593, 16
        %v8977 = vrot.slane %v8975, 5
        %v8978 = vor.u32 %v8974, %v8977
        %v8979 = vrot.slane %v8978, 4
        %v8981 = vshll.u32 %v8594, 16
        %v8983 = vrot.slane %v8981, 5
        %v8984 = vsel %vm565, %v8979, %v8983
        %v8985 = vshrl.u32 %v8594, 16
        %v8987 = vrot.slane %v8985, 4
        %v8988 = vor.u32 %v8987, %v8983
        %v8989 = vrot.slane %v8988, 4
        %v8991 = vshll.u32 %v8610, 16
        %v8993 = vrot.slane %v8991, 5
        %v8994 = vsel %vm565, %v8989, %v8993
        %v8995 = vld [vmem:[#allocation3] sm:$0xe]
        %v8996 = vld [vmem:[#allocation3 + $0xc] sm:$0xe]
        %v8997 = vld [vmem:[#allocation3 + $0x18] sm:$0xe]
        %v8998 = vld [vmem:[#allocation3 + $0x24] sm:$0xe]
        %v8999 = vld [vmem:[#allocation3 + $0x30] sm:$0xe]
        %v9000 = vld [vmem:[#allocation3 + $0x3c] sm:$0xe]
        %v9001 = vld [vmem:[#allocation3 + $0x48] sm:$0xe]
        %v9002 = vld [vmem:[#allocation3 + $0x54] sm:$0xe]
        %v9003 = vld [vmem:[#allocation3 + $0x60] sm:$0xe]
        %v9004 = vld [vmem:[#allocation3 + $0x6c] sm:$0xe]
        %v9005 = vld [vmem:[#allocation3 + $0x78] sm:$0xe]
        %v9006 = vld [vmem:[#allocation3 + $0x84] sm:$0xe]
        %v9007 = vld [vmem:[#allocation3 + $0x90] sm:$0xe]
        %v9008 = vld [vmem:[#allocation3 + $0x9c] sm:$0xe]
        %v9009 = vld [vmem:[#allocation3 + $0xa8] sm:$0xe]
        %v9010 = vld [vmem:[#allocation3 + $0xb4] sm:$0xe]
        %v9059 = vrot.slane %v8995, 5
        %v9060 = vrot.slane %v9059, 4
        %v9061 = vrot.slane %v8564, 5
        %v9062 = vsel %vm1016, %v9060, %v9061
        %v9063 = vrot.slane %v9061, 4
        %v9064 = vrot.slane %v8595, 5
        %v9065 = vsel %vm1016, %v9063, %v9064
        %v9066 = vrot.slane %v8996, 5
        %v9067 = vrot.slane %v9066, 4
        %v9068 = vrot.slane %v8566, 5
        %v9069 = vsel %vm1016, %v9067, %v9068
        %v9070 = vrot.slane %v9068, 4
        %v9071 = vrot.slane %v8596, 5
        %v9072 = vsel %vm1016, %v9070, %v9071
        %v9073 = vrot.slane %v8997, 5
        %v9074 = vrot.slane %v9073, 4
        %v9075 = vrot.slane %v8568, 5
        %v9076 = vsel %vm1016, %v9074, %v9075
        %v9077 = vrot.slane %v9075, 4
        %v9078 = vrot.slane %v8597, 5
        %v9079 = vsel %vm1016, %v9077, %v9078
        %v9080 = vrot.slane %v8998, 5
        %v9081 = vrot.slane %v9080, 4
        %v9082 = vrot.slane %v8570, 5
        %v9083 = vsel %vm1016, %v9081, %v9082
        %v9084 = vrot.slane %v9082, 4
        %v9085 = vrot.slane %v8598, 5
        %v9086 = vsel %vm1016, %v9084, %v9085
        %v9087 = vrot.slane %v8999, 5
        %v9088 = vrot.slane %v9087, 4
        %v9089 = vrot.slane %v8572, 5
        %v9090 = vsel %vm1016, %v9088, %v9089
        %v9091 = vrot.slane %v9089, 4
        %v9092 = vrot.slane %v8599, 5
        %v9093 = vsel %vm1016, %v9091, %v9092
        %v9094 = vrot.slane %v9000, 5
        %v9095 = vrot.slane %v9094, 4
        %v9096 = vrot.slane %v8574, 5
        %v9097 = vsel %vm1016, %v9095, %v9096
        %v9098 = vrot.slane %v9096, 4
        %v9099 = vrot.slane %v8600, 5
        %v9100 = vsel %vm1016, %v9098, %v9099
        %v9101 = vrot.slane %v9001, 5
        %v9102 = vrot.slane %v9101, 4
        %v9103 = vrot.slane %v8576, 5
        %v9104 = vsel %vm1016, %v9102, %v9103
        %v9105 = vrot.slane %v9103, 4
        %v9106 = vrot.slane %v8601, 5
        %v9107 = vsel %vm1016, %v9105, %v9106
        %v9108 = vrot.slane %v9002, 5
        %v9109 = vrot.slane %v9108, 4
        %v9110 = vrot.slane %v8578, 5
        %v9111 = vsel %vm1016, %v9109, %v9110
        %v9112 = vrot.slane %v9110, 4
        %v9113 = vrot.slane %v8602, 5
        %v9114 = vsel %vm1016, %v9112, %v9113
        %v9115 = vrot.slane %v9003, 5
        %v9116 = vrot.slane %v9115, 4
        %v9117 = vrot.slane %v8580, 5
        %v9118 = vsel %vm1016, %v9116, %v9117
        %v9119 = vrot.slane %v9117, 4
        %v9120 = vrot.slane %v8603, 5
        %v9121 = vsel %vm1016, %v9119, %v9120
        %v9122 = vrot.slane %v9004, 5
        %v9123 = vrot.slane %v9122, 4
        %v9124 = vrot.slane %v8582, 5
        %v9125 = vsel %vm1016, %v9123, %v9124
        %v9126 = vrot.slane %v9124, 4
        %v9127 = vrot.slane %v8604, 5
        %v9128 = vsel %vm1016, %v9126, %v9127
        %v9129 = vrot.slane %v9005, 5
        %v9130 = vrot.slane %v9129, 4
        %v9131 = vrot.slane %v8584, 5
        %v9132 = vsel %vm1016, %v9130, %v9131
        %v9133 = vrot.slane %v9131, 4
        %v9134 = vrot.slane %v8605, 5
        %v9135 = vsel %vm1016, %v9133, %v9134
        %v9136 = vrot.slane %v9006, 5
        %v9137 = vrot.slane %v9136, 4
        %v9138 = vrot.slane %v8586, 5
        %v9139 = vsel %vm1016, %v9137, %v9138
        %v9140 = vrot.slane %v9138, 4
        %v9141 = vrot.slane %v8606, 5
        %v9142 = vsel %vm1016, %v9140, %v9141
        %v9143 = vrot.slane %v9007, 5
        %v9144 = vrot.slane %v9143, 4
        %v9145 = vrot.slane %v8588, 5
        %v9146 = vsel %vm1016, %v9144, %v9145
        %v9147 = vrot.slane %v9145, 4
        %v9148 = vrot.slane %v8607, 5
        %v9149 = vsel %vm1016, %v9147, %v9148
        %v9150 = vrot.slane %v9008, 5
        %v9151 = vrot.slane %v9150, 4
        %v9152 = vrot.slane %v8590, 5
        %v9153 = vsel %vm1016, %v9151, %v9152
        %v9154 = vrot.slane %v9152, 4
        %v9155 = vrot.slane %v8608, 5
        %v9156 = vsel %vm1016, %v9154, %v9155
        %v9157 = vrot.slane %v9009, 5
        %v9158 = vrot.slane %v9157, 4
        %v9159 = vrot.slane %v8592, 5
        %v9160 = vsel %vm1016, %v9158, %v9159
        %v9161 = vrot.slane %v9159, 4
        %v9162 = vrot.slane %v8609, 5
        %v9163 = vsel %vm1016, %v9161, %v9162
        %v9164 = vrot.slane %v9010, 5
        %v9165 = vrot.slane %v9164, 4
        %v9166 = vrot.slane %v8594, 5
        %v9167 = vsel %vm1016, %v9165, %v9166
        %v9168 = vrot.slane %v9166, 4
        %v9169 = vrot.slane %v8610, 5
        %v9170 = vsel %vm1016, %v9168, %v9169
        %v9171 = vld [vmem:[%s8450] sm:$0xf]
        %v9172 = vld [vmem:[%s8450 + $0x4] sm:$0xf]
        %v9173 = vld [vmem:[%s8450 + $0xc] sm:$0xf]
        %v9174 = vld [vmem:[%s8450 + $0x10] sm:$0xf]
        %v9175 = vld [vmem:[%s8450 + $0x18] sm:$0xf]
        %v9176 = vld [vmem:[%s8450 + $0x1c] sm:$0xf]
        %v9177 = vld [vmem:[%s8450 + $0x24] sm:$0xf]
        %v9178 = vld [vmem:[%s8450 + $0x28] sm:$0xf]
        %v9179 = vld [vmem:[%s8450 + $0x30] sm:$0xf]
        %v9180 = vld [vmem:[%s8450 + $0x34] sm:$0xf]
        %v9181 = vld [vmem:[%s8450 + $0x3c] sm:$0xf]
        %v9182 = vld [vmem:[%s8450 + $0x40] sm:$0xf]
        %v9183 = vld [vmem:[%s8450 + $0x48] sm:$0xf]
        %v9184 = vld [vmem:[%s8450 + $0x4c] sm:$0xf]
        %v9185 = vld [vmem:[%s8450 + $0x54] sm:$0xf]
        %v9186 = vld [vmem:[%s8450 + $0x58] sm:$0xf]
        %v9187 = vld [vmem:[%s8450 + $0x60] sm:$0xf]
        %v9188 = vld [vmem:[%s8450 + $0x64] sm:$0xf]
        %v9189 = vld [vmem:[%s8450 + $0x6c] sm:$0xf]
        %v9190 = vld [vmem:[%s8450 + $0x70] sm:$0xf]
        %v9191 = vld [vmem:[%s8450 + $0x78] sm:$0xf]
        %v9192 = vld [vmem:[%s8450 + $0x7c] sm:$0xf]
        %v9193 = vld [vmem:[%s8450 + $0x84] sm:$0xf]
        %v9194 = vld [vmem:[%s8450 + $0x88] sm:$0xf]
        %v9195 = vld [vmem:[%s8450 + $0x90] sm:$0xf]
        %v9196 = vld [vmem:[%s8450 + $0x94] sm:$0xf]
        %v9197 = vld [vmem:[%s8450 + $0x9c] sm:$0xf]
        %v9198 = vld [vmem:[%s8450 + $0xa0] sm:$0xf]
        %v9199 = vld [vmem:[%s8450 + $0xa8] sm:$0xf]
        %v9200 = vld [vmem:[%s8450 + $0xac] sm:$0xf]
        %v9201 = vld [vmem:[%s8450 + $0xb4] sm:$0xf]
        %v9202 = vld [vmem:[%s8450 + $0xb8] sm:$0xf]
        %v9203 = vld [vmem:[%s8450 + $0x8] sm:$0x1]
        %v9204 = vld [vmem:[%s8450 + $0x14] sm:$0x1]
        %v9205 = vld [vmem:[%s8450 + $0x20] sm:$0x1]
        %v9206 = vld [vmem:[%s8450 + $0x2c] sm:$0x1]
        %v9207 = vld [vmem:[%s8450 + $0x38] sm:$0x1]
        %v9208 = vld [vmem:[%s8450 + $0x44] sm:$0x1]
        %v9209 = vld [vmem:[%s8450 + $0x50] sm:$0x1]
        %v9210 = vld [vmem:[%s8450 + $0x5c] sm:$0x1]
        %v9211 = vld [vmem:[%s8450 + $0x68] sm:$0x1]
        %v9212 = vld [vmem:[%s8450 + $0x74] sm:$0x1]
        %v9213 = vld [vmem:[%s8450 + $0x80] sm:$0x1]
        %v9214 = vld [vmem:[%s8450 + $0x8c] sm:$0x1]
        %v9215 = vld [vmem:[%s8450 + $0x98] sm:$0x1]
        %v9216 = vld [vmem:[%s8450 + $0xa4] sm:$0x1]
        %v9217 = vld [vmem:[%s8450 + $0xb0] sm:$0x1]
        %v9218 = vld [vmem:[%s8450 + $0xbc] sm:$0x1]
        %v9220 = vshrl.u32 %v9171, 16
        %v9222 = vrot.slane %v9220, 4
        %v9223 = vshll.u32 %v9171, 16
        %v9225 = vrot.slane %v9223, 5
        %v9226 = vor.u32 %v9222, %v9225
        %v9227 = vrot.slane %v9226, 4
        %v9229 = vshll.u32 %v9172, 16
        %v9231 = vrot.slane %v9229, 5
        %v9232 = vsel %vm565, %v9227, %v9231
        %v9233 = vshrl.u32 %v9172, 16
        %v9235 = vrot.slane %v9233, 4
        %v9236 = vor.u32 %v9235, %v9231
        %v9237 = vrot.slane %v9236, 4
        %v9239 = vshll.u32 %v9203, 16
        %v9241 = vrot.slane %v9239, 5
        %v9242 = vsel %vm565, %v9237, %v9241
        %v9244 = vshrl.u32 %v9173, 16
        %v9246 = vrot.slane %v9244, 4
        %v9247 = vshll.u32 %v9173, 16
        %v9249 = vrot.slane %v9247, 5
        %v9250 = vor.u32 %v9246, %v9249
        %v9251 = vrot.slane %v9250, 4
        %v9253 = vshll.u32 %v9174, 16
        %v9255 = vrot.slane %v9253, 5
        %v9256 = vsel %vm565, %v9251, %v9255
        %v9257 = vshrl.u32 %v9174, 16
        %v9259 = vrot.slane %v9257, 4
        %v9260 = vor.u32 %v9259, %v9255
        %v9261 = vrot.slane %v9260, 4
        %v9263 = vshll.u32 %v9204, 16
        %v9265 = vrot.slane %v9263, 5
        %v9266 = vsel %vm565, %v9261, %v9265
        %v9268 = vshrl.u32 %v9175, 16
        %v9270 = vrot.slane %v9268, 4
        %v9271 = vshll.u32 %v9175, 16
        %v9273 = vrot.slane %v9271, 5
        %v9274 = vor.u32 %v9270, %v9273
        %v9275 = vrot.slane %v9274, 4
        %v9277 = vshll.u32 %v9176, 16
        %v9279 = vrot.slane %v9277, 5
        %v9280 = vsel %vm565, %v9275, %v9279
        %v9281 = vshrl.u32 %v9176, 16
        %v9283 = vrot.slane %v9281, 4
        %v9284 = vor.u32 %v9283, %v9279
        %v9285 = vrot.slane %v9284, 4
        %v9287 = vshll.u32 %v9205, 16
        %v9289 = vrot.slane %v9287, 5
        %v9290 = vsel %vm565, %v9285, %v9289
        %v9292 = vshrl.u32 %v9177, 16
        %v9294 = vrot.slane %v9292, 4
        %v9295 = vshll.u32 %v9177, 16
        %v9297 = vrot.slane %v9295, 5
        %v9298 = vor.u32 %v9294, %v9297
        %v9299 = vrot.slane %v9298, 4
        %v9301 = vshll.u32 %v9178, 16
        %v9303 = vrot.slane %v9301, 5
        %v9304 = vsel %vm565, %v9299, %v9303
        %v9305 = vshrl.u32 %v9178, 16
        %v9307 = vrot.slane %v9305, 4
        %v9308 = vor.u32 %v9307, %v9303
        %v9309 = vrot.slane %v9308, 4
        %v9311 = vshll.u32 %v9206, 16
        %v9313 = vrot.slane %v9311, 5
        %v9314 = vsel %vm565, %v9309, %v9313
        %v9316 = vshrl.u32 %v9179, 16
        %v9318 = vrot.slane %v9316, 4
        %v9319 = vshll.u32 %v9179, 16
        %v9321 = vrot.slane %v9319, 5
        %v9322 = vor.u32 %v9318, %v9321
        %v9323 = vrot.slane %v9322, 4
        %v9325 = vshll.u32 %v9180, 16
        %v9327 = vrot.slane %v9325, 5
        %v9328 = vsel %vm565, %v9323, %v9327
        %v9329 = vshrl.u32 %v9180, 16
        %v9331 = vrot.slane %v9329, 4
        %v9332 = vor.u32 %v9331, %v9327
        %v9333 = vrot.slane %v9332, 4
        %v9335 = vshll.u32 %v9207, 16
        %v9337 = vrot.slane %v9335, 5
        %v9338 = vsel %vm565, %v9333, %v9337
        %v9340 = vshrl.u32 %v9181, 16
        %v9342 = vrot.slane %v9340, 4
        %v9343 = vshll.u32 %v9181, 16
        %v9345 = vrot.slane %v9343, 5
        %v9346 = vor.u32 %v9342, %v9345
        %v9347 = vrot.slane %v9346, 4
        %v9349 = vshll.u32 %v9182, 16
        %v9351 = vrot.slane %v9349, 5
        %v9352 = vsel %vm565, %v9347, %v9351
        %v9353 = vshrl.u32 %v9182, 16
        %v9355 = vrot.slane %v9353, 4
        %v9356 = vor.u32 %v9355, %v9351
        %v9357 = vrot.slane %v9356, 4
        %v9359 = vshll.u32 %v9208, 16
        %v9361 = vrot.slane %v9359, 5
        %v9362 = vsel %vm565, %v9357, %v9361
        %v9364 = vshrl.u32 %v9183, 16
        %v9366 = vrot.slane %v9364, 4
        %v9367 = vshll.u32 %v9183, 16
        %v9369 = vrot.slane %v9367, 5
        %v9370 = vor.u32 %v9366, %v9369
        %v9371 = vrot.slane %v9370, 4
        %v9373 = vshll.u32 %v9184, 16
        %v9375 = vrot.slane %v9373, 5
        %v9376 = vsel %vm565, %v9371, %v9375
        %v9377 = vshrl.u32 %v9184, 16
        %v9379 = vrot.slane %v9377, 4
        %v9380 = vor.u32 %v9379, %v9375
        %v9381 = vrot.slane %v9380, 4
        %v9383 = vshll.u32 %v9209, 16
        %v9385 = vrot.slane %v9383, 5
        %v9386 = vsel %vm565, %v9381, %v9385
        %v9388 = vshrl.u32 %v9185, 16
        %v9390 = vrot.slane %v9388, 4
        %v9391 = vshll.u32 %v9185, 16
        %v9393 = vrot.slane %v9391, 5
        %v9394 = vor.u32 %v9390, %v9393
        %v9395 = vrot.slane %v9394, 4
        %v9397 = vshll.u32 %v9186, 16
        %v9399 = vrot.slane %v9397, 5
        %v9400 = vsel %vm565, %v9395, %v9399
        %v9401 = vshrl.u32 %v9186, 16
        %v9403 = vrot.slane %v9401, 4
        %v9404 = vor.u32 %v9403, %v9399
        %v9405 = vrot.slane %v9404, 4
        %v9407 = vshll.u32 %v9210, 16
        %v9409 = vrot.slane %v9407, 5
        %v9410 = vsel %vm565, %v9405, %v9409
        %v9412 = vshrl.u32 %v9187, 16
        %v9414 = vrot.slane %v9412, 4
        %v9415 = vshll.u32 %v9187, 16
        %v9417 = vrot.slane %v9415, 5
        %v9418 = vor.u32 %v9414, %v9417
        %v9419 = vrot.slane %v9418, 4
        %v9421 = vshll.u32 %v9188, 16
        %v9423 = vrot.slane %v9421, 5
        %v9424 = vsel %vm565, %v9419, %v9423
        %v9425 = vshrl.u32 %v9188, 16
        %v9427 = vrot.slane %v9425, 4
        %v9428 = vor.u32 %v9427, %v9423
        %v9429 = vrot.slane %v9428, 4
        %v9431 = vshll.u32 %v9211, 16
        %v9433 = vrot.slane %v9431, 5
        %v9434 = vsel %vm565, %v9429, %v9433
        %v9436 = vshrl.u32 %v9189, 16
        %v9438 = vrot.slane %v9436, 4
        %v9439 = vshll.u32 %v9189, 16
        %v9441 = vrot.slane %v9439, 5
        %v9442 = vor.u32 %v9438, %v9441
        %v9443 = vrot.slane %v9442, 4
        %v9445 = vshll.u32 %v9190, 16
        %v9447 = vrot.slane %v9445, 5
        %v9448 = vsel %vm565, %v9443, %v9447
        %v9449 = vshrl.u32 %v9190, 16
        %v9451 = vrot.slane %v9449, 4
        %v9452 = vor.u32 %v9451, %v9447
        %v9453 = vrot.slane %v9452, 4
        %v9455 = vshll.u32 %v9212, 16
        %v9457 = vrot.slane %v9455, 5
        %v9458 = vsel %vm565, %v9453, %v9457
        %v9460 = vshrl.u32 %v9191, 16
        %v9462 = vrot.slane %v9460, 4
        %v9463 = vshll.u32 %v9191, 16
        %v9465 = vrot.slane %v9463, 5
        %v9466 = vor.u32 %v9462, %v9465
        %v9467 = vrot.slane %v9466, 4
        %v9469 = vshll.u32 %v9192, 16
        %v9471 = vrot.slane %v9469, 5
        %v9472 = vsel %vm565, %v9467, %v9471
        %v9473 = vshrl.u32 %v9192, 16
        %v9475 = vrot.slane %v9473, 4
        %v9476 = vor.u32 %v9475, %v9471
        %v9477 = vrot.slane %v9476, 4
        %v9479 = vshll.u32 %v9213, 16
        %v9481 = vrot.slane %v9479, 5
        %v9482 = vsel %vm565, %v9477, %v9481
        %v9484 = vshrl.u32 %v9193, 16
        %v9486 = vrot.slane %v9484, 4
        %v9487 = vshll.u32 %v9193, 16
        %v9489 = vrot.slane %v9487, 5
        %v9490 = vor.u32 %v9486, %v9489
        %v9491 = vrot.slane %v9490, 4
        %v9493 = vshll.u32 %v9194, 16
        %v9495 = vrot.slane %v9493, 5
        %v9496 = vsel %vm565, %v9491, %v9495
        %v9497 = vshrl.u32 %v9194, 16
        %v9499 = vrot.slane %v9497, 4
        %v9500 = vor.u32 %v9499, %v9495
        %v9501 = vrot.slane %v9500, 4
        %v9503 = vshll.u32 %v9214, 16
        %v9505 = vrot.slane %v9503, 5
        %v9506 = vsel %vm565, %v9501, %v9505
        %v9508 = vshrl.u32 %v9195, 16
        %v9510 = vrot.slane %v9508, 4
        %v9511 = vshll.u32 %v9195, 16
        %v9513 = vrot.slane %v9511, 5
        %v9514 = vor.u32 %v9510, %v9513
        %v9515 = vrot.slane %v9514, 4
        %v9517 = vshll.u32 %v9196, 16
        %v9519 = vrot.slane %v9517, 5
        %v9520 = vsel %vm565, %v9515, %v9519
        %v9521 = vshrl.u32 %v9196, 16
        %v9523 = vrot.slane %v9521, 4
        %v9524 = vor.u32 %v9523, %v9519
        %v9525 = vrot.slane %v9524, 4
        %v9527 = vshll.u32 %v9215, 16
        %v9529 = vrot.slane %v9527, 5
        %v9530 = vsel %vm565, %v9525, %v9529
        %v9532 = vshrl.u32 %v9197, 16
        %v9534 = vrot.slane %v9532, 4
        %v9535 = vshll.u32 %v9197, 16
        %v9537 = vrot.slane %v9535, 5
        %v9538 = vor.u32 %v9534, %v9537
        %v9539 = vrot.slane %v9538, 4
        %v9541 = vshll.u32 %v9198, 16
        %v9543 = vrot.slane %v9541, 5
        %v9544 = vsel %vm565, %v9539, %v9543
        %v9545 = vshrl.u32 %v9198, 16
        %v9547 = vrot.slane %v9545, 4
        %v9548 = vor.u32 %v9547, %v9543
        %v9549 = vrot.slane %v9548, 4
        %v9551 = vshll.u32 %v9216, 16
        %v9553 = vrot.slane %v9551, 5
        %v9554 = vsel %vm565, %v9549, %v9553
        %v9556 = vshrl.u32 %v9199, 16
        %v9558 = vrot.slane %v9556, 4
        %v9559 = vshll.u32 %v9199, 16
        %v9561 = vrot.slane %v9559, 5
        %v9562 = vor.u32 %v9558, %v9561
        %v9563 = vrot.slane %v9562, 4
        %v9565 = vshll.u32 %v9200, 16
        %v9567 = vrot.slane %v9565, 5
        %v9568 = vsel %vm565, %v9563, %v9567
        %v9569 = vshrl.u32 %v9200, 16
        %v9571 = vrot.slane %v9569, 4
        %v9572 = vor.u32 %v9571, %v9567
        %v9573 = vrot.slane %v9572, 4
        %v9575 = vshll.u32 %v9217, 16
        %v9577 = vrot.slane %v9575, 5
        %v9578 = vsel %vm565, %v9573, %v9577
        %v9580 = vshrl.u32 %v9201, 16
        %v9582 = vrot.slane %v9580, 4
        %v9583 = vshll.u32 %v9201, 16
        %v9585 = vrot.slane %v9583, 5
        %v9586 = vor.u32 %v9582, %v9585
        %v9587 = vrot.slane %v9586, 4
        %v9589 = vshll.u32 %v9202, 16
        %v9591 = vrot.slane %v9589, 5
        %v9592 = vsel %vm565, %v9587, %v9591
        %v9593 = vshrl.u32 %v9202, 16
        %v9595 = vrot.slane %v9593, 4
        %v9596 = vor.u32 %v9595, %v9591
        %v9597 = vrot.slane %v9596, 4
        %v9599 = vshll.u32 %v9218, 16
        %v9601 = vrot.slane %v9599, 5
        %v9602 = vsel %vm565, %v9597, %v9601
        %v9603 = vld [vmem:[%s8450] sm:$0xe]
        %v9604 = vld [vmem:[%s8450 + $0xc] sm:$0xe]
        %v9605 = vld [vmem:[%s8450 + $0x18] sm:$0xe]
        %v9606 = vld [vmem:[%s8450 + $0x24] sm:$0xe]
        %v9607 = vld [vmem:[%s8450 + $0x30] sm:$0xe]
        %v9608 = vld [vmem:[%s8450 + $0x3c] sm:$0xe]
        %v9609 = vld [vmem:[%s8450 + $0x48] sm:$0xe]
        %v9610 = vld [vmem:[%s8450 + $0x54] sm:$0xe]
        %v9611 = vld [vmem:[%s8450 + $0x60] sm:$0xe]
        %v9612 = vld [vmem:[%s8450 + $0x6c] sm:$0xe]
        %v9613 = vld [vmem:[%s8450 + $0x78] sm:$0xe]
        %v9614 = vld [vmem:[%s8450 + $0x84] sm:$0xe]
        %v9615 = vld [vmem:[%s8450 + $0x90] sm:$0xe]
        %v9616 = vld [vmem:[%s8450 + $0x9c] sm:$0xe]
        %v9617 = vld [vmem:[%s8450 + $0xa8] sm:$0xe]
        %v9618 = vld [vmem:[%s8450 + $0xb4] sm:$0xe]
        %v9667 = vrot.slane %v9603, 5
        %v9668 = vrot.slane %v9667, 4
        %v9669 = vrot.slane %v9172, 5
        %v9670 = vsel %vm1016, %v9668, %v9669
        %v9671 = vrot.slane %v9669, 4
        %v9672 = vrot.slane %v9203, 5
        %v9673 = vsel %vm1016, %v9671, %v9672
        %v9674 = vrot.slane %v9604, 5
        %v9675 = vrot.slane %v9674, 4
        %v9676 = vrot.slane %v9174, 5
        %v9677 = vsel %vm1016, %v9675, %v9676
        %v9678 = vrot.slane %v9676, 4
        %v9679 = vrot.slane %v9204, 5
        %v9680 = vsel %vm1016, %v9678, %v9679
        %v9681 = vrot.slane %v9605, 5
        %v9682 = vrot.slane %v9681, 4
        %v9683 = vrot.slane %v9176, 5
        %v9684 = vsel %vm1016, %v9682, %v9683
        %v9685 = vrot.slane %v9683, 4
        %v9686 = vrot.slane %v9205, 5
        %v9687 = vsel %vm1016, %v9685, %v9686
        %v9688 = vrot.slane %v9606, 5
        %v9689 = vrot.slane %v9688, 4
        %v9690 = vrot.slane %v9178, 5
        %v9691 = vsel %vm1016, %v9689, %v9690
        %v9692 = vrot.slane %v9690, 4
        %v9693 = vrot.slane %v9206, 5
        %v9694 = vsel %vm1016, %v9692, %v9693
        %v9695 = vrot.slane %v9607, 5
        %v9696 = vrot.slane %v9695, 4
        %v9697 = vrot.slane %v9180, 5
        %v9698 = vsel %vm1016, %v9696, %v9697
        %v9699 = vrot.slane %v9697, 4
        %v9700 = vrot.slane %v9207, 5
        %v9701 = vsel %vm1016, %v9699, %v9700
        %v9702 = vrot.slane %v9608, 5
        %v9703 = vrot.slane %v9702, 4
        %v9704 = vrot.slane %v9182, 5
        %v9705 = vsel %vm1016, %v9703, %v9704
        %v9706 = vrot.slane %v9704, 4
        %v9707 = vrot.slane %v9208, 5
        %v9708 = vsel %vm1016, %v9706, %v9707
        %v9709 = vrot.slane %v9609, 5
        %v9710 = vrot.slane %v9709, 4
        %v9711 = vrot.slane %v9184, 5
        %v9712 = vsel %vm1016, %v9710, %v9711
        %v9713 = vrot.slane %v9711, 4
        %v9714 = vrot.slane %v9209, 5
        %v9715 = vsel %vm1016, %v9713, %v9714
        %v9716 = vrot.slane %v9610, 5
        %v9717 = vrot.slane %v9716, 4
        %v9718 = vrot.slane %v9186, 5
        %v9719 = vsel %vm1016, %v9717, %v9718
        %v9720 = vrot.slane %v9718, 4
        %v9721 = vrot.slane %v9210, 5
        %v9722 = vsel %vm1016, %v9720, %v9721
        %v9723 = vrot.slane %v9611, 5
        %v9724 = vrot.slane %v9723, 4
        %v9725 = vrot.slane %v9188, 5
        %v9726 = vsel %vm1016, %v9724, %v9725
        %v9727 = vrot.slane %v9725, 4
        %v9728 = vrot.slane %v9211, 5
        %v9729 = vsel %vm1016, %v9727, %v9728
        %v9730 = vrot.slane %v9612, 5
        %v9731 = vrot.slane %v9730, 4
        %v9732 = vrot.slane %v9190, 5
        %v9733 = vsel %vm1016, %v9731, %v9732
        %v9734 = vrot.slane %v9732, 4
        %v9735 = vrot.slane %v9212, 5
        %v9736 = vsel %vm1016, %v9734, %v9735
        %v9737 = vrot.slane %v9613, 5
        %v9738 = vrot.slane %v9737, 4
        %v9739 = vrot.slane %v9192, 5
        %v9740 = vsel %vm1016, %v9738, %v9739
        %v9741 = vrot.slane %v9739, 4
        %v9742 = vrot.slane %v9213, 5
        %v9743 = vsel %vm1016, %v9741, %v9742
        %v9744 = vrot.slane %v9614, 5
        %v9745 = vrot.slane %v9744, 4
        %v9746 = vrot.slane %v9194, 5
        %v9747 = vsel %vm1016, %v9745, %v9746
        %v9748 = vrot.slane %v9746, 4
        %v9749 = vrot.slane %v9214, 5
        %v9750 = vsel %vm1016, %v9748, %v9749
        %v9751 = vrot.slane %v9615, 5
        %v9752 = vrot.slane %v9751, 4
        %v9753 = vrot.slane %v9196, 5
        %v9754 = vsel %vm1016, %v9752, %v9753
        %v9755 = vrot.slane %v9753, 4
        %v9756 = vrot.slane %v9215, 5
        %v9757 = vsel %vm1016, %v9755, %v9756
        %v9758 = vrot.slane %v9616, 5
        %v9759 = vrot.slane %v9758, 4
        %v9760 = vrot.slane %v9198, 5
        %v9761 = vsel %vm1016, %v9759, %v9760
        %v9762 = vrot.slane %v9760, 4
        %v9763 = vrot.slane %v9216, 5
        %v9764 = vsel %vm1016, %v9762, %v9763
        %v9765 = vrot.slane %v9617, 5
        %v9766 = vrot.slane %v9765, 4
        %v9767 = vrot.slane %v9200, 5
        %v9768 = vsel %vm1016, %v9766, %v9767
        %v9769 = vrot.slane %v9767, 4
        %v9770 = vrot.slane %v9217, 5
        %v9771 = vsel %vm1016, %v9769, %v9770
        %v9772 = vrot.slane %v9618, 5
        %v9773 = vrot.slane %v9772, 4
        %v9774 = vrot.slane %v9202, 5
        %v9775 = vsel %vm1016, %v9773, %v9774
        %v9776 = vrot.slane %v9774, 4
        %v9777 = vrot.slane %v9218, 5
        %v9778 = vsel %vm1016, %v9776, %v9777
        %s9779 = scalar_lea.vmem [#allocation3], 24
        %v9780 = vld [vmem:[%s9779] sm:$0xf]
        %v9781 = vld [vmem:[%s9779 + $0x4] sm:$0xf]
        %v9782 = vld [vmem:[%s9779 + $0xc] sm:$0xf]
        %v9783 = vld [vmem:[%s9779 + $0x10] sm:$0xf]
        %v9784 = vld [vmem:[%s9779 + $0x18] sm:$0xf]
        %v9785 = vld [vmem:[%s9779 + $0x1c] sm:$0xf]
        %v9786 = vld [vmem:[%s9779 + $0x24] sm:$0xf]
        %v9787 = vld [vmem:[%s9779 + $0x28] sm:$0xf]
        %v9788 = vld [vmem:[%s9779 + $0x30] sm:$0xf]
        %v9789 = vld [vmem:[%s9779 + $0x34] sm:$0xf]
        %v9790 = vld [vmem:[%s9779 + $0x3c] sm:$0xf]
        %v9791 = vld [vmem:[%s9779 + $0x40] sm:$0xf]
        %v9792 = vld [vmem:[%s9779 + $0x48] sm:$0xf]
        %v9793 = vld [vmem:[%s9779 + $0x4c] sm:$0xf]
        %v9794 = vld [vmem:[%s9779 + $0x54] sm:$0xf]
        %v9795 = vld [vmem:[%s9779 + $0x58] sm:$0xf]
        %v9796 = vld [vmem:[%s9779 + $0x60] sm:$0xf]
        %v9797 = vld [vmem:[%s9779 + $0x64] sm:$0xf]
        %v9798 = vld [vmem:[%s9779 + $0x6c] sm:$0xf]
        %v9799 = vld [vmem:[%s9779 + $0x70] sm:$0xf]
        %v9800 = vld [vmem:[%s9779 + $0x78] sm:$0xf]
        %v9801 = vld [vmem:[%s9779 + $0x7c] sm:$0xf]
        %v9802 = vld [vmem:[%s9779 + $0x84] sm:$0xf]
        %v9803 = vld [vmem:[%s9779 + $0x88] sm:$0xf]
        %v9804 = vld [vmem:[%s9779 + $0x90] sm:$0xf]
        %v9805 = vld [vmem:[%s9779 + $0x94] sm:$0xf]
        %v9806 = vld [vmem:[%s9779 + $0x9c] sm:$0xf]
        %v9807 = vld [vmem:[%s9779 + $0xa0] sm:$0xf]
        %v9808 = vld [vmem:[%s9779 + $0xa8] sm:$0xf]
        %v9809 = vld [vmem:[%s9779 + $0xac] sm:$0xf]
        %v9810 = vld [vmem:[%s9779 + $0xb4] sm:$0xf]
        %v9811 = vld [vmem:[%s9779 + $0xb8] sm:$0xf]
        %v9812 = vld [vmem:[%s9779 + $0x8] sm:$0x1]
        %v9813 = vld [vmem:[%s9779 + $0x14] sm:$0x1]
        %v9814 = vld [vmem:[%s9779 + $0x20] sm:$0x1]
        %v9815 = vld [vmem:[%s9779 + $0x2c] sm:$0x1]
        %v9816 = vld [vmem:[%s9779 + $0x38] sm:$0x1]
        %v9817 = vld [vmem:[%s9779 + $0x44] sm:$0x1]
        %v9818 = vld [vmem:[%s9779 + $0x50] sm:$0x1]
        %v9819 = vld [vmem:[%s9779 + $0x5c] sm:$0x1]
        %v9820 = vld [vmem:[%s9779 + $0x68] sm:$0x1]
        %v9821 = vld [vmem:[%s9779 + $0x74] sm:$0x1]
        %v9822 = vld [vmem:[%s9779 + $0x80] sm:$0x1]
        %v9823 = vld [vmem:[%s9779 + $0x8c] sm:$0x1]
        %v9824 = vld [vmem:[%s9779 + $0x98] sm:$0x1]
        %v9825 = vld [vmem:[%s9779 + $0xa4] sm:$0x1]
        %v9826 = vld [vmem:[%s9779 + $0xb0] sm:$0x1]
        %v9827 = vld [vmem:[%s9779 + $0xbc] sm:$0x1]
        %v9829 = vshrl.u32 %v9780, 16
        %v9831 = vrot.slane %v9829, 4
        %v9832 = vshll.u32 %v9780, 16
        %v9834 = vrot.slane %v9832, 5
        %v9835 = vor.u32 %v9831, %v9834
        %v9836 = vrot.slane %v9835, 4
        %v9838 = vshll.u32 %v9781, 16
        %v9840 = vrot.slane %v9838, 5
        %v9841 = vsel %vm565, %v9836, %v9840
        %v9842 = vshrl.u32 %v9781, 16
        %v9844 = vrot.slane %v9842, 4
        %v9845 = vor.u32 %v9844, %v9840
        %v9846 = vrot.slane %v9845, 4
        %v9848 = vshll.u32 %v9812, 16
        %v9850 = vrot.slane %v9848, 5
        %v9851 = vsel %vm565, %v9846, %v9850
        %v9853 = vshrl.u32 %v9782, 16
        %v9855 = vrot.slane %v9853, 4
        %v9856 = vshll.u32 %v9782, 16
        %v9858 = vrot.slane %v9856, 5
        %v9859 = vor.u32 %v9855, %v9858
        %v9860 = vrot.slane %v9859, 4
        %v9862 = vshll.u32 %v9783, 16
        %v9864 = vrot.slane %v9862, 5
        %v9865 = vsel %vm565, %v9860, %v9864
        %v9866 = vshrl.u32 %v9783, 16
        %v9868 = vrot.slane %v9866, 4
        %v9869 = vor.u32 %v9868, %v9864
        %v9870 = vrot.slane %v9869, 4
        %v9872 = vshll.u32 %v9813, 16
        %v9874 = vrot.slane %v9872, 5
        %v9875 = vsel %vm565, %v9870, %v9874
        %v9877 = vshrl.u32 %v9784, 16
        %v9879 = vrot.slane %v9877, 4
        %v9880 = vshll.u32 %v9784, 16
        %v9882 = vrot.slane %v9880, 5
        %v9883 = vor.u32 %v9879, %v9882
        %v9884 = vrot.slane %v9883, 4
        %v9886 = vshll.u32 %v9785, 16
        %v9888 = vrot.slane %v9886, 5
        %v9889 = vsel %vm565, %v9884, %v9888
        %v9890 = vshrl.u32 %v9785, 16
        %v9892 = vrot.slane %v9890, 4
        %v9893 = vor.u32 %v9892, %v9888
        %v9894 = vrot.slane %v9893, 4
        %v9896 = vshll.u32 %v9814, 16
        %v9898 = vrot.slane %v9896, 5
        %v9899 = vsel %vm565, %v9894, %v9898
        %v9901 = vshrl.u32 %v9786, 16
        %v9903 = vrot.slane %v9901, 4
        %v9904 = vshll.u32 %v9786, 16
        %v9906 = vrot.slane %v9904, 5
        %v9907 = vor.u32 %v9903, %v9906
        %v9908 = vrot.slane %v9907, 4
        %v9910 = vshll.u32 %v9787, 16
        %v9912 = vrot.slane %v9910, 5
        %v9913 = vsel %vm565, %v9908, %v9912
        %v9914 = vshrl.u32 %v9787, 16
        %v9916 = vrot.slane %v9914, 4
        %v9917 = vor.u32 %v9916, %v9912
        %v9918 = vrot.slane %v9917, 4
        %v9920 = vshll.u32 %v9815, 16
        %v9922 = vrot.slane %v9920, 5
        %v9923 = vsel %vm565, %v9918, %v9922
        %v9925 = vshrl.u32 %v9788, 16
        %v9927 = vrot.slane %v9925, 4
        %v9928 = vshll.u32 %v9788, 16
        %v9930 = vrot.slane %v9928, 5
        %v9931 = vor.u32 %v9927, %v9930
        %v9932 = vrot.slane %v9931, 4
        %v9934 = vshll.u32 %v9789, 16
        %v9936 = vrot.slane %v9934, 5
        %v9937 = vsel %vm565, %v9932, %v9936
        %v9938 = vshrl.u32 %v9789, 16
        %v9940 = vrot.slane %v9938, 4
        %v9941 = vor.u32 %v9940, %v9936
        %v9942 = vrot.slane %v9941, 4
        %v9944 = vshll.u32 %v9816, 16
        %v9946 = vrot.slane %v9944, 5
        %v9947 = vsel %vm565, %v9942, %v9946
        %v9949 = vshrl.u32 %v9790, 16
        %v9951 = vrot.slane %v9949, 4
        %v9952 = vshll.u32 %v9790, 16
        %v9954 = vrot.slane %v9952, 5
        %v9955 = vor.u32 %v9951, %v9954
        %v9956 = vrot.slane %v9955, 4
        %v9958 = vshll.u32 %v9791, 16
        %v9960 = vrot.slane %v9958, 5
        %v9961 = vsel %vm565, %v9956, %v9960
        %v9962 = vshrl.u32 %v9791, 16
        %v9964 = vrot.slane %v9962, 4
        %v9965 = vor.u32 %v9964, %v9960
        %v9966 = vrot.slane %v9965, 4
        %v9968 = vshll.u32 %v9817, 16
        %v9970 = vrot.slane %v9968, 5
        %v9971 = vsel %vm565, %v9966, %v9970
        %v9973 = vshrl.u32 %v9792, 16
        %v9975 = vrot.slane %v9973, 4
        %v9976 = vshll.u32 %v9792, 16
        %v9978 = vrot.slane %v9976, 5
        %v9979 = vor.u32 %v9975, %v9978
        %v9980 = vrot.slane %v9979, 4
        %v9982 = vshll.u32 %v9793, 16
        %v9984 = vrot.slane %v9982, 5
        %v9985 = vsel %vm565, %v9980, %v9984
        %v9986 = vshrl.u32 %v9793, 16
        %v9988 = vrot.slane %v9986, 4
        %v9989 = vor.u32 %v9988, %v9984
        %v9990 = vrot.slane %v9989, 4
        %v9992 = vshll.u32 %v9818, 16
        %v9994 = vrot.slane %v9992, 5
        %v9995 = vsel %vm565, %v9990, %v9994
        %v9997 = vshrl.u32 %v9794, 16
        %v9999 = vrot.slane %v9997, 4
        %v10000 = vshll.u32 %v9794, 16
        %v10002 = vrot.slane %v10000, 5
        %v10003 = vor.u32 %v9999, %v10002
        %v10004 = vrot.slane %v10003, 4
        %v10006 = vshll.u32 %v9795, 16
        %v10008 = vrot.slane %v10006, 5
        %v10009 = vsel %vm565, %v10004, %v10008
        %v10010 = vshrl.u32 %v9795, 16
        %v10012 = vrot.slane %v10010, 4
        %v10013 = vor.u32 %v10012, %v10008
        %v10014 = vrot.slane %v10013, 4
        %v10016 = vshll.u32 %v9819, 16
        %v10018 = vrot.slane %v10016, 5
        %v10019 = vsel %vm565, %v10014, %v10018
        %v10021 = vshrl.u32 %v9796, 16
        %v10023 = vrot.slane %v10021, 4
        %v10024 = vshll.u32 %v9796, 16
        %v10026 = vrot.slane %v10024, 5
        %v10027 = vor.u32 %v10023, %v10026
        %v10028 = vrot.slane %v10027, 4
        %v10030 = vshll.u32 %v9797, 16
        %v10032 = vrot.slane %v10030, 5
        %v10033 = vsel %vm565, %v10028, %v10032
        %v10034 = vshrl.u32 %v9797, 16
        %v10036 = vrot.slane %v10034, 4
        %v10037 = vor.u32 %v10036, %v10032
        %v10038 = vrot.slane %v10037, 4
        %v10040 = vshll.u32 %v9820, 16
        %v10042 = vrot.slane %v10040, 5
        %v10043 = vsel %vm565, %v10038, %v10042
        %v10045 = vshrl.u32 %v9798, 16
        %v10047 = vrot.slane %v10045, 4
        %v10048 = vshll.u32 %v9798, 16
        %v10050 = vrot.slane %v10048, 5
        %v10051 = vor.u32 %v10047, %v10050
        %v10052 = vrot.slane %v10051, 4
        %v10054 = vshll.u32 %v9799, 16
        %v10056 = vrot.slane %v10054, 5
        %v10057 = vsel %vm565, %v10052, %v10056
        %v10058 = vshrl.u32 %v9799, 16
        %v10060 = vrot.slane %v10058, 4
        %v10061 = vor.u32 %v10060, %v10056
        %v10062 = vrot.slane %v10061, 4
        %v10064 = vshll.u32 %v9821, 16
        %v10066 = vrot.slane %v10064, 5
        %v10067 = vsel %vm565, %v10062, %v10066
        %v10069 = vshrl.u32 %v9800, 16
        %v10071 = vrot.slane %v10069, 4
        %v10072 = vshll.u32 %v9800, 16
        %v10074 = vrot.slane %v10072, 5
        %v10075 = vor.u32 %v10071, %v10074
        %v10076 = vrot.slane %v10075, 4
        %v10078 = vshll.u32 %v9801, 16
        %v10080 = vrot.slane %v10078, 5
        %v10081 = vsel %vm565, %v10076, %v10080
        %v10082 = vshrl.u32 %v9801, 16
        %v10084 = vrot.slane %v10082, 4
        %v10085 = vor.u32 %v10084, %v10080
        %v10086 = vrot.slane %v10085, 4
        %v10088 = vshll.u32 %v9822, 16
        %v10090 = vrot.slane %v10088, 5
        %v10091 = vsel %vm565, %v10086, %v10090
        %v10093 = vshrl.u32 %v9802, 16
        %v10095 = vrot.slane %v10093, 4
        %v10096 = vshll.u32 %v9802, 16
        %v10098 = vrot.slane %v10096, 5
        %v10099 = vor.u32 %v10095, %v10098
        %v10100 = vrot.slane %v10099, 4
        %v10102 = vshll.u32 %v9803, 16
        %v10104 = vrot.slane %v10102, 5
        %v10105 = vsel %vm565, %v10100, %v10104
        %v10106 = vshrl.u32 %v9803, 16
        %v10108 = vrot.slane %v10106, 4
        %v10109 = vor.u32 %v10108, %v10104
        %v10110 = vrot.slane %v10109, 4
        %v10112 = vshll.u32 %v9823, 16
        %v10114 = vrot.slane %v10112, 5
        %v10115 = vsel %vm565, %v10110, %v10114
        %v10117 = vshrl.u32 %v9804, 16
        %v10119 = vrot.slane %v10117, 4
        %v10120 = vshll.u32 %v9804, 16
        %v10122 = vrot.slane %v10120, 5
        %v10123 = vor.u32 %v10119, %v10122
        %v10124 = vrot.slane %v10123, 4
        %v10126 = vshll.u32 %v9805, 16
        %v10128 = vrot.slane %v10126, 5
        %v10129 = vsel %vm565, %v10124, %v10128
        %v10130 = vshrl.u32 %v9805, 16
        %v10132 = vrot.slane %v10130, 4
        %v10133 = vor.u32 %v10132, %v10128
        %v10134 = vrot.slane %v10133, 4
        %v10136 = vshll.u32 %v9824, 16
        %v10138 = vrot.slane %v10136, 5
        %v10139 = vsel %vm565, %v10134, %v10138
        %v10141 = vshrl.u32 %v9806, 16
        %v10143 = vrot.slane %v10141, 4
        %v10144 = vshll.u32 %v9806, 16
        %v10146 = vrot.slane %v10144, 5
        %v10147 = vor.u32 %v10143, %v10146
        %v10148 = vrot.slane %v10147, 4
        %v10150 = vshll.u32 %v9807, 16
        %v10152 = vrot.slane %v10150, 5
        %v10153 = vsel %vm565, %v10148, %v10152
        %v10154 = vshrl.u32 %v9807, 16
        %v10156 = vrot.slane %v10154, 4
        %v10157 = vor.u32 %v10156, %v10152
        %v10158 = vrot.slane %v10157, 4
        %v10160 = vshll.u32 %v9825, 16
        %v10162 = vrot.slane %v10160, 5
        %v10163 = vsel %vm565, %v10158, %v10162
        %v10165 = vshrl.u32 %v9808, 16
        %v10167 = vrot.slane %v10165, 4
        %v10168 = vshll.u32 %v9808, 16
        %v10170 = vrot.slane %v10168, 5
        %v10171 = vor.u32 %v10167, %v10170
        %v10172 = vrot.slane %v10171, 4
        %v10174 = vshll.u32 %v9809, 16
        %v10176 = vrot.slane %v10174, 5
        %v10177 = vsel %vm565, %v10172, %v10176
        %v10178 = vshrl.u32 %v9809, 16
        %v10180 = vrot.slane %v10178, 4
        %v10181 = vor.u32 %v10180, %v10176
        %v10182 = vrot.slane %v10181, 4
        %v10184 = vshll.u32 %v9826, 16
        %v10186 = vrot.slane %v10184, 5
        %v10187 = vsel %vm565, %v10182, %v10186
        %v10189 = vshrl.u32 %v9810, 16
        %v10191 = vrot.slane %v10189, 4
        %v10192 = vshll.u32 %v9810, 16
        %v10194 = vrot.slane %v10192, 5
        %v10195 = vor.u32 %v10191, %v10194
        %v10196 = vrot.slane %v10195, 4
        %v10198 = vshll.u32 %v9811, 16
        %v10200 = vrot.slane %v10198, 5
        %v10201 = vsel %vm565, %v10196, %v10200
        %v10202 = vshrl.u32 %v9811, 16
        %v10204 = vrot.slane %v10202, 4
        %v10205 = vor.u32 %v10204, %v10200
        %v10206 = vrot.slane %v10205, 4
        %v10208 = vshll.u32 %v9827, 16
        %v10210 = vrot.slane %v10208, 5
        %v10211 = vsel %vm565, %v10206, %v10210
        %v10212 = vld [vmem:[%s9779] sm:$0xe]
        %v10213 = vld [vmem:[%s9779 + $0xc] sm:$0xe]
        %v10214 = vld [vmem:[%s9779 + $0x18] sm:$0xe]
        %v10215 = vld [vmem:[%s9779 + $0x24] sm:$0xe]
        %v10216 = vld [vmem:[%s9779 + $0x30] sm:$0xe]
        %v10217 = vld [vmem:[%s9779 + $0x3c] sm:$0xe]
        %v10218 = vld [vmem:[%s9779 + $0x48] sm:$0xe]
        %v10219 = vld [vmem:[%s9779 + $0x54] sm:$0xe]
        %v10220 = vld [vmem:[%s9779 + $0x60] sm:$0xe]
        %v10221 = vld [vmem:[%s9779 + $0x6c] sm:$0xe]
        %v10222 = vld [vmem:[%s9779 + $0x78] sm:$0xe]
        %v10223 = vld [vmem:[%s9779 + $0x84] sm:$0xe]
        %v10224 = vld [vmem:[%s9779 + $0x90] sm:$0xe]
        %v10225 = vld [vmem:[%s9779 + $0x9c] sm:$0xe]
        %v10226 = vld [vmem:[%s9779 + $0xa8] sm:$0xe]
        %v10227 = vld [vmem:[%s9779 + $0xb4] sm:$0xe]
        %v10276 = vrot.slane %v10212, 5
        %v10277 = vrot.slane %v10276, 4
        %v10278 = vrot.slane %v9781, 5
        %v10279 = vsel %vm1016, %v10277, %v10278
        %v10280 = vrot.slane %v10278, 4
        %v10281 = vrot.slane %v9812, 5
        %v10282 = vsel %vm1016, %v10280, %v10281
        %v10283 = vrot.slane %v10213, 5
        %v10284 = vrot.slane %v10283, 4
        %v10285 = vrot.slane %v9783, 5
        %v10286 = vsel %vm1016, %v10284, %v10285
        %v10287 = vrot.slane %v10285, 4
        %v10288 = vrot.slane %v9813, 5
        %v10289 = vsel %vm1016, %v10287, %v10288
        %v10290 = vrot.slane %v10214, 5
        %v10291 = vrot.slane %v10290, 4
        %v10292 = vrot.slane %v9785, 5
        %v10293 = vsel %vm1016, %v10291, %v10292
        %v10294 = vrot.slane %v10292, 4
        %v10295 = vrot.slane %v9814, 5
        %v10296 = vsel %vm1016, %v10294, %v10295
        %v10297 = vrot.slane %v10215, 5
        %v10298 = vrot.slane %v10297, 4
        %v10299 = vrot.slane %v9787, 5
        %v10300 = vsel %vm1016, %v10298, %v10299
        %v10301 = vrot.slane %v10299, 4
        %v10302 = vrot.slane %v9815, 5
        %v10303 = vsel %vm1016, %v10301, %v10302
        %v10304 = vrot.slane %v10216, 5
        %v10305 = vrot.slane %v10304, 4
        %v10306 = vrot.slane %v9789, 5
        %v10307 = vsel %vm1016, %v10305, %v10306
        %v10308 = vrot.slane %v10306, 4
        %v10309 = vrot.slane %v9816, 5
        %v10310 = vsel %vm1016, %v10308, %v10309
        %v10311 = vrot.slane %v10217, 5
        %v10312 = vrot.slane %v10311, 4
        %v10313 = vrot.slane %v9791, 5
        %v10314 = vsel %vm1016, %v10312, %v10313
        %v10315 = vrot.slane %v10313, 4
        %v10316 = vrot.slane %v9817, 5
        %v10317 = vsel %vm1016, %v10315, %v10316
        %v10318 = vrot.slane %v10218, 5
        %v10319 = vrot.slane %v10318, 4
        %v10320 = vrot.slane %v9793, 5
        %v10321 = vsel %vm1016, %v10319, %v10320
        %v10322 = vrot.slane %v10320, 4
        %v10323 = vrot.slane %v9818, 5
        %v10324 = vsel %vm1016, %v10322, %v10323
        %v10325 = vrot.slane %v10219, 5
        %v10326 = vrot.slane %v10325, 4
        %v10327 = vrot.slane %v9795, 5
        %v10328 = vsel %vm1016, %v10326, %v10327
        %v10329 = vrot.slane %v10327, 4
        %v10330 = vrot.slane %v9819, 5
        %v10331 = vsel %vm1016, %v10329, %v10330
        %v10332 = vrot.slane %v10220, 5
        %v10333 = vrot.slane %v10332, 4
        %v10334 = vrot.slane %v9797, 5
        %v10335 = vsel %vm1016, %v10333, %v10334
        %v10336 = vrot.slane %v10334, 4
        %v10337 = vrot.slane %v9820, 5
        %v10338 = vsel %vm1016, %v10336, %v10337
        %v10339 = vrot.slane %v10221, 5
        %v10340 = vrot.slane %v10339, 4
        %v10341 = vrot.slane %v9799, 5
        %v10342 = vsel %vm1016, %v10340, %v10341
        %v10343 = vrot.slane %v10341, 4
        %v10344 = vrot.slane %v9821, 5
        %v10345 = vsel %vm1016, %v10343, %v10344
        %v10346 = vrot.slane %v10222, 5
        %v10347 = vrot.slane %v10346, 4
        %v10348 = vrot.slane %v9801, 5
        %v10349 = vsel %vm1016, %v10347, %v10348
        %v10350 = vrot.slane %v10348, 4
        %v10351 = vrot.slane %v9822, 5
        %v10352 = vsel %vm1016, %v10350, %v10351
        %v10353 = vrot.slane %v10223, 5
        %v10354 = vrot.slane %v10353, 4
        %v10355 = vrot.slane %v9803, 5
        %v10356 = vsel %vm1016, %v10354, %v10355
        %v10357 = vrot.slane %v10355, 4
        %v10358 = vrot.slane %v9823, 5
        %v10359 = vsel %vm1016, %v10357, %v10358
        %v10360 = vrot.slane %v10224, 5
        %v10361 = vrot.slane %v10360, 4
        %v10362 = vrot.slane %v9805, 5
        %v10363 = vsel %vm1016, %v10361, %v10362
        %v10364 = vrot.slane %v10362, 4
        %v10365 = vrot.slane %v9824, 5
        %v10366 = vsel %vm1016, %v10364, %v10365
        %v10367 = vrot.slane %v10225, 5
        %v10368 = vrot.slane %v10367, 4
        %v10369 = vrot.slane %v9807, 5
        %v10370 = vsel %vm1016, %v10368, %v10369
        %v10371 = vrot.slane %v10369, 4
        %v10372 = vrot.slane %v9825, 5
        %v10373 = vsel %vm1016, %v10371, %v10372
        %v10374 = vrot.slane %v10226, 5
        %v10375 = vrot.slane %v10374, 4
        %v10376 = vrot.slane %v9809, 5
        %v10377 = vsel %vm1016, %v10375, %v10376
        %v10378 = vrot.slane %v10376, 4
        %v10379 = vrot.slane %v9826, 5
        %v10380 = vsel %vm1016, %v10378, %v10379
        %v10381 = vrot.slane %v10227, 5
        %v10382 = vrot.slane %v10381, 4
        %v10383 = vrot.slane %v9811, 5
        %v10384 = vsel %vm1016, %v10382, %v10383
        %v10385 = vrot.slane %v10383, 4
        %v10386 = vrot.slane %v9827, 5
        %v10387 = vsel %vm1016, %v10385, %v10386
        %v10404 = vunpack.c.l.b16 %v8563
        %v10405 = vunpack.c.l.b16 %v8564
        %v10406 = vunpack.c.l.b16 %v8565
        %v10407 = vunpack.c.l.b16 %v8566
        %v10408 = vunpack.c.l.b16 %v8567
        %v10409 = vunpack.c.l.b16 %v8568
        %v10410 = vunpack.c.l.b16 %v8569
        %v10411 = vunpack.c.l.b16 %v8570
        %v10412 = vunpack.c.l.b16 %v8571
        %v10413 = vunpack.c.l.b16 %v8572
        %v10414 = vunpack.c.l.b16 %v8573
        %v10415 = vunpack.c.l.b16 %v8574
        %v10416 = vunpack.c.l.b16 %v8575
        %v10417 = vunpack.c.l.b16 %v8576
        %v10418 = vunpack.c.l.b16 %v8577
        %v10419 = vunpack.c.l.b16 %v8578
        %v10420 = vunpack.c.l.b16 %v8579
        %v10421 = vunpack.c.l.b16 %v8580
        %v10422 = vunpack.c.l.b16 %v8581
        %v10423 = vunpack.c.l.b16 %v8582
        %v10424 = vunpack.c.l.b16 %v8583
        %v10425 = vunpack.c.l.b16 %v8584
        %v10426 = vunpack.c.l.b16 %v8585
        %v10427 = vunpack.c.l.b16 %v8586
        %v10428 = vunpack.c.l.b16 %v8587
        %v10429 = vunpack.c.l.b16 %v8588
        %v10430 = vunpack.c.l.b16 %v8589
        %v10431 = vunpack.c.l.b16 %v8590
        %v10432 = vunpack.c.l.b16 %v8591
        %v10433 = vunpack.c.l.b16 %v8592
        %v10434 = vunpack.c.l.b16 %v8593
        %v10435 = vunpack.c.l.b16 %v8594
        %v10436 = vpack.c.b16 %v10405, %v10404
        %v10437 = vpack.c.b16 %v10407, %v10406
        %v10438 = vpack.c.b16 %v10409, %v10408
        %v10439 = vpack.c.b16 %v10411, %v10410
        %v10440 = vpack.c.b16 %v10413, %v10412
        %v10441 = vpack.c.b16 %v10415, %v10414
        %v10442 = vpack.c.b16 %v10417, %v10416
        %v10443 = vpack.c.b16 %v10419, %v10418
        %v10444 = vpack.c.b16 %v10421, %v10420
        %v10445 = vpack.c.b16 %v10423, %v10422
        %v10446 = vpack.c.b16 %v10425, %v10424
        %v10447 = vpack.c.b16 %v10427, %v10426
        %v10448 = vpack.c.b16 %v10429, %v10428
        %v10449 = vpack.c.b16 %v10431, %v10430
        %v10450 = vpack.c.b16 %v10433, %v10432
        %v10451 = vpack.c.b16 %v10435, %v10434
        %v10452 = vunpack.c.l.b16 %v8624
        %v10453 = vunpack.c.l.b16 %v8634
        %v10454 = vunpack.c.l.b16 %v8648
        %v10455 = vunpack.c.l.b16 %v8658
        %v10456 = vunpack.c.l.b16 %v8672
        %v10457 = vunpack.c.l.b16 %v8682
        %v10458 = vunpack.c.l.b16 %v8696
        %v10459 = vunpack.c.l.b16 %v8706
        %v10460 = vunpack.c.l.b16 %v8720
        %v10461 = vunpack.c.l.b16 %v8730
        %v10462 = vunpack.c.l.b16 %v8744
        %v10463 = vunpack.c.l.b16 %v8754
        %v10464 = vunpack.c.l.b16 %v8768
        %v10465 = vunpack.c.l.b16 %v8778
        %v10466 = vunpack.c.l.b16 %v8792
        %v10467 = vunpack.c.l.b16 %v8802
        %v10468 = vunpack.c.l.b16 %v8816
        %v10469 = vunpack.c.l.b16 %v8826
        %v10470 = vunpack.c.l.b16 %v8840
        %v10471 = vunpack.c.l.b16 %v8850
        %v10472 = vunpack.c.l.b16 %v8864
        %v10473 = vunpack.c.l.b16 %v8874
        %v10474 = vunpack.c.l.b16 %v8888
        %v10475 = vunpack.c.l.b16 %v8898
        %v10476 = vunpack.c.l.b16 %v8912
        %v10477 = vunpack.c.l.b16 %v8922
        %v10478 = vunpack.c.l.b16 %v8936
        %v10479 = vunpack.c.l.b16 %v8946
        %v10480 = vunpack.c.l.b16 %v8960
        %v10481 = vunpack.c.l.b16 %v8970
        %v10482 = vunpack.c.l.b16 %v8984
        %v10483 = vunpack.c.l.b16 %v8994
        %v10484 = vpack.c.b16 %v10453, %v10452
        %v10485 = vpack.c.b16 %v10455, %v10454
        %v10486 = vpack.c.b16 %v10457, %v10456
        %v10487 = vpack.c.b16 %v10459, %v10458
        %v10488 = vpack.c.b16 %v10461, %v10460
        %v10489 = vpack.c.b16 %v10463, %v10462
        %v10490 = vpack.c.b16 %v10465, %v10464
        %v10491 = vpack.c.b16 %v10467, %v10466
        %v10492 = vpack.c.b16 %v10469, %v10468
        %v10493 = vpack.c.b16 %v10471, %v10470
        %v10494 = vpack.c.b16 %v10473, %v10472
        %v10495 = vpack.c.b16 %v10475, %v10474
        %v10496 = vpack.c.b16 %v10477, %v10476
        %v10497 = vpack.c.b16 %v10479, %v10478
        %v10498 = vpack.c.b16 %v10481, %v10480
        %v10499 = vpack.c.b16 %v10483, %v10482
        %10500 = vrot.lane.b32.xlu0 %v10484, 16
        %v10501 = vpop.permute.xlu0 %10500
        %10502 = vrot.lane.b32.xlu0 %v10485, 16
        %v10503 = vpop.permute.xlu0 %10502
        %10504 = vrot.lane.b32.xlu0 %v10486, 16
        %v10505 = vpop.permute.xlu0 %10504
        %10506 = vrot.lane.b32.xlu0 %v10487, 16
        %v10507 = vpop.permute.xlu0 %10506
        %10508 = vrot.lane.b32.xlu0 %v10488, 16
        %v10509 = vpop.permute.xlu0 %10508
        %10510 = vrot.lane.b32.xlu0 %v10489, 16
        %v10511 = vpop.permute.xlu0 %10510
        %10512 = vrot.lane.b32.xlu0 %v10490, 16
        %v10513 = vpop.permute.xlu0 %10512
        %10514 = vrot.lane.b32.xlu0 %v10491, 16
        %v10515 = vpop.permute.xlu0 %10514
        %10516 = vrot.lane.b32.xlu0 %v10492, 16
        %v10517 = vpop.permute.xlu0 %10516
        %10518 = vrot.lane.b32.xlu0 %v10493, 16
        %v10519 = vpop.permute.xlu0 %10518
        %10520 = vrot.lane.b32.xlu0 %v10494, 16
        %v10521 = vpop.permute.xlu0 %10520
        %10522 = vrot.lane.b32.xlu0 %v10495, 16
        %v10523 = vpop.permute.xlu0 %10522
        %10524 = vrot.lane.b32.xlu0 %v10496, 16
        %v10525 = vpop.permute.xlu0 %10524
        %10526 = vrot.lane.b32.xlu0 %v10497, 16
        %v10527 = vpop.permute.xlu0 %10526
        %10528 = vrot.lane.b32.xlu0 %v10498, 16
        %v10529 = vpop.permute.xlu0 %10528
        %10530 = vrot.lane.b32.xlu0 %v10499, 16
        %v10531 = vpop.permute.xlu0 %10530
        %v10532 = vunpack.c.l.b16 %v9062
        %v10533 = vunpack.c.l.b16 %v9065
        %v10534 = vunpack.c.l.b16 %v9069
        %v10535 = vunpack.c.l.b16 %v9072
        %v10536 = vunpack.c.l.b16 %v9076
        %v10537 = vunpack.c.l.b16 %v9079
        %v10538 = vunpack.c.l.b16 %v9083
        %v10539 = vunpack.c.l.b16 %v9086
        %v10540 = vunpack.c.l.b16 %v9090
        %v10541 = vunpack.c.l.b16 %v9093
        %v10542 = vunpack.c.l.b16 %v9097
        %v10543 = vunpack.c.l.b16 %v9100
        %v10544 = vunpack.c.l.b16 %v9104
        %v10545 = vunpack.c.l.b16 %v9107
        %v10546 = vunpack.c.l.b16 %v9111
        %v10547 = vunpack.c.l.b16 %v9114
        %v10548 = vunpack.c.l.b16 %v9118
        %v10549 = vunpack.c.l.b16 %v9121
        %v10550 = vunpack.c.l.b16 %v9125
        %v10551 = vunpack.c.l.b16 %v9128
        %v10552 = vunpack.c.l.b16 %v9132
        %v10553 = vunpack.c.l.b16 %v9135
        %v10554 = vunpack.c.l.b16 %v9139
        %v10555 = vunpack.c.l.b16 %v9142
        %v10556 = vunpack.c.l.b16 %v9146
        %v10557 = vunpack.c.l.b16 %v9149
        %v10558 = vunpack.c.l.b16 %v9153
        %v10559 = vunpack.c.l.b16 %v9156
        %v10560 = vunpack.c.l.b16 %v9160
        %v10561 = vunpack.c.l.b16 %v9163
        %v10562 = vunpack.c.l.b16 %v9167
        %v10563 = vunpack.c.l.b16 %v9170
        %v10564 = vpack.c.b16 %v10533, %v10532
        %v10565 = vpack.c.b16 %v10535, %v10534
        %v10566 = vpack.c.b16 %v10537, %v10536
        %v10567 = vpack.c.b16 %v10539, %v10538
        %v10568 = vpack.c.b16 %v10541, %v10540
        %v10569 = vpack.c.b16 %v10543, %v10542
        %v10570 = vpack.c.b16 %v10545, %v10544
        %v10571 = vpack.c.b16 %v10547, %v10546
        %v10572 = vpack.c.b16 %v10549, %v10548
        %v10573 = vpack.c.b16 %v10551, %v10550
        %v10574 = vpack.c.b16 %v10553, %v10552
        %v10575 = vpack.c.b16 %v10555, %v10554
        %v10576 = vpack.c.b16 %v10557, %v10556
        %v10577 = vpack.c.b16 %v10559, %v10558
        %v10578 = vpack.c.b16 %v10561, %v10560
        %v10579 = vpack.c.b16 %v10563, %v10562
        %10580 = vrot.lane.b32.xlu0 %v10564, 32
        %v10581 = vpop.permute.xlu0 %10580
        %10582 = vrot.lane.b32.xlu0 %v10565, 32
        %v10583 = vpop.permute.xlu0 %10582
        %10584 = vrot.lane.b32.xlu0 %v10566, 32
        %v10585 = vpop.permute.xlu0 %10584
        %10586 = vrot.lane.b32.xlu0 %v10567, 32
        %v10587 = vpop.permute.xlu0 %10586
        %10588 = vrot.lane.b32.xlu0 %v10568, 32
        %v10589 = vpop.permute.xlu0 %10588
        %10590 = vrot.lane.b32.xlu0 %v10569, 32
        %v10591 = vpop.permute.xlu0 %10590
        %10592 = vrot.lane.b32.xlu0 %v10570, 32
        %v10593 = vpop.permute.xlu0 %10592
        %10594 = vrot.lane.b32.xlu0 %v10571, 32
        %v10595 = vpop.permute.xlu0 %10594
        %10596 = vrot.lane.b32.xlu0 %v10572, 32
        %v10597 = vpop.permute.xlu0 %10596
        %10598 = vrot.lane.b32.xlu0 %v10573, 32
        %v10599 = vpop.permute.xlu0 %10598
        %10600 = vrot.lane.b32.xlu0 %v10574, 32
        %v10601 = vpop.permute.xlu0 %10600
        %10602 = vrot.lane.b32.xlu0 %v10575, 32
        %v10603 = vpop.permute.xlu0 %10602
        %10604 = vrot.lane.b32.xlu0 %v10576, 32
        %v10605 = vpop.permute.xlu0 %10604
        %10606 = vrot.lane.b32.xlu0 %v10577, 32
        %v10607 = vpop.permute.xlu0 %10606
        %10608 = vrot.lane.b32.xlu0 %v10578, 32
        %v10609 = vpop.permute.xlu0 %10608
        %10610 = vrot.lane.b32.xlu0 %v10579, 32
        %v10611 = vpop.permute.xlu0 %10610
        %v10628 = vunpack.c.l.b16 %v9171
        %v10629 = vunpack.c.l.b16 %v9172
        %v10630 = vunpack.c.l.b16 %v9173
        %v10631 = vunpack.c.l.b16 %v9174
        %v10632 = vunpack.c.l.b16 %v9175
        %v10633 = vunpack.c.l.b16 %v9176
        %v10634 = vunpack.c.l.b16 %v9177
        %v10635 = vunpack.c.l.b16 %v9178
        %v10636 = vunpack.c.l.b16 %v9179
        %v10637 = vunpack.c.l.b16 %v9180
        %v10638 = vunpack.c.l.b16 %v9181
        %v10639 = vunpack.c.l.b16 %v9182
        %v10640 = vunpack.c.l.b16 %v9183
        %v10641 = vunpack.c.l.b16 %v9184
        %v10642 = vunpack.c.l.b16 %v9185
        %v10643 = vunpack.c.l.b16 %v9186
        %v10644 = vunpack.c.l.b16 %v9187
        %v10645 = vunpack.c.l.b16 %v9188
        %v10646 = vunpack.c.l.b16 %v9189
        %v10647 = vunpack.c.l.b16 %v9190
        %v10648 = vunpack.c.l.b16 %v9191
        %v10649 = vunpack.c.l.b16 %v9192
        %v10650 = vunpack.c.l.b16 %v9193
        %v10651 = vunpack.c.l.b16 %v9194
        %v10652 = vunpack.c.l.b16 %v9195
        %v10653 = vunpack.c.l.b16 %v9196
        %v10654 = vunpack.c.l.b16 %v9197
        %v10655 = vunpack.c.l.b16 %v9198
        %v10656 = vunpack.c.l.b16 %v9199
        %v10657 = vunpack.c.l.b16 %v9200
        %v10658 = vunpack.c.l.b16 %v9201
        %v10659 = vunpack.c.l.b16 %v9202
        %v10660 = vpack.c.b16 %v10629, %v10628
        %v10661 = vpack.c.b16 %v10631, %v10630
        %v10662 = vpack.c.b16 %v10633, %v10632
        %v10663 = vpack.c.b16 %v10635, %v10634
        %v10664 = vpack.c.b16 %v10637, %v10636
        %v10665 = vpack.c.b16 %v10639, %v10638
        %v10666 = vpack.c.b16 %v10641, %v10640
        %v10667 = vpack.c.b16 %v10643, %v10642
        %v10668 = vpack.c.b16 %v10645, %v10644
        %v10669 = vpack.c.b16 %v10647, %v10646
        %v10670 = vpack.c.b16 %v10649, %v10648
        %v10671 = vpack.c.b16 %v10651, %v10650
        %v10672 = vpack.c.b16 %v10653, %v10652
        %v10673 = vpack.c.b16 %v10655, %v10654
        %v10674 = vpack.c.b16 %v10657, %v10656
        %v10675 = vpack.c.b16 %v10659, %v10658
        %10676 = vrot.lane.b32.xlu0 %v10660, 48
        %v10677 = vpop.permute.xlu0 %10676
        %10678 = vrot.lane.b32.xlu0 %v10661, 48
        %v10679 = vpop.permute.xlu0 %10678
        %10680 = vrot.lane.b32.xlu0 %v10662, 48
        %v10681 = vpop.permute.xlu0 %10680
        %10682 = vrot.lane.b32.xlu0 %v10663, 48
        %v10683 = vpop.permute.xlu0 %10682
        %10684 = vrot.lane.b32.xlu0 %v10664, 48
        %v10685 = vpop.permute.xlu0 %10684
        %10686 = vrot.lane.b32.xlu0 %v10665, 48
        %v10687 = vpop.permute.xlu0 %10686
        %10688 = vrot.lane.b32.xlu0 %v10666, 48
        %v10689 = vpop.permute.xlu0 %10688
        %10690 = vrot.lane.b32.xlu0 %v10667, 48
        %v10691 = vpop.permute.xlu0 %10690
        %10692 = vrot.lane.b32.xlu0 %v10668, 48
        %v10693 = vpop.permute.xlu0 %10692
        %10694 = vrot.lane.b32.xlu0 %v10669, 48
        %v10695 = vpop.permute.xlu0 %10694
        %10696 = vrot.lane.b32.xlu0 %v10670, 48
        %v10697 = vpop.permute.xlu0 %10696
        %10698 = vrot.lane.b32.xlu0 %v10671, 48
        %v10699 = vpop.permute.xlu0 %10698
        %10700 = vrot.lane.b32.xlu0 %v10672, 48
        %v10701 = vpop.permute.xlu0 %10700
        %10702 = vrot.lane.b32.xlu0 %v10673, 48
        %v10703 = vpop.permute.xlu0 %10702
        %10704 = vrot.lane.b32.xlu0 %v10674, 48
        %v10705 = vpop.permute.xlu0 %10704
        %10706 = vrot.lane.b32.xlu0 %v10675, 48
        %v10707 = vpop.permute.xlu0 %10706
        %v10708 = vunpack.c.l.b16 %v9232
        %v10709 = vunpack.c.l.b16 %v9242
        %v10710 = vunpack.c.l.b16 %v9256
        %v10711 = vunpack.c.l.b16 %v9266
        %v10712 = vunpack.c.l.b16 %v9280
        %v10713 = vunpack.c.l.b16 %v9290
        %v10714 = vunpack.c.l.b16 %v9304
        %v10715 = vunpack.c.l.b16 %v9314
        %v10716 = vunpack.c.l.b16 %v9328
        %v10717 = vunpack.c.l.b16 %v9338
        %v10718 = vunpack.c.l.b16 %v9352
        %v10719 = vunpack.c.l.b16 %v9362
        %v10720 = vunpack.c.l.b16 %v9376
        %v10721 = vunpack.c.l.b16 %v9386
        %v10722 = vunpack.c.l.b16 %v9400
        %v10723 = vunpack.c.l.b16 %v9410
        %v10724 = vunpack.c.l.b16 %v9424
        %v10725 = vunpack.c.l.b16 %v9434
        %v10726 = vunpack.c.l.b16 %v9448
        %v10727 = vunpack.c.l.b16 %v9458
        %v10728 = vunpack.c.l.b16 %v9472
        %v10729 = vunpack.c.l.b16 %v9482
        %v10730 = vunpack.c.l.b16 %v9496
        %v10731 = vunpack.c.l.b16 %v9506
        %v10732 = vunpack.c.l.b16 %v9520
        %v10733 = vunpack.c.l.b16 %v9530
        %v10734 = vunpack.c.l.b16 %v9544
        %v10735 = vunpack.c.l.b16 %v9554
        %v10736 = vunpack.c.l.b16 %v9568
        %v10737 = vunpack.c.l.b16 %v9578
        %v10738 = vunpack.c.l.b16 %v9592
        %v10739 = vunpack.c.l.b16 %v9602
        %v10740 = vpack.c.b16 %v10709, %v10708
        %v10741 = vpack.c.b16 %v10711, %v10710
        %v10742 = vpack.c.b16 %v10713, %v10712
        %v10743 = vpack.c.b16 %v10715, %v10714
        %v10744 = vpack.c.b16 %v10717, %v10716
        %v10745 = vpack.c.b16 %v10719, %v10718
        %v10746 = vpack.c.b16 %v10721, %v10720
        %v10747 = vpack.c.b16 %v10723, %v10722
        %v10748 = vpack.c.b16 %v10725, %v10724
        %v10749 = vpack.c.b16 %v10727, %v10726
        %v10750 = vpack.c.b16 %v10729, %v10728
        %v10751 = vpack.c.b16 %v10731, %v10730
        %v10752 = vpack.c.b16 %v10733, %v10732
        %v10753 = vpack.c.b16 %v10735, %v10734
        %v10754 = vpack.c.b16 %v10737, %v10736
        %v10755 = vpack.c.b16 %v10739, %v10738
        %10756 = vrot.lane.b32.xlu0 %v10740, 64
        %v10757 = vpop.permute.xlu0 %10756
        %10758 = vrot.lane.b32.xlu0 %v10741, 64
        %v10759 = vpop.permute.xlu0 %10758
        %10760 = vrot.lane.b32.xlu0 %v10742, 64
        %v10761 = vpop.permute.xlu0 %10760
        %10762 = vrot.lane.b32.xlu0 %v10743, 64
        %v10763 = vpop.permute.xlu0 %10762
        %10764 = vrot.lane.b32.xlu0 %v10744, 64
        %v10765 = vpop.permute.xlu0 %10764
        %10766 = vrot.lane.b32.xlu0 %v10745, 64
        %v10767 = vpop.permute.xlu0 %10766
        %10768 = vrot.lane.b32.xlu0 %v10746, 64
        %v10769 = vpop.permute.xlu0 %10768
        %10770 = vrot.lane.b32.xlu0 %v10747, 64
        %v10771 = vpop.permute.xlu0 %10770
        %10772 = vrot.lane.b32.xlu0 %v10748, 64
        %v10773 = vpop.permute.xlu0 %10772
        %10774 = vrot.lane.b32.xlu0 %v10749, 64
        %v10775 = vpop.permute.xlu0 %10774
        %10776 = vrot.lane.b32.xlu0 %v10750, 64
        %v10777 = vpop.permute.xlu0 %10776
        %10778 = vrot.lane.b32.xlu0 %v10751, 64
        %v10779 = vpop.permute.xlu0 %10778
        %10780 = vrot.lane.b32.xlu0 %v10752, 64
        %v10781 = vpop.permute.xlu0 %10780
        %10782 = vrot.lane.b32.xlu0 %v10753, 64
        %v10783 = vpop.permute.xlu0 %10782
        %10784 = vrot.lane.b32.xlu0 %v10754, 64
        %v10785 = vpop.permute.xlu0 %10784
        %10786 = vrot.lane.b32.xlu0 %v10755, 64
        %v10787 = vpop.permute.xlu0 %10786
        %v10788 = vunpack.c.l.b16 %v9670
        %v10789 = vunpack.c.l.b16 %v9673
        %v10790 = vunpack.c.l.b16 %v9677
        %v10791 = vunpack.c.l.b16 %v9680
        %v10792 = vunpack.c.l.b16 %v9684
        %v10793 = vunpack.c.l.b16 %v9687
        %v10794 = vunpack.c.l.b16 %v9691
        %v10795 = vunpack.c.l.b16 %v9694
        %v10796 = vunpack.c.l.b16 %v9698
        %v10797 = vunpack.c.l.b16 %v9701
        %v10798 = vunpack.c.l.b16 %v9705
        %v10799 = vunpack.c.l.b16 %v9708
        %v10800 = vunpack.c.l.b16 %v9712
        %v10801 = vunpack.c.l.b16 %v9715
        %v10802 = vunpack.c.l.b16 %v9719
        %v10803 = vunpack.c.l.b16 %v9722
        %v10804 = vunpack.c.l.b16 %v9726
        %v10805 = vunpack.c.l.b16 %v9729
        %v10806 = vunpack.c.l.b16 %v9733
        %v10807 = vunpack.c.l.b16 %v9736
        %v10808 = vunpack.c.l.b16 %v9740
        %v10809 = vunpack.c.l.b16 %v9743
        %v10810 = vunpack.c.l.b16 %v9747
        %v10811 = vunpack.c.l.b16 %v9750
        %v10812 = vunpack.c.l.b16 %v9754
        %v10813 = vunpack.c.l.b16 %v9757
        %v10814 = vunpack.c.l.b16 %v9761
        %v10815 = vunpack.c.l.b16 %v9764
        %v10816 = vunpack.c.l.b16 %v9768
        %v10817 = vunpack.c.l.b16 %v9771
        %v10818 = vunpack.c.l.b16 %v9775
        %v10819 = vunpack.c.l.b16 %v9778
        %v10820 = vpack.c.b16 %v10789, %v10788
        %v10821 = vpack.c.b16 %v10791, %v10790
        %v10822 = vpack.c.b16 %v10793, %v10792
        %v10823 = vpack.c.b16 %v10795, %v10794
        %v10824 = vpack.c.b16 %v10797, %v10796
        %v10825 = vpack.c.b16 %v10799, %v10798
        %v10826 = vpack.c.b16 %v10801, %v10800
        %v10827 = vpack.c.b16 %v10803, %v10802
        %v10828 = vpack.c.b16 %v10805, %v10804
        %v10829 = vpack.c.b16 %v10807, %v10806
        %v10830 = vpack.c.b16 %v10809, %v10808
        %v10831 = vpack.c.b16 %v10811, %v10810
        %v10832 = vpack.c.b16 %v10813, %v10812
        %v10833 = vpack.c.b16 %v10815, %v10814
        %v10834 = vpack.c.b16 %v10817, %v10816
        %v10835 = vpack.c.b16 %v10819, %v10818
        %10836 = vrot.lane.b32.xlu0 %v10820, 80
        %v10837 = vpop.permute.xlu0 %10836
        %10838 = vrot.lane.b32.xlu0 %v10821, 80
        %v10839 = vpop.permute.xlu0 %10838
        %10840 = vrot.lane.b32.xlu0 %v10822, 80
        %v10841 = vpop.permute.xlu0 %10840
        %10842 = vrot.lane.b32.xlu0 %v10823, 80
        %v10843 = vpop.permute.xlu0 %10842
        %10844 = vrot.lane.b32.xlu0 %v10824, 80
        %v10845 = vpop.permute.xlu0 %10844
        %10846 = vrot.lane.b32.xlu0 %v10825, 80
        %v10847 = vpop.permute.xlu0 %10846
        %10848 = vrot.lane.b32.xlu0 %v10826, 80
        %v10849 = vpop.permute.xlu0 %10848
        %10850 = vrot.lane.b32.xlu0 %v10827, 80
        %v10851 = vpop.permute.xlu0 %10850
        %10852 = vrot.lane.b32.xlu0 %v10828, 80
        %v10853 = vpop.permute.xlu0 %10852
        %10854 = vrot.lane.b32.xlu0 %v10829, 80
        %v10855 = vpop.permute.xlu0 %10854
        %10856 = vrot.lane.b32.xlu0 %v10830, 80
        %v10857 = vpop.permute.xlu0 %10856
        %10858 = vrot.lane.b32.xlu0 %v10831, 80
        %v10859 = vpop.permute.xlu0 %10858
        %10860 = vrot.lane.b32.xlu0 %v10832, 80
        %v10861 = vpop.permute.xlu0 %10860
        %10862 = vrot.lane.b32.xlu0 %v10833, 80
        %v10863 = vpop.permute.xlu0 %10862
        %10864 = vrot.lane.b32.xlu0 %v10834, 80
        %v10865 = vpop.permute.xlu0 %10864
        %10866 = vrot.lane.b32.xlu0 %v10835, 80
        %v10867 = vpop.permute.xlu0 %10866
        %v10884 = vunpack.c.l.b16 %v9780
        %v10885 = vunpack.c.l.b16 %v9781
        %v10886 = vunpack.c.l.b16 %v9782
        %v10887 = vunpack.c.l.b16 %v9783
        %v10888 = vunpack.c.l.b16 %v9784
        %v10889 = vunpack.c.l.b16 %v9785
        %v10890 = vunpack.c.l.b16 %v9786
        %v10891 = vunpack.c.l.b16 %v9787
        %v10892 = vunpack.c.l.b16 %v9788
        %v10893 = vunpack.c.l.b16 %v9789
        %v10894 = vunpack.c.l.b16 %v9790
        %v10895 = vunpack.c.l.b16 %v9791
        %v10896 = vunpack.c.l.b16 %v9792
        %v10897 = vunpack.c.l.b16 %v9793
        %v10898 = vunpack.c.l.b16 %v9794
        %v10899 = vunpack.c.l.b16 %v9795
        %v10900 = vunpack.c.l.b16 %v9796
        %v10901 = vunpack.c.l.b16 %v9797
        %v10902 = vunpack.c.l.b16 %v9798
        %v10903 = vunpack.c.l.b16 %v9799
        %v10904 = vunpack.c.l.b16 %v9800
        %v10905 = vunpack.c.l.b16 %v9801
        %v10906 = vunpack.c.l.b16 %v9802
        %v10907 = vunpack.c.l.b16 %v9803
        %v10908 = vunpack.c.l.b16 %v9804
        %v10909 = vunpack.c.l.b16 %v9805
        %v10910 = vunpack.c.l.b16 %v9806
        %v10911 = vunpack.c.l.b16 %v9807
        %v10912 = vunpack.c.l.b16 %v9808
        %v10913 = vunpack.c.l.b16 %v9809
        %v10914 = vunpack.c.l.b16 %v9810
        %v10915 = vunpack.c.l.b16 %v9811
        %v10916 = vpack.c.b16 %v10885, %v10884
        %v10917 = vpack.c.b16 %v10887, %v10886
        %v10918 = vpack.c.b16 %v10889, %v10888
        %v10919 = vpack.c.b16 %v10891, %v10890
        %v10920 = vpack.c.b16 %v10893, %v10892
        %v10921 = vpack.c.b16 %v10895, %v10894
        %v10922 = vpack.c.b16 %v10897, %v10896
        %v10923 = vpack.c.b16 %v10899, %v10898
        %v10924 = vpack.c.b16 %v10901, %v10900
        %v10925 = vpack.c.b16 %v10903, %v10902
        %v10926 = vpack.c.b16 %v10905, %v10904
        %v10927 = vpack.c.b16 %v10907, %v10906
        %v10928 = vpack.c.b16 %v10909, %v10908
        %v10929 = vpack.c.b16 %v10911, %v10910
        %v10930 = vpack.c.b16 %v10913, %v10912
        %v10931 = vpack.c.b16 %v10915, %v10914
        %10932 = vrot.lane.b32.xlu0 %v10916, 96
        %v10933 = vpop.permute.xlu0 %10932
        %10934 = vrot.lane.b32.xlu0 %v10917, 96
        %v10935 = vpop.permute.xlu0 %10934
        %10936 = vrot.lane.b32.xlu0 %v10918, 96
        %v10937 = vpop.permute.xlu0 %10936
        %10938 = vrot.lane.b32.xlu0 %v10919, 96
        %v10939 = vpop.permute.xlu0 %10938
        %10940 = vrot.lane.b32.xlu0 %v10920, 96
        %v10941 = vpop.permute.xlu0 %10940
        %10942 = vrot.lane.b32.xlu0 %v10921, 96
        %v10943 = vpop.permute.xlu0 %10942
        %10944 = vrot.lane.b32.xlu0 %v10922, 96
        %v10945 = vpop.permute.xlu0 %10944
        %10946 = vrot.lane.b32.xlu0 %v10923, 96
        %v10947 = vpop.permute.xlu0 %10946
        %10948 = vrot.lane.b32.xlu0 %v10924, 96
        %v10949 = vpop.permute.xlu0 %10948
        %10950 = vrot.lane.b32.xlu0 %v10925, 96
        %v10951 = vpop.permute.xlu0 %10950
        %10952 = vrot.lane.b32.xlu0 %v10926, 96
        %v10953 = vpop.permute.xlu0 %10952
        %10954 = vrot.lane.b32.xlu0 %v10927, 96
        %v10955 = vpop.permute.xlu0 %10954
        %10956 = vrot.lane.b32.xlu0 %v10928, 96
        %v10957 = vpop.permute.xlu0 %10956
        %10958 = vrot.lane.b32.xlu0 %v10929, 96
        %v10959 = vpop.permute.xlu0 %10958
        %10960 = vrot.lane.b32.xlu0 %v10930, 96
        %v10961 = vpop.permute.xlu0 %10960
        %10962 = vrot.lane.b32.xlu0 %v10931, 96
        %v10963 = vpop.permute.xlu0 %10962
        %v10964 = vunpack.c.l.b16 %v9841
        %v10965 = vunpack.c.l.b16 %v9851
        %v10966 = vunpack.c.l.b16 %v9865
        %v10967 = vunpack.c.l.b16 %v9875
        %v10968 = vunpack.c.l.b16 %v9889
        %v10969 = vunpack.c.l.b16 %v9899
        %v10970 = vunpack.c.l.b16 %v9913
        %v10971 = vunpack.c.l.b16 %v9923
        %v10972 = vunpack.c.l.b16 %v9937
        %v10973 = vunpack.c.l.b16 %v9947
        %v10974 = vunpack.c.l.b16 %v9961
        %v10975 = vunpack.c.l.b16 %v9971
        %v10976 = vunpack.c.l.b16 %v9985
        %v10977 = vunpack.c.l.b16 %v9995
        %v10978 = vunpack.c.l.b16 %v10009
        %v10979 = vunpack.c.l.b16 %v10019
        %v10980 = vunpack.c.l.b16 %v10033
        %v10981 = vunpack.c.l.b16 %v10043
        %v10982 = vunpack.c.l.b16 %v10057
        %v10983 = vunpack.c.l.b16 %v10067
        %v10984 = vunpack.c.l.b16 %v10081
        %v10985 = vunpack.c.l.b16 %v10091
        %v10986 = vunpack.c.l.b16 %v10105
        %v10987 = vunpack.c.l.b16 %v10115
        %v10988 = vunpack.c.l.b16 %v10129
        %v10989 = vunpack.c.l.b16 %v10139
        %v10990 = vunpack.c.l.b16 %v10153
        %v10991 = vunpack.c.l.b16 %v10163
        %v10992 = vunpack.c.l.b16 %v10177
        %v10993 = vunpack.c.l.b16 %v10187
        %v10994 = vunpack.c.l.b16 %v10201
        %v10995 = vunpack.c.l.b16 %v10211
        %v10996 = vpack.c.b16 %v10965, %v10964
        %v10997 = vpack.c.b16 %v10967, %v10966
        %v10998 = vpack.c.b16 %v10969, %v10968
        %v10999 = vpack.c.b16 %v10971, %v10970
        %v11000 = vpack.c.b16 %v10973, %v10972
        %v11001 = vpack.c.b16 %v10975, %v10974
        %v11002 = vpack.c.b16 %v10977, %v10976
        %v11003 = vpack.c.b16 %v10979, %v10978
        %v11004 = vpack.c.b16 %v10981, %v10980
        %v11005 = vpack.c.b16 %v10983, %v10982
        %v11006 = vpack.c.b16 %v10985, %v10984
        %v11007 = vpack.c.b16 %v10987, %v10986
        %v11008 = vpack.c.b16 %v10989, %v10988
        %v11009 = vpack.c.b16 %v10991, %v10990
        %v11010 = vpack.c.b16 %v10993, %v10992
        %v11011 = vpack.c.b16 %v10995, %v10994
        %11012 = vrot.lane.b32.xlu0 %v10996, 112
        %v11013 = vpop.permute.xlu0 %11012
        %11014 = vrot.lane.b32.xlu0 %v10997, 112
        %v11015 = vpop.permute.xlu0 %11014
        %11016 = vrot.lane.b32.xlu0 %v10998, 112
        %v11017 = vpop.permute.xlu0 %11016
        %11018 = vrot.lane.b32.xlu0 %v10999, 112
        %v11019 = vpop.permute.xlu0 %11018
        %11020 = vrot.lane.b32.xlu0 %v11000, 112
        %v11021 = vpop.permute.xlu0 %11020
        %11022 = vrot.lane.b32.xlu0 %v11001, 112
        %v11023 = vpop.permute.xlu0 %11022
        %11024 = vrot.lane.b32.xlu0 %v11002, 112
        %v11025 = vpop.permute.xlu0 %11024
        %11026 = vrot.lane.b32.xlu0 %v11003, 112
        %v11027 = vpop.permute.xlu0 %11026
        %11028 = vrot.lane.b32.xlu0 %v11004, 112
        %v11029 = vpop.permute.xlu0 %11028
        %11030 = vrot.lane.b32.xlu0 %v11005, 112
        %v11031 = vpop.permute.xlu0 %11030
        %11032 = vrot.lane.b32.xlu0 %v11006, 112
        %v11033 = vpop.permute.xlu0 %11032
        %11034 = vrot.lane.b32.xlu0 %v11007, 112
        %v11035 = vpop.permute.xlu0 %11034
        %11036 = vrot.lane.b32.xlu0 %v11008, 112
        %v11037 = vpop.permute.xlu0 %11036
        %11038 = vrot.lane.b32.xlu0 %v11009, 112
        %v11039 = vpop.permute.xlu0 %11038
        %11040 = vrot.lane.b32.xlu0 %v11010, 112
        %v11041 = vpop.permute.xlu0 %11040
        %11042 = vrot.lane.b32.xlu0 %v11011, 112
        %v11043 = vpop.permute.xlu0 %11042
        %v11044 = vunpack.c.l.b16 %v10279
        %v11045 = vunpack.c.l.b16 %v10282
        %v11046 = vunpack.c.l.b16 %v10286
        %v11047 = vunpack.c.l.b16 %v10289
        %v11048 = vunpack.c.l.b16 %v10293
        %v11049 = vunpack.c.l.b16 %v10296
        %v11050 = vunpack.c.l.b16 %v10300
        %v11051 = vunpack.c.l.b16 %v10303
        %v11052 = vunpack.c.l.b16 %v10307
        %v11053 = vunpack.c.l.b16 %v10310
        %v11054 = vunpack.c.l.b16 %v10314
        %v11055 = vunpack.c.l.b16 %v10317
        %v11056 = vunpack.c.l.b16 %v10321
        %v11057 = vunpack.c.l.b16 %v10324
        %v11058 = vunpack.c.l.b16 %v10328
        %v11059 = vunpack.c.l.b16 %v10331
        %v11060 = vunpack.c.l.b16 %v10335
        %v11061 = vunpack.c.l.b16 %v10338
        %v11062 = vunpack.c.l.b16 %v10342
        %v11063 = vunpack.c.l.b16 %v10345
        %v11064 = vunpack.c.l.b16 %v10349
        %v11065 = vunpack.c.l.b16 %v10352
        %v11066 = vunpack.c.l.b16 %v10356
        %v11067 = vunpack.c.l.b16 %v10359
        %v11068 = vunpack.c.l.b16 %v10363
        %v11069 = vunpack.c.l.b16 %v10366
        %v11070 = vunpack.c.l.b16 %v10370
        %v11071 = vunpack.c.l.b16 %v10373
        %v11072 = vunpack.c.l.b16 %v10377
        %v11073 = vunpack.c.l.b16 %v10380
        %v11074 = vunpack.c.l.b16 %v10384
        %v11075 = vunpack.c.l.b16 %v10387
        %v11076 = vpack.c.b16 %v11045, %v11044
        %v11077 = vpack.c.b16 %v11047, %v11046
        %v11078 = vpack.c.b16 %v11049, %v11048
        %v11079 = vpack.c.b16 %v11051, %v11050
        %v11080 = vpack.c.b16 %v11053, %v11052
        %v11081 = vpack.c.b16 %v11055, %v11054
        %v11082 = vpack.c.b16 %v11057, %v11056
        %v11083 = vpack.c.b16 %v11059, %v11058
        %v11084 = vpack.c.b16 %v11061, %v11060
        %v11085 = vpack.c.b16 %v11063, %v11062
        %v11086 = vpack.c.b16 %v11065, %v11064
        %v11087 = vpack.c.b16 %v11067, %v11066
        %v11088 = vpack.c.b16 %v11069, %v11068
        %v11089 = vpack.c.b16 %v11071, %v11070
        %v11090 = vpack.c.b16 %v11073, %v11072
        %v11091 = vpack.c.b16 %v11075, %v11074
        %v11094 = vsel %vm7292, %v10436, %v10501
        %v11097 = vsel %vm7292, %v10437, %v10503
        %v11100 = vsel %vm7292, %v10438, %v10505
        %v11103 = vsel %vm7292, %v10439, %v10507
        %v11106 = vsel %vm7292, %v10440, %v10509
        %v11109 = vsel %vm7292, %v10441, %v10511
        %v11112 = vsel %vm7292, %v10442, %v10513
        %v11115 = vsel %vm7292, %v10443, %v10515
        %v11118 = vsel %vm7292, %v10444, %v10517
        %v11121 = vsel %vm7292, %v10445, %v10519
        %v11124 = vsel %vm7292, %v10446, %v10521
        %v11127 = vsel %vm7292, %v10447, %v10523
        %v11130 = vsel %vm7292, %v10448, %v10525
        %v11133 = vsel %vm7292, %v10449, %v10527
        %v11136 = vsel %vm7292, %v10450, %v10529
        %v11139 = vsel %vm7292, %v10451, %v10531
        %v11141 = vsel %vm7341, %v11094, %v10581
        %v11143 = vsel %vm7341, %v11097, %v10583
        %v11145 = vsel %vm7341, %v11100, %v10585
        %v11147 = vsel %vm7341, %v11103, %v10587
        %v11149 = vsel %vm7341, %v11106, %v10589
        %v11151 = vsel %vm7341, %v11109, %v10591
        %v11153 = vsel %vm7341, %v11112, %v10593
        %v11155 = vsel %vm7341, %v11115, %v10595
        %v11157 = vsel %vm7341, %v11118, %v10597
        %v11159 = vsel %vm7341, %v11121, %v10599
        %v11161 = vsel %vm7341, %v11124, %v10601
        %v11163 = vsel %vm7341, %v11127, %v10603
        %v11165 = vsel %vm7341, %v11130, %v10605
        %v11167 = vsel %vm7341, %v11133, %v10607
        %v11169 = vsel %vm7341, %v11136, %v10609
        %v11171 = vsel %vm7341, %v11139, %v10611
        %v11173 = vsel %vm7374, %v11141, %v10677
        %v11175 = vsel %vm7374, %v11143, %v10679
        %v11177 = vsel %vm7374, %v11145, %v10681
        %v11179 = vsel %vm7374, %v11147, %v10683
        %v11181 = vsel %vm7374, %v11149, %v10685
        %v11183 = vsel %vm7374, %v11151, %v10687
        %v11185 = vsel %vm7374, %v11153, %v10689
        %v11187 = vsel %vm7374, %v11155, %v10691
        %v11189 = vsel %vm7374, %v11157, %v10693
        %v11191 = vsel %vm7374, %v11159, %v10695
        %v11193 = vsel %vm7374, %v11161, %v10697
        %v11195 = vsel %vm7374, %v11163, %v10699
        %v11197 = vsel %vm7374, %v11165, %v10701
        %v11199 = vsel %vm7374, %v11167, %v10703
        %v11201 = vsel %vm7374, %v11169, %v10705
        %v11203 = vsel %vm7374, %v11171, %v10707
        %v11205 = vsel %vm2955, %v11173, %v10757
        %v11207 = vsel %vm2955, %v11175, %v10759
        %v11209 = vsel %vm2955, %v11177, %v10761
        %v11211 = vsel %vm2955, %v11179, %v10763
        %v11213 = vsel %vm2955, %v11181, %v10765
        %v11215 = vsel %vm2955, %v11183, %v10767
        %v11217 = vsel %vm2955, %v11185, %v10769
        %v11219 = vsel %vm2955, %v11187, %v10771
        %v11221 = vsel %vm2955, %v11189, %v10773
        %v11223 = vsel %vm2955, %v11191, %v10775
        %v11225 = vsel %vm2955, %v11193, %v10777
        %v11227 = vsel %vm2955, %v11195, %v10779
        %v11229 = vsel %vm2955, %v11197, %v10781
        %v11231 = vsel %vm2955, %v11199, %v10783
        %v11233 = vsel %vm2955, %v11201, %v10785
        %v11235 = vsel %vm2955, %v11203, %v10787
        %v11237 = vsel %vm7439, %v11205, %v10837
        %v11239 = vsel %vm7439, %v11207, %v10839
        %v11241 = vsel %vm7439, %v11209, %v10841
        %v11243 = vsel %vm7439, %v11211, %v10843
        %v11245 = vsel %vm7439, %v11213, %v10845
        %v11247 = vsel %vm7439, %v11215, %v10847
        %v11249 = vsel %vm7439, %v11217, %v10849
        %v11251 = vsel %vm7439, %v11219, %v10851
        %v11253 = vsel %vm7439, %v11221, %v10853
        %v11255 = vsel %vm7439, %v11223, %v10855
        %v11257 = vsel %vm7439, %v11225, %v10857
        %v11259 = vsel %vm7439, %v11227, %v10859
        %v11261 = vsel %vm7439, %v11229, %v10861
        %v11263 = vsel %vm7439, %v11231, %v10863
        %v11265 = vsel %vm7439, %v11233, %v10865
        %v11267 = vsel %vm7439, %v11235, %v10867
        %v11269 = vsel %vm7472, %v11237, %v10933
        %v11271 = vsel %vm7472, %v11239, %v10935
        %v11273 = vsel %vm7472, %v11241, %v10937
        %v11275 = vsel %vm7472, %v11243, %v10939
        %v11277 = vsel %vm7472, %v11245, %v10941
        %v11279 = vsel %vm7472, %v11247, %v10943
        %v11281 = vsel %vm7472, %v11249, %v10945
        %v11283 = vsel %vm7472, %v11251, %v10947
        %v11285 = vsel %vm7472, %v11253, %v10949
        %v11287 = vsel %vm7472, %v11255, %v10951
        %v11289 = vsel %vm7472, %v11257, %v10953
        %v11291 = vsel %vm7472, %v11259, %v10955
        %v11293 = vsel %vm7472, %v11261, %v10957
        %v11295 = vsel %vm7472, %v11263, %v10959
        %v11297 = vsel %vm7472, %v11265, %v10961
        %v11299 = vsel %vm7472, %v11267, %v10963
        %v11301 = vsel %vm7505, %v11269, %v11013
        %v11304 = vsel %vm7505, %v11271, %v11015
        %v11307 = vsel %vm7505, %v11273, %v11017
        %v11310 = vsel %vm7505, %v11275, %v11019
        %v11313 = vsel %vm7505, %v11277, %v11021
        %v11316 = vsel %vm7505, %v11279, %v11023
        %v11319 = vsel %vm7505, %v11281, %v11025
        %v11322 = vsel %vm7505, %v11283, %v11027
        %v11325 = vsel %vm7505, %v11285, %v11029
        %v11328 = vsel %vm7505, %v11287, %v11031
        %v11331 = vsel %vm7505, %v11289, %v11033
        %v11334 = vsel %vm7505, %v11291, %v11035
        %v11337 = vsel %vm7505, %v11293, %v11037
        %v11340 = vsel %vm7505, %v11295, %v11039
        %v11343 = vsel %vm7505, %v11297, %v11041
        %v11346 = vsel %vm7505, %v11299, %v11043
        %v11348 = vld [vmem:[%s5] sm:$0xf]
        %v11349 = vld [vmem:[%s5 + $0x4] sm:$0xf]
        %v11350 = vld [vmem:[%s5 + $0x8] sm:$0xf]
        %v11351 = vld [vmem:[%s5 + $0xc] sm:$0xf]
        %v11352 = vld [vmem:[%s5 + $0x10] sm:$0xf]
        %v11353 = vld [vmem:[%s5 + $0x14] sm:$0xf]
        %v11354 = vld [vmem:[%s5 + $0x18] sm:$0xf]
        %v11355 = vld [vmem:[%s5 + $0x1c] sm:$0xf]
        %v11356 = vld [vmem:[%s5 + $0x20] sm:$0xf]
        %v11357 = vld [vmem:[%s5 + $0x24] sm:$0xf]
        %v11358 = vld [vmem:[%s5 + $0x28] sm:$0xf]
        %v11359 = vld [vmem:[%s5 + $0x2c] sm:$0xf]
        %v11360 = vld [vmem:[%s5 + $0x30] sm:$0xf]
        %v11361 = vld [vmem:[%s5 + $0x34] sm:$0xf]
        %v11362 = vld [vmem:[%s5 + $0x38] sm:$0xf]
        %v11363 = vld [vmem:[%s5 + $0x3c] sm:$0xf]
        %v11364 = vld [vmem:[%s5 + $0x40] sm:$0xf]
        %v11365 = vld [vmem:[%s5 + $0x44] sm:$0xf]
        %v11366 = vld [vmem:[%s6] sm:$0x1]
        %v11368 = vlaneseq
        %v11369 = vshrl.u32 %v11368, 7
        %v11370 = vsub.s32 0, %v11369
        %v11371 = vrot.slane %v11366, %v11370
        %v11391 = vunpack.c.l.b16 %v11348
        %v11392 = vunpack.c.l.b16 %v11349
        %v11393 = vunpack.c.l.b16 %v11350
        %v11394 = vunpack.c.l.b16 %v11351
        %v11395 = vunpack.c.l.b16 %v11352
        %v11396 = vunpack.c.l.b16 %v11353
        %v11397 = vunpack.c.l.b16 %v11354
        %v11398 = vunpack.c.l.b16 %v11355
        %v11399 = vunpack.c.l.b16 %v11356
        %v11400 = vunpack.c.l.b16 %v11357
        %v11401 = vunpack.c.l.b16 %v11358
        %v11402 = vunpack.c.l.b16 %v11359
        %v11403 = vunpack.c.l.b16 %v11360
        %v11404 = vunpack.c.l.b16 %v11361
        %v11405 = vunpack.c.l.b16 %v11362
        %v11406 = vunpack.c.l.b16 %v11363
        %v11407 = vunpack.c.l.b16 %v11364
        %v11408 = vunpack.c.l.b16 %v11365
        %v11409 = vpack.c.b16 %v11392, %v11391
        %v11410 = vpack.c.b16 %v11394, %v11393
        %v11411 = vpack.c.b16 %v11396, %v11395
        %v11412 = vpack.c.b16 %v11398, %v11397
        %v11413 = vpack.c.b16 %v11400, %v11399
        %v11414 = vpack.c.b16 %v11402, %v11401
        %v11415 = vpack.c.b16 %v11404, %v11403
        %v11416 = vpack.c.b16 %v11406, %v11405
        %v11417 = vpack.c.b16 %v11408, %v11407
        %v11428 = vsel %vm7292, %v11076, 0
        %v11431 = vsel %vm7292, %v11077, 0
        %v11434 = vsel %vm7292, %v11078, 0
        %v11437 = vsel %vm7292, %v11079, 0
        %v11440 = vsel %vm7292, %v11080, 0
        %v11443 = vsel %vm7292, %v11081, 0
        %v11446 = vsel %vm7292, %v11082, 0
        %v11449 = vsel %vm7292, %v11083, 0
        %v11452 = vsel %vm7292, %v11084, 0
        %v11455 = vsel %vm7292, %v11085, 0
        %v11458 = vsel %vm7292, %v11086, 0
        %v11461 = vsel %vm7292, %v11087, 0
        %v11464 = vsel %vm7292, %v11088, 0
        %v11467 = vsel %vm7292, %v11089, 0
        %v11470 = vsel %vm7292, %v11090, 0
        %v11473 = vsel %vm7292, %v11091, 0
        %11475 = vmatprep.subr.bf16.mxu0 0
        %11476 = vmatpush1.bf16.msra.mxu0 %v11409
        %11477 = vmatprep.subr.bf16.mxu0 0
        %11478 = vmatpush1.bf16.msra.mxu0 %v11410
        %11479 = vmatprep.subr.bf16.mxu0 0
        %11480 = vmatpush1.bf16.msra.mxu0 %v11411
        %11481 = vmatprep.subr.bf16.mxu0 0
        %11482 = vmatpush1.bf16.msra.mxu0 %v11412
        %11483 = vmatprep.subr.bf16.mxu0 0
        %11484 = vmatpush1.bf16.msra.mxu0 %v11413
        %11485 = vmatprep.subr.bf16.mxu0 0
        %11486 = vmatpush1.bf16.msra.mxu0 %v11414
        %11487 = vmatprep.subr.bf16.mxu0 0
        %11488 = vmatpush1.bf16.msra.mxu0 %v11415
        %11489 = vmatprep.subr.bf16.mxu0 0
        %11490 = vmatpush1.bf16.msra.mxu0 %v11416
        %11491 = vmatprep.subr.bf16.mxu0 0
        %11492 = vmatpush1.bf16.msra.mxu0 %v11417
        %11493 = vmatprep.subr.bf16.mxu0 0
        %11494 = vmatpush1.bf16.msra.mxu0 0
        %11495 = vmatprep.subr.bf16.mxu0 0
        %11496 = vmatpush1.bf16.msra.mxu0 0
        %11497 = vmatprep.subr.bf16.mxu0 0
        %11498 = vmatpush1.bf16.msra.mxu0 0
        %11499 = vmatprep.subr.bf16.mxu0 0
        %11500 = vmatpush1.bf16.msra.mxu0 0
        %11501 = vmatprep.subr.bf16.mxu0 0
        %11502 = vmatpush1.bf16.msra.mxu0 0
        %11503 = vmatprep.subr.bf16.mxu0 0
        %11504 = vmatpush1.bf16.msra.mxu0 0
        %11505 = vmatprep.subr.bf16.mxu0 0
        %11506 = vmatpush1.bf16.msra.mxu0 0
        %11507 = vmatprep.mubr.bf16.mxu0 %v11428
        %11508 = vmatmul.mubr.bf16.gmra.mrb[0].mxu0 %v11301
        %v11509 = vpop.f32.mrb[0].mxu0
        %v11510 = vadd.f32 %v11371, %v11509
        %v11511 = vpop.f32.mrb[0].mxu0
        %v11512 = vpop.f32.mrb[0].mxu0
        %v11513 = vadd.f32 %v11371, %v11512
        %v11514 = vpop.f32.mrb[0].mxu0
        %11515 = vmatprep.mubr.bf16.mxu0 %v11431
        %11516 = vmatmul.mubr.bf16.gmra.mrb[0].mxu0 %v11304
        %v11517 = vpop.f32.mrb[0].mxu0
        %v11518 = vadd.f32 %v11371, %v11517
        %v11519 = vpop.f32.mrb[0].mxu0
        %v11520 = vpop.f32.mrb[0].mxu0
        %v11521 = vadd.f32 %v11371, %v11520
        %v11522 = vpop.f32.mrb[0].mxu0
        %11523 = vmatprep.mubr.bf16.mxu0 %v11434
        %11524 = vmatmul.mubr.bf16.gmra.mrb[0].mxu0 %v11307
        %v11525 = vpop.f32.mrb[0].mxu0
        %v11526 = vadd.f32 %v11371, %v11525
        %v11527 = vpop.f32.mrb[0].mxu0
        %v11528 = vpop.f32.mrb[0].mxu0
        %v11529 = vadd.f32 %v11371, %v11528
        %v11530 = vpop.f32.mrb[0].mxu0
        %11531 = vmatprep.mubr.bf16.mxu0 %v11437
        %11532 = vmatmul.mubr.bf16.gmra.mrb[0].mxu0 %v11310
        %v11533 = vpop.f32.mrb[0].mxu0
        %v11534 = vadd.f32 %v11371, %v11533
        %v11535 = vpop.f32.mrb[0].mxu0
        %v11536 = vpop.f32.mrb[0].mxu0
        %v11537 = vadd.f32 %v11371, %v11536
        %v11538 = vpop.f32.mrb[0].mxu0
        %11539 = vmatprep.mubr.bf16.mxu0 %v11440
        %11540 = vmatmul.mubr.bf16.gmra.mrb[0].mxu0 %v11313
        %v11541 = vpop.f32.mrb[0].mxu0
        %v11542 = vadd.f32 %v11371, %v11541
        %v11543 = vpop.f32.mrb[0].mxu0
        %v11544 = vpop.f32.mrb[0].mxu0
        %v11545 = vadd.f32 %v11371, %v11544
        %v11546 = vpop.f32.mrb[0].mxu0
        %11547 = vmatprep.mubr.bf16.mxu0 %v11443
        %11548 = vmatmul.mubr.bf16.gmra.mrb[0].mxu0 %v11316
        %v11549 = vpop.f32.mrb[0].mxu0
        %v11550 = vadd.f32 %v11371, %v11549
        %v11551 = vpop.f32.mrb[0].mxu0
        %v11552 = vpop.f32.mrb[0].mxu0
        %v11553 = vadd.f32 %v11371, %v11552
        %v11554 = vpop.f32.mrb[0].mxu0
        %11555 = vmatprep.mubr.bf16.mxu0 %v11446
        %11556 = vmatmul.mubr.bf16.gmra.mrb[0].mxu0 %v11319
        %v11557 = vpop.f32.mrb[0].mxu0
        %v11558 = vadd.f32 %v11371, %v11557
        %v11559 = vpop.f32.mrb[0].mxu0
        %v11560 = vpop.f32.mrb[0].mxu0
        %v11561 = vadd.f32 %v11371, %v11560
        %v11562 = vpop.f32.mrb[0].mxu0
        %11563 = vmatprep.mubr.bf16.mxu0 %v11449
        %11564 = vmatmul.mubr.bf16.gmra.mrb[0].mxu0 %v11322
        %v11565 = vpop.f32.mrb[0].mxu0
        %v11566 = vadd.f32 %v11371, %v11565
        %v11567 = vpop.f32.mrb[0].mxu0
        %v11568 = vpop.f32.mrb[0].mxu0
        %v11569 = vadd.f32 %v11371, %v11568
        %v11570 = vpop.f32.mrb[0].mxu0
        %11571 = vmatprep.mubr.bf16.mxu0 %v11452
        %11572 = vmatmul.mubr.bf16.gmra.mrb[0].mxu0 %v11325
        %v11573 = vpop.f32.mrb[0].mxu0
        %v11574 = vadd.f32 %v11371, %v11573
        %v11575 = vpop.f32.mrb[0].mxu0
        %v11576 = vpop.f32.mrb[0].mxu0
        %v11577 = vadd.f32 %v11371, %v11576
        %v11578 = vpop.f32.mrb[0].mxu0
        %11579 = vmatprep.mubr.bf16.mxu0 %v11455
        %11580 = vmatmul.mubr.bf16.gmra.mrb[0].mxu0 %v11328
        %v11581 = vpop.f32.mrb[0].mxu0
        %v11582 = vadd.f32 %v11371, %v11581
        %v11583 = vpop.f32.mrb[0].mxu0
        %v11584 = vpop.f32.mrb[0].mxu0
        %v11585 = vadd.f32 %v11371, %v11584
        %v11586 = vpop.f32.mrb[0].mxu0
        %11587 = vmatprep.mubr.bf16.mxu0 %v11458
        %11588 = vmatmul.mubr.bf16.gmra.mrb[0].mxu0 %v11331
        %v11589 = vpop.f32.mrb[0].mxu0
        %v11590 = vadd.f32 %v11371, %v11589
        %v11591 = vpop.f32.mrb[0].mxu0
        %v11592 = vpop.f32.mrb[0].mxu0
        %v11593 = vadd.f32 %v11371, %v11592
        %v11594 = vpop.f32.mrb[0].mxu0
        %11595 = vmatprep.mubr.bf16.mxu0 %v11461
        %11596 = vmatmul.mubr.bf16.gmra.mrb[0].mxu0 %v11334
        %v11597 = vpop.f32.mrb[0].mxu0
        %v11598 = vadd.f32 %v11371, %v11597
        %v11599 = vpop.f32.mrb[0].mxu0
        %v11600 = vpop.f32.mrb[0].mxu0
        %v11601 = vadd.f32 %v11371, %v11600
        %v11602 = vpop.f32.mrb[0].mxu0
        %11603 = vmatprep.mubr.bf16.mxu0 %v11464
        %11604 = vmatmul.mubr.bf16.gmra.mrb[0].mxu0 %v11337
        %v11605 = vpop.f32.mrb[0].mxu0
        %v11606 = vadd.f32 %v11371, %v11605
        %v11607 = vpop.f32.mrb[0].mxu0
        %v11608 = vpop.f32.mrb[0].mxu0
        %v11609 = vadd.f32 %v11371, %v11608
        %v11610 = vpop.f32.mrb[0].mxu0
        %11611 = vmatprep.mubr.bf16.mxu0 %v11467
        %11612 = vmatmul.mubr.bf16.gmra.mrb[0].mxu0 %v11340
        %v11613 = vpop.f32.mrb[0].mxu0
        %v11614 = vadd.f32 %v11371, %v11613
        %v11615 = vpop.f32.mrb[0].mxu0
        %v11616 = vpop.f32.mrb[0].mxu0
        %v11617 = vadd.f32 %v11371, %v11616
        %v11618 = vpop.f32.mrb[0].mxu0
        %11619 = vmatprep.mubr.bf16.mxu0 %v11470
        %11620 = vmatmul.mubr.bf16.gmra.mrb[0].mxu0 %v11343
        %v11621 = vpop.f32.mrb[0].mxu0
        %v11622 = vadd.f32 %v11371, %v11621
        %v11623 = vpop.f32.mrb[0].mxu0
        %v11624 = vpop.f32.mrb[0].mxu0
        %v11625 = vadd.f32 %v11371, %v11624
        %v11626 = vpop.f32.mrb[0].mxu0
        %11627 = vmatprep.mubr.bf16.mxu0 %v11473
        %11628 = vmatmul.mubr.bf16.gmra.mrb[0].mxu0 %v11346
        %v11629 = vpop.f32.mrb[0].mxu0
        %v11630 = vadd.f32 %v11371, %v11629
        %v11631 = vpop.f32.mrb[0].mxu0
        %v11632 = vpop.f32.mrb[0].mxu0
        %v11633 = vadd.f32 %v11371, %v11632
        %v11634 = vpop.f32.mrb[0].mxu0
        %11635 = vdwg.mxu0
        %11668 = vrot.lane.b32.xlu0 %v7716, 32
        %v11669 = vpop.permute.xlu0 %11668
        %11670 = vrot.lane.b32.xlu0 %v7719, 32
        %v11671 = vpop.permute.xlu0 %11670
        %11672 = vrot.lane.b32.xlu0 %v7724, 32
        %v11673 = vpop.permute.xlu0 %11672
        %11674 = vrot.lane.b32.xlu0 %v7727, 32
        %v11675 = vpop.permute.xlu0 %11674
        %11676 = vrot.lane.b32.xlu0 %v7732, 32
        %v11677 = vpop.permute.xlu0 %11676
        %11678 = vrot.lane.b32.xlu0 %v7735, 32
        %v11679 = vpop.permute.xlu0 %11678
        %11680 = vrot.lane.b32.xlu0 %v7740, 32
        %v11681 = vpop.permute.xlu0 %11680
        %11682 = vrot.lane.b32.xlu0 %v7743, 32
        %v11683 = vpop.permute.xlu0 %11682
        %11684 = vrot.lane.b32.xlu0 %v7748, 32
        %v11685 = vpop.permute.xlu0 %11684
        %11686 = vrot.lane.b32.xlu0 %v7751, 32
        %v11687 = vpop.permute.xlu0 %11686
        %11688 = vrot.lane.b32.xlu0 %v7756, 32
        %v11689 = vpop.permute.xlu0 %11688
        %11690 = vrot.lane.b32.xlu0 %v7759, 32
        %v11691 = vpop.permute.xlu0 %11690
        %11692 = vrot.lane.b32.xlu0 %v7764, 32
        %v11693 = vpop.permute.xlu0 %11692
        %11694 = vrot.lane.b32.xlu0 %v7767, 32
        %v11695 = vpop.permute.xlu0 %11694
        %11696 = vrot.lane.b32.xlu0 %v7772, 32
        %v11697 = vpop.permute.xlu0 %11696
        %11698 = vrot.lane.b32.xlu0 %v7775, 32
        %v11699 = vpop.permute.xlu0 %11698
        %11700 = vrot.lane.b32.xlu0 %v7780, 32
        %v11701 = vpop.permute.xlu0 %11700
        %11702 = vrot.lane.b32.xlu0 %v7783, 32
        %v11703 = vpop.permute.xlu0 %11702
        %11704 = vrot.lane.b32.xlu0 %v7788, 32
        %v11705 = vpop.permute.xlu0 %11704
        %11706 = vrot.lane.b32.xlu0 %v7791, 32
        %v11707 = vpop.permute.xlu0 %11706
        %11708 = vrot.lane.b32.xlu0 %v7796, 32
        %v11709 = vpop.permute.xlu0 %11708
        %11710 = vrot.lane.b32.xlu0 %v7799, 32
        %v11711 = vpop.permute.xlu0 %11710
        %11712 = vrot.lane.b32.xlu0 %v7804, 32
        %v11713 = vpop.permute.xlu0 %11712
        %11714 = vrot.lane.b32.xlu0 %v7807, 32
        %v11715 = vpop.permute.xlu0 %11714
        %11716 = vrot.lane.b32.xlu0 %v7812, 32
        %v11717 = vpop.permute.xlu0 %11716
        %11718 = vrot.lane.b32.xlu0 %v7815, 32
        %v11719 = vpop.permute.xlu0 %11718
        %11720 = vrot.lane.b32.xlu0 %v7820, 32
        %v11721 = vpop.permute.xlu0 %11720
        %11722 = vrot.lane.b32.xlu0 %v7823, 32
        %v11723 = vpop.permute.xlu0 %11722
        %11724 = vrot.lane.b32.xlu0 %v7828, 32
        %v11725 = vpop.permute.xlu0 %11724
        %11726 = vrot.lane.b32.xlu0 %v7831, 32
        %v11727 = vpop.permute.xlu0 %11726
        %11728 = vrot.lane.b32.xlu0 %v7836, 32
        %v11729 = vpop.permute.xlu0 %11728
        %11730 = vrot.lane.b32.xlu0 %v7839, 32
        %v11731 = vpop.permute.xlu0 %11730
        %11796 = vrot.lane.b32.xlu0 %v11510, 48
        %v11797 = vpop.permute.xlu0 %11796
        %11798 = vrot.lane.b32.xlu0 %v11513, 48
        %v11799 = vpop.permute.xlu0 %11798
        %11800 = vrot.lane.b32.xlu0 %v11518, 48
        %v11801 = vpop.permute.xlu0 %11800
        %11802 = vrot.lane.b32.xlu0 %v11521, 48
        %v11803 = vpop.permute.xlu0 %11802
        %11804 = vrot.lane.b32.xlu0 %v11526, 48
        %v11805 = vpop.permute.xlu0 %11804
        %11806 = vrot.lane.b32.xlu0 %v11529, 48
        %v11807 = vpop.permute.xlu0 %11806
        %11808 = vrot.lane.b32.xlu0 %v11534, 48
        %v11809 = vpop.permute.xlu0 %11808
        %11810 = vrot.lane.b32.xlu0 %v11537, 48
        %v11811 = vpop.permute.xlu0 %11810
        %11812 = vrot.lane.b32.xlu0 %v11542, 48
        %v11813 = vpop.permute.xlu0 %11812
        %11814 = vrot.lane.b32.xlu0 %v11545, 48
        %v11815 = vpop.permute.xlu0 %11814
        %11816 = vrot.lane.b32.xlu0 %v11550, 48
        %v11817 = vpop.permute.xlu0 %11816
        %11818 = vrot.lane.b32.xlu0 %v11553, 48
        %v11819 = vpop.permute.xlu0 %11818
        %11820 = vrot.lane.b32.xlu0 %v11558, 48
        %v11821 = vpop.permute.xlu0 %11820
        %11822 = vrot.lane.b32.xlu0 %v11561, 48
        %v11823 = vpop.permute.xlu0 %11822
        %11824 = vrot.lane.b32.xlu0 %v11566, 48
        %v11825 = vpop.permute.xlu0 %11824
        %11826 = vrot.lane.b32.xlu0 %v11569, 48
        %v11827 = vpop.permute.xlu0 %11826
        %11828 = vrot.lane.b32.xlu0 %v11574, 48
        %v11829 = vpop.permute.xlu0 %11828
        %11830 = vrot.lane.b32.xlu0 %v11577, 48
        %v11831 = vpop.permute.xlu0 %11830
        %11832 = vrot.lane.b32.xlu0 %v11582, 48
        %v11833 = vpop.permute.xlu0 %11832
        %11834 = vrot.lane.b32.xlu0 %v11585, 48
        %v11835 = vpop.permute.xlu0 %11834
        %11836 = vrot.lane.b32.xlu0 %v11590, 48
        %v11837 = vpop.permute.xlu0 %11836
        %11838 = vrot.lane.b32.xlu0 %v11593, 48
        %v11839 = vpop.permute.xlu0 %11838
        %11840 = vrot.lane.b32.xlu0 %v11598, 48
        %v11841 = vpop.permute.xlu0 %11840
        %11842 = vrot.lane.b32.xlu0 %v11601, 48
        %v11843 = vpop.permute.xlu0 %11842
        %11844 = vrot.lane.b32.xlu0 %v11606, 48
        %v11845 = vpop.permute.xlu0 %11844
        %11846 = vrot.lane.b32.xlu0 %v11609, 48
        %v11847 = vpop.permute.xlu0 %11846
        %11848 = vrot.lane.b32.xlu0 %v11614, 48
        %v11849 = vpop.permute.xlu0 %11848
        %11850 = vrot.lane.b32.xlu0 %v11617, 48
        %v11851 = vpop.permute.xlu0 %11850
        %11852 = vrot.lane.b32.xlu0 %v11622, 48
        %v11853 = vpop.permute.xlu0 %11852
        %11854 = vrot.lane.b32.xlu0 %v11625, 48
        %v11855 = vpop.permute.xlu0 %11854
        %11856 = vrot.lane.b32.xlu0 %v11630, 48
        %v11857 = vpop.permute.xlu0 %11856
        %11858 = vrot.lane.b32.xlu0 %v11633, 48
        %v11859 = vpop.permute.xlu0 %11858
        %v11892 = vsel %vm7341, %v3912, %v11669
        %v11893 = vsel %vm7341, %v3915, %v11671
        %v11894 = vsel %vm7341, %v3920, %v11673
        %v11895 = vsel %vm7341, %v3923, %v11675
        %v11896 = vsel %vm7341, %v3928, %v11677
        %v11897 = vsel %vm7341, %v3931, %v11679
        %v11898 = vsel %vm7341, %v3936, %v11681
        %v11899 = vsel %vm7341, %v3939, %v11683
        %v11900 = vsel %vm7341, %v3944, %v11685
        %v11901 = vsel %vm7341, %v3947, %v11687
        %v11902 = vsel %vm7341, %v3952, %v11689
        %v11903 = vsel %vm7341, %v3955, %v11691
        %v11904 = vsel %vm7341, %v3960, %v11693
        %v11905 = vsel %vm7341, %v3963, %v11695
        %v11906 = vsel %vm7341, %v3968, %v11697
        %v11907 = vsel %vm7341, %v3971, %v11699
        %v11908 = vsel %vm7341, %v3976, %v11701
        %v11909 = vsel %vm7341, %v3979, %v11703
        %v11910 = vsel %vm7341, %v3984, %v11705
        %v11911 = vsel %vm7341, %v3987, %v11707
        %v11912 = vsel %vm7341, %v3992, %v11709
        %v11913 = vsel %vm7341, %v3995, %v11711
        %v11914 = vsel %vm7341, %v4000, %v11713
        %v11915 = vsel %vm7341, %v4003, %v11715
        %v11916 = vsel %vm7341, %v4008, %v11717
        %v11917 = vsel %vm7341, %v4011, %v11719
        %v11918 = vsel %vm7341, %v4016, %v11721
        %v11919 = vsel %vm7341, %v4019, %v11723
        %v11920 = vsel %vm7341, %v4024, %v11725
        %v11921 = vsel %vm7341, %v4027, %v11727
        %v11922 = vsel %vm7341, %v4032, %v11729
        %v11923 = vsel %vm7341, %v4035, %v11731
        %v11924 = vsel %vm7374, %v11892, %v11797
        %v11925 = vsel %vm7374, %v11893, %v11799
        %v11926 = vsel %vm7374, %v11894, %v11801
        %v11927 = vsel %vm7374, %v11895, %v11803
        %v11928 = vsel %vm7374, %v11896, %v11805
        %v11929 = vsel %vm7374, %v11897, %v11807
        %v11930 = vsel %vm7374, %v11898, %v11809
        %v11931 = vsel %vm7374, %v11899, %v11811
        %v11932 = vsel %vm7374, %v11900, %v11813
        %v11933 = vsel %vm7374, %v11901, %v11815
        %v11934 = vsel %vm7374, %v11902, %v11817
        %v11935 = vsel %vm7374, %v11903, %v11819
        %v11936 = vsel %vm7374, %v11904, %v11821
        %v11937 = vsel %vm7374, %v11905, %v11823
        %v11938 = vsel %vm7374, %v11906, %v11825
        %v11939 = vsel %vm7374, %v11907, %v11827
        %v11940 = vsel %vm7374, %v11908, %v11829
        %v11941 = vsel %vm7374, %v11909, %v11831
        %v11942 = vsel %vm7374, %v11910, %v11833
        %v11943 = vsel %vm7374, %v11911, %v11835
        %v11944 = vsel %vm7374, %v11912, %v11837
        %v11945 = vsel %vm7374, %v11913, %v11839
        %v11946 = vsel %vm7374, %v11914, %v11841
        %v11947 = vsel %vm7374, %v11915, %v11843
        %v11948 = vsel %vm7374, %v11916, %v11845
        %v11949 = vsel %vm7374, %v11917, %v11847
        %v11950 = vsel %vm7374, %v11918, %v11849
        %v11951 = vsel %vm7374, %v11919, %v11851
        %v11952 = vsel %vm7374, %v11920, %v11853
        %v11953 = vsel %vm7374, %v11921, %v11855
        %v11954 = vsel %vm7374, %v11922, %v11857
        %v11955 = vsel %vm7374, %v11923, %v11859
        %v11956 = vmax.f32 %v11924, 0.0
        %v11957 = vmax.f32 %v11925, 0.0
        %v11958 = vmax.f32 %v11926, 0.0
        %v11959 = vmax.f32 %v11927, 0.0
        %v11960 = vmax.f32 %v11928, 0.0
        %v11961 = vmax.f32 %v11929, 0.0
        %v11962 = vmax.f32 %v11930, 0.0
        %v11963 = vmax.f32 %v11931, 0.0
        %v11964 = vmax.f32 %v11932, 0.0
        %v11965 = vmax.f32 %v11933, 0.0
        %v11966 = vmax.f32 %v11934, 0.0
        %v11967 = vmax.f32 %v11935, 0.0
        %v11968 = vmax.f32 %v11936, 0.0
        %v11969 = vmax.f32 %v11937, 0.0
        %v11970 = vmax.f32 %v11938, 0.0
        %v11971 = vmax.f32 %v11939, 0.0
        %v11972 = vmax.f32 %v11940, 0.0
        %v11973 = vmax.f32 %v11941, 0.0
        %v11974 = vmax.f32 %v11942, 0.0
        %v11975 = vmax.f32 %v11943, 0.0
        %v11976 = vmax.f32 %v11944, 0.0
        %v11977 = vmax.f32 %v11945, 0.0
        %v11978 = vmax.f32 %v11946, 0.0
        %v11979 = vmax.f32 %v11947, 0.0
        %v11980 = vmax.f32 %v11948, 0.0
        %v11981 = vmax.f32 %v11949, 0.0
        %v11982 = vmax.f32 %v11950, 0.0
        %v11983 = vmax.f32 %v11951, 0.0
        %v11984 = vmax.f32 %v11952, 0.0
        %v11985 = vmax.f32 %v11953, 0.0
        %v11986 = vmax.f32 %v11954, 0.0
        %v11987 = vmax.f32 %v11955, 0.0
        %11988 = vst.msk [vmem:[%s271] sm:$0xff] %vm2955, %v11956
        %11989 = vst.msk [vmem:[%s271 + $0x8] sm:$0xff] %vm2955, %v11957
        %11990 = vst.msk [vmem:[%s271 + $0x10] sm:$0xff] %vm2955, %v11958
        %11991 = vst.msk [vmem:[%s271 + $0x18] sm:$0xff] %vm2955, %v11959
        %11992 = vst.msk [vmem:[%s271 + $0x20] sm:$0xff] %vm2955, %v11960
        %11993 = vst.msk [vmem:[%s271 + $0x28] sm:$0xff] %vm2955, %v11961
        %11994 = vst.msk [vmem:[%s271 + $0x30] sm:$0xff] %vm2955, %v11962
        %11995 = vst.msk [vmem:[%s271 + $0x38] sm:$0xff] %vm2955, %v11963
        %11996 = vst.msk [vmem:[%s271 + $0x40] sm:$0xff] %vm2955, %v11964
        %11997 = vst.msk [vmem:[%s271 + $0x48] sm:$0xff] %vm2955, %v11965
        %11998 = vst.msk [vmem:[%s271 + $0x50] sm:$0xff] %vm2955, %v11966
        %11999 = vst.msk [vmem:[%s271 + $0x58] sm:$0xff] %vm2955, %v11967
        %12000 = vst.msk [vmem:[%s271 + $0x60] sm:$0xff] %vm2955, %v11968
        %12001 = vst.msk [vmem:[%s271 + $0x68] sm:$0xff] %vm2955, %v11969
        %12002 = vst.msk [vmem:[%s271 + $0x70] sm:$0xff] %vm2955, %v11970
        %12003 = vst.msk [vmem:[%s271 + $0x78] sm:$0xff] %vm2955, %v11971
        %12004 = vst.msk [vmem:[%s271 + $0x80] sm:$0xff] %vm2955, %v11972
        %12005 = vst.msk [vmem:[%s271 + $0x88] sm:$0xff] %vm2955, %v11973
        %12006 = vst.msk [vmem:[%s271 + $0x90] sm:$0xff] %vm2955, %v11974
        %12007 = vst.msk [vmem:[%s271 + $0x98] sm:$0xff] %vm2955, %v11975
        %12008 = vst.msk [vmem:[%s271 + $0xa0] sm:$0xff] %vm2955, %v11976
        %12009 = vst.msk [vmem:[%s271 + $0xa8] sm:$0xff] %vm2955, %v11977
        %12010 = vst.msk [vmem:[%s271 + $0xb0] sm:$0xff] %vm2955, %v11978
        %12011 = vst.msk [vmem:[%s271 + $0xb8] sm:$0xff] %vm2955, %v11979
        %12012 = vst.msk [vmem:[%s271 + $0xc0] sm:$0xff] %vm2955, %v11980
        %12013 = vst.msk [vmem:[%s271 + $0xc8] sm:$0xff] %vm2955, %v11981
        %12014 = vst.msk [vmem:[%s271 + $0xd0] sm:$0xff] %vm2955, %v11982
        %12015 = vst.msk [vmem:[%s271 + $0xd8] sm:$0xff] %vm2955, %v11983
        %12016 = vst.msk [vmem:[%s271 + $0xe0] sm:$0xff] %vm2955, %v11984
        %12017 = vst.msk [vmem:[%s271 + $0xe8] sm:$0xff] %vm2955, %v11985
        %12018 = vst.msk [vmem:[%s271 + $0xf0] sm:$0xff] %vm2955, %v11986
        %12019 = vst.msk [vmem:[%s271 + $0xf8] sm:$0xff] %vm2955, %v11987
        %s12020 = sand.u32 %s181, 1
        %s12021 = scalar_lea.sflag [#allocation5], %s12020
        %s12022 = sand.u32 %s181, 1
        %s12023 = smul.addr %s12022, 256
        %s12024 = scalar_lea.vmem [#allocation4], %s12023
        // Predicated region
        $region49: #{tpu_custom_call.1} parent=47 // pred_check
          %p12025 = pneg %p191
        $region50: #{tpu_custom_call.1} parent=47 // pred_check_branch
          %12027 = sbr.rel (%p12025) target = $region52
        $region51: #{tpu_custom_call.1} parent=47 // pred_region
          %s12029 = ssub.s32 4096, 4096
          %12030 = vsyncadd %s12021, %s12029
          %s12031 = smul.addr %s21, 32
          %s12032 = smul.addr %s12031, 128
          %s12033 = scalar_lea.hbm %s7, %s12032
          %s12034 = sshll.u32 %s12024, 4
          %s12035 = int_to_ptr.vmem [resolvable:$true] %s12034
          %12040 = dma.vmem_to_hbm [thread:$0]  %s12035, 4096, %s12033, %s12021, 128, 128, 8
        $region52: #{tpu_custom_call.1} parent=47 // pred_fallthru
          _
      $region48: #{tpu_custom_call.1} parent=5 // pred_fallthru
        _
      %p12041 = scmp.le.s32.totalorder 2, %s16
      // Predicated region
      $region53: #{tpu_custom_call.1} parent=5 // pred_check
        %p12042 = pneg %p12041
      $region54: #{tpu_custom_call.1} parent=5 // pred_check_branch
        %12044 = sbr.rel (%p12042) target = $region56
      $region55: #{tpu_custom_call.1} parent=5 // pred_region
        %s12045 = ssub.s32 %s16, 2
        // Predicated region
        $region57: #{tpu_custom_call.1} parent=55 // pred_check
          %p12046 = pneg %p197
        $region58: #{tpu_custom_call.1} parent=55 // pred_check_branch
          %12048 = sbr.rel (%p12046) target = $region60
        $region59: #{tpu_custom_call.1} parent=55 // pred_region
          %s12049 = sand.u32 %s182, 1
          %s12050 = scalar_lea.sflag [#allocation5], %s12049
          %s12051 = sand.u32 %s182, 1
          %s12052 = smul.addr %s12051, 256
          %s12053 = scalar_lea.vmem [#allocation4], %s12052
          %12054 = dma.done %s12050, 4096
        $region60: #{tpu_custom_call.1} parent=55 // pred_fallthru
          _
      $region56: #{tpu_custom_call.1} parent=5 // pred_fallthru
        _
    $region6: #{tpu_custom_call.1} parent=1 // loop_footer
      %s20 = sadd.s32 1, %s16
    $region7: #{tpu_custom_call.1} parent=1 // loop_footer_branch
      %15 = sbr.rel target = $region3
    $region8: #{tpu_custom_call.1} parent=1 // loop_exit
      _
    %12055 = vsyncpa [#allocation5], 1
    %s12056 = scalar_lea.sflag [#allocation5], 1
    %12057 = vsyncpa %s12056, 1

</llo_original>
